<compile_context>
chip_gen: v7x
topology: tpu7x:2x2x1
jax: 0.10.0
libtpu: 0.0.40
codegen_flags: <defaults>
</compile_context>

<pallas_src>
import functools

import jax
import jax.numpy as jnp
from jax.experimental import pallas as pl
from jax.experimental.pallas import tpu as pltpu

COMMIT_WEIGHT = 0.25  # stand-in for cfg.commit_weight


def _quantizer_kernel(z_ref, cbt_ref, csqh_ref, q_ref, ids_ref, loss_ref, *,
                      chunk_rows, num_chunks, rows_per_tile, n_valid, mask_tail):
    # Loop-invariant operands: loaded once per grid step, already pre-transposed /
    # pre-scaled in the wrapper (no per-step cast / transpose / 2x multiply).
    cbt = cbt_ref[...]            # (D, K) f32 -- codebook^T, lane-dense resident
    c_sq_half = csqh_ref[...]     # (1, K) f32 -- 0.5 * ||c_k||^2
    k = cbt.shape[1]
    iota_k = jax.lax.broadcasted_iota(jnp.int32, (1, k), 1)   # (1, K), hoisted

    tile_row0 = pl.program_id(0) * rows_per_tile   # global row offset of this tile

    def chunk_body(c, sse):
        # Iterate the compute over chunk_rows-row chunks so the live (chunk, K) f32
        # intermediates (scores, d2, onehot) stay within the 64-vreg file.
        row0 = pl.multiple_of(c * chunk_rows, chunk_rows)
        zf = z_ref[pl.ds(row0, chunk_rows), :].astype(jnp.float32)      # (chunk, D)

        # MXU: scores = z @ c^T  (codebook pre-transposed to (D, K), NN form).
        scores = jnp.dot(zf, cbt, preferred_element_type=jnp.float32)   # (chunk, K)

        # argmin_k ||z - c_k||^2 == argmin_k (0.5*||c_k||^2 - z.c_k);
        # per-row ||z||^2 dropped, the 2x folded into the hoisted norms.
        d2 = c_sq_half - scores                                         # (chunk, K)
        ids = jnp.argmin(d2, axis=-1).astype(jnp.int32)                 # (chunk,) first-min

        # Gather q = codebook[ids] as a one-hot matmul on the MXU (NT form against
        # the pre-transposed codebook), kept f32 so q is an exact codebook row copy.
        onehot = (iota_k == ids[:, None]).astype(jnp.float32)           # (chunk, K)
        q = jax.lax.dot_general(onehot, cbt, (((1,), (1,)), ((), ())),
                                preferred_element_type=jnp.float32)     # (chunk, D)

        q_ref[pl.ds(row0, chunk_rows), :] = q.astype(q_ref.dtype)
        # Lane-dense ids store (sublane->lane relayout runs on the otherwise-idle XLU).
        ids_ref[0, pl.ds(row0, chunk_rows)] = ids

        sq = (zf - q) ** 2                                              # (chunk, D)
        if mask_tail:   # static: only emitted when N was padded up to the tile grid
            gidx = tile_row0 + row0 + jax.lax.broadcasted_iota(
                jnp.int32, (chunk_rows, 1), 0)
            sq = jnp.where(gidx < n_valid, sq, 0.0)
        return sse + jnp.sum(sq)

    sse = jax.lax.fori_loop(0, num_chunks, chunk_body, jnp.float32(0.0),
                            unroll=True)
    # Per-tile SSE partial: every lane of this tile's (1, 1, 128) row holds the same
    # value.  Reduced + scaled by (1 + commit_weight) / (N*D) in the wrapper so the
    # grid axis stays "parallel" (megacore-shardable, no cross-step carry).
    loss_ref[...] = jnp.broadcast_to(sse, loss_ref.shape)


def _cores_per_chip():
    # v7x has 2 TensorCores per chip: keep >= 2 grid steps there so the "parallel"
    # grid axis actually shards.  Single-TC chips (v5e/v6e) prefer a single grid step
    # for small N (the grid is a serial loop with ~0.35us/step overhead).
    try:
        dev = jax.devices()[0]
        nc = getattr(dev, "num_cores", None)
        if nc:
            return int(nc)
        if "v7" in dev.device_kind.lower():
            return 2
    except Exception:
        pass
    return 1


def quantizer_forward(z, codebook, *, commit_weight=COMMIT_WEIGHT, tile_n=None,
                      chunk_rows=128):
    """z: (N, D) float; codebook: (K, D) float. Returns (q, loss, ids)."""
    n, d = z.shape
    k, d_cb = codebook.shape
    assert d == d_cb

    # --- tile geometry --------------------------------------------------------
    if tile_n is None:
        # One tile per TensorCore for small N; cap rows so per-step VMEM stays
        # modest on the 64 MiB/TC v7x parts (and everywhere else).
        tile_n = min(pl.cdiv(n, _cores_per_chip()), 1024)
    tile_n = max(8, min(int(tile_n), max(n, 8)))
    chunk = max(8, (min(chunk_rows, tile_n) // 8) * 8)   # sublane-aligned compute chunk
    tile_n = pl.cdiv(tile_n, chunk) * chunk              # whole number of chunks / tile
    n_pad = pl.cdiv(n, tile_n) * tile_n
    num_tiles = n_pad // tile_n
    mask_tail = n_pad != n

    z_p = jnp.pad(z, ((0, n_pad - n), (0, 0))) if mask_tail else z

    # --- loop-invariant codebook prep (hoisted out of the kernel) -------------
    cbf = codebook.astype(jnp.float32)
    cbt = cbf.T                                                # (D, K) lane-dense
    c_sq_half = 0.5 * jnp.sum(cbf * cbf, axis=-1)[None, :]     # (1, K)

    kernel = functools.partial(
        _quantizer_kernel, chunk_rows=chunk, num_chunks=tile_n // chunk,
        rows_per_tile=tile_n, n_valid=n, mask_tail=mask_tail)

    q_pad, ids_row, loss_parts = pl.pallas_call(
        kernel,
        out_shape=(
            jax.ShapeDtypeStruct((n_pad, d), z.dtype),               # q
            jax.ShapeDtypeStruct((1, n_pad), jnp.int32),             # ids (lane-dense)
            jax.ShapeDtypeStruct((num_tiles, 1, 128), jnp.float32),  # per-tile SSE
        ),
        grid_spec=pltpu.PrefetchScalarGridSpec(
            num_scalar_prefetch=0,
            grid=(num_tiles,),
            in_specs=[
                pl.BlockSpec((tile_n, d), lambda i: (i, 0)),   # z tile
                pl.BlockSpec((d, k), lambda i: (0, 0)),        # codebook^T, resident
                pl.BlockSpec((1, k), lambda i: (0, 0)),        # 0.5*||c||^2, resident
            ],
            out_specs=[
                pl.BlockSpec((tile_n, d), lambda i: (i, 0)),     # q tile
                pl.BlockSpec((1, tile_n), lambda i: (0, i)),     # ids tile (lane-dense)
                pl.BlockSpec((1, 1, 128), lambda i: (i, 0, 0)),  # per-tile loss partial
            ],
        ),
        compiler_params=pltpu.CompilerParams(
            dimension_semantics=("parallel",),      # no cross-step carry
            vmem_limit_bytes=32 * 1024 * 1024,      # safe on all gens (v7x 64MiB/TC)
        ),
    )(z_p, cbt, c_sq_half)

    scale = (1.0 + commit_weight) / float(n * d)
    # Every lane of a partial row holds the same per-tile SSE; lane 0 is well-defined.
    loss = jnp.sum(loss_parts[:, 0, 0]) * scale
    return q_pad[:n], loss, ids_row[0, :n]


def _reference(z, codebook, commit_weight=COMMIT_WEIGHT):
    zf = z.astype(jnp.float32)
    cf = codebook.astype(jnp.float32)
    d2 = (jnp.sum(zf * zf, -1, keepdims=True) + jnp.sum(cf * cf, -1)[None, :]
          - 2.0 * zf @ cf.T)
    ids = jnp.argmin(d2, axis=-1)
    q = cf[ids]
    loss = (1.0 + commit_weight) * jnp.mean((zf - q) ** 2)
    return q.astype(z.dtype), loss, ids.astype(jnp.int32)


if __name__ == "__main__":
    # Quantizer(num_codes=256, codebook_dim=32); z: 512 residual vectors of dim 32.
    NUM_CODES, CODEBOOK_DIM, N = 256, 32, 512

    key = jax.random.PRNGKey(0)
    k_cb, k_z = jax.random.split(key)
    codebook = jax.random.normal(k_cb, (NUM_CODES, CODEBOOK_DIM), jnp.float32) * 0.02
    z = jax.random.normal(k_z, (N, CODEBOOK_DIM), jnp.float32)

    q, loss, ids = quantizer_forward(z, codebook)
    jax.block_until_ready((q, loss, ids))

    q_ref, loss_ref, ids_ref = _reference(z, codebook)
    assert jnp.array_equal(ids, ids_ref), "ids mismatch"
    assert jnp.allclose(q, q_ref, atol=1e-5), "q mismatch"
    assert jnp.allclose(loss, loss_ref, atol=1e-5), "loss mismatch"

    print("KERNEL_OK")
</pallas_src>

<mosaic_0001>
module attributes {stable_mosaic.version = 11 : i64} {
  func.func @_quantizer_kernel(%arg0: i32, %arg1: memref<512x32xf32, #tpu.memory_space<vmem>>, %arg2: memref<32x256xf32, #tpu.memory_space<vmem>>, %arg3: memref<1x256xf32, #tpu.memory_space<vmem>>, %arg4: memref<512x32xf32, #tpu.memory_space<vmem>>, %arg5: memref<1x512xi32, #tpu.memory_space<vmem>>, %arg6: memref<1x1x128xf32, #tpu.memory_space<vmem>>) attributes {dimension_semantics = [#tpu.dimension_semantics<parallel>], iteration_bounds = array<i64: 1>, scalar_prefetch = 0 : i64, scratch_operands = 0 : i64, tpu.core_type = #tpu.core_type<tc>, window_params = [{transform_indices = @transform_0, window_bounds = array<i64: 512, 32>}, {pipeline_mode = #tpu.pipeline_mode<synchronous>, transform_indices = @transform_1, window_bounds = array<i64: 32, 256>}, {pipeline_mode = #tpu.pipeline_mode<synchronous>, transform_indices = @transform_2, window_bounds = array<i64: 1, 256>}, {transform_indices = @transform_3, window_bounds = array<i64: 512, 32>}, {transform_indices = @transform_4, window_bounds = array<i64: 1, 512>}, {transform_indices = @transform_5, window_bounds = array<i64: 1, 1, 128>}]} {
    %c0 = arith.constant 0 : index
    %c0_0 = arith.constant 0 : index
    %0 = vector.load %arg2[%c0, %c0_0] : memref<32x256xf32, #tpu.memory_space<vmem>>, vector<32x256xf32>
    %c0_1 = arith.constant 0 : index
    %c0_2 = arith.constant 0 : index
    %1 = vector.load %arg3[%c0_1, %c0_2] : memref<1x256xf32, #tpu.memory_space<vmem>>, vector<1x256xf32>
    %2 = tpu.iota {dimensions = array<i32: 1>} : vector<1x256xi32>
    %cst = arith.constant 0.000000e+00 : f32
    %c0_i32 = arith.constant 0 : i32
    %c128_i32 = arith.constant 128 : i32
    %3 = arith.muli %c0_i32, %c128_i32 : i32
    %4 = tpu.assume_multiple %3, 128 : i32
    %5 = arith.index_cast %4 : i32 to index
    %c0_3 = arith.constant 0 : index
    %6 = vector.load %arg1[%5, %c0_3] : memref<512x32xf32, #tpu.memory_space<vmem>>, vector<128x32xf32>
    %cst_4 = arith.constant dense<0.000000e+00> : vector<128x256xf32>
    %7 = tpu.matmul %6, %0, %cst_4 {dimension_numbers = #tpu.dot_dimension_numbers<[1], [0], [0], [1], [0, 0, 1, 1], [], []>} : vector<128x32xf32>, vector<32x256xf32>, vector<128x256xf32> -> vector<128x256xf32>
    %8 = vector.broadcast %1 : vector<1x256xf32> to vector<128x256xf32>
    %9 = arith.subf %8, %7 : vector<128x256xf32>
    %10 = tpu.reduce_index %9 {axis = 1 : i32, kind = #tpu.reduction_kind<arg_min>} : vector<128x256xf32> -> vector<128xi32>
    %11 = vector.shape_cast %10 : vector<128xi32> to vector<128x1xi32>
    %12 = vector.broadcast %2 : vector<1x256xi32> to vector<128x256xi32>
    %13 = vector.broadcast %11 : vector<128x1xi32> to vector<128x256xi32>
    %14 = arith.cmpi eq, %12, %13 : vector<128x256xi32>
    %15 = arith.extui %14 : vector<128x256xi1> to vector<128x256xi32>
    %16 = arith.sitofp %15 : vector<128x256xi32> to vector<128x256xf32>
    %cst_5 = arith.constant dense<0.000000e+00> : vector<128x32xf32>
    %17 = tpu.matmul %16, %0, %cst_5 {dimension_numbers = #tpu.dot_dimension_numbers<[1], [1], [0], [0], [0, 0, 1, 0], [], []>} : vector<128x256xf32>, vector<32x256xf32>, vector<128x32xf32> -> vector<128x32xf32>
    %18 = arith.index_cast %4 : i32 to index
    %c0_6 = arith.constant 0 : index
    %19 = vector.load %arg4[%18, %c0_6] : memref<512x32xf32, #tpu.memory_space<vmem>>, vector<128x32xf32>
    tpu.vector_store %arg4[%18, %c0_6], %17 {strides = array<i32>} : memref<512x32xf32, #tpu.memory_space<vmem>>, vector<128x32xf32>,
    %c0_7 = arith.constant 0 : index
    %20 = arith.index_cast %4 : i32 to index
    %21 = vector.load %arg5[%c0_7, %20] : memref<1x512xi32, #tpu.memory_space<vmem>>, vector<1x128xi32>
    %22 = vector.shape_cast %21 : vector<1x128xi32> to vector<128xi32>
    %23 = vector.shape_cast %10 : vector<128xi32> to vector<1x128xi32>
    tpu.vector_store %arg5[%c0_7, %20], %23 {strides = array<i32>} : memref<1x512xi32, #tpu.memory_space<vmem>>, vector<1x128xi32>,
    %24 = arith.subf %6, %17 : vector<128x32xf32>
    %25 = arith.mulf %24, %24 : vector<128x32xf32>
    %26 = vector.shape_cast %25 : vector<128x32xf32> to vector<1x128x32xf32>
    %cst_8 = arith.constant dense<0.000000e+00> : vector<1xf32>
    %27 = vector.multi_reduction <add>, %26, %cst_8 [1, 2] : vector<1x128x32xf32> to vector<1xf32>
    %28 = vector.shape_cast %27 : vector<1xf32> to vector<1x1x1xf32>
    %29 = vector.extract %28[0, 0, 0] : f32 from vector<1x1x1xf32>
    %30 = arith.addf %cst, %29 : f32
    %c1_i32 = arith.constant 1 : i32
    %c128_i32_9 = arith.constant 128 : i32
    %31 = arith.muli %c1_i32, %c128_i32_9 : i32
    %32 = tpu.assume_multiple %31, 128 : i32
    %33 = arith.index_cast %32 : i32 to index
    %c0_10 = arith.constant 0 : index
    %34 = vector.load %arg1[%33, %c0_10] : memref<512x32xf32, #tpu.memory_space<vmem>>, vector<128x32xf32>
    %cst_11 = arith.constant dense<0.000000e+00> : vector<128x256xf32>
    %35 = tpu.matmul %34, %0, %cst_11 {dimension_numbers = #tpu.dot_dimension_numbers<[1], [0], [0], [1], [0, 0, 1, 1], [], []>} : vector<128x32xf32>, vector<32x256xf32>, vector<128x256xf32> -> vector<128x256xf32>
    %36 = vector.broadcast %1 : vector<1x256xf32> to vector<128x256xf32>
    %37 = arith.subf %36, %35 : vector<128x256xf32>
    %38 = tpu.reduce_index %37 {axis = 1 : i32, kind = #tpu.reduction_kind<arg_min>} : vector<128x256xf32> -> vector<128xi32>
    %39 = vector.shape_cast %38 : vector<128xi32> to vector<128x1xi32>
    %40 = vector.broadcast %2 : vector<1x256xi32> to vector<128x256xi32>
    %41 = vector.broadcast %39 : vector<128x1xi32> to vector<128x256xi32>
    %42 = arith.cmpi eq, %40, %41 : vector<128x256xi32>
    %43 = arith.extui %42 : vector<128x256xi1> to vector<128x256xi32>
    %44 = arith.sitofp %43 : vector<128x256xi32> to vector<128x256xf32>
    %cst_12 = arith.constant dense<0.000000e+00> : vector<128x32xf32>
    %45 = tpu.matmul %44, %0, %cst_12 {dimension_numbers = #tpu.dot_dimension_numbers<[1], [1], [0], [0], [0, 0, 1, 0], [], []>} : vector<128x256xf32>, vector<32x256xf32>, vector<128x32xf32> -> vector<128x32xf32>
    %46 = arith.index_cast %32 : i32 to index
    %c0_13 = arith.constant 0 : index
    %47 = vector.load %arg4[%46, %c0_13] : memref<512x32xf32, #tpu.memory_space<vmem>>, vector<128x32xf32>
    tpu.vector_store %arg4[%46, %c0_13], %45 {strides = array<i32>} : memref<512x32xf32, #tpu.memory_space<vmem>>, vector<128x32xf32>,
    %c0_14 = arith.constant 0 : index
    %48 = arith.index_cast %32 : i32 to index
    %49 = vector.load %arg5[%c0_14, %48] : memref<1x512xi32, #tpu.memory_space<vmem>>, vector<1x128xi32>
    %50 = vector.shape_cast %49 : vector<1x128xi32> to vector<128xi32>
    %51 = vector.shape_cast %38 : vector<128xi32> to vector<1x128xi32>
    tpu.vector_store %arg5[%c0_14, %48], %51 {strides = array<i32>} : memref<1x512xi32, #tpu.memory_space<vmem>>, vector<1x128xi32>,
    %52 = arith.subf %34, %45 : vector<128x32xf32>
    %53 = arith.mulf %52, %52 : vector<128x32xf32>
    %54 = vector.shape_cast %53 : vector<128x32xf32> to vector<1x128x32xf32>
    %cst_15 = arith.constant dense<0.000000e+00> : vector<1xf32>
    %55 = vector.multi_reduction <add>, %54, %cst_15 [1, 2] : vector<1x128x32xf32> to vector<1xf32>
    %56 = vector.shape_cast %55 : vector<1xf32> to vector<1x1x1xf32>
    %57 = vector.extract %56[0, 0, 0] : f32 from vector<1x1x1xf32>
    %58 = arith.addf %30, %57 : f32
    %c2_i32 = arith.constant 2 : i32
    %c128_i32_16 = arith.constant 128 : i32
    %59 = arith.muli %c2_i32, %c128_i32_16 : i32
    %60 = tpu.assume_multiple %59, 128 : i32
    %61 = arith.index_cast %60 : i32 to index
    %c0_17 = arith.constant 0 : index
    %62 = vector.load %arg1[%61, %c0_17] : memref<512x32xf32, #tpu.memory_space<vmem>>, vector<128x32xf32>
    %cst_18 = arith.constant dense<0.000000e+00> : vector<128x256xf32>
    %63 = tpu.matmul %62, %0, %cst_18 {dimension_numbers = #tpu.dot_dimension_numbers<[1], [0], [0], [1], [0, 0, 1, 1], [], []>} : vector<128x32xf32>, vector<32x256xf32>, vector<128x256xf32> -> vector<128x256xf32>
    %64 = vector.broadcast %1 : vector<1x256xf32> to vector<128x256xf32>
    %65 = arith.subf %64, %63 : vector<128x256xf32>
    %66 = tpu.reduce_index %65 {axis = 1 : i32, kind = #tpu.reduction_kind<arg_min>} : vector<128x256xf32> -> vector<128xi32>
    %67 = vector.shape_cast %66 : vector<128xi32> to vector<128x1xi32>
    %68 = vector.broadcast %2 : vector<1x256xi32> to vector<128x256xi32>
    %69 = vector.broadcast %67 : vector<128x1xi32> to vector<128x256xi32>
    %70 = arith.cmpi eq, %68, %69 : vector<128x256xi32>
    %71 = arith.extui %70 : vector<128x256xi1> to vector<128x256xi32>
    %72 = arith.sitofp %71 : vector<128x256xi32> to vector<128x256xf32>
    %cst_19 = arith.constant dense<0.000000e+00> : vector<128x32xf32>
    %73 = tpu.matmul %72, %0, %cst_19 {dimension_numbers = #tpu.dot_dimension_numbers<[1], [1], [0], [0], [0, 0, 1, 0], [], []>} : vector<128x256xf32>, vector<32x256xf32>, vector<128x32xf32> -> vector<128x32xf32>
    %74 = arith.index_cast %60 : i32 to index
    %c0_20 = arith.constant 0 : index
    %75 = vector.load %arg4[%74, %c0_20] : memref<512x32xf32, #tpu.memory_space<vmem>>, vector<128x32xf32>
    tpu.vector_store %arg4[%74, %c0_20], %73 {strides = array<i32>} : memref<512x32xf32, #tpu.memory_space<vmem>>, vector<128x32xf32>,
    %c0_21 = arith.constant 0 : index
    %76 = arith.index_cast %60 : i32 to index
    %77 = vector.load %arg5[%c0_21, %76] : memref<1x512xi32, #tpu.memory_space<vmem>>, vector<1x128xi32>
    %78 = vector.shape_cast %77 : vector<1x128xi32> to vector<128xi32>
    %79 = vector.shape_cast %66 : vector<128xi32> to vector<1x128xi32>
    tpu.vector_store %arg5[%c0_21, %76], %79 {strides = array<i32>} : memref<1x512xi32, #tpu.memory_space<vmem>>, vector<1x128xi32>,
    %80 = arith.subf %62, %73 : vector<128x32xf32>
    %81 = arith.mulf %80, %80 : vector<128x32xf32>
    %82 = vector.shape_cast %81 : vector<128x32xf32> to vector<1x128x32xf32>
    %cst_22 = arith.constant dense<0.000000e+00> : vector<1xf32>
    %83 = vector.multi_reduction <add>, %82, %cst_22 [1, 2] : vector<1x128x32xf32> to vector<1xf32>
    %84 = vector.shape_cast %83 : vector<1xf32> to vector<1x1x1xf32>
    %85 = vector.extract %84[0, 0, 0] : f32 from vector<1x1x1xf32>
    %86 = arith.addf %58, %85 : f32
    %c3_i32 = arith.constant 3 : i32
    %c128_i32_23 = arith.constant 128 : i32
    %87 = arith.muli %c3_i32, %c128_i32_23 : i32
    %88 = tpu.assume_multiple %87, 128 : i32
    %89 = arith.index_cast %88 : i32 to index
    %c0_24 = arith.constant 0 : index
    %90 = vector.load %arg1[%89, %c0_24] : memref<512x32xf32, #tpu.memory_space<vmem>>, vector<128x32xf32>
    %cst_25 = arith.constant dense<0.000000e+00> : vector<128x256xf32>
    %91 = tpu.matmul %90, %0, %cst_25 {dimension_numbers = #tpu.dot_dimension_numbers<[1], [0], [0], [1], [0, 0, 1, 1], [], []>} : vector<128x32xf32>, vector<32x256xf32>, vector<128x256xf32> -> vector<128x256xf32>
    %92 = vector.broadcast %1 : vector<1x256xf32> to vector<128x256xf32>
    %93 = arith.subf %92, %91 : vector<128x256xf32>
    %94 = tpu.reduce_index %93 {axis = 1 : i32, kind = #tpu.reduction_kind<arg_min>} : vector<128x256xf32> -> vector<128xi32>
    %95 = vector.shape_cast %94 : vector<128xi32> to vector<128x1xi32>
    %96 = vector.broadcast %2 : vector<1x256xi32> to vector<128x256xi32>
    %97 = vector.broadcast %95 : vector<128x1xi32> to vector<128x256xi32>
    %98 = arith.cmpi eq, %96, %97 : vector<128x256xi32>
    %99 = arith.extui %98 : vector<128x256xi1> to vector<128x256xi32>
    %100 = arith.sitofp %99 : vector<128x256xi32> to vector<128x256xf32>
    %cst_26 = arith.constant dense<0.000000e+00> : vector<128x32xf32>
    %101 = tpu.matmul %100, %0, %cst_26 {dimension_numbers = #tpu.dot_dimension_numbers<[1], [1], [0], [0], [0, 0, 1, 0], [], []>} : vector<128x256xf32>, vector<32x256xf32>, vector<128x32xf32> -> vector<128x32xf32>
    %102 = arith.index_cast %88 : i32 to index
    %c0_27 = arith.constant 0 : index
    %103 = vector.load %arg4[%102, %c0_27] : memref<512x32xf32, #tpu.memory_space<vmem>>, vector<128x32xf32>
    tpu.vector_store %arg4[%102, %c0_27], %101 {strides = array<i32>} : memref<512x32xf32, #tpu.memory_space<vmem>>, vector<128x32xf32>,
    %c0_28 = arith.constant 0 : index
    %104 = arith.index_cast %88 : i32 to index
    %105 = vector.load %arg5[%c0_28, %104] : memref<1x512xi32, #tpu.memory_space<vmem>>, vector<1x128xi32>
    %106 = vector.shape_cast %105 : vector<1x128xi32> to vector<128xi32>
    %107 = vector.shape_cast %94 : vector<128xi32> to vector<1x128xi32>
    tpu.vector_store %arg5[%c0_28, %104], %107 {strides = array<i32>} : memref<1x512xi32, #tpu.memory_space<vmem>>, vector<1x128xi32>,
    %108 = arith.subf %90, %101 : vector<128x32xf32>
    %109 = arith.mulf %108, %108 : vector<128x32xf32>
    %110 = vector.shape_cast %109 : vector<128x32xf32> to vector<1x128x32xf32>
    %cst_29 = arith.constant dense<0.000000e+00> : vector<1xf32>
    %111 = vector.multi_reduction <add>, %110, %cst_29 [1, 2] : vector<1x128x32xf32> to vector<1xf32>
    %112 = vector.shape_cast %111 : vector<1xf32> to vector<1x1x1xf32>
    %113 = vector.extract %112[0, 0, 0] : f32 from vector<1x1x1xf32>
    %114 = arith.addf %86, %113 : f32
    %c4_i32 = arith.constant 4 : i32
    %115 = vector.broadcast %114 : f32 to vector<1x1x128xf32>
    %c0_30 = arith.constant 0 : index
    %c0_31 = arith.constant 0 : index
    %c0_32 = arith.constant 0 : index
    %116 = vector.load %arg6[%c0_30, %c0_31, %c0_32] : memref<1x1x128xf32, #tpu.memory_space<vmem>>, vector<1x1x128xf32>
    tpu.vector_store %arg6[%c0_30, %c0_31, %c0_32], %115 {strides = array<i32>} : memref<1x1x128xf32, #tpu.memory_space<vmem>>, vector<1x1x128xf32>,
    return
  }
  func.func @transform_0(%arg0: i32) -> (i32, i32) {
    %c0_i32 = arith.constant 0 : i32
    %c0_i32_0 = arith.constant 0 : i32
    return %arg0, %c0_i32 : i32, i32
  }
  func.func @transform_1(%arg0: i32) -> (i32, i32) {
    %c0_i32 = arith.constant 0 : i32
    %c0_i32_0 = arith.constant 0 : i32
    %c0_i32_1 = arith.constant 0 : i32
    return %c0_i32, %c0_i32_0 : i32, i32
  }
  func.func @transform_2(%arg0: i32) -> (i32, i32) {
    %c0_i32 = arith.constant 0 : i32
    %c0_i32_0 = arith.constant 0 : i32
    %c0_i32_1 = arith.constant 0 : i32
    return %c0_i32, %c0_i32_0 : i32, i32
  }
  func.func @transform_3(%arg0: i32) -> (i32, i32) {
    %c0_i32 = arith.constant 0 : i32
    %c0_i32_0 = arith.constant 0 : i32
    return %arg0, %c0_i32 : i32, i32
  }
  func.func @transform_4(%arg0: i32) -> (i32, i32) {
    %c0_i32 = arith.constant 0 : i32
    %c0_i32_0 = arith.constant 0 : i32
    return %c0_i32, %arg0 : i32, i32
  }
  func.func @transform_5(%arg0: i32) -> (i32, i32, i32) {
    %c0_i32 = arith.constant 0 : i32
    %c0_i32_0 = arith.constant 0 : i32
    %c0_i32_1 = arith.constant 0 : i32
    return %arg0, %c0_i32, %c0_i32_0 : i32, i32, i32
  }
}

</mosaic_0001>

<llo_original>
// kernel: tpu_custom_call.1
$region0: #{tpu_custom_call.1}
  #allocation0 [shape = 'u32[]', space=smem, size = 0x4, offset = 0x4, fixed_abs, tag = 'smem constant byte address 0x4 - core index']
  #allocation1 [shape = 'u32[144,128]{1,0:T(1,128)}', space=vmem, size = 0x12000, scoped, tag = 'internal scratch']
  %s0 = inlined_call_operand.vmem [shape: f32[512,32], index: 0, kind: input, shape index: {}]
  %s1 = inlined_call_operand.vmem [shape: f32[32,256], index: 1, kind: input, shape index: {}]
  %s2 = inlined_call_operand.vmem [shape: f32[1,256], index: 2, kind: input, shape index: {}]
  %s3 = inlined_call_operand.vmem [shape: f32[512,32], index: 3, kind: output, shape index: {0}]
  %s4 = inlined_call_operand.hbm [shape: s32[1,512], index: 4, kind: output, shape index: {1}]
  %s5 = inlined_call_operand.hbm [shape: f32[1,1,128], index: 5, kind: output, shape index: {2}]
  %6 = xla_tuple %s3, %s4, %s5
  %s7 = sld [smem:[#allocation0]]
  $region38: #{tpu_custom_call.1} parent=0
    _
  %s9 = ssub.s32 1, %s7
  %s10 = scalar_select 0, %s9, %s7
  $region1: #{tpu_custom_call.1} parent=0
    #allocation2 [shape = 'u8[2048]{0}', space=vmem, size = 0x800, scoped, tag = 'output window, operand 1, single buffered']
    #allocation3 [shape = 's32[1]{0}', space=sflag, size = 0x4, scoped, tag = 'scoped memory for tpu_custom_call.1']
    #allocation4 [shape = 'u8[512]{0}', space=vmem, size = 0x400, scoped, tag = 'output window, operand 2, single buffered']
    #allocation5 [shape = 's32[1]{0}', space=sflag, size = 0x4, scoped, tag = 'scoped memory for tpu_custom_call.1']
    %11 = vsyncpa [#allocation3], 0
    %12 = vsyncpa [#allocation5], 0
    // Predicated region
    $region2: #{tpu_custom_call.1} parent=1 // pred_check
      _
    $region3: #{tpu_custom_call.1} parent=1 // pred_check_branch
      %14 = sbr.rel (0) target = $region5
    $region4: #{tpu_custom_call.1} parent=1 // pred_region
      _
    $region5: #{tpu_custom_call.1} parent=1 // pred_fallthru
      _
    // Predicated region
    $region6: #{tpu_custom_call.1} parent=1 // pred_check
      _
    $region7: #{tpu_custom_call.1} parent=1 // pred_check_branch
      %16 = sbr.rel (0) target = $region9
    $region8: #{tpu_custom_call.1} parent=1 // pred_region
      _
    $region9: #{tpu_custom_call.1} parent=1 // pred_fallthru
      _
    // Predicated region
    $region10: #{tpu_custom_call.1} parent=1 // pred_check
      _
    $region11: #{tpu_custom_call.1} parent=1 // pred_check_branch
      %18 = sbr.rel (0) target = $region13
    $region12: #{tpu_custom_call.1} parent=1 // pred_region
      _
    $region13: #{tpu_custom_call.1} parent=1 // pred_fallthru
      _
    %v19 = vld [vmem:[%s1] sm:$0xff]
    %v20 = vld [vmem:[%s1 + $0x8] sm:$0xff]
    %v21 = vld [vmem:[%s1 + $0x10] sm:$0xff]
    %v22 = vld [vmem:[%s1 + $0x18] sm:$0xff]
    %v23 = vld [vmem:[%s1 + $0x20] sm:$0xff]
    %v24 = vld [vmem:[%s1 + $0x28] sm:$0xff]
    %v25 = vld [vmem:[%s1 + $0x30] sm:$0xff]
    %v26 = vld [vmem:[%s1 + $0x38] sm:$0xff]
    %v27 = vld [vmem:[%s2] sm:$0x3]
    %v28 = vlaneseq
    %v29 = vand.u32 %v28, 127
    %v30 = vadd.s32 %v29, 128
    %v31 = vld [vmem:[%s0] sm:$0xff]
    %v32 = vld [vmem:[%s0 + $0x8] sm:$0xff]
    %v33 = vld [vmem:[%s0 + $0x10] sm:$0xff]
    %v34 = vld [vmem:[%s0 + $0x18] sm:$0xff]
    %v35 = vld [vmem:[%s0 + $0x20] sm:$0xff]
    %v36 = vld [vmem:[%s0 + $0x28] sm:$0xff]
    %v37 = vld [vmem:[%s0 + $0x30] sm:$0xff]
    %v38 = vld [vmem:[%s0 + $0x38] sm:$0xff]
    %v39 = vld [vmem:[%s0 + $0x40] sm:$0xff]
    %v40 = vld [vmem:[%s0 + $0x48] sm:$0xff]
    %v41 = vld [vmem:[%s0 + $0x50] sm:$0xff]
    %v42 = vld [vmem:[%s0 + $0x58] sm:$0xff]
    %v43 = vld [vmem:[%s0 + $0x60] sm:$0xff]
    %v44 = vld [vmem:[%s0 + $0x68] sm:$0xff]
    %v45 = vld [vmem:[%s0 + $0x70] sm:$0xff]
    %v46 = vld [vmem:[%s0 + $0x78] sm:$0xff]
    %vm47 = vcmask 261120
    %v49 = vsel %vm47, %v31, 0
    %v52 = vsel %vm47, %v32, 0
    %v55 = vsel %vm47, %v33, 0
    %v58 = vsel %vm47, %v34, 0
    %v61 = vsel %vm47, %v35, 0
    %v64 = vsel %vm47, %v36, 0
    %v67 = vsel %vm47, %v37, 0
    %v70 = vsel %vm47, %v38, 0
    %v73 = vsel %vm47, %v39, 0
    %v76 = vsel %vm47, %v40, 0
    %v79 = vsel %vm47, %v41, 0
    %v82 = vsel %vm47, %v42, 0
    %v85 = vsel %vm47, %v43, 0
    %v88 = vsel %vm47, %v44, 0
    %v91 = vsel %vm47, %v45, 0
    %v94 = vsel %vm47, %v46, 0
    %96 = vmatprep.subr.mxu0 %v20
    %97 = vmatpush1.msra.mxu0 %v19
    %98 = vmatprep.subr.mxu0 %v22
    %99 = vmatpush1.msra.mxu0 %v21
    %100 = vmatprep.subr.mxu0 %v24
    %101 = vmatpush1.msra.mxu0 %v23
    %102 = vmatprep.subr.mxu0 %v26
    %103 = vmatpush1.msra.mxu0 %v25
    %104 = vmatprep.subr.mxu0 0.0
    %105 = vmatpush1.msra.mxu0 0.0
    %106 = vmatprep.subr.mxu0 0.0
    %107 = vmatpush1.msra.mxu0 0.0
    %108 = vmatprep.subr.mxu0 0.0
    %109 = vmatpush1.msra.mxu0 0.0
    %110 = vmatprep.subr.mxu0 0.0
    %111 = vmatpush1.msra.mxu0 0.0
    %112 = vmatprep.subr.mxu0 0.0
    %113 = vmatpush1.msra.mxu0 0.0
    %114 = vmatprep.subr.mxu0 0.0
    %115 = vmatpush1.msra.mxu0 0.0
    %116 = vmatprep.subr.mxu0 0.0
    %117 = vmatpush1.msra.mxu0 0.0
    %118 = vmatprep.subr.mxu0 0.0
    %119 = vmatpush1.msra.mxu0 0.0
    %120 = vmatprep.subr.mxu0 0.0
    %121 = vmatpush1.msra.mxu0 0.0
    %122 = vmatprep.subr.mxu0 0.0
    %123 = vmatpush1.msra.mxu0 0.0
    %124 = vmatprep.subr.mxu0 0.0
    %125 = vmatpush1.msra.mxu0 0.0
    %126 = vmatprep.subr.mxu0 0.0
    %127 = vmatpush1.msra.mxu0 0.0
    %128 = vmatprep.subr.mxu0 0.0
    %129 = vmatpush1.msra.mxu0 0.0
    %130 = vmatprep.subr.mxu0 0.0
    %131 = vmatpush1.msra.mxu0 0.0
    %132 = vmatprep.subr.mxu0 0.0
    %133 = vmatpush1.msra.mxu0 0.0
    %134 = vmatprep.subr.mxu0 0.0
    %135 = vmatpush1.msra.mxu0 0.0
    %136 = vmatprep.subr.mxu0 0.0
    %137 = vmatpush1.msra.mxu0 0.0
    %138 = vmatprep.subr.mxu0 0.0
    %139 = vmatpush1.msra.mxu0 0.0
    %140 = vmatprep.subr.mxu0 0.0
    %141 = vmatpush1.msra.mxu0 0.0
    %142 = vmatprep.subr.mxu0 0.0
    %143 = vmatpush1.msra.mxu0 0.0
    %144 = vmatprep.subr.mxu0 0.0
    %145 = vmatpush1.msra.mxu0 0.0
    %146 = vmatprep.subr.mxu0 0.0
    %147 = vmatpush1.msra.mxu0 0.0
    %148 = vmatprep.subr.mxu0 0.0
    %149 = vmatpush1.msra.mxu0 0.0
    %150 = vmatprep.subr.mxu0 0.0
    %151 = vmatpush1.msra.mxu0 0.0
    %152 = vmatprep.subr.mxu0 0.0
    %153 = vmatpush1.msra.mxu0 0.0
    %154 = vmatprep.subr.mxu0 0.0
    %155 = vmatpush1.msra.mxu0 0.0
    %156 = vmatprep.subr.mxu0 0.0
    %157 = vmatpush1.msra.mxu0 0.0
    %158 = vmatprep.subr.mxu0 0.0
    %159 = vmatpush1.msra.mxu0 0.0
    %160 = vmatprep.mubr.f32.mxu0 0.0
    %161 = vmatmul.mubr.f32.gmra.mrb[0].mxu0 %v49
    %v162 = vpop.f32.mrb[0].mxu0
    %v163 = vadd.f32 0.0, %v162
    %v164 = vpop.f32.mrb[0].mxu0
    %v165 = vadd.f32 0.0, %v164
    %166 = vmatprep.mubr.f32.mxu0 0.0
    %167 = vmatmul.mubr.f32.gmra.mrb[0].mxu0 %v52
    %v168 = vpop.f32.mrb[0].mxu0
    %v169 = vadd.f32 0.0, %v168
    %v170 = vpop.f32.mrb[0].mxu0
    %v171 = vadd.f32 0.0, %v170
    %172 = vmatprep.mubr.f32.mxu0 0.0
    %173 = vmatmul.mubr.f32.gmra.mrb[0].mxu0 %v55
    %v174 = vpop.f32.mrb[0].mxu0
    %v175 = vadd.f32 0.0, %v174
    %v176 = vpop.f32.mrb[0].mxu0
    %v177 = vadd.f32 0.0, %v176
    %178 = vmatprep.mubr.f32.mxu0 0.0
    %179 = vmatmul.mubr.f32.gmra.mrb[0].mxu0 %v58
    %v180 = vpop.f32.mrb[0].mxu0
    %v181 = vadd.f32 0.0, %v180
    %v182 = vpop.f32.mrb[0].mxu0
    %v183 = vadd.f32 0.0, %v182
    %184 = vmatprep.mubr.f32.mxu0 0.0
    %185 = vmatmul.mubr.f32.gmra.mrb[0].mxu0 %v61
    %v186 = vpop.f32.mrb[0].mxu0
    %v187 = vadd.f32 0.0, %v186
    %v188 = vpop.f32.mrb[0].mxu0
    %v189 = vadd.f32 0.0, %v188
    %190 = vmatprep.mubr.f32.mxu0 0.0
    %191 = vmatmul.mubr.f32.gmra.mrb[0].mxu0 %v64
    %v192 = vpop.f32.mrb[0].mxu0
    %v193 = vadd.f32 0.0, %v192
    %v194 = vpop.f32.mrb[0].mxu0
    %v195 = vadd.f32 0.0, %v194
    %196 = vmatprep.mubr.f32.mxu0 0.0
    %197 = vmatmul.mubr.f32.gmra.mrb[0].mxu0 %v67
    %v198 = vpop.f32.mrb[0].mxu0
    %v199 = vadd.f32 0.0, %v198
    %v200 = vpop.f32.mrb[0].mxu0
    %v201 = vadd.f32 0.0, %v200
    %202 = vmatprep.mubr.f32.mxu0 0.0
    %203 = vmatmul.mubr.f32.gmra.mrb[0].mxu0 %v70
    %v204 = vpop.f32.mrb[0].mxu0
    %v205 = vadd.f32 0.0, %v204
    %v206 = vpop.f32.mrb[0].mxu0
    %v207 = vadd.f32 0.0, %v206
    %208 = vmatprep.mubr.f32.mxu0 0.0
    %209 = vmatmul.mubr.f32.gmra.mrb[0].mxu0 %v73
    %v210 = vpop.f32.mrb[0].mxu0
    %v211 = vadd.f32 0.0, %v210
    %v212 = vpop.f32.mrb[0].mxu0
    %v213 = vadd.f32 0.0, %v212
    %214 = vmatprep.mubr.f32.mxu0 0.0
    %215 = vmatmul.mubr.f32.gmra.mrb[0].mxu0 %v76
    %v216 = vpop.f32.mrb[0].mxu0
    %v217 = vadd.f32 0.0, %v216
    %v218 = vpop.f32.mrb[0].mxu0
    %v219 = vadd.f32 0.0, %v218
    %220 = vmatprep.mubr.f32.mxu0 0.0
    %221 = vmatmul.mubr.f32.gmra.mrb[0].mxu0 %v79
    %v222 = vpop.f32.mrb[0].mxu0
    %v223 = vadd.f32 0.0, %v222
    %v224 = vpop.f32.mrb[0].mxu0
    %v225 = vadd.f32 0.0, %v224
    %226 = vmatprep.mubr.f32.mxu0 0.0
    %227 = vmatmul.mubr.f32.gmra.mrb[0].mxu0 %v82
    %v228 = vpop.f32.mrb[0].mxu0
    %v229 = vadd.f32 0.0, %v228
    %v230 = vpop.f32.mrb[0].mxu0
    %v231 = vadd.f32 0.0, %v230
    %232 = vmatprep.mubr.f32.mxu0 0.0
    %233 = vmatmul.mubr.f32.gmra.mrb[0].mxu0 %v85
    %v234 = vpop.f32.mrb[0].mxu0
    %v235 = vadd.f32 0.0, %v234
    %v236 = vpop.f32.mrb[0].mxu0
    %v237 = vadd.f32 0.0, %v236
    %238 = vmatprep.mubr.f32.mxu0 0.0
    %239 = vmatmul.mubr.f32.gmra.mrb[0].mxu0 %v88
    %v240 = vpop.f32.mrb[0].mxu0
    %v241 = vadd.f32 0.0, %v240
    %v242 = vpop.f32.mrb[0].mxu0
    %v243 = vadd.f32 0.0, %v242
    %244 = vmatprep.mubr.f32.mxu0 0.0
    %245 = vmatmul.mubr.f32.gmra.mrb[0].mxu0 %v91
    %v246 = vpop.f32.mrb[0].mxu0
    %v247 = vadd.f32 0.0, %v246
    %v248 = vpop.f32.mrb[0].mxu0
    %v249 = vadd.f32 0.0, %v248
    %250 = vmatprep.mubr.f32.mxu0 0.0
    %251 = vmatmul.mubr.f32.gmra.mrb[0].mxu0 %v94
    %v252 = vpop.f32.mrb[0].mxu0
    %v253 = vadd.f32 0.0, %v252
    %v254 = vpop.f32.mrb[0].mxu0
    %v255 = vadd.f32 0.0, %v254
    %256 = vdwg.mxu0
    %v258 = vlaneseq
    %v259 = vshrl.u32 %v258, 7
    %v260 = vsub.s32 0, %v259
    %v261 = vrot.slane %v27, %v260
    %v262 = vlaneseq
    %v263 = vshrl.u32 %v262, 7
    %v264 = vsub.s32 1, %v263
    %v265 = vrot.slane %v27, %v264
    %v268 = vsub.f32 %v261, %v163
    %v269 = vsub.f32 %v265, %v165
    %v270 = vsub.f32 %v261, %v169
    %v271 = vsub.f32 %v265, %v171
    %v272 = vsub.f32 %v261, %v175
    %v273 = vsub.f32 %v265, %v177
    %v274 = vsub.f32 %v261, %v181
    %v275 = vsub.f32 %v265, %v183
    %v276 = vsub.f32 %v261, %v187
    %v277 = vsub.f32 %v265, %v189
    %v278 = vsub.f32 %v261, %v193
    %v279 = vsub.f32 %v265, %v195
    %v280 = vsub.f32 %v261, %v199
    %v281 = vsub.f32 %v265, %v201
    %v282 = vsub.f32 %v261, %v205
    %v283 = vsub.f32 %v265, %v207
    %v284 = vsub.f32 %v261, %v211
    %v285 = vsub.f32 %v265, %v213
    %v286 = vsub.f32 %v261, %v217
    %v287 = vsub.f32 %v265, %v219
    %v288 = vsub.f32 %v261, %v223
    %v289 = vsub.f32 %v265, %v225
    %v290 = vsub.f32 %v261, %v229
    %v291 = vsub.f32 %v265, %v231
    %v292 = vsub.f32 %v261, %v235
    %v293 = vsub.f32 %v265, %v237
    %v294 = vsub.f32 %v261, %v241
    %v295 = vsub.f32 %v265, %v243
    %v296 = vsub.f32 %v261, %v247
    %v297 = vsub.f32 %v265, %v249
    %v298 = vsub.f32 %v261, %v253
    %v299 = vsub.f32 %v265, %v255
    %vm300 = vcmp.le.f32.partialorder %v268, %v269
    %v301 = vsel %vm300, %v268, %v269
    %v302 = vsel %vm300, %v29, %v30
    %303 = vmin.index.xlane.f32.xlu0 %v301
    %v304 = vpop.xlane.xlu0 %303
    %305 = vset.pattern.permute.xlu0 %v304
    %306 = vperm.xlu0 %305, %v302
    %v307 = vpop.permute.xlu0 %306
    %vm308 = vcmp.le.f32.partialorder %v270, %v271
    %v309 = vsel %vm308, %v270, %v271
    %v310 = vsel %vm308, %v29, %v30
    %311 = vmin.index.xlane.f32.xlu0 %v309
    %v312 = vpop.xlane.xlu0 %311
    %313 = vset.pattern.permute.xlu0 %v312
    %314 = vperm.xlu0 %313, %v310
    %v315 = vpop.permute.xlu0 %314
    %vm316 = vcmp.le.f32.partialorder %v272, %v273
    %v317 = vsel %vm316, %v272, %v273
    %v318 = vsel %vm316, %v29, %v30
    %319 = vmin.index.xlane.f32.xlu0 %v317
    %v320 = vpop.xlane.xlu0 %319
    %321 = vset.pattern.permute.xlu0 %v320
    %322 = vperm.xlu0 %321, %v318
    %v323 = vpop.permute.xlu0 %322
    %vm324 = vcmp.le.f32.partialorder %v274, %v275
    %v325 = vsel %vm324, %v274, %v275
    %v326 = vsel %vm324, %v29, %v30
    %327 = vmin.index.xlane.f32.xlu0 %v325
    %v328 = vpop.xlane.xlu0 %327
    %329 = vset.pattern.permute.xlu0 %v328
    %330 = vperm.xlu0 %329, %v326
    %v331 = vpop.permute.xlu0 %330
    %vm332 = vcmp.le.f32.partialorder %v276, %v277
    %v333 = vsel %vm332, %v276, %v277
    %v334 = vsel %vm332, %v29, %v30
    %335 = vmin.index.xlane.f32.xlu0 %v333
    %v336 = vpop.xlane.xlu0 %335
    %337 = vset.pattern.permute.xlu0 %v336
    %338 = vperm.xlu0 %337, %v334
    %v339 = vpop.permute.xlu0 %338
    %vm340 = vcmp.le.f32.partialorder %v278, %v279
    %v341 = vsel %vm340, %v278, %v279
    %v342 = vsel %vm340, %v29, %v30
    %343 = vmin.index.xlane.f32.xlu0 %v341
    %v344 = vpop.xlane.xlu0 %343
    %345 = vset.pattern.permute.xlu0 %v344
    %346 = vperm.xlu0 %345, %v342
    %v347 = vpop.permute.xlu0 %346
    %vm348 = vcmp.le.f32.partialorder %v280, %v281
    %v349 = vsel %vm348, %v280, %v281
    %v350 = vsel %vm348, %v29, %v30
    %351 = vmin.index.xlane.f32.xlu0 %v349
    %v352 = vpop.xlane.xlu0 %351
    %353 = vset.pattern.permute.xlu0 %v352
    %354 = vperm.xlu0 %353, %v350
    %v355 = vpop.permute.xlu0 %354
    %vm356 = vcmp.le.f32.partialorder %v282, %v283
    %v357 = vsel %vm356, %v282, %v283
    %v358 = vsel %vm356, %v29, %v30
    %359 = vmin.index.xlane.f32.xlu0 %v357
    %v360 = vpop.xlane.xlu0 %359
    %361 = vset.pattern.permute.xlu0 %v360
    %362 = vperm.xlu0 %361, %v358
    %v363 = vpop.permute.xlu0 %362
    %vm364 = vcmp.le.f32.partialorder %v284, %v285
    %v365 = vsel %vm364, %v284, %v285
    %v366 = vsel %vm364, %v29, %v30
    %367 = vmin.index.xlane.f32.xlu0 %v365
    %v368 = vpop.xlane.xlu0 %367
    %369 = vset.pattern.permute.xlu0 %v368
    %370 = vperm.xlu0 %369, %v366
    %v371 = vpop.permute.xlu0 %370
    %vm372 = vcmp.le.f32.partialorder %v286, %v287
    %v373 = vsel %vm372, %v286, %v287
    %v374 = vsel %vm372, %v29, %v30
    %375 = vmin.index.xlane.f32.xlu0 %v373
    %v376 = vpop.xlane.xlu0 %375
    %377 = vset.pattern.permute.xlu0 %v376
    %378 = vperm.xlu0 %377, %v374
    %v379 = vpop.permute.xlu0 %378
    %vm380 = vcmp.le.f32.partialorder %v288, %v289
    %v381 = vsel %vm380, %v288, %v289
    %v382 = vsel %vm380, %v29, %v30
    %383 = vmin.index.xlane.f32.xlu0 %v381
    %v384 = vpop.xlane.xlu0 %383
    %385 = vset.pattern.permute.xlu0 %v384
    %386 = vperm.xlu0 %385, %v382
    %v387 = vpop.permute.xlu0 %386
    %vm388 = vcmp.le.f32.partialorder %v290, %v291
    %v389 = vsel %vm388, %v290, %v291
    %v390 = vsel %vm388, %v29, %v30
    %391 = vmin.index.xlane.f32.xlu0 %v389
    %v392 = vpop.xlane.xlu0 %391
    %393 = vset.pattern.permute.xlu0 %v392
    %394 = vperm.xlu0 %393, %v390
    %v395 = vpop.permute.xlu0 %394
    %vm396 = vcmp.le.f32.partialorder %v292, %v293
    %v397 = vsel %vm396, %v292, %v293
    %v398 = vsel %vm396, %v29, %v30
    %399 = vmin.index.xlane.f32.xlu0 %v397
    %v400 = vpop.xlane.xlu0 %399
    %401 = vset.pattern.permute.xlu0 %v400
    %402 = vperm.xlu0 %401, %v398
    %v403 = vpop.permute.xlu0 %402
    %vm404 = vcmp.le.f32.partialorder %v294, %v295
    %v405 = vsel %vm404, %v294, %v295
    %v406 = vsel %vm404, %v29, %v30
    %407 = vmin.index.xlane.f32.xlu0 %v405
    %v408 = vpop.xlane.xlu0 %407
    %409 = vset.pattern.permute.xlu0 %v408
    %410 = vperm.xlu0 %409, %v406
    %v411 = vpop.permute.xlu0 %410
    %vm412 = vcmp.le.f32.partialorder %v296, %v297
    %v413 = vsel %vm412, %v296, %v297
    %v414 = vsel %vm412, %v29, %v30
    %415 = vmin.index.xlane.f32.xlu0 %v413
    %v416 = vpop.xlane.xlu0 %415
    %417 = vset.pattern.permute.xlu0 %v416
    %418 = vperm.xlu0 %417, %v414
    %v419 = vpop.permute.xlu0 %418
    %vm420 = vcmp.le.f32.partialorder %v298, %v299
    %v421 = vsel %vm420, %v298, %v299
    %v422 = vsel %vm420, %v29, %v30
    %423 = vmin.index.xlane.f32.xlu0 %v421
    %v424 = vpop.xlane.xlu0 %423
    %425 = vset.pattern.permute.xlu0 %v424
    %426 = vperm.xlu0 %425, %v422
    %v427 = vpop.permute.xlu0 %426
    %vm428 = vcmp.eq.s32.totalorder %v29, %v307
    %vm429 = vcmp.eq.s32.totalorder %v30, %v307
    %vm430 = vcmp.eq.s32.totalorder %v29, %v315
    %vm431 = vcmp.eq.s32.totalorder %v30, %v315
    %vm432 = vcmp.eq.s32.totalorder %v29, %v323
    %vm433 = vcmp.eq.s32.totalorder %v30, %v323
    %vm434 = vcmp.eq.s32.totalorder %v29, %v331
    %vm435 = vcmp.eq.s32.totalorder %v30, %v331
    %vm436 = vcmp.eq.s32.totalorder %v29, %v339
    %vm437 = vcmp.eq.s32.totalorder %v30, %v339
    %vm438 = vcmp.eq.s32.totalorder %v29, %v347
    %vm439 = vcmp.eq.s32.totalorder %v30, %v347
    %vm440 = vcmp.eq.s32.totalorder %v29, %v355
    %vm441 = vcmp.eq.s32.totalorder %v30, %v355
    %vm442 = vcmp.eq.s32.totalorder %v29, %v363
    %vm443 = vcmp.eq.s32.totalorder %v30, %v363
    %vm444 = vcmp.eq.s32.totalorder %v29, %v371
    %vm445 = vcmp.eq.s32.totalorder %v30, %v371
    %vm446 = vcmp.eq.s32.totalorder %v29, %v379
    %vm447 = vcmp.eq.s32.totalorder %v30, %v379
    %vm448 = vcmp.eq.s32.totalorder %v29, %v387
    %vm449 = vcmp.eq.s32.totalorder %v30, %v387
    %vm450 = vcmp.eq.s32.totalorder %v29, %v395
    %vm451 = vcmp.eq.s32.totalorder %v30, %v395
    %vm452 = vcmp.eq.s32.totalorder %v29, %v403
    %vm453 = vcmp.eq.s32.totalorder %v30, %v403
    %vm454 = vcmp.eq.s32.totalorder %v29, %v411
    %vm455 = vcmp.eq.s32.totalorder %v30, %v411
    %vm456 = vcmp.eq.s32.totalorder %v29, %v419
    %vm457 = vcmp.eq.s32.totalorder %v30, %v419
    %vm458 = vcmp.eq.s32.totalorder %v29, %v427
    %vm459 = vcmp.eq.s32.totalorder %v30, %v427
    %v460 = vsel %vm428, 1, 0
    %v461 = vsel %vm429, 1, 0
    %v462 = vsel %vm430, 1, 0
    %v463 = vsel %vm431, 1, 0
    %v464 = vsel %vm432, 1, 0
    %v465 = vsel %vm433, 1, 0
    %v466 = vsel %vm434, 1, 0
    %v467 = vsel %vm435, 1, 0
    %v468 = vsel %vm436, 1, 0
    %v469 = vsel %vm437, 1, 0
    %v470 = vsel %vm438, 1, 0
    %v471 = vsel %vm439, 1, 0
    %v472 = vsel %vm440, 1, 0
    %v473 = vsel %vm441, 1, 0
    %v474 = vsel %vm442, 1, 0
    %v475 = vsel %vm443, 1, 0
    %v476 = vsel %vm444, 1, 0
    %v477 = vsel %vm445, 1, 0
    %v478 = vsel %vm446, 1, 0
    %v479 = vsel %vm447, 1, 0
    %v480 = vsel %vm448, 1, 0
    %v481 = vsel %vm449, 1, 0
    %v482 = vsel %vm450, 1, 0
    %v483 = vsel %vm451, 1, 0
    %v484 = vsel %vm452, 1, 0
    %v485 = vsel %vm453, 1, 0
    %v486 = vsel %vm454, 1, 0
    %v487 = vsel %vm455, 1, 0
    %v488 = vsel %vm456, 1, 0
    %v489 = vsel %vm457, 1, 0
    %v490 = vsel %vm458, 1, 0
    %v491 = vsel %vm459, 1, 0
    %v492 = vcvt.s32.f32 %v460
    %v493 = vcvt.s32.f32 %v461
    %v494 = vcvt.s32.f32 %v462
    %v495 = vcvt.s32.f32 %v463
    %v496 = vcvt.s32.f32 %v464
    %v497 = vcvt.s32.f32 %v465
    %v498 = vcvt.s32.f32 %v466
    %v499 = vcvt.s32.f32 %v467
    %v500 = vcvt.s32.f32 %v468
    %v501 = vcvt.s32.f32 %v469
    %v502 = vcvt.s32.f32 %v470
    %v503 = vcvt.s32.f32 %v471
    %v504 = vcvt.s32.f32 %v472
    %v505 = vcvt.s32.f32 %v473
    %v506 = vcvt.s32.f32 %v474
    %v507 = vcvt.s32.f32 %v475
    %v508 = vcvt.s32.f32 %v476
    %v509 = vcvt.s32.f32 %v477
    %v510 = vcvt.s32.f32 %v478
    %v511 = vcvt.s32.f32 %v479
    %v512 = vcvt.s32.f32 %v480
    %v513 = vcvt.s32.f32 %v481
    %v514 = vcvt.s32.f32 %v482
    %v515 = vcvt.s32.f32 %v483
    %v516 = vcvt.s32.f32 %v484
    %v517 = vcvt.s32.f32 %v485
    %v518 = vcvt.s32.f32 %v486
    %v519 = vcvt.s32.f32 %v487
    %v520 = vcvt.s32.f32 %v488
    %v521 = vcvt.s32.f32 %v489
    %v522 = vcvt.s32.f32 %v490
    %v523 = vcvt.s32.f32 %v491
    %524 = vmatprep.subr.mxu0 %v20
    %525 = vmatpush1.xpose.msra.mxu0 %v19
    %526 = vmatprep.subr.mxu0 %v22
    %527 = vmatpush1.xpose.msra.mxu0 %v21
    %528 = vmatprep.subr.mxu0 %v24
    %529 = vmatpush1.xpose.msra.mxu0 %v23
    %530 = vmatprep.subr.mxu0 %v26
    %531 = vmatpush1.xpose.msra.mxu0 %v25
    %532 = vmatprep.subr.mxu0 0.0
    %533 = vmatpush1.xpose.msra.mxu0 0.0
    %534 = vmatprep.subr.mxu0 0.0
    %535 = vmatpush1.xpose.msra.mxu0 0.0
    %536 = vmatprep.subr.mxu0 0.0
    %537 = vmatpush1.xpose.msra.mxu0 0.0
    %538 = vmatprep.subr.mxu0 0.0
    %539 = vmatpush1.xpose.msra.mxu0 0.0
    %540 = vmatprep.subr.mxu0 0.0
    %541 = vmatpush1.xpose.msra.mxu0 0.0
    %542 = vmatprep.subr.mxu0 0.0
    %543 = vmatpush1.xpose.msra.mxu0 0.0
    %544 = vmatprep.subr.mxu0 0.0
    %545 = vmatpush1.xpose.msra.mxu0 0.0
    %546 = vmatprep.subr.mxu0 0.0
    %547 = vmatpush1.xpose.msra.mxu0 0.0
    %548 = vmatprep.subr.mxu0 0.0
    %549 = vmatpush1.xpose.msra.mxu0 0.0
    %550 = vmatprep.subr.mxu0 0.0
    %551 = vmatpush1.xpose.msra.mxu0 0.0
    %552 = vmatprep.subr.mxu0 0.0
    %553 = vmatpush1.xpose.msra.mxu0 0.0
    %554 = vmatprep.subr.mxu0 0.0
    %555 = vmatpush1.xpose.msra.mxu0 0.0
    %556 = vmatprep.subr.mxu0 0.0
    %557 = vmatpush1.xpose.msra.mxu0 0.0
    %558 = vmatprep.subr.mxu0 0.0
    %559 = vmatpush1.xpose.msra.mxu0 0.0
    %560 = vmatprep.subr.mxu0 0.0
    %561 = vmatpush1.xpose.msra.mxu0 0.0
    %562 = vmatprep.subr.mxu0 0.0
    %563 = vmatpush1.xpose.msra.mxu0 0.0
    %564 = vmatprep.subr.mxu0 0.0
    %565 = vmatpush1.xpose.msra.mxu0 0.0
    %566 = vmatprep.subr.mxu0 0.0
    %567 = vmatpush1.xpose.msra.mxu0 0.0
    %568 = vmatprep.subr.mxu0 0.0
    %569 = vmatpush1.xpose.msra.mxu0 0.0
    %570 = vmatprep.subr.mxu0 0.0
    %571 = vmatpush1.xpose.msra.mxu0 0.0
    %572 = vmatprep.subr.mxu0 0.0
    %573 = vmatpush1.xpose.msra.mxu0 0.0
    %574 = vmatprep.subr.mxu0 0.0
    %575 = vmatpush1.xpose.msra.mxu0 0.0
    %576 = vmatprep.subr.mxu0 0.0
    %577 = vmatpush1.xpose.msra.mxu0 0.0
    %578 = vmatprep.subr.mxu0 0.0
    %579 = vmatpush1.xpose.msra.mxu0 0.0
    %580 = vmatprep.subr.mxu0 0.0
    %581 = vmatpush1.xpose.msra.mxu0 0.0
    %582 = vmatprep.subr.mxu0 0.0
    %583 = vmatpush1.xpose.msra.mxu0 0.0
    %584 = vmatprep.subr.mxu0 0.0
    %585 = vmatpush1.xpose.msra.mxu0 0.0
    %586 = vmatprep.subr.mxu0 0.0
    %587 = vmatpush1.xpose.msra.mxu0 0.0
    %588 = vmatprep.mubr.f32.mxu0 %v493
    %589 = vmatmul.mubr.f32.gmra.mrb[0].mxu0 %v492
    %v590 = vpop.f32.mrb[0].mxu0
    %v591 = vadd.f32 0.0, %v590
    %v592 = vpop.f32.mrb[0].mxu0
    %593 = vmatprep.mubr.f32.mxu0 %v495
    %594 = vmatmul.mubr.f32.gmra.mrb[0].mxu0 %v494
    %v595 = vpop.f32.mrb[0].mxu0
    %v596 = vadd.f32 0.0, %v595
    %v597 = vpop.f32.mrb[0].mxu0
    %598 = vmatprep.mubr.f32.mxu0 %v497
    %599 = vmatmul.mubr.f32.gmra.mrb[0].mxu0 %v496
    %v600 = vpop.f32.mrb[0].mxu0
    %v601 = vadd.f32 0.0, %v600
    %v602 = vpop.f32.mrb[0].mxu0
    %603 = vmatprep.mubr.f32.mxu0 %v499
    %604 = vmatmul.mubr.f32.gmra.mrb[0].mxu0 %v498
    %v605 = vpop.f32.mrb[0].mxu0
    %v606 = vadd.f32 0.0, %v605
    %v607 = vpop.f32.mrb[0].mxu0
    %608 = vmatprep.mubr.f32.mxu0 %v501
    %609 = vmatmul.mubr.f32.gmra.mrb[0].mxu0 %v500
    %v610 = vpop.f32.mrb[0].mxu0
    %v611 = vadd.f32 0.0, %v610
    %v612 = vpop.f32.mrb[0].mxu0
    %613 = vmatprep.mubr.f32.mxu0 %v503
    %614 = vmatmul.mubr.f32.gmra.mrb[0].mxu0 %v502
    %v615 = vpop.f32.mrb[0].mxu0
    %v616 = vadd.f32 0.0, %v615
    %v617 = vpop.f32.mrb[0].mxu0
    %618 = vmatprep.mubr.f32.mxu0 %v505
    %619 = vmatmul.mubr.f32.gmra.mrb[0].mxu0 %v504
    %v620 = vpop.f32.mrb[0].mxu0
    %v621 = vadd.f32 0.0, %v620
    %v622 = vpop.f32.mrb[0].mxu0
    %623 = vmatprep.mubr.f32.mxu0 %v507
    %624 = vmatmul.mubr.f32.gmra.mrb[0].mxu0 %v506
    %v625 = vpop.f32.mrb[0].mxu0
    %v626 = vadd.f32 0.0, %v625
    %v627 = vpop.f32.mrb[0].mxu0
    %628 = vmatprep.mubr.f32.mxu0 %v509
    %629 = vmatmul.mubr.f32.gmra.mrb[0].mxu0 %v508
    %v630 = vpop.f32.mrb[0].mxu0
    %v631 = vadd.f32 0.0, %v630
    %v632 = vpop.f32.mrb[0].mxu0
    %633 = vmatprep.mubr.f32.mxu0 %v511
    %634 = vmatmul.mubr.f32.gmra.mrb[0].mxu0 %v510
    %v635 = vpop.f32.mrb[0].mxu0
    %v636 = vadd.f32 0.0, %v635
    %v637 = vpop.f32.mrb[0].mxu0
    %638 = vmatprep.mubr.f32.mxu0 %v513
    %639 = vmatmul.mubr.f32.gmra.mrb[0].mxu0 %v512
    %v640 = vpop.f32.mrb[0].mxu0
    %v641 = vadd.f32 0.0, %v640
    %v642 = vpop.f32.mrb[0].mxu0
    %643 = vmatprep.mubr.f32.mxu0 %v515
    %644 = vmatmul.mubr.f32.gmra.mrb[0].mxu0 %v514
    %v645 = vpop.f32.mrb[0].mxu0
    %v646 = vadd.f32 0.0, %v645
    %v647 = vpop.f32.mrb[0].mxu0
    %648 = vmatprep.mubr.f32.mxu0 %v517
    %649 = vmatmul.mubr.f32.gmra.mrb[0].mxu0 %v516
    %v650 = vpop.f32.mrb[0].mxu0
    %v651 = vadd.f32 0.0, %v650
    %v652 = vpop.f32.mrb[0].mxu0
    %653 = vmatprep.mubr.f32.mxu0 %v519
    %654 = vmatmul.mubr.f32.gmra.mrb[0].mxu0 %v518
    %v655 = vpop.f32.mrb[0].mxu0
    %v656 = vadd.f32 0.0, %v655
    %v657 = vpop.f32.mrb[0].mxu0
    %658 = vmatprep.mubr.f32.mxu0 %v521
    %659 = vmatmul.mubr.f32.gmra.mrb[0].mxu0 %v520
    %v660 = vpop.f32.mrb[0].mxu0
    %v661 = vadd.f32 0.0, %v660
    %v662 = vpop.f32.mrb[0].mxu0
    %663 = vmatprep.mubr.f32.mxu0 %v523
    %664 = vmatmul.mubr.f32.gmra.mrb[0].mxu0 %v522
    %v665 = vpop.f32.mrb[0].mxu0
    %v666 = vadd.f32 0.0, %v665
    %v667 = vpop.f32.mrb[0].mxu0
    %668 = vdwg.mxu0
    %669 = vst.msk [vmem:[%s3] sm:$0xff] %vm47, %v591
    %670 = vst.msk [vmem:[%s3 + $0x8] sm:$0xff] %vm47, %v596
    %671 = vst.msk [vmem:[%s3 + $0x10] sm:$0xff] %vm47, %v601
    %672 = vst.msk [vmem:[%s3 + $0x18] sm:$0xff] %vm47, %v606
    %673 = vst.msk [vmem:[%s3 + $0x20] sm:$0xff] %vm47, %v611
    %674 = vst.msk [vmem:[%s3 + $0x28] sm:$0xff] %vm47, %v616
    %675 = vst.msk [vmem:[%s3 + $0x30] sm:$0xff] %vm47, %v621
    %676 = vst.msk [vmem:[%s3 + $0x38] sm:$0xff] %vm47, %v626
    %677 = vst.msk [vmem:[%s3 + $0x40] sm:$0xff] %vm47, %v631
    %678 = vst.msk [vmem:[%s3 + $0x48] sm:$0xff] %vm47, %v636
    %679 = vst.msk [vmem:[%s3 + $0x50] sm:$0xff] %vm47, %v641
    %680 = vst.msk [vmem:[%s3 + $0x58] sm:$0xff] %vm47, %v646
    %681 = vst.msk [vmem:[%s3 + $0x60] sm:$0xff] %vm47, %v651
    %682 = vst.msk [vmem:[%s3 + $0x68] sm:$0xff] %vm47, %v656
    %683 = vst.msk [vmem:[%s3 + $0x70] sm:$0xff] %vm47, %v661
    %684 = vst.msk [vmem:[%s3 + $0x78] sm:$0xff] %vm47, %v666
    %v685 = vlaneseq
    %v686 = vshrl.u32 %v685, 7
    %v687 = vsub.s32 0, %v686
    %v688 = vrot.slane %v307, %v687
    %v689 = vlaneseq
    %v690 = vshrl.u32 %v689, 7
    %v691 = vsub.s32 1, %v690
    %v692 = vrot.slane %v307, %v691
    %v693 = vlaneseq
    %v694 = vshrl.u32 %v693, 7
    %v695 = vsub.s32 2, %v694
    %v696 = vrot.slane %v307, %v695
    %v697 = vlaneseq
    %v698 = vshrl.u32 %v697, 7
    %v699 = vsub.s32 3, %v698
    %v700 = vrot.slane %v307, %v699
    %v701 = vlaneseq
    %v702 = vshrl.u32 %v701, 7
    %v703 = vsub.s32 4, %v702
    %v704 = vrot.slane %v307, %v703
    %v705 = vlaneseq
    %v706 = vshrl.u32 %v705, 7
    %v707 = vsub.s32 5, %v706
    %v708 = vrot.slane %v307, %v707
    %v709 = vlaneseq
    %v710 = vshrl.u32 %v709, 7
    %v711 = vsub.s32 6, %v710
    %v712 = vrot.slane %v307, %v711
    %v713 = vlaneseq
    %v714 = vshrl.u32 %v713, 7
    %v715 = vsub.s32 7, %v714
    %v716 = vrot.slane %v307, %v715
    %v717 = vlaneseq
    %v718 = vshrl.u32 %v717, 7
    %v719 = vsub.s32 0, %v718
    %v720 = vrot.slane %v315, %v719
    %v721 = vlaneseq
    %v722 = vshrl.u32 %v721, 7
    %v723 = vsub.s32 1, %v722
    %v724 = vrot.slane %v315, %v723
    %v725 = vlaneseq
    %v726 = vshrl.u32 %v725, 7
    %v727 = vsub.s32 2, %v726
    %v728 = vrot.slane %v315, %v727
    %v729 = vlaneseq
    %v730 = vshrl.u32 %v729, 7
    %v731 = vsub.s32 3, %v730
    %v732 = vrot.slane %v315, %v731
    %v733 = vlaneseq
    %v734 = vshrl.u32 %v733, 7
    %v735 = vsub.s32 4, %v734
    %v736 = vrot.slane %v315, %v735
    %v737 = vlaneseq
    %v738 = vshrl.u32 %v737, 7
    %v739 = vsub.s32 5, %v738
    %v740 = vrot.slane %v315, %v739
    %v741 = vlaneseq
    %v742 = vshrl.u32 %v741, 7
    %v743 = vsub.s32 6, %v742
    %v744 = vrot.slane %v315, %v743
    %v745 = vlaneseq
    %v746 = vshrl.u32 %v745, 7
    %v747 = vsub.s32 7, %v746
    %v748 = vrot.slane %v315, %v747
    %v749 = vlaneseq
    %v750 = vshrl.u32 %v749, 7
    %v751 = vsub.s32 0, %v750
    %v752 = vrot.slane %v323, %v751
    %v753 = vlaneseq
    %v754 = vshrl.u32 %v753, 7
    %v755 = vsub.s32 1, %v754
    %v756 = vrot.slane %v323, %v755
    %v757 = vlaneseq
    %v758 = vshrl.u32 %v757, 7
    %v759 = vsub.s32 2, %v758
    %v760 = vrot.slane %v323, %v759
    %v761 = vlaneseq
    %v762 = vshrl.u32 %v761, 7
    %v763 = vsub.s32 3, %v762
    %v764 = vrot.slane %v323, %v763
    %v765 = vlaneseq
    %v766 = vshrl.u32 %v765, 7
    %v767 = vsub.s32 4, %v766
    %v768 = vrot.slane %v323, %v767
    %v769 = vlaneseq
    %v770 = vshrl.u32 %v769, 7
    %v771 = vsub.s32 5, %v770
    %v772 = vrot.slane %v323, %v771
    %v773 = vlaneseq
    %v774 = vshrl.u32 %v773, 7
    %v775 = vsub.s32 6, %v774
    %v776 = vrot.slane %v323, %v775
    %v777 = vlaneseq
    %v778 = vshrl.u32 %v777, 7
    %v779 = vsub.s32 7, %v778
    %v780 = vrot.slane %v323, %v779
    %v781 = vlaneseq
    %v782 = vshrl.u32 %v781, 7
    %v783 = vsub.s32 0, %v782
    %v784 = vrot.slane %v331, %v783
    %v785 = vlaneseq
    %v786 = vshrl.u32 %v785, 7
    %v787 = vsub.s32 1, %v786
    %v788 = vrot.slane %v331, %v787
    %v789 = vlaneseq
    %v790 = vshrl.u32 %v789, 7
    %v791 = vsub.s32 2, %v790
    %v792 = vrot.slane %v331, %v791
    %v793 = vlaneseq
    %v794 = vshrl.u32 %v793, 7
    %v795 = vsub.s32 3, %v794
    %v796 = vrot.slane %v331, %v795
    %v797 = vlaneseq
    %v798 = vshrl.u32 %v797, 7
    %v799 = vsub.s32 4, %v798
    %v800 = vrot.slane %v331, %v799
    %v801 = vlaneseq
    %v802 = vshrl.u32 %v801, 7
    %v803 = vsub.s32 5, %v802
    %v804 = vrot.slane %v331, %v803
    %v805 = vlaneseq
    %v806 = vshrl.u32 %v805, 7
    %v807 = vsub.s32 6, %v806
    %v808 = vrot.slane %v331, %v807
    %v809 = vlaneseq
    %v810 = vshrl.u32 %v809, 7
    %v811 = vsub.s32 7, %v810
    %v812 = vrot.slane %v331, %v811
    %v813 = vlaneseq
    %v814 = vshrl.u32 %v813, 7
    %v815 = vsub.s32 0, %v814
    %v816 = vrot.slane %v339, %v815
    %v817 = vlaneseq
    %v818 = vshrl.u32 %v817, 7
    %v819 = vsub.s32 1, %v818
    %v820 = vrot.slane %v339, %v819
    %v821 = vlaneseq
    %v822 = vshrl.u32 %v821, 7
    %v823 = vsub.s32 2, %v822
    %v824 = vrot.slane %v339, %v823
    %v825 = vlaneseq
    %v826 = vshrl.u32 %v825, 7
    %v827 = vsub.s32 3, %v826
    %v828 = vrot.slane %v339, %v827
    %v829 = vlaneseq
    %v830 = vshrl.u32 %v829, 7
    %v831 = vsub.s32 4, %v830
    %v832 = vrot.slane %v339, %v831
    %v833 = vlaneseq
    %v834 = vshrl.u32 %v833, 7
    %v835 = vsub.s32 5, %v834
    %v836 = vrot.slane %v339, %v835
    %v837 = vlaneseq
    %v838 = vshrl.u32 %v837, 7
    %v839 = vsub.s32 6, %v838
    %v840 = vrot.slane %v339, %v839
    %v841 = vlaneseq
    %v842 = vshrl.u32 %v841, 7
    %v843 = vsub.s32 7, %v842
    %v844 = vrot.slane %v339, %v843
    %v845 = vlaneseq
    %v846 = vshrl.u32 %v845, 7
    %v847 = vsub.s32 0, %v846
    %v848 = vrot.slane %v347, %v847
    %v849 = vlaneseq
    %v850 = vshrl.u32 %v849, 7
    %v851 = vsub.s32 1, %v850
    %v852 = vrot.slane %v347, %v851
    %v853 = vlaneseq
    %v854 = vshrl.u32 %v853, 7
    %v855 = vsub.s32 2, %v854
    %v856 = vrot.slane %v347, %v855
    %v857 = vlaneseq
    %v858 = vshrl.u32 %v857, 7
    %v859 = vsub.s32 3, %v858
    %v860 = vrot.slane %v347, %v859
    %v861 = vlaneseq
    %v862 = vshrl.u32 %v861, 7
    %v863 = vsub.s32 4, %v862
    %v864 = vrot.slane %v347, %v863
    %v865 = vlaneseq
    %v866 = vshrl.u32 %v865, 7
    %v867 = vsub.s32 5, %v866
    %v868 = vrot.slane %v347, %v867
    %v869 = vlaneseq
    %v870 = vshrl.u32 %v869, 7
    %v871 = vsub.s32 6, %v870
    %v872 = vrot.slane %v347, %v871
    %v873 = vlaneseq
    %v874 = vshrl.u32 %v873, 7
    %v875 = vsub.s32 7, %v874
    %v876 = vrot.slane %v347, %v875
    %v877 = vlaneseq
    %v878 = vshrl.u32 %v877, 7
    %v879 = vsub.s32 0, %v878
    %v880 = vrot.slane %v355, %v879
    %v881 = vlaneseq
    %v882 = vshrl.u32 %v881, 7
    %v883 = vsub.s32 1, %v882
    %v884 = vrot.slane %v355, %v883
    %v885 = vlaneseq
    %v886 = vshrl.u32 %v885, 7
    %v887 = vsub.s32 2, %v886
    %v888 = vrot.slane %v355, %v887
    %v889 = vlaneseq
    %v890 = vshrl.u32 %v889, 7
    %v891 = vsub.s32 3, %v890
    %v892 = vrot.slane %v355, %v891
    %v893 = vlaneseq
    %v894 = vshrl.u32 %v893, 7
    %v895 = vsub.s32 4, %v894
    %v896 = vrot.slane %v355, %v895
    %v897 = vlaneseq
    %v898 = vshrl.u32 %v897, 7
    %v899 = vsub.s32 5, %v898
    %v900 = vrot.slane %v355, %v899
    %v901 = vlaneseq
    %v902 = vshrl.u32 %v901, 7
    %v903 = vsub.s32 6, %v902
    %v904 = vrot.slane %v355, %v903
    %v905 = vlaneseq
    %v906 = vshrl.u32 %v905, 7
    %v907 = vsub.s32 7, %v906
    %v908 = vrot.slane %v355, %v907
    %v909 = vlaneseq
    %v910 = vshrl.u32 %v909, 7
    %v911 = vsub.s32 0, %v910
    %v912 = vrot.slane %v363, %v911
    %v913 = vlaneseq
    %v914 = vshrl.u32 %v913, 7
    %v915 = vsub.s32 1, %v914
    %v916 = vrot.slane %v363, %v915
    %v917 = vlaneseq
    %v918 = vshrl.u32 %v917, 7
    %v919 = vsub.s32 2, %v918
    %v920 = vrot.slane %v363, %v919
    %v921 = vlaneseq
    %v922 = vshrl.u32 %v921, 7
    %v923 = vsub.s32 3, %v922
    %v924 = vrot.slane %v363, %v923
    %v925 = vlaneseq
    %v926 = vshrl.u32 %v925, 7
    %v927 = vsub.s32 4, %v926
    %v928 = vrot.slane %v363, %v927
    %v929 = vlaneseq
    %v930 = vshrl.u32 %v929, 7
    %v931 = vsub.s32 5, %v930
    %v932 = vrot.slane %v363, %v931
    %v933 = vlaneseq
    %v934 = vshrl.u32 %v933, 7
    %v935 = vsub.s32 6, %v934
    %v936 = vrot.slane %v363, %v935
    %v937 = vlaneseq
    %v938 = vshrl.u32 %v937, 7
    %v939 = vsub.s32 7, %v938
    %v940 = vrot.slane %v363, %v939
    %v941 = vlaneseq
    %v942 = vshrl.u32 %v941, 7
    %v943 = vsub.s32 0, %v942
    %v944 = vrot.slane %v371, %v943
    %v945 = vlaneseq
    %v946 = vshrl.u32 %v945, 7
    %v947 = vsub.s32 1, %v946
    %v948 = vrot.slane %v371, %v947
    %v949 = vlaneseq
    %v950 = vshrl.u32 %v949, 7
    %v951 = vsub.s32 2, %v950
    %v952 = vrot.slane %v371, %v951
    %v953 = vlaneseq
    %v954 = vshrl.u32 %v953, 7
    %v955 = vsub.s32 3, %v954
    %v956 = vrot.slane %v371, %v955
    %v957 = vlaneseq
    %v958 = vshrl.u32 %v957, 7
    %v959 = vsub.s32 4, %v958
    %v960 = vrot.slane %v371, %v959
    %v961 = vlaneseq
    %v962 = vshrl.u32 %v961, 7
    %v963 = vsub.s32 5, %v962
    %v964 = vrot.slane %v371, %v963
    %v965 = vlaneseq
    %v966 = vshrl.u32 %v965, 7
    %v967 = vsub.s32 6, %v966
    %v968 = vrot.slane %v371, %v967
    %v969 = vlaneseq
    %v970 = vshrl.u32 %v969, 7
    %v971 = vsub.s32 7, %v970
    %v972 = vrot.slane %v371, %v971
    %v973 = vlaneseq
    %v974 = vshrl.u32 %v973, 7
    %v975 = vsub.s32 0, %v974
    %v976 = vrot.slane %v379, %v975
    %v977 = vlaneseq
    %v978 = vshrl.u32 %v977, 7
    %v979 = vsub.s32 1, %v978
    %v980 = vrot.slane %v379, %v979
    %v981 = vlaneseq
    %v982 = vshrl.u32 %v981, 7
    %v983 = vsub.s32 2, %v982
    %v984 = vrot.slane %v379, %v983
    %v985 = vlaneseq
    %v986 = vshrl.u32 %v985, 7
    %v987 = vsub.s32 3, %v986
    %v988 = vrot.slane %v379, %v987
    %v989 = vlaneseq
    %v990 = vshrl.u32 %v989, 7
    %v991 = vsub.s32 4, %v990
    %v992 = vrot.slane %v379, %v991
    %v993 = vlaneseq
    %v994 = vshrl.u32 %v993, 7
    %v995 = vsub.s32 5, %v994
    %v996 = vrot.slane %v379, %v995
    %v997 = vlaneseq
    %v998 = vshrl.u32 %v997, 7
    %v999 = vsub.s32 6, %v998
    %v1000 = vrot.slane %v379, %v999
    %v1001 = vlaneseq
    %v1002 = vshrl.u32 %v1001, 7
    %v1003 = vsub.s32 7, %v1002
    %v1004 = vrot.slane %v379, %v1003
    %v1005 = vlaneseq
    %v1006 = vshrl.u32 %v1005, 7
    %v1007 = vsub.s32 0, %v1006
    %v1008 = vrot.slane %v387, %v1007
    %v1009 = vlaneseq
    %v1010 = vshrl.u32 %v1009, 7
    %v1011 = vsub.s32 1, %v1010
    %v1012 = vrot.slane %v387, %v1011
    %v1013 = vlaneseq
    %v1014 = vshrl.u32 %v1013, 7
    %v1015 = vsub.s32 2, %v1014
    %v1016 = vrot.slane %v387, %v1015
    %v1017 = vlaneseq
    %v1018 = vshrl.u32 %v1017, 7
    %v1019 = vsub.s32 3, %v1018
    %v1020 = vrot.slane %v387, %v1019
    %v1021 = vlaneseq
    %v1022 = vshrl.u32 %v1021, 7
    %v1023 = vsub.s32 4, %v1022
    %v1024 = vrot.slane %v387, %v1023
    %v1025 = vlaneseq
    %v1026 = vshrl.u32 %v1025, 7
    %v1027 = vsub.s32 5, %v1026
    %v1028 = vrot.slane %v387, %v1027
    %v1029 = vlaneseq
    %v1030 = vshrl.u32 %v1029, 7
    %v1031 = vsub.s32 6, %v1030
    %v1032 = vrot.slane %v387, %v1031
    %v1033 = vlaneseq
    %v1034 = vshrl.u32 %v1033, 7
    %v1035 = vsub.s32 7, %v1034
    %v1036 = vrot.slane %v387, %v1035
    %v1037 = vlaneseq
    %v1038 = vshrl.u32 %v1037, 7
    %v1039 = vsub.s32 0, %v1038
    %v1040 = vrot.slane %v395, %v1039
    %v1041 = vlaneseq
    %v1042 = vshrl.u32 %v1041, 7
    %v1043 = vsub.s32 1, %v1042
    %v1044 = vrot.slane %v395, %v1043
    %v1045 = vlaneseq
    %v1046 = vshrl.u32 %v1045, 7
    %v1047 = vsub.s32 2, %v1046
    %v1048 = vrot.slane %v395, %v1047
    %v1049 = vlaneseq
    %v1050 = vshrl.u32 %v1049, 7
    %v1051 = vsub.s32 3, %v1050
    %v1052 = vrot.slane %v395, %v1051
    %v1053 = vlaneseq
    %v1054 = vshrl.u32 %v1053, 7
    %v1055 = vsub.s32 4, %v1054
    %v1056 = vrot.slane %v395, %v1055
    %v1057 = vlaneseq
    %v1058 = vshrl.u32 %v1057, 7
    %v1059 = vsub.s32 5, %v1058
    %v1060 = vrot.slane %v395, %v1059
    %v1061 = vlaneseq
    %v1062 = vshrl.u32 %v1061, 7
    %v1063 = vsub.s32 6, %v1062
    %v1064 = vrot.slane %v395, %v1063
    %v1065 = vlaneseq
    %v1066 = vshrl.u32 %v1065, 7
    %v1067 = vsub.s32 7, %v1066
    %v1068 = vrot.slane %v395, %v1067
    %v1069 = vlaneseq
    %v1070 = vshrl.u32 %v1069, 7
    %v1071 = vsub.s32 0, %v1070
    %v1072 = vrot.slane %v403, %v1071
    %v1073 = vlaneseq
    %v1074 = vshrl.u32 %v1073, 7
    %v1075 = vsub.s32 1, %v1074
    %v1076 = vrot.slane %v403, %v1075
    %v1077 = vlaneseq
    %v1078 = vshrl.u32 %v1077, 7
    %v1079 = vsub.s32 2, %v1078
    %v1080 = vrot.slane %v403, %v1079
    %v1081 = vlaneseq
    %v1082 = vshrl.u32 %v1081, 7
    %v1083 = vsub.s32 3, %v1082
    %v1084 = vrot.slane %v403, %v1083
    %v1085 = vlaneseq
    %v1086 = vshrl.u32 %v1085, 7
    %v1087 = vsub.s32 4, %v1086
    %v1088 = vrot.slane %v403, %v1087
    %v1089 = vlaneseq
    %v1090 = vshrl.u32 %v1089, 7
    %v1091 = vsub.s32 5, %v1090
    %v1092 = vrot.slane %v403, %v1091
    %v1093 = vlaneseq
    %v1094 = vshrl.u32 %v1093, 7
    %v1095 = vsub.s32 6, %v1094
    %v1096 = vrot.slane %v403, %v1095
    %v1097 = vlaneseq
    %v1098 = vshrl.u32 %v1097, 7
    %v1099 = vsub.s32 7, %v1098
    %v1100 = vrot.slane %v403, %v1099
    %v1101 = vlaneseq
    %v1102 = vshrl.u32 %v1101, 7
    %v1103 = vsub.s32 0, %v1102
    %v1104 = vrot.slane %v411, %v1103
    %v1105 = vlaneseq
    %v1106 = vshrl.u32 %v1105, 7
    %v1107 = vsub.s32 1, %v1106
    %v1108 = vrot.slane %v411, %v1107
    %v1109 = vlaneseq
    %v1110 = vshrl.u32 %v1109, 7
    %v1111 = vsub.s32 2, %v1110
    %v1112 = vrot.slane %v411, %v1111
    %v1113 = vlaneseq
    %v1114 = vshrl.u32 %v1113, 7
    %v1115 = vsub.s32 3, %v1114
    %v1116 = vrot.slane %v411, %v1115
    %v1117 = vlaneseq
    %v1118 = vshrl.u32 %v1117, 7
    %v1119 = vsub.s32 4, %v1118
    %v1120 = vrot.slane %v411, %v1119
    %v1121 = vlaneseq
    %v1122 = vshrl.u32 %v1121, 7
    %v1123 = vsub.s32 5, %v1122
    %v1124 = vrot.slane %v411, %v1123
    %v1125 = vlaneseq
    %v1126 = vshrl.u32 %v1125, 7
    %v1127 = vsub.s32 6, %v1126
    %v1128 = vrot.slane %v411, %v1127
    %v1129 = vlaneseq
    %v1130 = vshrl.u32 %v1129, 7
    %v1131 = vsub.s32 7, %v1130
    %v1132 = vrot.slane %v411, %v1131
    %v1133 = vlaneseq
    %v1134 = vshrl.u32 %v1133, 7
    %v1135 = vsub.s32 0, %v1134
    %v1136 = vrot.slane %v419, %v1135
    %v1137 = vlaneseq
    %v1138 = vshrl.u32 %v1137, 7
    %v1139 = vsub.s32 1, %v1138
    %v1140 = vrot.slane %v419, %v1139
    %v1141 = vlaneseq
    %v1142 = vshrl.u32 %v1141, 7
    %v1143 = vsub.s32 2, %v1142
    %v1144 = vrot.slane %v419, %v1143
    %v1145 = vlaneseq
    %v1146 = vshrl.u32 %v1145, 7
    %v1147 = vsub.s32 3, %v1146
    %v1148 = vrot.slane %v419, %v1147
    %v1149 = vlaneseq
    %v1150 = vshrl.u32 %v1149, 7
    %v1151 = vsub.s32 4, %v1150
    %v1152 = vrot.slane %v419, %v1151
    %v1153 = vlaneseq
    %v1154 = vshrl.u32 %v1153, 7
    %v1155 = vsub.s32 5, %v1154
    %v1156 = vrot.slane %v419, %v1155
    %v1157 = vlaneseq
    %v1158 = vshrl.u32 %v1157, 7
    %v1159 = vsub.s32 6, %v1158
    %v1160 = vrot.slane %v419, %v1159
    %v1161 = vlaneseq
    %v1162 = vshrl.u32 %v1161, 7
    %v1163 = vsub.s32 7, %v1162
    %v1164 = vrot.slane %v419, %v1163
    %v1165 = vlaneseq
    %v1166 = vshrl.u32 %v1165, 7
    %v1167 = vsub.s32 0, %v1166
    %v1168 = vrot.slane %v427, %v1167
    %v1169 = vlaneseq
    %v1170 = vshrl.u32 %v1169, 7
    %v1171 = vsub.s32 1, %v1170
    %v1172 = vrot.slane %v427, %v1171
    %v1173 = vlaneseq
    %v1174 = vshrl.u32 %v1173, 7
    %v1175 = vsub.s32 2, %v1174
    %v1176 = vrot.slane %v427, %v1175
    %v1177 = vlaneseq
    %v1178 = vshrl.u32 %v1177, 7
    %v1179 = vsub.s32 3, %v1178
    %v1180 = vrot.slane %v427, %v1179
    %v1181 = vlaneseq
    %v1182 = vshrl.u32 %v1181, 7
    %v1183 = vsub.s32 4, %v1182
    %v1184 = vrot.slane %v427, %v1183
    %v1185 = vlaneseq
    %v1186 = vshrl.u32 %v1185, 7
    %v1187 = vsub.s32 5, %v1186
    %v1188 = vrot.slane %v427, %v1187
    %v1189 = vlaneseq
    %v1190 = vshrl.u32 %v1189, 7
    %v1191 = vsub.s32 6, %v1190
    %v1192 = vrot.slane %v427, %v1191
    %v1193 = vlaneseq
    %v1194 = vshrl.u32 %v1193, 7
    %v1195 = vsub.s32 7, %v1194
    %v1196 = vrot.slane %v427, %v1195
    %v1197 = vcombine.low %v688, %v692
    %v1198 = vcombine.low %v696, %v700
    %v1199 = vcombine.low %v704, %v708
    %v1200 = vcombine.low %v712, %v716
    %v1202 = vunpack.c.l.s4 1966171168
    %v1203 = vunpack.c.0.s8 %v1202
    %v1204 = vlaneseq
    %v1205 = vshrl.u32 %v1204, 7
    %v1206 = vsub.s32 %v1203, %v1205
    %v1207 = vrot.slane %v1197, %v1206
    %v1209 = vunpack.c.l.s4 1966171168
    %v1210 = vunpack.c.0.s8 %v1209
    %v1211 = vlaneseq
    %v1212 = vshrl.u32 %v1211, 7
    %v1213 = vsub.s32 %v1210, %v1212
    %v1214 = vrot.slane %v1198, %v1213
    %v1216 = vunpack.c.l.s4 1966171168
    %v1217 = vunpack.c.0.s8 %v1216
    %v1218 = vlaneseq
    %v1219 = vshrl.u32 %v1218, 7
    %v1220 = vsub.s32 %v1217, %v1219
    %v1221 = vrot.slane %v1199, %v1220
    %v1223 = vunpack.c.l.s4 1966171168
    %v1224 = vunpack.c.0.s8 %v1223
    %v1225 = vlaneseq
    %v1226 = vshrl.u32 %v1225, 7
    %v1227 = vsub.s32 %v1224, %v1226
    %v1228 = vrot.slane %v1200, %v1227
    %v1229 = vcombine.low %v1207, %v1214
    %v1230 = vcombine.low %v1221, %v1228
    %v1232 = vunpack.c.l.s4 1966171168
    %v1233 = vunpack.c.0.s8 %v1232
    %v1234 = vlaneseq
    %v1235 = vshrl.u32 %v1234, 7
    %v1236 = vsub.s32 %v1233, %v1235
    %v1237 = vrot.slane %v1229, %v1236
    %v1239 = vunpack.c.l.s4 1966171168
    %v1240 = vunpack.c.0.s8 %v1239
    %v1241 = vlaneseq
    %v1242 = vshrl.u32 %v1241, 7
    %v1243 = vsub.s32 %v1240, %v1242
    %v1244 = vrot.slane %v1230, %v1243
    %v1245 = vcombine.low %v1237, %v1244
    %v1246 = vcombine.low %v720, %v724
    %v1247 = vcombine.low %v728, %v732
    %v1248 = vcombine.low %v736, %v740
    %v1249 = vcombine.low %v744, %v748
    %v1251 = vunpack.c.l.s4 1966171168
    %v1252 = vunpack.c.0.s8 %v1251
    %v1253 = vlaneseq
    %v1254 = vshrl.u32 %v1253, 7
    %v1255 = vsub.s32 %v1252, %v1254
    %v1256 = vrot.slane %v1246, %v1255
    %v1258 = vunpack.c.l.s4 1966171168
    %v1259 = vunpack.c.0.s8 %v1258
    %v1260 = vlaneseq
    %v1261 = vshrl.u32 %v1260, 7
    %v1262 = vsub.s32 %v1259, %v1261
    %v1263 = vrot.slane %v1247, %v1262
    %v1265 = vunpack.c.l.s4 1966171168
    %v1266 = vunpack.c.0.s8 %v1265
    %v1267 = vlaneseq
    %v1268 = vshrl.u32 %v1267, 7
    %v1269 = vsub.s32 %v1266, %v1268
    %v1270 = vrot.slane %v1248, %v1269
    %v1272 = vunpack.c.l.s4 1966171168
    %v1273 = vunpack.c.0.s8 %v1272
    %v1274 = vlaneseq
    %v1275 = vshrl.u32 %v1274, 7
    %v1276 = vsub.s32 %v1273, %v1275
    %v1277 = vrot.slane %v1249, %v1276
    %v1278 = vcombine.low %v1256, %v1263
    %v1279 = vcombine.low %v1270, %v1277
    %v1281 = vunpack.c.l.s4 1966171168
    %v1282 = vunpack.c.0.s8 %v1281
    %v1283 = vlaneseq
    %v1284 = vshrl.u32 %v1283, 7
    %v1285 = vsub.s32 %v1282, %v1284
    %v1286 = vrot.slane %v1278, %v1285
    %v1288 = vunpack.c.l.s4 1966171168
    %v1289 = vunpack.c.0.s8 %v1288
    %v1290 = vlaneseq
    %v1291 = vshrl.u32 %v1290, 7
    %v1292 = vsub.s32 %v1289, %v1291
    %v1293 = vrot.slane %v1279, %v1292
    %v1294 = vcombine.low %v1286, %v1293
    %v1295 = vcombine.low %v752, %v756
    %v1296 = vcombine.low %v760, %v764
    %v1297 = vcombine.low %v768, %v772
    %v1298 = vcombine.low %v776, %v780
    %v1300 = vunpack.c.l.s4 1966171168
    %v1301 = vunpack.c.0.s8 %v1300
    %v1302 = vlaneseq
    %v1303 = vshrl.u32 %v1302, 7
    %v1304 = vsub.s32 %v1301, %v1303
    %v1305 = vrot.slane %v1295, %v1304
    %v1307 = vunpack.c.l.s4 1966171168
    %v1308 = vunpack.c.0.s8 %v1307
    %v1309 = vlaneseq
    %v1310 = vshrl.u32 %v1309, 7
    %v1311 = vsub.s32 %v1308, %v1310
    %v1312 = vrot.slane %v1296, %v1311
    %v1314 = vunpack.c.l.s4 1966171168
    %v1315 = vunpack.c.0.s8 %v1314
    %v1316 = vlaneseq
    %v1317 = vshrl.u32 %v1316, 7
    %v1318 = vsub.s32 %v1315, %v1317
    %v1319 = vrot.slane %v1297, %v1318
    %v1321 = vunpack.c.l.s4 1966171168
    %v1322 = vunpack.c.0.s8 %v1321
    %v1323 = vlaneseq
    %v1324 = vshrl.u32 %v1323, 7
    %v1325 = vsub.s32 %v1322, %v1324
    %v1326 = vrot.slane %v1298, %v1325
    %v1327 = vcombine.low %v1305, %v1312
    %v1328 = vcombine.low %v1319, %v1326
    %v1330 = vunpack.c.l.s4 1966171168
    %v1331 = vunpack.c.0.s8 %v1330
    %v1332 = vlaneseq
    %v1333 = vshrl.u32 %v1332, 7
    %v1334 = vsub.s32 %v1331, %v1333
    %v1335 = vrot.slane %v1327, %v1334
    %v1337 = vunpack.c.l.s4 1966171168
    %v1338 = vunpack.c.0.s8 %v1337
    %v1339 = vlaneseq
    %v1340 = vshrl.u32 %v1339, 7
    %v1341 = vsub.s32 %v1338, %v1340
    %v1342 = vrot.slane %v1328, %v1341
    %v1343 = vcombine.low %v1335, %v1342
    %v1344 = vcombine.low %v784, %v788
    %v1345 = vcombine.low %v792, %v796
    %v1346 = vcombine.low %v800, %v804
    %v1347 = vcombine.low %v808, %v812
    %v1349 = vunpack.c.l.s4 1966171168
    %v1350 = vunpack.c.0.s8 %v1349
    %v1351 = vlaneseq
    %v1352 = vshrl.u32 %v1351, 7
    %v1353 = vsub.s32 %v1350, %v1352
    %v1354 = vrot.slane %v1344, %v1353
    %v1356 = vunpack.c.l.s4 1966171168
    %v1357 = vunpack.c.0.s8 %v1356
    %v1358 = vlaneseq
    %v1359 = vshrl.u32 %v1358, 7
    %v1360 = vsub.s32 %v1357, %v1359
    %v1361 = vrot.slane %v1345, %v1360
    %v1363 = vunpack.c.l.s4 1966171168
    %v1364 = vunpack.c.0.s8 %v1363
    %v1365 = vlaneseq
    %v1366 = vshrl.u32 %v1365, 7
    %v1367 = vsub.s32 %v1364, %v1366
    %v1368 = vrot.slane %v1346, %v1367
    %v1370 = vunpack.c.l.s4 1966171168
    %v1371 = vunpack.c.0.s8 %v1370
    %v1372 = vlaneseq
    %v1373 = vshrl.u32 %v1372, 7
    %v1374 = vsub.s32 %v1371, %v1373
    %v1375 = vrot.slane %v1347, %v1374
    %v1376 = vcombine.low %v1354, %v1361
    %v1377 = vcombine.low %v1368, %v1375
    %v1379 = vunpack.c.l.s4 1966171168
    %v1380 = vunpack.c.0.s8 %v1379
    %v1381 = vlaneseq
    %v1382 = vshrl.u32 %v1381, 7
    %v1383 = vsub.s32 %v1380, %v1382
    %v1384 = vrot.slane %v1376, %v1383
    %v1386 = vunpack.c.l.s4 1966171168
    %v1387 = vunpack.c.0.s8 %v1386
    %v1388 = vlaneseq
    %v1389 = vshrl.u32 %v1388, 7
    %v1390 = vsub.s32 %v1387, %v1389
    %v1391 = vrot.slane %v1377, %v1390
    %v1392 = vcombine.low %v1384, %v1391
    %v1393 = vcombine.low %v816, %v820
    %v1394 = vcombine.low %v824, %v828
    %v1395 = vcombine.low %v832, %v836
    %v1396 = vcombine.low %v840, %v844
    %v1398 = vunpack.c.l.s4 1966171168
    %v1399 = vunpack.c.0.s8 %v1398
    %v1400 = vlaneseq
    %v1401 = vshrl.u32 %v1400, 7
    %v1402 = vsub.s32 %v1399, %v1401
    %v1403 = vrot.slane %v1393, %v1402
    %v1405 = vunpack.c.l.s4 1966171168
    %v1406 = vunpack.c.0.s8 %v1405
    %v1407 = vlaneseq
    %v1408 = vshrl.u32 %v1407, 7
    %v1409 = vsub.s32 %v1406, %v1408
    %v1410 = vrot.slane %v1394, %v1409
    %v1412 = vunpack.c.l.s4 1966171168
    %v1413 = vunpack.c.0.s8 %v1412
    %v1414 = vlaneseq
    %v1415 = vshrl.u32 %v1414, 7
    %v1416 = vsub.s32 %v1413, %v1415
    %v1417 = vrot.slane %v1395, %v1416
    %v1419 = vunpack.c.l.s4 1966171168
    %v1420 = vunpack.c.0.s8 %v1419
    %v1421 = vlaneseq
    %v1422 = vshrl.u32 %v1421, 7
    %v1423 = vsub.s32 %v1420, %v1422
    %v1424 = vrot.slane %v1396, %v1423
    %v1425 = vcombine.low %v1403, %v1410
    %v1426 = vcombine.low %v1417, %v1424
    %v1428 = vunpack.c.l.s4 1966171168
    %v1429 = vunpack.c.0.s8 %v1428
    %v1430 = vlaneseq
    %v1431 = vshrl.u32 %v1430, 7
    %v1432 = vsub.s32 %v1429, %v1431
    %v1433 = vrot.slane %v1425, %v1432
    %v1435 = vunpack.c.l.s4 1966171168
    %v1436 = vunpack.c.0.s8 %v1435
    %v1437 = vlaneseq
    %v1438 = vshrl.u32 %v1437, 7
    %v1439 = vsub.s32 %v1436, %v1438
    %v1440 = vrot.slane %v1426, %v1439
    %v1441 = vcombine.low %v1433, %v1440
    %v1442 = vcombine.low %v848, %v852
    %v1443 = vcombine.low %v856, %v860
    %v1444 = vcombine.low %v864, %v868
    %v1445 = vcombine.low %v872, %v876
    %v1447 = vunpack.c.l.s4 1966171168
    %v1448 = vunpack.c.0.s8 %v1447
    %v1449 = vlaneseq
    %v1450 = vshrl.u32 %v1449, 7
    %v1451 = vsub.s32 %v1448, %v1450
    %v1452 = vrot.slane %v1442, %v1451
    %v1454 = vunpack.c.l.s4 1966171168
    %v1455 = vunpack.c.0.s8 %v1454
    %v1456 = vlaneseq
    %v1457 = vshrl.u32 %v1456, 7
    %v1458 = vsub.s32 %v1455, %v1457
    %v1459 = vrot.slane %v1443, %v1458
    %v1461 = vunpack.c.l.s4 1966171168
    %v1462 = vunpack.c.0.s8 %v1461
    %v1463 = vlaneseq
    %v1464 = vshrl.u32 %v1463, 7
    %v1465 = vsub.s32 %v1462, %v1464
    %v1466 = vrot.slane %v1444, %v1465
    %v1468 = vunpack.c.l.s4 1966171168
    %v1469 = vunpack.c.0.s8 %v1468
    %v1470 = vlaneseq
    %v1471 = vshrl.u32 %v1470, 7
    %v1472 = vsub.s32 %v1469, %v1471
    %v1473 = vrot.slane %v1445, %v1472
    %v1474 = vcombine.low %v1452, %v1459
    %v1475 = vcombine.low %v1466, %v1473
    %v1477 = vunpack.c.l.s4 1966171168
    %v1478 = vunpack.c.0.s8 %v1477
    %v1479 = vlaneseq
    %v1480 = vshrl.u32 %v1479, 7
    %v1481 = vsub.s32 %v1478, %v1480
    %v1482 = vrot.slane %v1474, %v1481
    %v1484 = vunpack.c.l.s4 1966171168
    %v1485 = vunpack.c.0.s8 %v1484
    %v1486 = vlaneseq
    %v1487 = vshrl.u32 %v1486, 7
    %v1488 = vsub.s32 %v1485, %v1487
    %v1489 = vrot.slane %v1475, %v1488
    %v1490 = vcombine.low %v1482, %v1489
    %v1491 = vcombine.low %v880, %v884
    %v1492 = vcombine.low %v888, %v892
    %v1493 = vcombine.low %v896, %v900
    %v1494 = vcombine.low %v904, %v908
    %v1496 = vunpack.c.l.s4 1966171168
    %v1497 = vunpack.c.0.s8 %v1496
    %v1498 = vlaneseq
    %v1499 = vshrl.u32 %v1498, 7
    %v1500 = vsub.s32 %v1497, %v1499
    %v1501 = vrot.slane %v1491, %v1500
    %v1503 = vunpack.c.l.s4 1966171168
    %v1504 = vunpack.c.0.s8 %v1503
    %v1505 = vlaneseq
    %v1506 = vshrl.u32 %v1505, 7
    %v1507 = vsub.s32 %v1504, %v1506
    %v1508 = vrot.slane %v1492, %v1507
    %v1510 = vunpack.c.l.s4 1966171168
    %v1511 = vunpack.c.0.s8 %v1510
    %v1512 = vlaneseq
    %v1513 = vshrl.u32 %v1512, 7
    %v1514 = vsub.s32 %v1511, %v1513
    %v1515 = vrot.slane %v1493, %v1514
    %v1517 = vunpack.c.l.s4 1966171168
    %v1518 = vunpack.c.0.s8 %v1517
    %v1519 = vlaneseq
    %v1520 = vshrl.u32 %v1519, 7
    %v1521 = vsub.s32 %v1518, %v1520
    %v1522 = vrot.slane %v1494, %v1521
    %v1523 = vcombine.low %v1501, %v1508
    %v1524 = vcombine.low %v1515, %v1522
    %v1526 = vunpack.c.l.s4 1966171168
    %v1527 = vunpack.c.0.s8 %v1526
    %v1528 = vlaneseq
    %v1529 = vshrl.u32 %v1528, 7
    %v1530 = vsub.s32 %v1527, %v1529
    %v1531 = vrot.slane %v1523, %v1530
    %v1533 = vunpack.c.l.s4 1966171168
    %v1534 = vunpack.c.0.s8 %v1533
    %v1535 = vlaneseq
    %v1536 = vshrl.u32 %v1535, 7
    %v1537 = vsub.s32 %v1534, %v1536
    %v1538 = vrot.slane %v1524, %v1537
    %v1539 = vcombine.low %v1531, %v1538
    %v1540 = vcombine.low %v912, %v916
    %v1541 = vcombine.low %v920, %v924
    %v1542 = vcombine.low %v928, %v932
    %v1543 = vcombine.low %v936, %v940
    %v1545 = vunpack.c.l.s4 1966171168
    %v1546 = vunpack.c.0.s8 %v1545
    %v1547 = vlaneseq
    %v1548 = vshrl.u32 %v1547, 7
    %v1549 = vsub.s32 %v1546, %v1548
    %v1550 = vrot.slane %v1540, %v1549
    %v1552 = vunpack.c.l.s4 1966171168
    %v1553 = vunpack.c.0.s8 %v1552
    %v1554 = vlaneseq
    %v1555 = vshrl.u32 %v1554, 7
    %v1556 = vsub.s32 %v1553, %v1555
    %v1557 = vrot.slane %v1541, %v1556
    %v1559 = vunpack.c.l.s4 1966171168
    %v1560 = vunpack.c.0.s8 %v1559
    %v1561 = vlaneseq
    %v1562 = vshrl.u32 %v1561, 7
    %v1563 = vsub.s32 %v1560, %v1562
    %v1564 = vrot.slane %v1542, %v1563
    %v1566 = vunpack.c.l.s4 1966171168
    %v1567 = vunpack.c.0.s8 %v1566
    %v1568 = vlaneseq
    %v1569 = vshrl.u32 %v1568, 7
    %v1570 = vsub.s32 %v1567, %v1569
    %v1571 = vrot.slane %v1543, %v1570
    %v1572 = vcombine.low %v1550, %v1557
    %v1573 = vcombine.low %v1564, %v1571
    %v1575 = vunpack.c.l.s4 1966171168
    %v1576 = vunpack.c.0.s8 %v1575
    %v1577 = vlaneseq
    %v1578 = vshrl.u32 %v1577, 7
    %v1579 = vsub.s32 %v1576, %v1578
    %v1580 = vrot.slane %v1572, %v1579
    %v1582 = vunpack.c.l.s4 1966171168
    %v1583 = vunpack.c.0.s8 %v1582
    %v1584 = vlaneseq
    %v1585 = vshrl.u32 %v1584, 7
    %v1586 = vsub.s32 %v1583, %v1585
    %v1587 = vrot.slane %v1573, %v1586
    %v1588 = vcombine.low %v1580, %v1587
    %v1589 = vcombine.low %v944, %v948
    %v1590 = vcombine.low %v952, %v956
    %v1591 = vcombine.low %v960, %v964
    %v1592 = vcombine.low %v968, %v972
    %v1594 = vunpack.c.l.s4 1966171168
    %v1595 = vunpack.c.0.s8 %v1594
    %v1596 = vlaneseq
    %v1597 = vshrl.u32 %v1596, 7
    %v1598 = vsub.s32 %v1595, %v1597
    %v1599 = vrot.slane %v1589, %v1598
    %v1601 = vunpack.c.l.s4 1966171168
    %v1602 = vunpack.c.0.s8 %v1601
    %v1603 = vlaneseq
    %v1604 = vshrl.u32 %v1603, 7
    %v1605 = vsub.s32 %v1602, %v1604
    %v1606 = vrot.slane %v1590, %v1605
    %v1608 = vunpack.c.l.s4 1966171168
    %v1609 = vunpack.c.0.s8 %v1608
    %v1610 = vlaneseq
    %v1611 = vshrl.u32 %v1610, 7
    %v1612 = vsub.s32 %v1609, %v1611
    %v1613 = vrot.slane %v1591, %v1612
    %v1615 = vunpack.c.l.s4 1966171168
    %v1616 = vunpack.c.0.s8 %v1615
    %v1617 = vlaneseq
    %v1618 = vshrl.u32 %v1617, 7
    %v1619 = vsub.s32 %v1616, %v1618
    %v1620 = vrot.slane %v1592, %v1619
    %v1621 = vcombine.low %v1599, %v1606
    %v1622 = vcombine.low %v1613, %v1620
    %v1624 = vunpack.c.l.s4 1966171168
    %v1625 = vunpack.c.0.s8 %v1624
    %v1626 = vlaneseq
    %v1627 = vshrl.u32 %v1626, 7
    %v1628 = vsub.s32 %v1625, %v1627
    %v1629 = vrot.slane %v1621, %v1628
    %v1631 = vunpack.c.l.s4 1966171168
    %v1632 = vunpack.c.0.s8 %v1631
    %v1633 = vlaneseq
    %v1634 = vshrl.u32 %v1633, 7
    %v1635 = vsub.s32 %v1632, %v1634
    %v1636 = vrot.slane %v1622, %v1635
    %v1637 = vcombine.low %v1629, %v1636
    %v1638 = vcombine.low %v976, %v980
    %v1639 = vcombine.low %v984, %v988
    %v1640 = vcombine.low %v992, %v996
    %v1641 = vcombine.low %v1000, %v1004
    %v1643 = vunpack.c.l.s4 1966171168
    %v1644 = vunpack.c.0.s8 %v1643
    %v1645 = vlaneseq
    %v1646 = vshrl.u32 %v1645, 7
    %v1647 = vsub.s32 %v1644, %v1646
    %v1648 = vrot.slane %v1638, %v1647
    %v1650 = vunpack.c.l.s4 1966171168
    %v1651 = vunpack.c.0.s8 %v1650
    %v1652 = vlaneseq
    %v1653 = vshrl.u32 %v1652, 7
    %v1654 = vsub.s32 %v1651, %v1653
    %v1655 = vrot.slane %v1639, %v1654
    %v1657 = vunpack.c.l.s4 1966171168
    %v1658 = vunpack.c.0.s8 %v1657
    %v1659 = vlaneseq
    %v1660 = vshrl.u32 %v1659, 7
    %v1661 = vsub.s32 %v1658, %v1660
    %v1662 = vrot.slane %v1640, %v1661
    %v1664 = vunpack.c.l.s4 1966171168
    %v1665 = vunpack.c.0.s8 %v1664
    %v1666 = vlaneseq
    %v1667 = vshrl.u32 %v1666, 7
    %v1668 = vsub.s32 %v1665, %v1667
    %v1669 = vrot.slane %v1641, %v1668
    %v1670 = vcombine.low %v1648, %v1655
    %v1671 = vcombine.low %v1662, %v1669
    %v1673 = vunpack.c.l.s4 1966171168
    %v1674 = vunpack.c.0.s8 %v1673
    %v1675 = vlaneseq
    %v1676 = vshrl.u32 %v1675, 7
    %v1677 = vsub.s32 %v1674, %v1676
    %v1678 = vrot.slane %v1670, %v1677
    %v1680 = vunpack.c.l.s4 1966171168
    %v1681 = vunpack.c.0.s8 %v1680
    %v1682 = vlaneseq
    %v1683 = vshrl.u32 %v1682, 7
    %v1684 = vsub.s32 %v1681, %v1683
    %v1685 = vrot.slane %v1671, %v1684
    %v1686 = vcombine.low %v1678, %v1685
    %v1687 = vcombine.low %v1008, %v1012
    %v1688 = vcombine.low %v1016, %v1020
    %v1689 = vcombine.low %v1024, %v1028
    %v1690 = vcombine.low %v1032, %v1036
    %v1692 = vunpack.c.l.s4 1966171168
    %v1693 = vunpack.c.0.s8 %v1692
    %v1694 = vlaneseq
    %v1695 = vshrl.u32 %v1694, 7
    %v1696 = vsub.s32 %v1693, %v1695
    %v1697 = vrot.slane %v1687, %v1696
    %v1699 = vunpack.c.l.s4 1966171168
    %v1700 = vunpack.c.0.s8 %v1699
    %v1701 = vlaneseq
    %v1702 = vshrl.u32 %v1701, 7
    %v1703 = vsub.s32 %v1700, %v1702
    %v1704 = vrot.slane %v1688, %v1703
    %v1706 = vunpack.c.l.s4 1966171168
    %v1707 = vunpack.c.0.s8 %v1706
    %v1708 = vlaneseq
    %v1709 = vshrl.u32 %v1708, 7
    %v1710 = vsub.s32 %v1707, %v1709
    %v1711 = vrot.slane %v1689, %v1710
    %v1713 = vunpack.c.l.s4 1966171168
    %v1714 = vunpack.c.0.s8 %v1713
    %v1715 = vlaneseq
    %v1716 = vshrl.u32 %v1715, 7
    %v1717 = vsub.s32 %v1714, %v1716
    %v1718 = vrot.slane %v1690, %v1717
    %v1719 = vcombine.low %v1697, %v1704
    %v1720 = vcombine.low %v1711, %v1718
    %v1722 = vunpack.c.l.s4 1966171168
    %v1723 = vunpack.c.0.s8 %v1722
    %v1724 = vlaneseq
    %v1725 = vshrl.u32 %v1724, 7
    %v1726 = vsub.s32 %v1723, %v1725
    %v1727 = vrot.slane %v1719, %v1726
    %v1729 = vunpack.c.l.s4 1966171168
    %v1730 = vunpack.c.0.s8 %v1729
    %v1731 = vlaneseq
    %v1732 = vshrl.u32 %v1731, 7
    %v1733 = vsub.s32 %v1730, %v1732
    %v1734 = vrot.slane %v1720, %v1733
    %v1735 = vcombine.low %v1727, %v1734
    %v1736 = vcombine.low %v1040, %v1044
    %v1737 = vcombine.low %v1048, %v1052
    %v1738 = vcombine.low %v1056, %v1060
    %v1739 = vcombine.low %v1064, %v1068
    %v1741 = vunpack.c.l.s4 1966171168
    %v1742 = vunpack.c.0.s8 %v1741
    %v1743 = vlaneseq
    %v1744 = vshrl.u32 %v1743, 7
    %v1745 = vsub.s32 %v1742, %v1744
    %v1746 = vrot.slane %v1736, %v1745
    %v1748 = vunpack.c.l.s4 1966171168
    %v1749 = vunpack.c.0.s8 %v1748
    %v1750 = vlaneseq
    %v1751 = vshrl.u32 %v1750, 7
    %v1752 = vsub.s32 %v1749, %v1751
    %v1753 = vrot.slane %v1737, %v1752
    %v1755 = vunpack.c.l.s4 1966171168
    %v1756 = vunpack.c.0.s8 %v1755
    %v1757 = vlaneseq
    %v1758 = vshrl.u32 %v1757, 7
    %v1759 = vsub.s32 %v1756, %v1758
    %v1760 = vrot.slane %v1738, %v1759
    %v1762 = vunpack.c.l.s4 1966171168
    %v1763 = vunpack.c.0.s8 %v1762
    %v1764 = vlaneseq
    %v1765 = vshrl.u32 %v1764, 7
    %v1766 = vsub.s32 %v1763, %v1765
    %v1767 = vrot.slane %v1739, %v1766
    %v1768 = vcombine.low %v1746, %v1753
    %v1769 = vcombine.low %v1760, %v1767
    %v1771 = vunpack.c.l.s4 1966171168
    %v1772 = vunpack.c.0.s8 %v1771
    %v1773 = vlaneseq
    %v1774 = vshrl.u32 %v1773, 7
    %v1775 = vsub.s32 %v1772, %v1774
    %v1776 = vrot.slane %v1768, %v1775
    %v1778 = vunpack.c.l.s4 1966171168
    %v1779 = vunpack.c.0.s8 %v1778
    %v1780 = vlaneseq
    %v1781 = vshrl.u32 %v1780, 7
    %v1782 = vsub.s32 %v1779, %v1781
    %v1783 = vrot.slane %v1769, %v1782
    %v1784 = vcombine.low %v1776, %v1783
    %v1785 = vcombine.low %v1072, %v1076
    %v1786 = vcombine.low %v1080, %v1084
    %v1787 = vcombine.low %v1088, %v1092
    %v1788 = vcombine.low %v1096, %v1100
    %v1790 = vunpack.c.l.s4 1966171168
    %v1791 = vunpack.c.0.s8 %v1790
    %v1792 = vlaneseq
    %v1793 = vshrl.u32 %v1792, 7
    %v1794 = vsub.s32 %v1791, %v1793
    %v1795 = vrot.slane %v1785, %v1794
    %v1797 = vunpack.c.l.s4 1966171168
    %v1798 = vunpack.c.0.s8 %v1797
    %v1799 = vlaneseq
    %v1800 = vshrl.u32 %v1799, 7
    %v1801 = vsub.s32 %v1798, %v1800
    %v1802 = vrot.slane %v1786, %v1801
    %v1804 = vunpack.c.l.s4 1966171168
    %v1805 = vunpack.c.0.s8 %v1804
    %v1806 = vlaneseq
    %v1807 = vshrl.u32 %v1806, 7
    %v1808 = vsub.s32 %v1805, %v1807
    %v1809 = vrot.slane %v1787, %v1808
    %v1811 = vunpack.c.l.s4 1966171168
    %v1812 = vunpack.c.0.s8 %v1811
    %v1813 = vlaneseq
    %v1814 = vshrl.u32 %v1813, 7
    %v1815 = vsub.s32 %v1812, %v1814
    %v1816 = vrot.slane %v1788, %v1815
    %v1817 = vcombine.low %v1795, %v1802
    %v1818 = vcombine.low %v1809, %v1816
    %v1820 = vunpack.c.l.s4 1966171168
    %v1821 = vunpack.c.0.s8 %v1820
    %v1822 = vlaneseq
    %v1823 = vshrl.u32 %v1822, 7
    %v1824 = vsub.s32 %v1821, %v1823
    %v1825 = vrot.slane %v1817, %v1824
    %v1827 = vunpack.c.l.s4 1966171168
    %v1828 = vunpack.c.0.s8 %v1827
    %v1829 = vlaneseq
    %v1830 = vshrl.u32 %v1829, 7
    %v1831 = vsub.s32 %v1828, %v1830
    %v1832 = vrot.slane %v1818, %v1831
    %v1833 = vcombine.low %v1825, %v1832
    %v1834 = vcombine.low %v1104, %v1108
    %v1835 = vcombine.low %v1112, %v1116
    %v1836 = vcombine.low %v1120, %v1124
    %v1837 = vcombine.low %v1128, %v1132
    %v1839 = vunpack.c.l.s4 1966171168
    %v1840 = vunpack.c.0.s8 %v1839
    %v1841 = vlaneseq
    %v1842 = vshrl.u32 %v1841, 7
    %v1843 = vsub.s32 %v1840, %v1842
    %v1844 = vrot.slane %v1834, %v1843
    %v1846 = vunpack.c.l.s4 1966171168
    %v1847 = vunpack.c.0.s8 %v1846
    %v1848 = vlaneseq
    %v1849 = vshrl.u32 %v1848, 7
    %v1850 = vsub.s32 %v1847, %v1849
    %v1851 = vrot.slane %v1835, %v1850
    %v1853 = vunpack.c.l.s4 1966171168
    %v1854 = vunpack.c.0.s8 %v1853
    %v1855 = vlaneseq
    %v1856 = vshrl.u32 %v1855, 7
    %v1857 = vsub.s32 %v1854, %v1856
    %v1858 = vrot.slane %v1836, %v1857
    %v1860 = vunpack.c.l.s4 1966171168
    %v1861 = vunpack.c.0.s8 %v1860
    %v1862 = vlaneseq
    %v1863 = vshrl.u32 %v1862, 7
    %v1864 = vsub.s32 %v1861, %v1863
    %v1865 = vrot.slane %v1837, %v1864
    %v1866 = vcombine.low %v1844, %v1851
    %v1867 = vcombine.low %v1858, %v1865
    %v1869 = vunpack.c.l.s4 1966171168
    %v1870 = vunpack.c.0.s8 %v1869
    %v1871 = vlaneseq
    %v1872 = vshrl.u32 %v1871, 7
    %v1873 = vsub.s32 %v1870, %v1872
    %v1874 = vrot.slane %v1866, %v1873
    %v1876 = vunpack.c.l.s4 1966171168
    %v1877 = vunpack.c.0.s8 %v1876
    %v1878 = vlaneseq
    %v1879 = vshrl.u32 %v1878, 7
    %v1880 = vsub.s32 %v1877, %v1879
    %v1881 = vrot.slane %v1867, %v1880
    %v1882 = vcombine.low %v1874, %v1881
    %v1883 = vcombine.low %v1136, %v1140
    %v1884 = vcombine.low %v1144, %v1148
    %v1885 = vcombine.low %v1152, %v1156
    %v1886 = vcombine.low %v1160, %v1164
    %v1888 = vunpack.c.l.s4 1966171168
    %v1889 = vunpack.c.0.s8 %v1888
    %v1890 = vlaneseq
    %v1891 = vshrl.u32 %v1890, 7
    %v1892 = vsub.s32 %v1889, %v1891
    %v1893 = vrot.slane %v1883, %v1892
    %v1895 = vunpack.c.l.s4 1966171168
    %v1896 = vunpack.c.0.s8 %v1895
    %v1897 = vlaneseq
    %v1898 = vshrl.u32 %v1897, 7
    %v1899 = vsub.s32 %v1896, %v1898
    %v1900 = vrot.slane %v1884, %v1899
    %v1902 = vunpack.c.l.s4 1966171168
    %v1903 = vunpack.c.0.s8 %v1902
    %v1904 = vlaneseq
    %v1905 = vshrl.u32 %v1904, 7
    %v1906 = vsub.s32 %v1903, %v1905
    %v1907 = vrot.slane %v1885, %v1906
    %v1909 = vunpack.c.l.s4 1966171168
    %v1910 = vunpack.c.0.s8 %v1909
    %v1911 = vlaneseq
    %v1912 = vshrl.u32 %v1911, 7
    %v1913 = vsub.s32 %v1910, %v1912
    %v1914 = vrot.slane %v1886, %v1913
    %v1915 = vcombine.low %v1893, %v1900
    %v1916 = vcombine.low %v1907, %v1914
    %v1918 = vunpack.c.l.s4 1966171168
    %v1919 = vunpack.c.0.s8 %v1918
    %v1920 = vlaneseq
    %v1921 = vshrl.u32 %v1920, 7
    %v1922 = vsub.s32 %v1919, %v1921
    %v1923 = vrot.slane %v1915, %v1922
    %v1925 = vunpack.c.l.s4 1966171168
    %v1926 = vunpack.c.0.s8 %v1925
    %v1927 = vlaneseq
    %v1928 = vshrl.u32 %v1927, 7
    %v1929 = vsub.s32 %v1926, %v1928
    %v1930 = vrot.slane %v1916, %v1929
    %v1931 = vcombine.low %v1923, %v1930
    %v1932 = vcombine.low %v1168, %v1172
    %v1933 = vcombine.low %v1176, %v1180
    %v1934 = vcombine.low %v1184, %v1188
    %v1935 = vcombine.low %v1192, %v1196
    %v1937 = vunpack.c.l.s4 1966171168
    %v1938 = vunpack.c.0.s8 %v1937
    %v1939 = vlaneseq
    %v1940 = vshrl.u32 %v1939, 7
    %v1941 = vsub.s32 %v1938, %v1940
    %v1942 = vrot.slane %v1932, %v1941
    %v1944 = vunpack.c.l.s4 1966171168
    %v1945 = vunpack.c.0.s8 %v1944
    %v1946 = vlaneseq
    %v1947 = vshrl.u32 %v1946, 7
    %v1948 = vsub.s32 %v1945, %v1947
    %v1949 = vrot.slane %v1933, %v1948
    %v1951 = vunpack.c.l.s4 1966171168
    %v1952 = vunpack.c.0.s8 %v1951
    %v1953 = vlaneseq
    %v1954 = vshrl.u32 %v1953, 7
    %v1955 = vsub.s32 %v1952, %v1954
    %v1956 = vrot.slane %v1934, %v1955
    %v1958 = vunpack.c.l.s4 1966171168
    %v1959 = vunpack.c.0.s8 %v1958
    %v1960 = vlaneseq
    %v1961 = vshrl.u32 %v1960, 7
    %v1962 = vsub.s32 %v1959, %v1961
    %v1963 = vrot.slane %v1935, %v1962
    %v1964 = vcombine.low %v1942, %v1949
    %v1965 = vcombine.low %v1956, %v1963
    %v1967 = vunpack.c.l.s4 1966171168
    %v1968 = vunpack.c.0.s8 %v1967
    %v1969 = vlaneseq
    %v1970 = vshrl.u32 %v1969, 7
    %v1971 = vsub.s32 %v1968, %v1970
    %v1972 = vrot.slane %v1964, %v1971
    %v1974 = vunpack.c.l.s4 1966171168
    %v1975 = vunpack.c.0.s8 %v1974
    %v1976 = vlaneseq
    %v1977 = vshrl.u32 %v1976, 7
    %v1978 = vsub.s32 %v1975, %v1977
    %v1979 = vrot.slane %v1965, %v1978
    %v1980 = vcombine.low %v1972, %v1979
    %1981 = vset.pattern.permute.xlu0 0
    %1982 = vperm.xlu0 %1981, %v1245
    %v1983 = vpop.permute.xlu0 %1982
    %1984 = vset.pattern.permute.xlu0 0
    %1985 = vperm.xlu0 %1984, %v1294
    %v1986 = vpop.permute.xlu0 %1985
    %1987 = vset.pattern.permute.xlu0 0
    %1988 = vperm.xlu0 %1987, %v1343
    %v1989 = vpop.permute.xlu0 %1988
    %1990 = vset.pattern.permute.xlu0 0
    %1991 = vperm.xlu0 %1990, %v1392
    %v1992 = vpop.permute.xlu0 %1991
    %1993 = vset.pattern.permute.xlu0 0
    %1994 = vperm.xlu0 %1993, %v1441
    %v1995 = vpop.permute.xlu0 %1994
    %1996 = vset.pattern.permute.xlu0 0
    %1997 = vperm.xlu0 %1996, %v1490
    %v1998 = vpop.permute.xlu0 %1997
    %1999 = vset.pattern.permute.xlu0 0
    %2000 = vperm.xlu0 %1999, %v1539
    %v2001 = vpop.permute.xlu0 %2000
    %2002 = vset.pattern.permute.xlu0 0
    %2003 = vperm.xlu0 %2002, %v1588
    %v2004 = vpop.permute.xlu0 %2003
    %2005 = vset.pattern.permute.xlu0 0
    %2006 = vperm.xlu0 %2005, %v1637
    %v2007 = vpop.permute.xlu0 %2006
    %2008 = vset.pattern.permute.xlu0 0
    %2009 = vperm.xlu0 %2008, %v1686
    %v2010 = vpop.permute.xlu0 %2009
    %2011 = vset.pattern.permute.xlu0 0
    %2012 = vperm.xlu0 %2011, %v1735
    %v2013 = vpop.permute.xlu0 %2012
    %2014 = vset.pattern.permute.xlu0 0
    %2015 = vperm.xlu0 %2014, %v1784
    %v2016 = vpop.permute.xlu0 %2015
    %2017 = vset.pattern.permute.xlu0 0
    %2018 = vperm.xlu0 %2017, %v1833
    %v2019 = vpop.permute.xlu0 %2018
    %2020 = vset.pattern.permute.xlu0 0
    %2021 = vperm.xlu0 %2020, %v1882
    %v2022 = vpop.permute.xlu0 %2021
    %2023 = vset.pattern.permute.xlu0 0
    %2024 = vperm.xlu0 %2023, %v1931
    %v2025 = vpop.permute.xlu0 %2024
    %2026 = vset.pattern.permute.xlu0 0
    %2027 = vperm.xlu0 %2026, %v1980
    %v2028 = vpop.permute.xlu0 %2027
    %v2029 = vlaneseq
    %v2030 = vshrl.u32 %v2029, 7
    %v2031 = vsub.s32 %v29, %v2030
    %v2032 = vrot.slane %v1983, %v2031
    %v2033 = vadd.s32 %v29, 4294967288
    %v2034 = vlaneseq
    %v2035 = vshrl.u32 %v2034, 7
    %v2036 = vsub.s32 %v2033, %v2035
    %v2037 = vrot.slane %v1986, %v2036
    %vm2038 = vcmask 130112
    %v2039 = vsel %vm2038, %v2037, %v2032
    %v2040 = vadd.s32 %v29, 4294967280
    %v2041 = vlaneseq
    %v2042 = vshrl.u32 %v2041, 7
    %v2043 = vsub.s32 %v2040, %v2042
    %v2044 = vrot.slane %v1989, %v2043
    %vm2045 = vcmask 195712
    %v2046 = vsel %vm2045, %v2044, %v2039
    %v2047 = vadd.s32 %v29, 4294967272
    %v2048 = vlaneseq
    %v2049 = vshrl.u32 %v2048, 7
    %v2050 = vsub.s32 %v2047, %v2049
    %v2051 = vrot.slane %v1992, %v2050
    %vm2052 = vcmask 261312
    %v2053 = vsel %vm2052, %v2051, %v2046
    %v2054 = vadd.s32 %v29, 4294967264
    %v2055 = vlaneseq
    %v2056 = vshrl.u32 %v2055, 7
    %v2057 = vsub.s32 %v2054, %v2056
    %v2058 = vrot.slane %v1995, %v2057
    %vm2059 = vcmask 326912
    %v2060 = vsel %vm2059, %v2058, %v2053
    %v2061 = vadd.s32 %v29, 4294967256
    %v2062 = vlaneseq
    %v2063 = vshrl.u32 %v2062, 7
    %v2064 = vsub.s32 %v2061, %v2063
    %v2065 = vrot.slane %v1998, %v2064
    %vm2066 = vcmask 392512
    %v2067 = vsel %vm2066, %v2065, %v2060
    %v2068 = vadd.s32 %v29, 4294967248
    %v2069 = vlaneseq
    %v2070 = vshrl.u32 %v2069, 7
    %v2071 = vsub.s32 %v2068, %v2070
    %v2072 = vrot.slane %v2001, %v2071
    %vm2073 = vcmask 458112
    %v2074 = vsel %vm2073, %v2072, %v2067
    %v2075 = vadd.s32 %v29, 4294967240
    %v2076 = vlaneseq
    %v2077 = vshrl.u32 %v2076, 7
    %v2078 = vsub.s32 %v2075, %v2077
    %v2079 = vrot.slane %v2004, %v2078
    %vm2080 = vcmask 523712
    %v2081 = vsel %vm2080, %v2079, %v2074
    %v2082 = vadd.s32 %v29, 4294967232
    %v2083 = vlaneseq
    %v2084 = vshrl.u32 %v2083, 7
    %v2085 = vsub.s32 %v2082, %v2084
    %v2086 = vrot.slane %v2007, %v2085
    %vm2087 = vcmask 589312
    %v2088 = vsel %vm2087, %v2086, %v2081
    %v2089 = vadd.s32 %v29, 4294967224
    %v2090 = vlaneseq
    %v2091 = vshrl.u32 %v2090, 7
    %v2092 = vsub.s32 %v2089, %v2091
    %v2093 = vrot.slane %v2010, %v2092
    %vm2094 = vcmask 654912
    %v2095 = vsel %vm2094, %v2093, %v2088
    %v2096 = vadd.s32 %v29, 4294967216
    %v2097 = vlaneseq
    %v2098 = vshrl.u32 %v2097, 7
    %v2099 = vsub.s32 %v2096, %v2098
    %v2100 = vrot.slane %v2013, %v2099
    %vm2101 = vcmask 720512
    %v2102 = vsel %vm2101, %v2100, %v2095
    %v2103 = vadd.s32 %v29, 4294967208
    %v2104 = vlaneseq
    %v2105 = vshrl.u32 %v2104, 7
    %v2106 = vsub.s32 %v2103, %v2105
    %v2107 = vrot.slane %v2016, %v2106
    %vm2108 = vcmask 786112
    %v2109 = vsel %vm2108, %v2107, %v2102
    %v2110 = vadd.s32 %v29, 4294967200
    %v2111 = vlaneseq
    %v2112 = vshrl.u32 %v2111, 7
    %v2113 = vsub.s32 %v2110, %v2112
    %v2114 = vrot.slane %v2019, %v2113
    %vm2115 = vcmask 851712
    %v2116 = vsel %vm2115, %v2114, %v2109
    %v2117 = vadd.s32 %v29, 4294967192
    %v2118 = vlaneseq
    %v2119 = vshrl.u32 %v2118, 7
    %v2120 = vsub.s32 %v2117, %v2119
    %v2121 = vrot.slane %v2022, %v2120
    %vm2122 = vcmask 917312
    %v2123 = vsel %vm2122, %v2121, %v2116
    %v2124 = vadd.s32 %v29, 4294967184
    %v2125 = vlaneseq
    %v2126 = vshrl.u32 %v2125, 7
    %v2127 = vsub.s32 %v2124, %v2126
    %v2128 = vrot.slane %v2025, %v2127
    %vm2129 = vcmask 982912
    %v2130 = vsel %vm2129, %v2128, %v2123
    %v2131 = vadd.s32 %v29, 4294967176
    %v2132 = vlaneseq
    %v2133 = vshrl.u32 %v2132, 7
    %v2134 = vsub.s32 %v2131, %v2133
    %v2135 = vrot.slane %v2028, %v2134
    %vm2136 = vcmask 1048512
    %v2137 = vsel %vm2136, %v2135, %v2130
    %v2139 = vunpack.c.l.s4 1966171168
    %v2140 = vunpack.c.0.s8 %v2139
    %v2141 = vlaneseq
    %v2142 = vshrl.u32 %v2141, 7
    %v2143 = vsub.s32 %v2140, %v2142
    %v2144 = vrot.slane %v2137, %v2143
    %v2146 = vunpack.c.l.s4 1966171168
    %v2147 = vunpack.c.0.s8 %v2146
    %v2148 = vlaneseq
    %v2149 = vshrl.u32 %v2148, 7
    %v2150 = vsub.s32 %v2147, %v2149
    %v2151 = vrot.slane %v2144, %v2150
    %v2152 = vlaneseq
    %vm2153 = vcmp.ge.s32.totalorder %v2152, 0
    %vm2154 = vcmp.lt.s32.totalorder %v2152, 128
    %vm2155 = vmand %vm2153, %vm2154
    %2156 = vst.msk [vmem:[#allocation2] sm:$0x1] %vm2155, %v2151
    %v2157 = vsub.f32 %v31, %v591
    %v2158 = vsub.f32 %v32, %v596
    %v2159 = vsub.f32 %v33, %v601
    %v2160 = vsub.f32 %v34, %v606
    %v2161 = vsub.f32 %v35, %v611
    %v2162 = vsub.f32 %v36, %v616
    %v2163 = vsub.f32 %v37, %v621
    %v2164 = vsub.f32 %v38, %v626
    %v2165 = vsub.f32 %v39, %v631
    %v2166 = vsub.f32 %v40, %v636
    %v2167 = vsub.f32 %v41, %v641
    %v2168 = vsub.f32 %v42, %v646
    %v2169 = vsub.f32 %v43, %v651
    %v2170 = vsub.f32 %v44, %v656
    %v2171 = vsub.f32 %v45, %v661
    %v2172 = vsub.f32 %v46, %v666
    %v2173 = vmul.f32 %v2157, %v2157
    %v2174 = vmul.f32 %v2158, %v2158
    %v2175 = vmul.f32 %v2159, %v2159
    %v2176 = vmul.f32 %v2160, %v2160
    %v2177 = vmul.f32 %v2161, %v2161
    %v2178 = vmul.f32 %v2162, %v2162
    %v2179 = vmul.f32 %v2163, %v2163
    %v2180 = vmul.f32 %v2164, %v2164
    %v2181 = vmul.f32 %v2165, %v2165
    %v2182 = vmul.f32 %v2166, %v2166
    %v2183 = vmul.f32 %v2167, %v2167
    %v2184 = vmul.f32 %v2168, %v2168
    %v2185 = vmul.f32 %v2169, %v2169
    %v2186 = vmul.f32 %v2170, %v2170
    %v2187 = vmul.f32 %v2171, %v2171
    %v2188 = vmul.f32 %v2172, %v2172
    %v2189 = vsel %vm47, %v2173, 0.0
    %v2190 = vsel %vm47, %v2174, 0.0
    %v2191 = vadd.f32 %v2189, %v2190
    %v2192 = vsel %vm47, %v2175, 0.0
    %v2193 = vadd.f32 %v2191, %v2192
    %v2194 = vsel %vm47, %v2176, 0.0
    %v2195 = vadd.f32 %v2193, %v2194
    %v2196 = vsel %vm47, %v2177, 0.0
    %v2197 = vadd.f32 %v2195, %v2196
    %v2198 = vsel %vm47, %v2178, 0.0
    %v2199 = vadd.f32 %v2197, %v2198
    %v2200 = vsel %vm47, %v2179, 0.0
    %v2201 = vadd.f32 %v2199, %v2200
    %v2202 = vsel %vm47, %v2180, 0.0
    %v2203 = vadd.f32 %v2201, %v2202
    %v2204 = vsel %vm47, %v2181, 0.0
    %v2205 = vadd.f32 %v2203, %v2204
    %v2206 = vsel %vm47, %v2182, 0.0
    %v2207 = vadd.f32 %v2205, %v2206
    %v2208 = vsel %vm47, %v2183, 0.0
    %v2209 = vadd.f32 %v2207, %v2208
    %v2210 = vsel %vm47, %v2184, 0.0
    %v2211 = vadd.f32 %v2209, %v2210
    %v2212 = vsel %vm47, %v2185, 0.0
    %v2213 = vadd.f32 %v2211, %v2212
    %v2214 = vsel %vm47, %v2186, 0.0
    %v2215 = vadd.f32 %v2213, %v2214
    %v2216 = vsel %vm47, %v2187, 0.0
    %v2217 = vadd.f32 %v2215, %v2216
    %v2218 = vsel %vm47, %v2188, 0.0
    %v2219 = vadd.f32 %v2217, %v2218
    %2220 = vadd.xlane.f32.xlu0 %v2219
    %v2221 = vpop.xlane.xlu0 %2220
    %v2222 = vrot.slane %v2221, 4
    %v2223 = vadd.f32 %v2221, %v2222
    %v2224 = vrot.slane %v2223, 2
    %v2225 = vadd.f32 %v2223, %v2224
    %v2226 = vrot.slane %v2225, 1
    %v2227 = vadd.f32 %v2225, %v2226
    %s2228 = vtos %v2227
    %s2229 = sadd.f32 %s2228, 0.0
    %s2230 = scalar_lea.vmem %s0, 128
    %v2231 = vld [vmem:[%s2230] sm:$0xff]
    %v2232 = vld [vmem:[%s2230 + $0x8] sm:$0xff]
    %v2233 = vld [vmem:[%s2230 + $0x10] sm:$0xff]
    %v2234 = vld [vmem:[%s2230 + $0x18] sm:$0xff]
    %v2235 = vld [vmem:[%s2230 + $0x20] sm:$0xff]
    %v2236 = vld [vmem:[%s2230 + $0x28] sm:$0xff]
    %v2237 = vld [vmem:[%s2230 + $0x30] sm:$0xff]
    %v2238 = vld [vmem:[%s2230 + $0x38] sm:$0xff]
    %v2239 = vld [vmem:[%s2230 + $0x40] sm:$0xff]
    %v2240 = vld [vmem:[%s2230 + $0x48] sm:$0xff]
    %v2241 = vld [vmem:[%s2230 + $0x50] sm:$0xff]
    %v2242 = vld [vmem:[%s2230 + $0x58] sm:$0xff]
    %v2243 = vld [vmem:[%s2230 + $0x60] sm:$0xff]
    %v2244 = vld [vmem:[%s2230 + $0x68] sm:$0xff]
    %v2245 = vld [vmem:[%s2230 + $0x70] sm:$0xff]
    %v2246 = vld [vmem:[%s2230 + $0x78] sm:$0xff]
    %v2248 = vsel %vm47, %v2231, 0
    %v2251 = vsel %vm47, %v2232, 0
    %v2254 = vsel %vm47, %v2233, 0
    %v2257 = vsel %vm47, %v2234, 0
    %v2260 = vsel %vm47, %v2235, 0
    %v2263 = vsel %vm47, %v2236, 0
    %v2266 = vsel %vm47, %v2237, 0
    %v2269 = vsel %vm47, %v2238, 0
    %v2272 = vsel %vm47, %v2239, 0
    %v2275 = vsel %vm47, %v2240, 0
    %v2278 = vsel %vm47, %v2241, 0
    %v2281 = vsel %vm47, %v2242, 0
    %v2284 = vsel %vm47, %v2243, 0
    %v2287 = vsel %vm47, %v2244, 0
    %v2290 = vsel %vm47, %v2245, 0
    %v2293 = vsel %vm47, %v2246, 0
    %2295 = vmatprep.subr.mxu0 %v20
    %2296 = vmatpush1.msra.mxu0 %v19
    %2297 = vmatprep.subr.mxu0 %v22
    %2298 = vmatpush1.msra.mxu0 %v21
    %2299 = vmatprep.subr.mxu0 %v24
    %2300 = vmatpush1.msra.mxu0 %v23
    %2301 = vmatprep.subr.mxu0 %v26
    %2302 = vmatpush1.msra.mxu0 %v25
    %2303 = vmatprep.subr.mxu0 0.0
    %2304 = vmatpush1.msra.mxu0 0.0
    %2305 = vmatprep.subr.mxu0 0.0
    %2306 = vmatpush1.msra.mxu0 0.0
    %2307 = vmatprep.subr.mxu0 0.0
    %2308 = vmatpush1.msra.mxu0 0.0
    %2309 = vmatprep.subr.mxu0 0.0
    %2310 = vmatpush1.msra.mxu0 0.0
    %2311 = vmatprep.subr.mxu0 0.0
    %2312 = vmatpush1.msra.mxu0 0.0
    %2313 = vmatprep.subr.mxu0 0.0
    %2314 = vmatpush1.msra.mxu0 0.0
    %2315 = vmatprep.subr.mxu0 0.0
    %2316 = vmatpush1.msra.mxu0 0.0
    %2317 = vmatprep.subr.mxu0 0.0
    %2318 = vmatpush1.msra.mxu0 0.0
    %2319 = vmatprep.subr.mxu0 0.0
    %2320 = vmatpush1.msra.mxu0 0.0
    %2321 = vmatprep.subr.mxu0 0.0
    %2322 = vmatpush1.msra.mxu0 0.0
    %2323 = vmatprep.subr.mxu0 0.0
    %2324 = vmatpush1.msra.mxu0 0.0
    %2325 = vmatprep.subr.mxu0 0.0
    %2326 = vmatpush1.msra.mxu0 0.0
    %2327 = vmatprep.subr.mxu0 0.0
    %2328 = vmatpush1.msra.mxu0 0.0
    %2329 = vmatprep.subr.mxu0 0.0
    %2330 = vmatpush1.msra.mxu0 0.0
    %2331 = vmatprep.subr.mxu0 0.0
    %2332 = vmatpush1.msra.mxu0 0.0
    %2333 = vmatprep.subr.mxu0 0.0
    %2334 = vmatpush1.msra.mxu0 0.0
    %2335 = vmatprep.subr.mxu0 0.0
    %2336 = vmatpush1.msra.mxu0 0.0
    %2337 = vmatprep.subr.mxu0 0.0
    %2338 = vmatpush1.msra.mxu0 0.0
    %2339 = vmatprep.subr.mxu0 0.0
    %2340 = vmatpush1.msra.mxu0 0.0
    %2341 = vmatprep.subr.mxu0 0.0
    %2342 = vmatpush1.msra.mxu0 0.0
    %2343 = vmatprep.subr.mxu0 0.0
    %2344 = vmatpush1.msra.mxu0 0.0
    %2345 = vmatprep.subr.mxu0 0.0
    %2346 = vmatpush1.msra.mxu0 0.0
    %2347 = vmatprep.subr.mxu0 0.0
    %2348 = vmatpush1.msra.mxu0 0.0
    %2349 = vmatprep.subr.mxu0 0.0
    %2350 = vmatpush1.msra.mxu0 0.0
    %2351 = vmatprep.subr.mxu0 0.0
    %2352 = vmatpush1.msra.mxu0 0.0
    %2353 = vmatprep.subr.mxu0 0.0
    %2354 = vmatpush1.msra.mxu0 0.0
    %2355 = vmatprep.subr.mxu0 0.0
    %2356 = vmatpush1.msra.mxu0 0.0
    %2357 = vmatprep.subr.mxu0 0.0
    %2358 = vmatpush1.msra.mxu0 0.0
    %2359 = vmatprep.mubr.f32.mxu0 0.0
    %2360 = vmatmul.mubr.f32.gmra.mrb[0].mxu0 %v2248
    %v2361 = vpop.f32.mrb[0].mxu0
    %v2362 = vadd.f32 0.0, %v2361
    %v2363 = vpop.f32.mrb[0].mxu0
    %v2364 = vadd.f32 0.0, %v2363
    %2365 = vmatprep.mubr.f32.mxu0 0.0
    %2366 = vmatmul.mubr.f32.gmra.mrb[0].mxu0 %v2251
    %v2367 = vpop.f32.mrb[0].mxu0
    %v2368 = vadd.f32 0.0, %v2367
    %v2369 = vpop.f32.mrb[0].mxu0
    %v2370 = vadd.f32 0.0, %v2369
    %2371 = vmatprep.mubr.f32.mxu0 0.0
    %2372 = vmatmul.mubr.f32.gmra.mrb[0].mxu0 %v2254
    %v2373 = vpop.f32.mrb[0].mxu0
    %v2374 = vadd.f32 0.0, %v2373
    %v2375 = vpop.f32.mrb[0].mxu0
    %v2376 = vadd.f32 0.0, %v2375
    %2377 = vmatprep.mubr.f32.mxu0 0.0
    %2378 = vmatmul.mubr.f32.gmra.mrb[0].mxu0 %v2257
    %v2379 = vpop.f32.mrb[0].mxu0
    %v2380 = vadd.f32 0.0, %v2379
    %v2381 = vpop.f32.mrb[0].mxu0
    %v2382 = vadd.f32 0.0, %v2381
    %2383 = vmatprep.mubr.f32.mxu0 0.0
    %2384 = vmatmul.mubr.f32.gmra.mrb[0].mxu0 %v2260
    %v2385 = vpop.f32.mrb[0].mxu0
    %v2386 = vadd.f32 0.0, %v2385
    %v2387 = vpop.f32.mrb[0].mxu0
    %v2388 = vadd.f32 0.0, %v2387
    %2389 = vmatprep.mubr.f32.mxu0 0.0
    %2390 = vmatmul.mubr.f32.gmra.mrb[0].mxu0 %v2263
    %v2391 = vpop.f32.mrb[0].mxu0
    %v2392 = vadd.f32 0.0, %v2391
    %v2393 = vpop.f32.mrb[0].mxu0
    %v2394 = vadd.f32 0.0, %v2393
    %2395 = vmatprep.mubr.f32.mxu0 0.0
    %2396 = vmatmul.mubr.f32.gmra.mrb[0].mxu0 %v2266
    %v2397 = vpop.f32.mrb[0].mxu0
    %v2398 = vadd.f32 0.0, %v2397
    %v2399 = vpop.f32.mrb[0].mxu0
    %v2400 = vadd.f32 0.0, %v2399
    %2401 = vmatprep.mubr.f32.mxu0 0.0
    %2402 = vmatmul.mubr.f32.gmra.mrb[0].mxu0 %v2269
    %v2403 = vpop.f32.mrb[0].mxu0
    %v2404 = vadd.f32 0.0, %v2403
    %v2405 = vpop.f32.mrb[0].mxu0
    %v2406 = vadd.f32 0.0, %v2405
    %2407 = vmatprep.mubr.f32.mxu0 0.0
    %2408 = vmatmul.mubr.f32.gmra.mrb[0].mxu0 %v2272
    %v2409 = vpop.f32.mrb[0].mxu0
    %v2410 = vadd.f32 0.0, %v2409
    %v2411 = vpop.f32.mrb[0].mxu0
    %v2412 = vadd.f32 0.0, %v2411
    %2413 = vmatprep.mubr.f32.mxu0 0.0
    %2414 = vmatmul.mubr.f32.gmra.mrb[0].mxu0 %v2275
    %v2415 = vpop.f32.mrb[0].mxu0
    %v2416 = vadd.f32 0.0, %v2415
    %v2417 = vpop.f32.mrb[0].mxu0
    %v2418 = vadd.f32 0.0, %v2417
    %2419 = vmatprep.mubr.f32.mxu0 0.0
    %2420 = vmatmul.mubr.f32.gmra.mrb[0].mxu0 %v2278
    %v2421 = vpop.f32.mrb[0].mxu0
    %v2422 = vadd.f32 0.0, %v2421
    %v2423 = vpop.f32.mrb[0].mxu0
    %v2424 = vadd.f32 0.0, %v2423
    %2425 = vmatprep.mubr.f32.mxu0 0.0
    %2426 = vmatmul.mubr.f32.gmra.mrb[0].mxu0 %v2281
    %v2427 = vpop.f32.mrb[0].mxu0
    %v2428 = vadd.f32 0.0, %v2427
    %v2429 = vpop.f32.mrb[0].mxu0
    %v2430 = vadd.f32 0.0, %v2429
    %2431 = vmatprep.mubr.f32.mxu0 0.0
    %2432 = vmatmul.mubr.f32.gmra.mrb[0].mxu0 %v2284
    %v2433 = vpop.f32.mrb[0].mxu0
    %v2434 = vadd.f32 0.0, %v2433
    %v2435 = vpop.f32.mrb[0].mxu0
    %v2436 = vadd.f32 0.0, %v2435
    %2437 = vmatprep.mubr.f32.mxu0 0.0
    %2438 = vmatmul.mubr.f32.gmra.mrb[0].mxu0 %v2287
    %v2439 = vpop.f32.mrb[0].mxu0
    %v2440 = vadd.f32 0.0, %v2439
    %v2441 = vpop.f32.mrb[0].mxu0
    %v2442 = vadd.f32 0.0, %v2441
    %2443 = vmatprep.mubr.f32.mxu0 0.0
    %2444 = vmatmul.mubr.f32.gmra.mrb[0].mxu0 %v2290
    %v2445 = vpop.f32.mrb[0].mxu0
    %v2446 = vadd.f32 0.0, %v2445
    %v2447 = vpop.f32.mrb[0].mxu0
    %v2448 = vadd.f32 0.0, %v2447
    %2449 = vmatprep.mubr.f32.mxu0 0.0
    %2450 = vmatmul.mubr.f32.gmra.mrb[0].mxu0 %v2293
    %v2451 = vpop.f32.mrb[0].mxu0
    %v2452 = vadd.f32 0.0, %v2451
    %v2453 = vpop.f32.mrb[0].mxu0
    %v2454 = vadd.f32 0.0, %v2453
    %2455 = vdwg.mxu0
    %v2456 = vsub.f32 %v261, %v2362
    %v2457 = vsub.f32 %v265, %v2364
    %v2458 = vsub.f32 %v261, %v2368
    %v2459 = vsub.f32 %v265, %v2370
    %v2460 = vsub.f32 %v261, %v2374
    %v2461 = vsub.f32 %v265, %v2376
    %v2462 = vsub.f32 %v261, %v2380
    %v2463 = vsub.f32 %v265, %v2382
    %v2464 = vsub.f32 %v261, %v2386
    %v2465 = vsub.f32 %v265, %v2388
    %v2466 = vsub.f32 %v261, %v2392
    %v2467 = vsub.f32 %v265, %v2394
    %v2468 = vsub.f32 %v261, %v2398
    %v2469 = vsub.f32 %v265, %v2400
    %v2470 = vsub.f32 %v261, %v2404
    %v2471 = vsub.f32 %v265, %v2406
    %v2472 = vsub.f32 %v261, %v2410
    %v2473 = vsub.f32 %v265, %v2412
    %v2474 = vsub.f32 %v261, %v2416
    %v2475 = vsub.f32 %v265, %v2418
    %v2476 = vsub.f32 %v261, %v2422
    %v2477 = vsub.f32 %v265, %v2424
    %v2478 = vsub.f32 %v261, %v2428
    %v2479 = vsub.f32 %v265, %v2430
    %v2480 = vsub.f32 %v261, %v2434
    %v2481 = vsub.f32 %v265, %v2436
    %v2482 = vsub.f32 %v261, %v2440
    %v2483 = vsub.f32 %v265, %v2442
    %v2484 = vsub.f32 %v261, %v2446
    %v2485 = vsub.f32 %v265, %v2448
    %v2486 = vsub.f32 %v261, %v2452
    %v2487 = vsub.f32 %v265, %v2454
    %vm2488 = vcmp.le.f32.partialorder %v2456, %v2457
    %v2489 = vsel %vm2488, %v2456, %v2457
    %v2490 = vsel %vm2488, %v29, %v30
    %2491 = vmin.index.xlane.f32.xlu0 %v2489
    %v2492 = vpop.xlane.xlu0 %2491
    %2493 = vset.pattern.permute.xlu0 %v2492
    %2494 = vperm.xlu0 %2493, %v2490
    %v2495 = vpop.permute.xlu0 %2494
    %vm2496 = vcmp.le.f32.partialorder %v2458, %v2459
    %v2497 = vsel %vm2496, %v2458, %v2459
    %v2498 = vsel %vm2496, %v29, %v30
    %2499 = vmin.index.xlane.f32.xlu0 %v2497
    %v2500 = vpop.xlane.xlu0 %2499
    %2501 = vset.pattern.permute.xlu0 %v2500
    %2502 = vperm.xlu0 %2501, %v2498
    %v2503 = vpop.permute.xlu0 %2502
    %vm2504 = vcmp.le.f32.partialorder %v2460, %v2461
    %v2505 = vsel %vm2504, %v2460, %v2461
    %v2506 = vsel %vm2504, %v29, %v30
    %2507 = vmin.index.xlane.f32.xlu0 %v2505
    %v2508 = vpop.xlane.xlu0 %2507
    %2509 = vset.pattern.permute.xlu0 %v2508
    %2510 = vperm.xlu0 %2509, %v2506
    %v2511 = vpop.permute.xlu0 %2510
    %vm2512 = vcmp.le.f32.partialorder %v2462, %v2463
    %v2513 = vsel %vm2512, %v2462, %v2463
    %v2514 = vsel %vm2512, %v29, %v30
    %2515 = vmin.index.xlane.f32.xlu0 %v2513
    %v2516 = vpop.xlane.xlu0 %2515
    %2517 = vset.pattern.permute.xlu0 %v2516
    %2518 = vperm.xlu0 %2517, %v2514
    %v2519 = vpop.permute.xlu0 %2518
    %vm2520 = vcmp.le.f32.partialorder %v2464, %v2465
    %v2521 = vsel %vm2520, %v2464, %v2465
    %v2522 = vsel %vm2520, %v29, %v30
    %2523 = vmin.index.xlane.f32.xlu0 %v2521
    %v2524 = vpop.xlane.xlu0 %2523
    %2525 = vset.pattern.permute.xlu0 %v2524
    %2526 = vperm.xlu0 %2525, %v2522
    %v2527 = vpop.permute.xlu0 %2526
    %vm2528 = vcmp.le.f32.partialorder %v2466, %v2467
    %v2529 = vsel %vm2528, %v2466, %v2467
    %v2530 = vsel %vm2528, %v29, %v30
    %2531 = vmin.index.xlane.f32.xlu0 %v2529
    %v2532 = vpop.xlane.xlu0 %2531
    %2533 = vset.pattern.permute.xlu0 %v2532
    %2534 = vperm.xlu0 %2533, %v2530
    %v2535 = vpop.permute.xlu0 %2534
    %vm2536 = vcmp.le.f32.partialorder %v2468, %v2469
    %v2537 = vsel %vm2536, %v2468, %v2469
    %v2538 = vsel %vm2536, %v29, %v30
    %2539 = vmin.index.xlane.f32.xlu0 %v2537
    %v2540 = vpop.xlane.xlu0 %2539
    %2541 = vset.pattern.permute.xlu0 %v2540
    %2542 = vperm.xlu0 %2541, %v2538
    %v2543 = vpop.permute.xlu0 %2542
    %vm2544 = vcmp.le.f32.partialorder %v2470, %v2471
    %v2545 = vsel %vm2544, %v2470, %v2471
    %v2546 = vsel %vm2544, %v29, %v30
    %2547 = vmin.index.xlane.f32.xlu0 %v2545
    %v2548 = vpop.xlane.xlu0 %2547
    %2549 = vset.pattern.permute.xlu0 %v2548
    %2550 = vperm.xlu0 %2549, %v2546
    %v2551 = vpop.permute.xlu0 %2550
    %vm2552 = vcmp.le.f32.partialorder %v2472, %v2473
    %v2553 = vsel %vm2552, %v2472, %v2473
    %v2554 = vsel %vm2552, %v29, %v30
    %2555 = vmin.index.xlane.f32.xlu0 %v2553
    %v2556 = vpop.xlane.xlu0 %2555
    %2557 = vset.pattern.permute.xlu0 %v2556
    %2558 = vperm.xlu0 %2557, %v2554
    %v2559 = vpop.permute.xlu0 %2558
    %vm2560 = vcmp.le.f32.partialorder %v2474, %v2475
    %v2561 = vsel %vm2560, %v2474, %v2475
    %v2562 = vsel %vm2560, %v29, %v30
    %2563 = vmin.index.xlane.f32.xlu0 %v2561
    %v2564 = vpop.xlane.xlu0 %2563
    %2565 = vset.pattern.permute.xlu0 %v2564
    %2566 = vperm.xlu0 %2565, %v2562
    %v2567 = vpop.permute.xlu0 %2566
    %vm2568 = vcmp.le.f32.partialorder %v2476, %v2477
    %v2569 = vsel %vm2568, %v2476, %v2477
    %v2570 = vsel %vm2568, %v29, %v30
    %2571 = vmin.index.xlane.f32.xlu0 %v2569
    %v2572 = vpop.xlane.xlu0 %2571
    %2573 = vset.pattern.permute.xlu0 %v2572
    %2574 = vperm.xlu0 %2573, %v2570
    %v2575 = vpop.permute.xlu0 %2574
    %vm2576 = vcmp.le.f32.partialorder %v2478, %v2479
    %v2577 = vsel %vm2576, %v2478, %v2479
    %v2578 = vsel %vm2576, %v29, %v30
    %2579 = vmin.index.xlane.f32.xlu0 %v2577
    %v2580 = vpop.xlane.xlu0 %2579
    %2581 = vset.pattern.permute.xlu0 %v2580
    %2582 = vperm.xlu0 %2581, %v2578
    %v2583 = vpop.permute.xlu0 %2582
    %vm2584 = vcmp.le.f32.partialorder %v2480, %v2481
    %v2585 = vsel %vm2584, %v2480, %v2481
    %v2586 = vsel %vm2584, %v29, %v30
    %2587 = vmin.index.xlane.f32.xlu0 %v2585
    %v2588 = vpop.xlane.xlu0 %2587
    %2589 = vset.pattern.permute.xlu0 %v2588
    %2590 = vperm.xlu0 %2589, %v2586
    %v2591 = vpop.permute.xlu0 %2590
    %vm2592 = vcmp.le.f32.partialorder %v2482, %v2483
    %v2593 = vsel %vm2592, %v2482, %v2483
    %v2594 = vsel %vm2592, %v29, %v30
    %2595 = vmin.index.xlane.f32.xlu0 %v2593
    %v2596 = vpop.xlane.xlu0 %2595
    %2597 = vset.pattern.permute.xlu0 %v2596
    %2598 = vperm.xlu0 %2597, %v2594
    %v2599 = vpop.permute.xlu0 %2598
    %vm2600 = vcmp.le.f32.partialorder %v2484, %v2485
    %v2601 = vsel %vm2600, %v2484, %v2485
    %v2602 = vsel %vm2600, %v29, %v30
    %2603 = vmin.index.xlane.f32.xlu0 %v2601
    %v2604 = vpop.xlane.xlu0 %2603
    %2605 = vset.pattern.permute.xlu0 %v2604
    %2606 = vperm.xlu0 %2605, %v2602
    %v2607 = vpop.permute.xlu0 %2606
    %vm2608 = vcmp.le.f32.partialorder %v2486, %v2487
    %v2609 = vsel %vm2608, %v2486, %v2487
    %v2610 = vsel %vm2608, %v29, %v30
    %2611 = vmin.index.xlane.f32.xlu0 %v2609
    %v2612 = vpop.xlane.xlu0 %2611
    %2613 = vset.pattern.permute.xlu0 %v2612
    %2614 = vperm.xlu0 %2613, %v2610
    %v2615 = vpop.permute.xlu0 %2614
    %vm2616 = vcmp.eq.s32.totalorder %v29, %v2495
    %vm2617 = vcmp.eq.s32.totalorder %v30, %v2495
    %vm2618 = vcmp.eq.s32.totalorder %v29, %v2503
    %vm2619 = vcmp.eq.s32.totalorder %v30, %v2503
    %vm2620 = vcmp.eq.s32.totalorder %v29, %v2511
    %vm2621 = vcmp.eq.s32.totalorder %v30, %v2511
    %vm2622 = vcmp.eq.s32.totalorder %v29, %v2519
    %vm2623 = vcmp.eq.s32.totalorder %v30, %v2519
    %vm2624 = vcmp.eq.s32.totalorder %v29, %v2527
    %vm2625 = vcmp.eq.s32.totalorder %v30, %v2527
    %vm2626 = vcmp.eq.s32.totalorder %v29, %v2535
    %vm2627 = vcmp.eq.s32.totalorder %v30, %v2535
    %vm2628 = vcmp.eq.s32.totalorder %v29, %v2543
    %vm2629 = vcmp.eq.s32.totalorder %v30, %v2543
    %vm2630 = vcmp.eq.s32.totalorder %v29, %v2551
    %vm2631 = vcmp.eq.s32.totalorder %v30, %v2551
    %vm2632 = vcmp.eq.s32.totalorder %v29, %v2559
    %vm2633 = vcmp.eq.s32.totalorder %v30, %v2559
    %vm2634 = vcmp.eq.s32.totalorder %v29, %v2567
    %vm2635 = vcmp.eq.s32.totalorder %v30, %v2567
    %vm2636 = vcmp.eq.s32.totalorder %v29, %v2575
    %vm2637 = vcmp.eq.s32.totalorder %v30, %v2575
    %vm2638 = vcmp.eq.s32.totalorder %v29, %v2583
    %vm2639 = vcmp.eq.s32.totalorder %v30, %v2583
    %vm2640 = vcmp.eq.s32.totalorder %v29, %v2591
    %vm2641 = vcmp.eq.s32.totalorder %v30, %v2591
    %vm2642 = vcmp.eq.s32.totalorder %v29, %v2599
    %vm2643 = vcmp.eq.s32.totalorder %v30, %v2599
    %vm2644 = vcmp.eq.s32.totalorder %v29, %v2607
    %vm2645 = vcmp.eq.s32.totalorder %v30, %v2607
    %vm2646 = vcmp.eq.s32.totalorder %v29, %v2615
    %vm2647 = vcmp.eq.s32.totalorder %v30, %v2615
    %v2648 = vsel %vm2616, 1, 0
    %v2649 = vsel %vm2617, 1, 0
    %v2650 = vsel %vm2618, 1, 0
    %v2651 = vsel %vm2619, 1, 0
    %v2652 = vsel %vm2620, 1, 0
    %v2653 = vsel %vm2621, 1, 0
    %v2654 = vsel %vm2622, 1, 0
    %v2655 = vsel %vm2623, 1, 0
    %v2656 = vsel %vm2624, 1, 0
    %v2657 = vsel %vm2625, 1, 0
    %v2658 = vsel %vm2626, 1, 0
    %v2659 = vsel %vm2627, 1, 0
    %v2660 = vsel %vm2628, 1, 0
    %v2661 = vsel %vm2629, 1, 0
    %v2662 = vsel %vm2630, 1, 0
    %v2663 = vsel %vm2631, 1, 0
    %v2664 = vsel %vm2632, 1, 0
    %v2665 = vsel %vm2633, 1, 0
    %v2666 = vsel %vm2634, 1, 0
    %v2667 = vsel %vm2635, 1, 0
    %v2668 = vsel %vm2636, 1, 0
    %v2669 = vsel %vm2637, 1, 0
    %v2670 = vsel %vm2638, 1, 0
    %v2671 = vsel %vm2639, 1, 0
    %v2672 = vsel %vm2640, 1, 0
    %v2673 = vsel %vm2641, 1, 0
    %v2674 = vsel %vm2642, 1, 0
    %v2675 = vsel %vm2643, 1, 0
    %v2676 = vsel %vm2644, 1, 0
    %v2677 = vsel %vm2645, 1, 0
    %v2678 = vsel %vm2646, 1, 0
    %v2679 = vsel %vm2647, 1, 0
    %v2680 = vcvt.s32.f32 %v2648
    %v2681 = vcvt.s32.f32 %v2649
    %v2682 = vcvt.s32.f32 %v2650
    %v2683 = vcvt.s32.f32 %v2651
    %v2684 = vcvt.s32.f32 %v2652
    %v2685 = vcvt.s32.f32 %v2653
    %v2686 = vcvt.s32.f32 %v2654
    %v2687 = vcvt.s32.f32 %v2655
    %v2688 = vcvt.s32.f32 %v2656
    %v2689 = vcvt.s32.f32 %v2657
    %v2690 = vcvt.s32.f32 %v2658
    %v2691 = vcvt.s32.f32 %v2659
    %v2692 = vcvt.s32.f32 %v2660
    %v2693 = vcvt.s32.f32 %v2661
    %v2694 = vcvt.s32.f32 %v2662
    %v2695 = vcvt.s32.f32 %v2663
    %v2696 = vcvt.s32.f32 %v2664
    %v2697 = vcvt.s32.f32 %v2665
    %v2698 = vcvt.s32.f32 %v2666
    %v2699 = vcvt.s32.f32 %v2667
    %v2700 = vcvt.s32.f32 %v2668
    %v2701 = vcvt.s32.f32 %v2669
    %v2702 = vcvt.s32.f32 %v2670
    %v2703 = vcvt.s32.f32 %v2671
    %v2704 = vcvt.s32.f32 %v2672
    %v2705 = vcvt.s32.f32 %v2673
    %v2706 = vcvt.s32.f32 %v2674
    %v2707 = vcvt.s32.f32 %v2675
    %v2708 = vcvt.s32.f32 %v2676
    %v2709 = vcvt.s32.f32 %v2677
    %v2710 = vcvt.s32.f32 %v2678
    %v2711 = vcvt.s32.f32 %v2679
    %2712 = vmatprep.subr.mxu0 %v20
    %2713 = vmatpush1.xpose.msra.mxu0 %v19
    %2714 = vmatprep.subr.mxu0 %v22
    %2715 = vmatpush1.xpose.msra.mxu0 %v21
    %2716 = vmatprep.subr.mxu0 %v24
    %2717 = vmatpush1.xpose.msra.mxu0 %v23
    %2718 = vmatprep.subr.mxu0 %v26
    %2719 = vmatpush1.xpose.msra.mxu0 %v25
    %2720 = vmatprep.subr.mxu0 0.0
    %2721 = vmatpush1.xpose.msra.mxu0 0.0
    %2722 = vmatprep.subr.mxu0 0.0
    %2723 = vmatpush1.xpose.msra.mxu0 0.0
    %2724 = vmatprep.subr.mxu0 0.0
    %2725 = vmatpush1.xpose.msra.mxu0 0.0
    %2726 = vmatprep.subr.mxu0 0.0
    %2727 = vmatpush1.xpose.msra.mxu0 0.0
    %2728 = vmatprep.subr.mxu0 0.0
    %2729 = vmatpush1.xpose.msra.mxu0 0.0
    %2730 = vmatprep.subr.mxu0 0.0
    %2731 = vmatpush1.xpose.msra.mxu0 0.0
    %2732 = vmatprep.subr.mxu0 0.0
    %2733 = vmatpush1.xpose.msra.mxu0 0.0
    %2734 = vmatprep.subr.mxu0 0.0
    %2735 = vmatpush1.xpose.msra.mxu0 0.0
    %2736 = vmatprep.subr.mxu0 0.0
    %2737 = vmatpush1.xpose.msra.mxu0 0.0
    %2738 = vmatprep.subr.mxu0 0.0
    %2739 = vmatpush1.xpose.msra.mxu0 0.0
    %2740 = vmatprep.subr.mxu0 0.0
    %2741 = vmatpush1.xpose.msra.mxu0 0.0
    %2742 = vmatprep.subr.mxu0 0.0
    %2743 = vmatpush1.xpose.msra.mxu0 0.0
    %2744 = vmatprep.subr.mxu0 0.0
    %2745 = vmatpush1.xpose.msra.mxu0 0.0
    %2746 = vmatprep.subr.mxu0 0.0
    %2747 = vmatpush1.xpose.msra.mxu0 0.0
    %2748 = vmatprep.subr.mxu0 0.0
    %2749 = vmatpush1.xpose.msra.mxu0 0.0
    %2750 = vmatprep.subr.mxu0 0.0
    %2751 = vmatpush1.xpose.msra.mxu0 0.0
    %2752 = vmatprep.subr.mxu0 0.0
    %2753 = vmatpush1.xpose.msra.mxu0 0.0
    %2754 = vmatprep.subr.mxu0 0.0
    %2755 = vmatpush1.xpose.msra.mxu0 0.0
    %2756 = vmatprep.subr.mxu0 0.0
    %2757 = vmatpush1.xpose.msra.mxu0 0.0
    %2758 = vmatprep.subr.mxu0 0.0
    %2759 = vmatpush1.xpose.msra.mxu0 0.0
    %2760 = vmatprep.subr.mxu0 0.0
    %2761 = vmatpush1.xpose.msra.mxu0 0.0
    %2762 = vmatprep.subr.mxu0 0.0
    %2763 = vmatpush1.xpose.msra.mxu0 0.0
    %2764 = vmatprep.subr.mxu0 0.0
    %2765 = vmatpush1.xpose.msra.mxu0 0.0
    %2766 = vmatprep.subr.mxu0 0.0
    %2767 = vmatpush1.xpose.msra.mxu0 0.0
    %2768 = vmatprep.subr.mxu0 0.0
    %2769 = vmatpush1.xpose.msra.mxu0 0.0
    %2770 = vmatprep.subr.mxu0 0.0
    %2771 = vmatpush1.xpose.msra.mxu0 0.0
    %2772 = vmatprep.subr.mxu0 0.0
    %2773 = vmatpush1.xpose.msra.mxu0 0.0
    %2774 = vmatprep.subr.mxu0 0.0
    %2775 = vmatpush1.xpose.msra.mxu0 0.0
    %2776 = vmatprep.mubr.f32.mxu0 %v2681
    %2777 = vmatmul.mubr.f32.gmra.mrb[0].mxu0 %v2680
    %v2778 = vpop.f32.mrb[0].mxu0
    %v2779 = vadd.f32 0.0, %v2778
    %v2780 = vpop.f32.mrb[0].mxu0
    %2781 = vmatprep.mubr.f32.mxu0 %v2683
    %2782 = vmatmul.mubr.f32.gmra.mrb[0].mxu0 %v2682
    %v2783 = vpop.f32.mrb[0].mxu0
    %v2784 = vadd.f32 0.0, %v2783
    %v2785 = vpop.f32.mrb[0].mxu0
    %2786 = vmatprep.mubr.f32.mxu0 %v2685
    %2787 = vmatmul.mubr.f32.gmra.mrb[0].mxu0 %v2684
    %v2788 = vpop.f32.mrb[0].mxu0
    %v2789 = vadd.f32 0.0, %v2788
    %v2790 = vpop.f32.mrb[0].mxu0
    %2791 = vmatprep.mubr.f32.mxu0 %v2687
    %2792 = vmatmul.mubr.f32.gmra.mrb[0].mxu0 %v2686
    %v2793 = vpop.f32.mrb[0].mxu0
    %v2794 = vadd.f32 0.0, %v2793
    %v2795 = vpop.f32.mrb[0].mxu0
    %2796 = vmatprep.mubr.f32.mxu0 %v2689
    %2797 = vmatmul.mubr.f32.gmra.mrb[0].mxu0 %v2688
    %v2798 = vpop.f32.mrb[0].mxu0
    %v2799 = vadd.f32 0.0, %v2798
    %v2800 = vpop.f32.mrb[0].mxu0
    %2801 = vmatprep.mubr.f32.mxu0 %v2691
    %2802 = vmatmul.mubr.f32.gmra.mrb[0].mxu0 %v2690
    %v2803 = vpop.f32.mrb[0].mxu0
    %v2804 = vadd.f32 0.0, %v2803
    %v2805 = vpop.f32.mrb[0].mxu0
    %2806 = vmatprep.mubr.f32.mxu0 %v2693
    %2807 = vmatmul.mubr.f32.gmra.mrb[0].mxu0 %v2692
    %v2808 = vpop.f32.mrb[0].mxu0
    %v2809 = vadd.f32 0.0, %v2808
    %v2810 = vpop.f32.mrb[0].mxu0
    %2811 = vmatprep.mubr.f32.mxu0 %v2695
    %2812 = vmatmul.mubr.f32.gmra.mrb[0].mxu0 %v2694
    %v2813 = vpop.f32.mrb[0].mxu0
    %v2814 = vadd.f32 0.0, %v2813
    %v2815 = vpop.f32.mrb[0].mxu0
    %2816 = vmatprep.mubr.f32.mxu0 %v2697
    %2817 = vmatmul.mubr.f32.gmra.mrb[0].mxu0 %v2696
    %v2818 = vpop.f32.mrb[0].mxu0
    %v2819 = vadd.f32 0.0, %v2818
    %v2820 = vpop.f32.mrb[0].mxu0
    %2821 = vmatprep.mubr.f32.mxu0 %v2699
    %2822 = vmatmul.mubr.f32.gmra.mrb[0].mxu0 %v2698
    %v2823 = vpop.f32.mrb[0].mxu0
    %v2824 = vadd.f32 0.0, %v2823
    %v2825 = vpop.f32.mrb[0].mxu0
    %2826 = vmatprep.mubr.f32.mxu0 %v2701
    %2827 = vmatmul.mubr.f32.gmra.mrb[0].mxu0 %v2700
    %v2828 = vpop.f32.mrb[0].mxu0
    %v2829 = vadd.f32 0.0, %v2828
    %v2830 = vpop.f32.mrb[0].mxu0
    %2831 = vmatprep.mubr.f32.mxu0 %v2703
    %2832 = vmatmul.mubr.f32.gmra.mrb[0].mxu0 %v2702
    %v2833 = vpop.f32.mrb[0].mxu0
    %v2834 = vadd.f32 0.0, %v2833
    %v2835 = vpop.f32.mrb[0].mxu0
    %2836 = vmatprep.mubr.f32.mxu0 %v2705
    %2837 = vmatmul.mubr.f32.gmra.mrb[0].mxu0 %v2704
    %v2838 = vpop.f32.mrb[0].mxu0
    %v2839 = vadd.f32 0.0, %v2838
    %v2840 = vpop.f32.mrb[0].mxu0
    %2841 = vmatprep.mubr.f32.mxu0 %v2707
    %2842 = vmatmul.mubr.f32.gmra.mrb[0].mxu0 %v2706
    %v2843 = vpop.f32.mrb[0].mxu0
    %v2844 = vadd.f32 0.0, %v2843
    %v2845 = vpop.f32.mrb[0].mxu0
    %2846 = vmatprep.mubr.f32.mxu0 %v2709
    %2847 = vmatmul.mubr.f32.gmra.mrb[0].mxu0 %v2708
    %v2848 = vpop.f32.mrb[0].mxu0
    %v2849 = vadd.f32 0.0, %v2848
    %v2850 = vpop.f32.mrb[0].mxu0
    %2851 = vmatprep.mubr.f32.mxu0 %v2711
    %2852 = vmatmul.mubr.f32.gmra.mrb[0].mxu0 %v2710
    %v2853 = vpop.f32.mrb[0].mxu0
    %v2854 = vadd.f32 0.0, %v2853
    %v2855 = vpop.f32.mrb[0].mxu0
    %2856 = vdwg.mxu0
    %s2857 = scalar_lea.vmem %s3, 128
    %2858 = vst.msk [vmem:[%s2857] sm:$0xff] %vm47, %v2779
    %2859 = vst.msk [vmem:[%s2857 + $0x8] sm:$0xff] %vm47, %v2784
    %2860 = vst.msk [vmem:[%s2857 + $0x10] sm:$0xff] %vm47, %v2789
    %2861 = vst.msk [vmem:[%s2857 + $0x18] sm:$0xff] %vm47, %v2794
    %2862 = vst.msk [vmem:[%s2857 + $0x20] sm:$0xff] %vm47, %v2799
    %2863 = vst.msk [vmem:[%s2857 + $0x28] sm:$0xff] %vm47, %v2804
    %2864 = vst.msk [vmem:[%s2857 + $0x30] sm:$0xff] %vm47, %v2809
    %2865 = vst.msk [vmem:[%s2857 + $0x38] sm:$0xff] %vm47, %v2814
    %2866 = vst.msk [vmem:[%s2857 + $0x40] sm:$0xff] %vm47, %v2819
    %2867 = vst.msk [vmem:[%s2857 + $0x48] sm:$0xff] %vm47, %v2824
    %2868 = vst.msk [vmem:[%s2857 + $0x50] sm:$0xff] %vm47, %v2829
    %2869 = vst.msk [vmem:[%s2857 + $0x58] sm:$0xff] %vm47, %v2834
    %2870 = vst.msk [vmem:[%s2857 + $0x60] sm:$0xff] %vm47, %v2839
    %2871 = vst.msk [vmem:[%s2857 + $0x68] sm:$0xff] %vm47, %v2844
    %2872 = vst.msk [vmem:[%s2857 + $0x70] sm:$0xff] %vm47, %v2849
    %2873 = vst.msk [vmem:[%s2857 + $0x78] sm:$0xff] %vm47, %v2854
    %v2874 = vlaneseq
    %v2875 = vshrl.u32 %v2874, 7
    %v2876 = vsub.s32 0, %v2875
    %v2877 = vrot.slane %v2495, %v2876
    %v2878 = vlaneseq
    %v2879 = vshrl.u32 %v2878, 7
    %v2880 = vsub.s32 1, %v2879
    %v2881 = vrot.slane %v2495, %v2880
    %v2882 = vlaneseq
    %v2883 = vshrl.u32 %v2882, 7
    %v2884 = vsub.s32 2, %v2883
    %v2885 = vrot.slane %v2495, %v2884
    %v2886 = vlaneseq
    %v2887 = vshrl.u32 %v2886, 7
    %v2888 = vsub.s32 3, %v2887
    %v2889 = vrot.slane %v2495, %v2888
    %v2890 = vlaneseq
    %v2891 = vshrl.u32 %v2890, 7
    %v2892 = vsub.s32 4, %v2891
    %v2893 = vrot.slane %v2495, %v2892
    %v2894 = vlaneseq
    %v2895 = vshrl.u32 %v2894, 7
    %v2896 = vsub.s32 5, %v2895
    %v2897 = vrot.slane %v2495, %v2896
    %v2898 = vlaneseq
    %v2899 = vshrl.u32 %v2898, 7
    %v2900 = vsub.s32 6, %v2899
    %v2901 = vrot.slane %v2495, %v2900
    %v2902 = vlaneseq
    %v2903 = vshrl.u32 %v2902, 7
    %v2904 = vsub.s32 7, %v2903
    %v2905 = vrot.slane %v2495, %v2904
    %v2906 = vlaneseq
    %v2907 = vshrl.u32 %v2906, 7
    %v2908 = vsub.s32 0, %v2907
    %v2909 = vrot.slane %v2503, %v2908
    %v2910 = vlaneseq
    %v2911 = vshrl.u32 %v2910, 7
    %v2912 = vsub.s32 1, %v2911
    %v2913 = vrot.slane %v2503, %v2912
    %v2914 = vlaneseq
    %v2915 = vshrl.u32 %v2914, 7
    %v2916 = vsub.s32 2, %v2915
    %v2917 = vrot.slane %v2503, %v2916
    %v2918 = vlaneseq
    %v2919 = vshrl.u32 %v2918, 7
    %v2920 = vsub.s32 3, %v2919
    %v2921 = vrot.slane %v2503, %v2920
    %v2922 = vlaneseq
    %v2923 = vshrl.u32 %v2922, 7
    %v2924 = vsub.s32 4, %v2923
    %v2925 = vrot.slane %v2503, %v2924
    %v2926 = vlaneseq
    %v2927 = vshrl.u32 %v2926, 7
    %v2928 = vsub.s32 5, %v2927
    %v2929 = vrot.slane %v2503, %v2928
    %v2930 = vlaneseq
    %v2931 = vshrl.u32 %v2930, 7
    %v2932 = vsub.s32 6, %v2931
    %v2933 = vrot.slane %v2503, %v2932
    %v2934 = vlaneseq
    %v2935 = vshrl.u32 %v2934, 7
    %v2936 = vsub.s32 7, %v2935
    %v2937 = vrot.slane %v2503, %v2936
    %v2938 = vlaneseq
    %v2939 = vshrl.u32 %v2938, 7
    %v2940 = vsub.s32 0, %v2939
    %v2941 = vrot.slane %v2511, %v2940
    %v2942 = vlaneseq
    %v2943 = vshrl.u32 %v2942, 7
    %v2944 = vsub.s32 1, %v2943
    %v2945 = vrot.slane %v2511, %v2944
    %v2946 = vlaneseq
    %v2947 = vshrl.u32 %v2946, 7
    %v2948 = vsub.s32 2, %v2947
    %v2949 = vrot.slane %v2511, %v2948
    %v2950 = vlaneseq
    %v2951 = vshrl.u32 %v2950, 7
    %v2952 = vsub.s32 3, %v2951
    %v2953 = vrot.slane %v2511, %v2952
    %v2954 = vlaneseq
    %v2955 = vshrl.u32 %v2954, 7
    %v2956 = vsub.s32 4, %v2955
    %v2957 = vrot.slane %v2511, %v2956
    %v2958 = vlaneseq
    %v2959 = vshrl.u32 %v2958, 7
    %v2960 = vsub.s32 5, %v2959
    %v2961 = vrot.slane %v2511, %v2960
    %v2962 = vlaneseq
    %v2963 = vshrl.u32 %v2962, 7
    %v2964 = vsub.s32 6, %v2963
    %v2965 = vrot.slane %v2511, %v2964
    %v2966 = vlaneseq
    %v2967 = vshrl.u32 %v2966, 7
    %v2968 = vsub.s32 7, %v2967
    %v2969 = vrot.slane %v2511, %v2968
    %v2970 = vlaneseq
    %v2971 = vshrl.u32 %v2970, 7
    %v2972 = vsub.s32 0, %v2971
    %v2973 = vrot.slane %v2519, %v2972
    %v2974 = vlaneseq
    %v2975 = vshrl.u32 %v2974, 7
    %v2976 = vsub.s32 1, %v2975
    %v2977 = vrot.slane %v2519, %v2976
    %v2978 = vlaneseq
    %v2979 = vshrl.u32 %v2978, 7
    %v2980 = vsub.s32 2, %v2979
    %v2981 = vrot.slane %v2519, %v2980
    %v2982 = vlaneseq
    %v2983 = vshrl.u32 %v2982, 7
    %v2984 = vsub.s32 3, %v2983
    %v2985 = vrot.slane %v2519, %v2984
    %v2986 = vlaneseq
    %v2987 = vshrl.u32 %v2986, 7
    %v2988 = vsub.s32 4, %v2987
    %v2989 = vrot.slane %v2519, %v2988
    %v2990 = vlaneseq
    %v2991 = vshrl.u32 %v2990, 7
    %v2992 = vsub.s32 5, %v2991
    %v2993 = vrot.slane %v2519, %v2992
    %v2994 = vlaneseq
    %v2995 = vshrl.u32 %v2994, 7
    %v2996 = vsub.s32 6, %v2995
    %v2997 = vrot.slane %v2519, %v2996
    %v2998 = vlaneseq
    %v2999 = vshrl.u32 %v2998, 7
    %v3000 = vsub.s32 7, %v2999
    %v3001 = vrot.slane %v2519, %v3000
    %v3002 = vlaneseq
    %v3003 = vshrl.u32 %v3002, 7
    %v3004 = vsub.s32 0, %v3003
    %v3005 = vrot.slane %v2527, %v3004
    %v3006 = vlaneseq
    %v3007 = vshrl.u32 %v3006, 7
    %v3008 = vsub.s32 1, %v3007
    %v3009 = vrot.slane %v2527, %v3008
    %v3010 = vlaneseq
    %v3011 = vshrl.u32 %v3010, 7
    %v3012 = vsub.s32 2, %v3011
    %v3013 = vrot.slane %v2527, %v3012
    %v3014 = vlaneseq
    %v3015 = vshrl.u32 %v3014, 7
    %v3016 = vsub.s32 3, %v3015
    %v3017 = vrot.slane %v2527, %v3016
    %v3018 = vlaneseq
    %v3019 = vshrl.u32 %v3018, 7
    %v3020 = vsub.s32 4, %v3019
    %v3021 = vrot.slane %v2527, %v3020
    %v3022 = vlaneseq
    %v3023 = vshrl.u32 %v3022, 7
    %v3024 = vsub.s32 5, %v3023
    %v3025 = vrot.slane %v2527, %v3024
    %v3026 = vlaneseq
    %v3027 = vshrl.u32 %v3026, 7
    %v3028 = vsub.s32 6, %v3027
    %v3029 = vrot.slane %v2527, %v3028
    %v3030 = vlaneseq
    %v3031 = vshrl.u32 %v3030, 7
    %v3032 = vsub.s32 7, %v3031
    %v3033 = vrot.slane %v2527, %v3032
    %v3034 = vlaneseq
    %v3035 = vshrl.u32 %v3034, 7
    %v3036 = vsub.s32 0, %v3035
    %v3037 = vrot.slane %v2535, %v3036
    %v3038 = vlaneseq
    %v3039 = vshrl.u32 %v3038, 7
    %v3040 = vsub.s32 1, %v3039
    %v3041 = vrot.slane %v2535, %v3040
    %v3042 = vlaneseq
    %v3043 = vshrl.u32 %v3042, 7
    %v3044 = vsub.s32 2, %v3043
    %v3045 = vrot.slane %v2535, %v3044
    %v3046 = vlaneseq
    %v3047 = vshrl.u32 %v3046, 7
    %v3048 = vsub.s32 3, %v3047
    %v3049 = vrot.slane %v2535, %v3048
    %v3050 = vlaneseq
    %v3051 = vshrl.u32 %v3050, 7
    %v3052 = vsub.s32 4, %v3051
    %v3053 = vrot.slane %v2535, %v3052
    %v3054 = vlaneseq
    %v3055 = vshrl.u32 %v3054, 7
    %v3056 = vsub.s32 5, %v3055
    %v3057 = vrot.slane %v2535, %v3056
    %v3058 = vlaneseq
    %v3059 = vshrl.u32 %v3058, 7
    %v3060 = vsub.s32 6, %v3059
    %v3061 = vrot.slane %v2535, %v3060
    %v3062 = vlaneseq
    %v3063 = vshrl.u32 %v3062, 7
    %v3064 = vsub.s32 7, %v3063
    %v3065 = vrot.slane %v2535, %v3064
    %v3066 = vlaneseq
    %v3067 = vshrl.u32 %v3066, 7
    %v3068 = vsub.s32 0, %v3067
    %v3069 = vrot.slane %v2543, %v3068
    %v3070 = vlaneseq
    %v3071 = vshrl.u32 %v3070, 7
    %v3072 = vsub.s32 1, %v3071
    %v3073 = vrot.slane %v2543, %v3072
    %v3074 = vlaneseq
    %v3075 = vshrl.u32 %v3074, 7
    %v3076 = vsub.s32 2, %v3075
    %v3077 = vrot.slane %v2543, %v3076
    %v3078 = vlaneseq
    %v3079 = vshrl.u32 %v3078, 7
    %v3080 = vsub.s32 3, %v3079
    %v3081 = vrot.slane %v2543, %v3080
    %v3082 = vlaneseq
    %v3083 = vshrl.u32 %v3082, 7
    %v3084 = vsub.s32 4, %v3083
    %v3085 = vrot.slane %v2543, %v3084
    %v3086 = vlaneseq
    %v3087 = vshrl.u32 %v3086, 7
    %v3088 = vsub.s32 5, %v3087
    %v3089 = vrot.slane %v2543, %v3088
    %v3090 = vlaneseq
    %v3091 = vshrl.u32 %v3090, 7
    %v3092 = vsub.s32 6, %v3091
    %v3093 = vrot.slane %v2543, %v3092
    %v3094 = vlaneseq
    %v3095 = vshrl.u32 %v3094, 7
    %v3096 = vsub.s32 7, %v3095
    %v3097 = vrot.slane %v2543, %v3096
    %v3098 = vlaneseq
    %v3099 = vshrl.u32 %v3098, 7
    %v3100 = vsub.s32 0, %v3099
    %v3101 = vrot.slane %v2551, %v3100
    %v3102 = vlaneseq
    %v3103 = vshrl.u32 %v3102, 7
    %v3104 = vsub.s32 1, %v3103
    %v3105 = vrot.slane %v2551, %v3104
    %v3106 = vlaneseq
    %v3107 = vshrl.u32 %v3106, 7
    %v3108 = vsub.s32 2, %v3107
    %v3109 = vrot.slane %v2551, %v3108
    %v3110 = vlaneseq
    %v3111 = vshrl.u32 %v3110, 7
    %v3112 = vsub.s32 3, %v3111
    %v3113 = vrot.slane %v2551, %v3112
    %v3114 = vlaneseq
    %v3115 = vshrl.u32 %v3114, 7
    %v3116 = vsub.s32 4, %v3115
    %v3117 = vrot.slane %v2551, %v3116
    %v3118 = vlaneseq
    %v3119 = vshrl.u32 %v3118, 7
    %v3120 = vsub.s32 5, %v3119
    %v3121 = vrot.slane %v2551, %v3120
    %v3122 = vlaneseq
    %v3123 = vshrl.u32 %v3122, 7
    %v3124 = vsub.s32 6, %v3123
    %v3125 = vrot.slane %v2551, %v3124
    %v3126 = vlaneseq
    %v3127 = vshrl.u32 %v3126, 7
    %v3128 = vsub.s32 7, %v3127
    %v3129 = vrot.slane %v2551, %v3128
    %v3130 = vlaneseq
    %v3131 = vshrl.u32 %v3130, 7
    %v3132 = vsub.s32 0, %v3131
    %v3133 = vrot.slane %v2559, %v3132
    %v3134 = vlaneseq
    %v3135 = vshrl.u32 %v3134, 7
    %v3136 = vsub.s32 1, %v3135
    %v3137 = vrot.slane %v2559, %v3136
    %v3138 = vlaneseq
    %v3139 = vshrl.u32 %v3138, 7
    %v3140 = vsub.s32 2, %v3139
    %v3141 = vrot.slane %v2559, %v3140
    %v3142 = vlaneseq
    %v3143 = vshrl.u32 %v3142, 7
    %v3144 = vsub.s32 3, %v3143
    %v3145 = vrot.slane %v2559, %v3144
    %v3146 = vlaneseq
    %v3147 = vshrl.u32 %v3146, 7
    %v3148 = vsub.s32 4, %v3147
    %v3149 = vrot.slane %v2559, %v3148
    %v3150 = vlaneseq
    %v3151 = vshrl.u32 %v3150, 7
    %v3152 = vsub.s32 5, %v3151
    %v3153 = vrot.slane %v2559, %v3152
    %v3154 = vlaneseq
    %v3155 = vshrl.u32 %v3154, 7
    %v3156 = vsub.s32 6, %v3155
    %v3157 = vrot.slane %v2559, %v3156
    %v3158 = vlaneseq
    %v3159 = vshrl.u32 %v3158, 7
    %v3160 = vsub.s32 7, %v3159
    %v3161 = vrot.slane %v2559, %v3160
    %v3162 = vlaneseq
    %v3163 = vshrl.u32 %v3162, 7
    %v3164 = vsub.s32 0, %v3163
    %v3165 = vrot.slane %v2567, %v3164
    %v3166 = vlaneseq
    %v3167 = vshrl.u32 %v3166, 7
    %v3168 = vsub.s32 1, %v3167
    %v3169 = vrot.slane %v2567, %v3168
    %v3170 = vlaneseq
    %v3171 = vshrl.u32 %v3170, 7
    %v3172 = vsub.s32 2, %v3171
    %v3173 = vrot.slane %v2567, %v3172
    %v3174 = vlaneseq
    %v3175 = vshrl.u32 %v3174, 7
    %v3176 = vsub.s32 3, %v3175
    %v3177 = vrot.slane %v2567, %v3176
    %v3178 = vlaneseq
    %v3179 = vshrl.u32 %v3178, 7
    %v3180 = vsub.s32 4, %v3179
    %v3181 = vrot.slane %v2567, %v3180
    %v3182 = vlaneseq
    %v3183 = vshrl.u32 %v3182, 7
    %v3184 = vsub.s32 5, %v3183
    %v3185 = vrot.slane %v2567, %v3184
    %v3186 = vlaneseq
    %v3187 = vshrl.u32 %v3186, 7
    %v3188 = vsub.s32 6, %v3187
    %v3189 = vrot.slane %v2567, %v3188
    %v3190 = vlaneseq
    %v3191 = vshrl.u32 %v3190, 7
    %v3192 = vsub.s32 7, %v3191
    %v3193 = vrot.slane %v2567, %v3192
    %v3194 = vlaneseq
    %v3195 = vshrl.u32 %v3194, 7
    %v3196 = vsub.s32 0, %v3195
    %v3197 = vrot.slane %v2575, %v3196
    %v3198 = vlaneseq
    %v3199 = vshrl.u32 %v3198, 7
    %v3200 = vsub.s32 1, %v3199
    %v3201 = vrot.slane %v2575, %v3200
    %v3202 = vlaneseq
    %v3203 = vshrl.u32 %v3202, 7
    %v3204 = vsub.s32 2, %v3203
    %v3205 = vrot.slane %v2575, %v3204
    %v3206 = vlaneseq
    %v3207 = vshrl.u32 %v3206, 7
    %v3208 = vsub.s32 3, %v3207
    %v3209 = vrot.slane %v2575, %v3208
    %v3210 = vlaneseq
    %v3211 = vshrl.u32 %v3210, 7
    %v3212 = vsub.s32 4, %v3211
    %v3213 = vrot.slane %v2575, %v3212
    %v3214 = vlaneseq
    %v3215 = vshrl.u32 %v3214, 7
    %v3216 = vsub.s32 5, %v3215
    %v3217 = vrot.slane %v2575, %v3216
    %v3218 = vlaneseq
    %v3219 = vshrl.u32 %v3218, 7
    %v3220 = vsub.s32 6, %v3219
    %v3221 = vrot.slane %v2575, %v3220
    %v3222 = vlaneseq
    %v3223 = vshrl.u32 %v3222, 7
    %v3224 = vsub.s32 7, %v3223
    %v3225 = vrot.slane %v2575, %v3224
    %v3226 = vlaneseq
    %v3227 = vshrl.u32 %v3226, 7
    %v3228 = vsub.s32 0, %v3227
    %v3229 = vrot.slane %v2583, %v3228
    %v3230 = vlaneseq
    %v3231 = vshrl.u32 %v3230, 7
    %v3232 = vsub.s32 1, %v3231
    %v3233 = vrot.slane %v2583, %v3232
    %v3234 = vlaneseq
    %v3235 = vshrl.u32 %v3234, 7
    %v3236 = vsub.s32 2, %v3235
    %v3237 = vrot.slane %v2583, %v3236
    %v3238 = vlaneseq
    %v3239 = vshrl.u32 %v3238, 7
    %v3240 = vsub.s32 3, %v3239
    %v3241 = vrot.slane %v2583, %v3240
    %v3242 = vlaneseq
    %v3243 = vshrl.u32 %v3242, 7
    %v3244 = vsub.s32 4, %v3243
    %v3245 = vrot.slane %v2583, %v3244
    %v3246 = vlaneseq
    %v3247 = vshrl.u32 %v3246, 7
    %v3248 = vsub.s32 5, %v3247
    %v3249 = vrot.slane %v2583, %v3248
    %v3250 = vlaneseq
    %v3251 = vshrl.u32 %v3250, 7
    %v3252 = vsub.s32 6, %v3251
    %v3253 = vrot.slane %v2583, %v3252
    %v3254 = vlaneseq
    %v3255 = vshrl.u32 %v3254, 7
    %v3256 = vsub.s32 7, %v3255
    %v3257 = vrot.slane %v2583, %v3256
    %v3258 = vlaneseq
    %v3259 = vshrl.u32 %v3258, 7
    %v3260 = vsub.s32 0, %v3259
    %v3261 = vrot.slane %v2591, %v3260
    %v3262 = vlaneseq
    %v3263 = vshrl.u32 %v3262, 7
    %v3264 = vsub.s32 1, %v3263
    %v3265 = vrot.slane %v2591, %v3264
    %v3266 = vlaneseq
    %v3267 = vshrl.u32 %v3266, 7
    %v3268 = vsub.s32 2, %v3267
    %v3269 = vrot.slane %v2591, %v3268
    %v3270 = vlaneseq
    %v3271 = vshrl.u32 %v3270, 7
    %v3272 = vsub.s32 3, %v3271
    %v3273 = vrot.slane %v2591, %v3272
    %v3274 = vlaneseq
    %v3275 = vshrl.u32 %v3274, 7
    %v3276 = vsub.s32 4, %v3275
    %v3277 = vrot.slane %v2591, %v3276
    %v3278 = vlaneseq
    %v3279 = vshrl.u32 %v3278, 7
    %v3280 = vsub.s32 5, %v3279
    %v3281 = vrot.slane %v2591, %v3280
    %v3282 = vlaneseq
    %v3283 = vshrl.u32 %v3282, 7
    %v3284 = vsub.s32 6, %v3283
    %v3285 = vrot.slane %v2591, %v3284
    %v3286 = vlaneseq
    %v3287 = vshrl.u32 %v3286, 7
    %v3288 = vsub.s32 7, %v3287
    %v3289 = vrot.slane %v2591, %v3288
    %v3290 = vlaneseq
    %v3291 = vshrl.u32 %v3290, 7
    %v3292 = vsub.s32 0, %v3291
    %v3293 = vrot.slane %v2599, %v3292
    %v3294 = vlaneseq
    %v3295 = vshrl.u32 %v3294, 7
    %v3296 = vsub.s32 1, %v3295
    %v3297 = vrot.slane %v2599, %v3296
    %v3298 = vlaneseq
    %v3299 = vshrl.u32 %v3298, 7
    %v3300 = vsub.s32 2, %v3299
    %v3301 = vrot.slane %v2599, %v3300
    %v3302 = vlaneseq
    %v3303 = vshrl.u32 %v3302, 7
    %v3304 = vsub.s32 3, %v3303
    %v3305 = vrot.slane %v2599, %v3304
    %v3306 = vlaneseq
    %v3307 = vshrl.u32 %v3306, 7
    %v3308 = vsub.s32 4, %v3307
    %v3309 = vrot.slane %v2599, %v3308
    %v3310 = vlaneseq
    %v3311 = vshrl.u32 %v3310, 7
    %v3312 = vsub.s32 5, %v3311
    %v3313 = vrot.slane %v2599, %v3312
    %v3314 = vlaneseq
    %v3315 = vshrl.u32 %v3314, 7
    %v3316 = vsub.s32 6, %v3315
    %v3317 = vrot.slane %v2599, %v3316
    %v3318 = vlaneseq
    %v3319 = vshrl.u32 %v3318, 7
    %v3320 = vsub.s32 7, %v3319
    %v3321 = vrot.slane %v2599, %v3320
    %v3322 = vlaneseq
    %v3323 = vshrl.u32 %v3322, 7
    %v3324 = vsub.s32 0, %v3323
    %v3325 = vrot.slane %v2607, %v3324
    %v3326 = vlaneseq
    %v3327 = vshrl.u32 %v3326, 7
    %v3328 = vsub.s32 1, %v3327
    %v3329 = vrot.slane %v2607, %v3328
    %v3330 = vlaneseq
    %v3331 = vshrl.u32 %v3330, 7
    %v3332 = vsub.s32 2, %v3331
    %v3333 = vrot.slane %v2607, %v3332
    %v3334 = vlaneseq
    %v3335 = vshrl.u32 %v3334, 7
    %v3336 = vsub.s32 3, %v3335
    %v3337 = vrot.slane %v2607, %v3336
    %v3338 = vlaneseq
    %v3339 = vshrl.u32 %v3338, 7
    %v3340 = vsub.s32 4, %v3339
    %v3341 = vrot.slane %v2607, %v3340
    %v3342 = vlaneseq
    %v3343 = vshrl.u32 %v3342, 7
    %v3344 = vsub.s32 5, %v3343
    %v3345 = vrot.slane %v2607, %v3344
    %v3346 = vlaneseq
    %v3347 = vshrl.u32 %v3346, 7
    %v3348 = vsub.s32 6, %v3347
    %v3349 = vrot.slane %v2607, %v3348
    %v3350 = vlaneseq
    %v3351 = vshrl.u32 %v3350, 7
    %v3352 = vsub.s32 7, %v3351
    %v3353 = vrot.slane %v2607, %v3352
    %v3354 = vlaneseq
    %v3355 = vshrl.u32 %v3354, 7
    %v3356 = vsub.s32 0, %v3355
    %v3357 = vrot.slane %v2615, %v3356
    %v3358 = vlaneseq
    %v3359 = vshrl.u32 %v3358, 7
    %v3360 = vsub.s32 1, %v3359
    %v3361 = vrot.slane %v2615, %v3360
    %v3362 = vlaneseq
    %v3363 = vshrl.u32 %v3362, 7
    %v3364 = vsub.s32 2, %v3363
    %v3365 = vrot.slane %v2615, %v3364
    %v3366 = vlaneseq
    %v3367 = vshrl.u32 %v3366, 7
    %v3368 = vsub.s32 3, %v3367
    %v3369 = vrot.slane %v2615, %v3368
    %v3370 = vlaneseq
    %v3371 = vshrl.u32 %v3370, 7
    %v3372 = vsub.s32 4, %v3371
    %v3373 = vrot.slane %v2615, %v3372
    %v3374 = vlaneseq
    %v3375 = vshrl.u32 %v3374, 7
    %v3376 = vsub.s32 5, %v3375
    %v3377 = vrot.slane %v2615, %v3376
    %v3378 = vlaneseq
    %v3379 = vshrl.u32 %v3378, 7
    %v3380 = vsub.s32 6, %v3379
    %v3381 = vrot.slane %v2615, %v3380
    %v3382 = vlaneseq
    %v3383 = vshrl.u32 %v3382, 7
    %v3384 = vsub.s32 7, %v3383
    %v3385 = vrot.slane %v2615, %v3384
    %v3386 = vcombine.low %v2877, %v2881
    %v3387 = vcombine.low %v2885, %v2889
    %v3388 = vcombine.low %v2893, %v2897
    %v3389 = vcombine.low %v2901, %v2905
    %v3391 = vunpack.c.l.s4 1966171168
    %v3392 = vunpack.c.0.s8 %v3391
    %v3393 = vlaneseq
    %v3394 = vshrl.u32 %v3393, 7
    %v3395 = vsub.s32 %v3392, %v3394
    %v3396 = vrot.slane %v3386, %v3395
    %v3398 = vunpack.c.l.s4 1966171168
    %v3399 = vunpack.c.0.s8 %v3398
    %v3400 = vlaneseq
    %v3401 = vshrl.u32 %v3400, 7
    %v3402 = vsub.s32 %v3399, %v3401
    %v3403 = vrot.slane %v3387, %v3402
    %v3405 = vunpack.c.l.s4 1966171168
    %v3406 = vunpack.c.0.s8 %v3405
    %v3407 = vlaneseq
    %v3408 = vshrl.u32 %v3407, 7
    %v3409 = vsub.s32 %v3406, %v3408
    %v3410 = vrot.slane %v3388, %v3409
    %v3412 = vunpack.c.l.s4 1966171168
    %v3413 = vunpack.c.0.s8 %v3412
    %v3414 = vlaneseq
    %v3415 = vshrl.u32 %v3414, 7
    %v3416 = vsub.s32 %v3413, %v3415
    %v3417 = vrot.slane %v3389, %v3416
    %v3418 = vcombine.low %v3396, %v3403
    %v3419 = vcombine.low %v3410, %v3417
    %v3421 = vunpack.c.l.s4 1966171168
    %v3422 = vunpack.c.0.s8 %v3421
    %v3423 = vlaneseq
    %v3424 = vshrl.u32 %v3423, 7
    %v3425 = vsub.s32 %v3422, %v3424
    %v3426 = vrot.slane %v3418, %v3425
    %v3428 = vunpack.c.l.s4 1966171168
    %v3429 = vunpack.c.0.s8 %v3428
    %v3430 = vlaneseq
    %v3431 = vshrl.u32 %v3430, 7
    %v3432 = vsub.s32 %v3429, %v3431
    %v3433 = vrot.slane %v3419, %v3432
    %v3434 = vcombine.low %v3426, %v3433
    %v3435 = vcombine.low %v2909, %v2913
    %v3436 = vcombine.low %v2917, %v2921
    %v3437 = vcombine.low %v2925, %v2929
    %v3438 = vcombine.low %v2933, %v2937
    %v3440 = vunpack.c.l.s4 1966171168
    %v3441 = vunpack.c.0.s8 %v3440
    %v3442 = vlaneseq
    %v3443 = vshrl.u32 %v3442, 7
    %v3444 = vsub.s32 %v3441, %v3443
    %v3445 = vrot.slane %v3435, %v3444
    %v3447 = vunpack.c.l.s4 1966171168
    %v3448 = vunpack.c.0.s8 %v3447
    %v3449 = vlaneseq
    %v3450 = vshrl.u32 %v3449, 7
    %v3451 = vsub.s32 %v3448, %v3450
    %v3452 = vrot.slane %v3436, %v3451
    %v3454 = vunpack.c.l.s4 1966171168
    %v3455 = vunpack.c.0.s8 %v3454
    %v3456 = vlaneseq
    %v3457 = vshrl.u32 %v3456, 7
    %v3458 = vsub.s32 %v3455, %v3457
    %v3459 = vrot.slane %v3437, %v3458
    %v3461 = vunpack.c.l.s4 1966171168
    %v3462 = vunpack.c.0.s8 %v3461
    %v3463 = vlaneseq
    %v3464 = vshrl.u32 %v3463, 7
    %v3465 = vsub.s32 %v3462, %v3464
    %v3466 = vrot.slane %v3438, %v3465
    %v3467 = vcombine.low %v3445, %v3452
    %v3468 = vcombine.low %v3459, %v3466
    %v3470 = vunpack.c.l.s4 1966171168
    %v3471 = vunpack.c.0.s8 %v3470
    %v3472 = vlaneseq
    %v3473 = vshrl.u32 %v3472, 7
    %v3474 = vsub.s32 %v3471, %v3473
    %v3475 = vrot.slane %v3467, %v3474
    %v3477 = vunpack.c.l.s4 1966171168
    %v3478 = vunpack.c.0.s8 %v3477
    %v3479 = vlaneseq
    %v3480 = vshrl.u32 %v3479, 7
    %v3481 = vsub.s32 %v3478, %v3480
    %v3482 = vrot.slane %v3468, %v3481
    %v3483 = vcombine.low %v3475, %v3482
    %v3484 = vcombine.low %v2941, %v2945
    %v3485 = vcombine.low %v2949, %v2953
    %v3486 = vcombine.low %v2957, %v2961
    %v3487 = vcombine.low %v2965, %v2969
    %v3489 = vunpack.c.l.s4 1966171168
    %v3490 = vunpack.c.0.s8 %v3489
    %v3491 = vlaneseq
    %v3492 = vshrl.u32 %v3491, 7
    %v3493 = vsub.s32 %v3490, %v3492
    %v3494 = vrot.slane %v3484, %v3493
    %v3496 = vunpack.c.l.s4 1966171168
    %v3497 = vunpack.c.0.s8 %v3496
    %v3498 = vlaneseq
    %v3499 = vshrl.u32 %v3498, 7
    %v3500 = vsub.s32 %v3497, %v3499
    %v3501 = vrot.slane %v3485, %v3500
    %v3503 = vunpack.c.l.s4 1966171168
    %v3504 = vunpack.c.0.s8 %v3503
    %v3505 = vlaneseq
    %v3506 = vshrl.u32 %v3505, 7
    %v3507 = vsub.s32 %v3504, %v3506
    %v3508 = vrot.slane %v3486, %v3507
    %v3510 = vunpack.c.l.s4 1966171168
    %v3511 = vunpack.c.0.s8 %v3510
    %v3512 = vlaneseq
    %v3513 = vshrl.u32 %v3512, 7
    %v3514 = vsub.s32 %v3511, %v3513
    %v3515 = vrot.slane %v3487, %v3514
    %v3516 = vcombine.low %v3494, %v3501
    %v3517 = vcombine.low %v3508, %v3515
    %v3519 = vunpack.c.l.s4 1966171168
    %v3520 = vunpack.c.0.s8 %v3519
    %v3521 = vlaneseq
    %v3522 = vshrl.u32 %v3521, 7
    %v3523 = vsub.s32 %v3520, %v3522
    %v3524 = vrot.slane %v3516, %v3523
    %v3526 = vunpack.c.l.s4 1966171168
    %v3527 = vunpack.c.0.s8 %v3526
    %v3528 = vlaneseq
    %v3529 = vshrl.u32 %v3528, 7
    %v3530 = vsub.s32 %v3527, %v3529
    %v3531 = vrot.slane %v3517, %v3530
    %v3532 = vcombine.low %v3524, %v3531
    %v3533 = vcombine.low %v2973, %v2977
    %v3534 = vcombine.low %v2981, %v2985
    %v3535 = vcombine.low %v2989, %v2993
    %v3536 = vcombine.low %v2997, %v3001
    %v3538 = vunpack.c.l.s4 1966171168
    %v3539 = vunpack.c.0.s8 %v3538
    %v3540 = vlaneseq
    %v3541 = vshrl.u32 %v3540, 7
    %v3542 = vsub.s32 %v3539, %v3541
    %v3543 = vrot.slane %v3533, %v3542
    %v3545 = vunpack.c.l.s4 1966171168
    %v3546 = vunpack.c.0.s8 %v3545
    %v3547 = vlaneseq
    %v3548 = vshrl.u32 %v3547, 7
    %v3549 = vsub.s32 %v3546, %v3548
    %v3550 = vrot.slane %v3534, %v3549
    %v3552 = vunpack.c.l.s4 1966171168
    %v3553 = vunpack.c.0.s8 %v3552
    %v3554 = vlaneseq
    %v3555 = vshrl.u32 %v3554, 7
    %v3556 = vsub.s32 %v3553, %v3555
    %v3557 = vrot.slane %v3535, %v3556
    %v3559 = vunpack.c.l.s4 1966171168
    %v3560 = vunpack.c.0.s8 %v3559
    %v3561 = vlaneseq
    %v3562 = vshrl.u32 %v3561, 7
    %v3563 = vsub.s32 %v3560, %v3562
    %v3564 = vrot.slane %v3536, %v3563
    %v3565 = vcombine.low %v3543, %v3550
    %v3566 = vcombine.low %v3557, %v3564
    %v3568 = vunpack.c.l.s4 1966171168
    %v3569 = vunpack.c.0.s8 %v3568
    %v3570 = vlaneseq
    %v3571 = vshrl.u32 %v3570, 7
    %v3572 = vsub.s32 %v3569, %v3571
    %v3573 = vrot.slane %v3565, %v3572
    %v3575 = vunpack.c.l.s4 1966171168
    %v3576 = vunpack.c.0.s8 %v3575
    %v3577 = vlaneseq
    %v3578 = vshrl.u32 %v3577, 7
    %v3579 = vsub.s32 %v3576, %v3578
    %v3580 = vrot.slane %v3566, %v3579
    %v3581 = vcombine.low %v3573, %v3580
    %v3582 = vcombine.low %v3005, %v3009
    %v3583 = vcombine.low %v3013, %v3017
    %v3584 = vcombine.low %v3021, %v3025
    %v3585 = vcombine.low %v3029, %v3033
    %v3587 = vunpack.c.l.s4 1966171168
    %v3588 = vunpack.c.0.s8 %v3587
    %v3589 = vlaneseq
    %v3590 = vshrl.u32 %v3589, 7
    %v3591 = vsub.s32 %v3588, %v3590
    %v3592 = vrot.slane %v3582, %v3591
    %v3594 = vunpack.c.l.s4 1966171168
    %v3595 = vunpack.c.0.s8 %v3594
    %v3596 = vlaneseq
    %v3597 = vshrl.u32 %v3596, 7
    %v3598 = vsub.s32 %v3595, %v3597
    %v3599 = vrot.slane %v3583, %v3598
    %v3601 = vunpack.c.l.s4 1966171168
    %v3602 = vunpack.c.0.s8 %v3601
    %v3603 = vlaneseq
    %v3604 = vshrl.u32 %v3603, 7
    %v3605 = vsub.s32 %v3602, %v3604
    %v3606 = vrot.slane %v3584, %v3605
    %v3608 = vunpack.c.l.s4 1966171168
    %v3609 = vunpack.c.0.s8 %v3608
    %v3610 = vlaneseq
    %v3611 = vshrl.u32 %v3610, 7
    %v3612 = vsub.s32 %v3609, %v3611
    %v3613 = vrot.slane %v3585, %v3612
    %v3614 = vcombine.low %v3592, %v3599
    %v3615 = vcombine.low %v3606, %v3613
    %v3617 = vunpack.c.l.s4 1966171168
    %v3618 = vunpack.c.0.s8 %v3617
    %v3619 = vlaneseq
    %v3620 = vshrl.u32 %v3619, 7
    %v3621 = vsub.s32 %v3618, %v3620
    %v3622 = vrot.slane %v3614, %v3621
    %v3624 = vunpack.c.l.s4 1966171168
    %v3625 = vunpack.c.0.s8 %v3624
    %v3626 = vlaneseq
    %v3627 = vshrl.u32 %v3626, 7
    %v3628 = vsub.s32 %v3625, %v3627
    %v3629 = vrot.slane %v3615, %v3628
    %v3630 = vcombine.low %v3622, %v3629
    %v3631 = vcombine.low %v3037, %v3041
    %v3632 = vcombine.low %v3045, %v3049
    %v3633 = vcombine.low %v3053, %v3057
    %v3634 = vcombine.low %v3061, %v3065
    %v3636 = vunpack.c.l.s4 1966171168
    %v3637 = vunpack.c.0.s8 %v3636
    %v3638 = vlaneseq
    %v3639 = vshrl.u32 %v3638, 7
    %v3640 = vsub.s32 %v3637, %v3639
    %v3641 = vrot.slane %v3631, %v3640
    %v3643 = vunpack.c.l.s4 1966171168
    %v3644 = vunpack.c.0.s8 %v3643
    %v3645 = vlaneseq
    %v3646 = vshrl.u32 %v3645, 7
    %v3647 = vsub.s32 %v3644, %v3646
    %v3648 = vrot.slane %v3632, %v3647
    %v3650 = vunpack.c.l.s4 1966171168
    %v3651 = vunpack.c.0.s8 %v3650
    %v3652 = vlaneseq
    %v3653 = vshrl.u32 %v3652, 7
    %v3654 = vsub.s32 %v3651, %v3653
    %v3655 = vrot.slane %v3633, %v3654
    %v3657 = vunpack.c.l.s4 1966171168
    %v3658 = vunpack.c.0.s8 %v3657
    %v3659 = vlaneseq
    %v3660 = vshrl.u32 %v3659, 7
    %v3661 = vsub.s32 %v3658, %v3660
    %v3662 = vrot.slane %v3634, %v3661
    %v3663 = vcombine.low %v3641, %v3648
    %v3664 = vcombine.low %v3655, %v3662
    %v3666 = vunpack.c.l.s4 1966171168
    %v3667 = vunpack.c.0.s8 %v3666
    %v3668 = vlaneseq
    %v3669 = vshrl.u32 %v3668, 7
    %v3670 = vsub.s32 %v3667, %v3669
    %v3671 = vrot.slane %v3663, %v3670
    %v3673 = vunpack.c.l.s4 1966171168
    %v3674 = vunpack.c.0.s8 %v3673
    %v3675 = vlaneseq
    %v3676 = vshrl.u32 %v3675, 7
    %v3677 = vsub.s32 %v3674, %v3676
    %v3678 = vrot.slane %v3664, %v3677
    %v3679 = vcombine.low %v3671, %v3678
    %v3680 = vcombine.low %v3069, %v3073
    %v3681 = vcombine.low %v3077, %v3081
    %v3682 = vcombine.low %v3085, %v3089
    %v3683 = vcombine.low %v3093, %v3097
    %v3685 = vunpack.c.l.s4 1966171168
    %v3686 = vunpack.c.0.s8 %v3685
    %v3687 = vlaneseq
    %v3688 = vshrl.u32 %v3687, 7
    %v3689 = vsub.s32 %v3686, %v3688
    %v3690 = vrot.slane %v3680, %v3689
    %v3692 = vunpack.c.l.s4 1966171168
    %v3693 = vunpack.c.0.s8 %v3692
    %v3694 = vlaneseq
    %v3695 = vshrl.u32 %v3694, 7
    %v3696 = vsub.s32 %v3693, %v3695
    %v3697 = vrot.slane %v3681, %v3696
    %v3699 = vunpack.c.l.s4 1966171168
    %v3700 = vunpack.c.0.s8 %v3699
    %v3701 = vlaneseq
    %v3702 = vshrl.u32 %v3701, 7
    %v3703 = vsub.s32 %v3700, %v3702
    %v3704 = vrot.slane %v3682, %v3703
    %v3706 = vunpack.c.l.s4 1966171168
    %v3707 = vunpack.c.0.s8 %v3706
    %v3708 = vlaneseq
    %v3709 = vshrl.u32 %v3708, 7
    %v3710 = vsub.s32 %v3707, %v3709
    %v3711 = vrot.slane %v3683, %v3710
    %v3712 = vcombine.low %v3690, %v3697
    %v3713 = vcombine.low %v3704, %v3711
    %v3715 = vunpack.c.l.s4 1966171168
    %v3716 = vunpack.c.0.s8 %v3715
    %v3717 = vlaneseq
    %v3718 = vshrl.u32 %v3717, 7
    %v3719 = vsub.s32 %v3716, %v3718
    %v3720 = vrot.slane %v3712, %v3719
    %v3722 = vunpack.c.l.s4 1966171168
    %v3723 = vunpack.c.0.s8 %v3722
    %v3724 = vlaneseq
    %v3725 = vshrl.u32 %v3724, 7
    %v3726 = vsub.s32 %v3723, %v3725
    %v3727 = vrot.slane %v3713, %v3726
    %v3728 = vcombine.low %v3720, %v3727
    %v3729 = vcombine.low %v3101, %v3105
    %v3730 = vcombine.low %v3109, %v3113
    %v3731 = vcombine.low %v3117, %v3121
    %v3732 = vcombine.low %v3125, %v3129
    %v3734 = vunpack.c.l.s4 1966171168
    %v3735 = vunpack.c.0.s8 %v3734
    %v3736 = vlaneseq
    %v3737 = vshrl.u32 %v3736, 7
    %v3738 = vsub.s32 %v3735, %v3737
    %v3739 = vrot.slane %v3729, %v3738
    %v3741 = vunpack.c.l.s4 1966171168
    %v3742 = vunpack.c.0.s8 %v3741
    %v3743 = vlaneseq
    %v3744 = vshrl.u32 %v3743, 7
    %v3745 = vsub.s32 %v3742, %v3744
    %v3746 = vrot.slane %v3730, %v3745
    %v3748 = vunpack.c.l.s4 1966171168
    %v3749 = vunpack.c.0.s8 %v3748
    %v3750 = vlaneseq
    %v3751 = vshrl.u32 %v3750, 7
    %v3752 = vsub.s32 %v3749, %v3751
    %v3753 = vrot.slane %v3731, %v3752
    %v3755 = vunpack.c.l.s4 1966171168
    %v3756 = vunpack.c.0.s8 %v3755
    %v3757 = vlaneseq
    %v3758 = vshrl.u32 %v3757, 7
    %v3759 = vsub.s32 %v3756, %v3758
    %v3760 = vrot.slane %v3732, %v3759
    %v3761 = vcombine.low %v3739, %v3746
    %v3762 = vcombine.low %v3753, %v3760
    %v3764 = vunpack.c.l.s4 1966171168
    %v3765 = vunpack.c.0.s8 %v3764
    %v3766 = vlaneseq
    %v3767 = vshrl.u32 %v3766, 7
    %v3768 = vsub.s32 %v3765, %v3767
    %v3769 = vrot.slane %v3761, %v3768
    %v3771 = vunpack.c.l.s4 1966171168
    %v3772 = vunpack.c.0.s8 %v3771
    %v3773 = vlaneseq
    %v3774 = vshrl.u32 %v3773, 7
    %v3775 = vsub.s32 %v3772, %v3774
    %v3776 = vrot.slane %v3762, %v3775
    %v3777 = vcombine.low %v3769, %v3776
    %v3778 = vcombine.low %v3133, %v3137
    %v3779 = vcombine.low %v3141, %v3145
    %v3780 = vcombine.low %v3149, %v3153
    %v3781 = vcombine.low %v3157, %v3161
    %v3783 = vunpack.c.l.s4 1966171168
    %v3784 = vunpack.c.0.s8 %v3783
    %v3785 = vlaneseq
    %v3786 = vshrl.u32 %v3785, 7
    %v3787 = vsub.s32 %v3784, %v3786
    %v3788 = vrot.slane %v3778, %v3787
    %v3790 = vunpack.c.l.s4 1966171168
    %v3791 = vunpack.c.0.s8 %v3790
    %v3792 = vlaneseq
    %v3793 = vshrl.u32 %v3792, 7
    %v3794 = vsub.s32 %v3791, %v3793
    %v3795 = vrot.slane %v3779, %v3794
    %v3797 = vunpack.c.l.s4 1966171168
    %v3798 = vunpack.c.0.s8 %v3797
    %v3799 = vlaneseq
    %v3800 = vshrl.u32 %v3799, 7
    %v3801 = vsub.s32 %v3798, %v3800
    %v3802 = vrot.slane %v3780, %v3801
    %v3804 = vunpack.c.l.s4 1966171168
    %v3805 = vunpack.c.0.s8 %v3804
    %v3806 = vlaneseq
    %v3807 = vshrl.u32 %v3806, 7
    %v3808 = vsub.s32 %v3805, %v3807
    %v3809 = vrot.slane %v3781, %v3808
    %v3810 = vcombine.low %v3788, %v3795
    %v3811 = vcombine.low %v3802, %v3809
    %v3813 = vunpack.c.l.s4 1966171168
    %v3814 = vunpack.c.0.s8 %v3813
    %v3815 = vlaneseq
    %v3816 = vshrl.u32 %v3815, 7
    %v3817 = vsub.s32 %v3814, %v3816
    %v3818 = vrot.slane %v3810, %v3817
    %v3820 = vunpack.c.l.s4 1966171168
    %v3821 = vunpack.c.0.s8 %v3820
    %v3822 = vlaneseq
    %v3823 = vshrl.u32 %v3822, 7
    %v3824 = vsub.s32 %v3821, %v3823
    %v3825 = vrot.slane %v3811, %v3824
    %v3826 = vcombine.low %v3818, %v3825
    %v3827 = vcombine.low %v3165, %v3169
    %v3828 = vcombine.low %v3173, %v3177
    %v3829 = vcombine.low %v3181, %v3185
    %v3830 = vcombine.low %v3189, %v3193
    %v3832 = vunpack.c.l.s4 1966171168
    %v3833 = vunpack.c.0.s8 %v3832
    %v3834 = vlaneseq
    %v3835 = vshrl.u32 %v3834, 7
    %v3836 = vsub.s32 %v3833, %v3835
    %v3837 = vrot.slane %v3827, %v3836
    %v3839 = vunpack.c.l.s4 1966171168
    %v3840 = vunpack.c.0.s8 %v3839
    %v3841 = vlaneseq
    %v3842 = vshrl.u32 %v3841, 7
    %v3843 = vsub.s32 %v3840, %v3842
    %v3844 = vrot.slane %v3828, %v3843
    %v3846 = vunpack.c.l.s4 1966171168
    %v3847 = vunpack.c.0.s8 %v3846
    %v3848 = vlaneseq
    %v3849 = vshrl.u32 %v3848, 7
    %v3850 = vsub.s32 %v3847, %v3849
    %v3851 = vrot.slane %v3829, %v3850
    %v3853 = vunpack.c.l.s4 1966171168
    %v3854 = vunpack.c.0.s8 %v3853
    %v3855 = vlaneseq
    %v3856 = vshrl.u32 %v3855, 7
    %v3857 = vsub.s32 %v3854, %v3856
    %v3858 = vrot.slane %v3830, %v3857
    %v3859 = vcombine.low %v3837, %v3844
    %v3860 = vcombine.low %v3851, %v3858
    %v3862 = vunpack.c.l.s4 1966171168
    %v3863 = vunpack.c.0.s8 %v3862
    %v3864 = vlaneseq
    %v3865 = vshrl.u32 %v3864, 7
    %v3866 = vsub.s32 %v3863, %v3865
    %v3867 = vrot.slane %v3859, %v3866
    %v3869 = vunpack.c.l.s4 1966171168
    %v3870 = vunpack.c.0.s8 %v3869
    %v3871 = vlaneseq
    %v3872 = vshrl.u32 %v3871, 7
    %v3873 = vsub.s32 %v3870, %v3872
    %v3874 = vrot.slane %v3860, %v3873
    %v3875 = vcombine.low %v3867, %v3874
    %v3876 = vcombine.low %v3197, %v3201
    %v3877 = vcombine.low %v3205, %v3209
    %v3878 = vcombine.low %v3213, %v3217
    %v3879 = vcombine.low %v3221, %v3225
    %v3881 = vunpack.c.l.s4 1966171168
    %v3882 = vunpack.c.0.s8 %v3881
    %v3883 = vlaneseq
    %v3884 = vshrl.u32 %v3883, 7
    %v3885 = vsub.s32 %v3882, %v3884
    %v3886 = vrot.slane %v3876, %v3885
    %v3888 = vunpack.c.l.s4 1966171168
    %v3889 = vunpack.c.0.s8 %v3888
    %v3890 = vlaneseq
    %v3891 = vshrl.u32 %v3890, 7
    %v3892 = vsub.s32 %v3889, %v3891
    %v3893 = vrot.slane %v3877, %v3892
    %v3895 = vunpack.c.l.s4 1966171168
    %v3896 = vunpack.c.0.s8 %v3895
    %v3897 = vlaneseq
    %v3898 = vshrl.u32 %v3897, 7
    %v3899 = vsub.s32 %v3896, %v3898
    %v3900 = vrot.slane %v3878, %v3899
    %v3902 = vunpack.c.l.s4 1966171168
    %v3903 = vunpack.c.0.s8 %v3902
    %v3904 = vlaneseq
    %v3905 = vshrl.u32 %v3904, 7
    %v3906 = vsub.s32 %v3903, %v3905
    %v3907 = vrot.slane %v3879, %v3906
    %v3908 = vcombine.low %v3886, %v3893
    %v3909 = vcombine.low %v3900, %v3907
    %v3911 = vunpack.c.l.s4 1966171168
    %v3912 = vunpack.c.0.s8 %v3911
    %v3913 = vlaneseq
    %v3914 = vshrl.u32 %v3913, 7
    %v3915 = vsub.s32 %v3912, %v3914
    %v3916 = vrot.slane %v3908, %v3915
    %v3918 = vunpack.c.l.s4 1966171168
    %v3919 = vunpack.c.0.s8 %v3918
    %v3920 = vlaneseq
    %v3921 = vshrl.u32 %v3920, 7
    %v3922 = vsub.s32 %v3919, %v3921
    %v3923 = vrot.slane %v3909, %v3922
    %v3924 = vcombine.low %v3916, %v3923
    %v3925 = vcombine.low %v3229, %v3233
    %v3926 = vcombine.low %v3237, %v3241
    %v3927 = vcombine.low %v3245, %v3249
    %v3928 = vcombine.low %v3253, %v3257
    %v3930 = vunpack.c.l.s4 1966171168
    %v3931 = vunpack.c.0.s8 %v3930
    %v3932 = vlaneseq
    %v3933 = vshrl.u32 %v3932, 7
    %v3934 = vsub.s32 %v3931, %v3933
    %v3935 = vrot.slane %v3925, %v3934
    %v3937 = vunpack.c.l.s4 1966171168
    %v3938 = vunpack.c.0.s8 %v3937
    %v3939 = vlaneseq
    %v3940 = vshrl.u32 %v3939, 7
    %v3941 = vsub.s32 %v3938, %v3940
    %v3942 = vrot.slane %v3926, %v3941
    %v3944 = vunpack.c.l.s4 1966171168
    %v3945 = vunpack.c.0.s8 %v3944
    %v3946 = vlaneseq
    %v3947 = vshrl.u32 %v3946, 7
    %v3948 = vsub.s32 %v3945, %v3947
    %v3949 = vrot.slane %v3927, %v3948
    %v3951 = vunpack.c.l.s4 1966171168
    %v3952 = vunpack.c.0.s8 %v3951
    %v3953 = vlaneseq
    %v3954 = vshrl.u32 %v3953, 7
    %v3955 = vsub.s32 %v3952, %v3954
    %v3956 = vrot.slane %v3928, %v3955
    %v3957 = vcombine.low %v3935, %v3942
    %v3958 = vcombine.low %v3949, %v3956
    %v3960 = vunpack.c.l.s4 1966171168
    %v3961 = vunpack.c.0.s8 %v3960
    %v3962 = vlaneseq
    %v3963 = vshrl.u32 %v3962, 7
    %v3964 = vsub.s32 %v3961, %v3963
    %v3965 = vrot.slane %v3957, %v3964
    %v3967 = vunpack.c.l.s4 1966171168
    %v3968 = vunpack.c.0.s8 %v3967
    %v3969 = vlaneseq
    %v3970 = vshrl.u32 %v3969, 7
    %v3971 = vsub.s32 %v3968, %v3970
    %v3972 = vrot.slane %v3958, %v3971
    %v3973 = vcombine.low %v3965, %v3972
    %v3974 = vcombine.low %v3261, %v3265
    %v3975 = vcombine.low %v3269, %v3273
    %v3976 = vcombine.low %v3277, %v3281
    %v3977 = vcombine.low %v3285, %v3289
    %v3979 = vunpack.c.l.s4 1966171168
    %v3980 = vunpack.c.0.s8 %v3979
    %v3981 = vlaneseq
    %v3982 = vshrl.u32 %v3981, 7
    %v3983 = vsub.s32 %v3980, %v3982
    %v3984 = vrot.slane %v3974, %v3983
    %v3986 = vunpack.c.l.s4 1966171168
    %v3987 = vunpack.c.0.s8 %v3986
    %v3988 = vlaneseq
    %v3989 = vshrl.u32 %v3988, 7
    %v3990 = vsub.s32 %v3987, %v3989
    %v3991 = vrot.slane %v3975, %v3990
    %v3993 = vunpack.c.l.s4 1966171168
    %v3994 = vunpack.c.0.s8 %v3993
    %v3995 = vlaneseq
    %v3996 = vshrl.u32 %v3995, 7
    %v3997 = vsub.s32 %v3994, %v3996
    %v3998 = vrot.slane %v3976, %v3997
    %v4000 = vunpack.c.l.s4 1966171168
    %v4001 = vunpack.c.0.s8 %v4000
    %v4002 = vlaneseq
    %v4003 = vshrl.u32 %v4002, 7
    %v4004 = vsub.s32 %v4001, %v4003
    %v4005 = vrot.slane %v3977, %v4004
    %v4006 = vcombine.low %v3984, %v3991
    %v4007 = vcombine.low %v3998, %v4005
    %v4009 = vunpack.c.l.s4 1966171168
    %v4010 = vunpack.c.0.s8 %v4009
    %v4011 = vlaneseq
    %v4012 = vshrl.u32 %v4011, 7
    %v4013 = vsub.s32 %v4010, %v4012
    %v4014 = vrot.slane %v4006, %v4013
    %v4016 = vunpack.c.l.s4 1966171168
    %v4017 = vunpack.c.0.s8 %v4016
    %v4018 = vlaneseq
    %v4019 = vshrl.u32 %v4018, 7
    %v4020 = vsub.s32 %v4017, %v4019
    %v4021 = vrot.slane %v4007, %v4020
    %v4022 = vcombine.low %v4014, %v4021
    %v4023 = vcombine.low %v3293, %v3297
    %v4024 = vcombine.low %v3301, %v3305
    %v4025 = vcombine.low %v3309, %v3313
    %v4026 = vcombine.low %v3317, %v3321
    %v4028 = vunpack.c.l.s4 1966171168
    %v4029 = vunpack.c.0.s8 %v4028
    %v4030 = vlaneseq
    %v4031 = vshrl.u32 %v4030, 7
    %v4032 = vsub.s32 %v4029, %v4031
    %v4033 = vrot.slane %v4023, %v4032
    %v4035 = vunpack.c.l.s4 1966171168
    %v4036 = vunpack.c.0.s8 %v4035
    %v4037 = vlaneseq
    %v4038 = vshrl.u32 %v4037, 7
    %v4039 = vsub.s32 %v4036, %v4038
    %v4040 = vrot.slane %v4024, %v4039
    %v4042 = vunpack.c.l.s4 1966171168
    %v4043 = vunpack.c.0.s8 %v4042
    %v4044 = vlaneseq
    %v4045 = vshrl.u32 %v4044, 7
    %v4046 = vsub.s32 %v4043, %v4045
    %v4047 = vrot.slane %v4025, %v4046
    %v4049 = vunpack.c.l.s4 1966171168
    %v4050 = vunpack.c.0.s8 %v4049
    %v4051 = vlaneseq
    %v4052 = vshrl.u32 %v4051, 7
    %v4053 = vsub.s32 %v4050, %v4052
    %v4054 = vrot.slane %v4026, %v4053
    %v4055 = vcombine.low %v4033, %v4040
    %v4056 = vcombine.low %v4047, %v4054
    %v4058 = vunpack.c.l.s4 1966171168
    %v4059 = vunpack.c.0.s8 %v4058
    %v4060 = vlaneseq
    %v4061 = vshrl.u32 %v4060, 7
    %v4062 = vsub.s32 %v4059, %v4061
    %v4063 = vrot.slane %v4055, %v4062
    %v4065 = vunpack.c.l.s4 1966171168
    %v4066 = vunpack.c.0.s8 %v4065
    %v4067 = vlaneseq
    %v4068 = vshrl.u32 %v4067, 7
    %v4069 = vsub.s32 %v4066, %v4068
    %v4070 = vrot.slane %v4056, %v4069
    %v4071 = vcombine.low %v4063, %v4070
    %v4072 = vcombine.low %v3325, %v3329
    %v4073 = vcombine.low %v3333, %v3337
    %v4074 = vcombine.low %v3341, %v3345
    %v4075 = vcombine.low %v3349, %v3353
    %v4077 = vunpack.c.l.s4 1966171168
    %v4078 = vunpack.c.0.s8 %v4077
    %v4079 = vlaneseq
    %v4080 = vshrl.u32 %v4079, 7
    %v4081 = vsub.s32 %v4078, %v4080
    %v4082 = vrot.slane %v4072, %v4081
    %v4084 = vunpack.c.l.s4 1966171168
    %v4085 = vunpack.c.0.s8 %v4084
    %v4086 = vlaneseq
    %v4087 = vshrl.u32 %v4086, 7
    %v4088 = vsub.s32 %v4085, %v4087
    %v4089 = vrot.slane %v4073, %v4088
    %v4091 = vunpack.c.l.s4 1966171168
    %v4092 = vunpack.c.0.s8 %v4091
    %v4093 = vlaneseq
    %v4094 = vshrl.u32 %v4093, 7
    %v4095 = vsub.s32 %v4092, %v4094
    %v4096 = vrot.slane %v4074, %v4095
    %v4098 = vunpack.c.l.s4 1966171168
    %v4099 = vunpack.c.0.s8 %v4098
    %v4100 = vlaneseq
    %v4101 = vshrl.u32 %v4100, 7
    %v4102 = vsub.s32 %v4099, %v4101
    %v4103 = vrot.slane %v4075, %v4102
    %v4104 = vcombine.low %v4082, %v4089
    %v4105 = vcombine.low %v4096, %v4103
    %v4107 = vunpack.c.l.s4 1966171168
    %v4108 = vunpack.c.0.s8 %v4107
    %v4109 = vlaneseq
    %v4110 = vshrl.u32 %v4109, 7
    %v4111 = vsub.s32 %v4108, %v4110
    %v4112 = vrot.slane %v4104, %v4111
    %v4114 = vunpack.c.l.s4 1966171168
    %v4115 = vunpack.c.0.s8 %v4114
    %v4116 = vlaneseq
    %v4117 = vshrl.u32 %v4116, 7
    %v4118 = vsub.s32 %v4115, %v4117
    %v4119 = vrot.slane %v4105, %v4118
    %v4120 = vcombine.low %v4112, %v4119
    %v4121 = vcombine.low %v3357, %v3361
    %v4122 = vcombine.low %v3365, %v3369
    %v4123 = vcombine.low %v3373, %v3377
    %v4124 = vcombine.low %v3381, %v3385
    %v4126 = vunpack.c.l.s4 1966171168
    %v4127 = vunpack.c.0.s8 %v4126
    %v4128 = vlaneseq
    %v4129 = vshrl.u32 %v4128, 7
    %v4130 = vsub.s32 %v4127, %v4129
    %v4131 = vrot.slane %v4121, %v4130
    %v4133 = vunpack.c.l.s4 1966171168
    %v4134 = vunpack.c.0.s8 %v4133
    %v4135 = vlaneseq
    %v4136 = vshrl.u32 %v4135, 7
    %v4137 = vsub.s32 %v4134, %v4136
    %v4138 = vrot.slane %v4122, %v4137
    %v4140 = vunpack.c.l.s4 1966171168
    %v4141 = vunpack.c.0.s8 %v4140
    %v4142 = vlaneseq
    %v4143 = vshrl.u32 %v4142, 7
    %v4144 = vsub.s32 %v4141, %v4143
    %v4145 = vrot.slane %v4123, %v4144
    %v4147 = vunpack.c.l.s4 1966171168
    %v4148 = vunpack.c.0.s8 %v4147
    %v4149 = vlaneseq
    %v4150 = vshrl.u32 %v4149, 7
    %v4151 = vsub.s32 %v4148, %v4150
    %v4152 = vrot.slane %v4124, %v4151
    %v4153 = vcombine.low %v4131, %v4138
    %v4154 = vcombine.low %v4145, %v4152
    %v4156 = vunpack.c.l.s4 1966171168
    %v4157 = vunpack.c.0.s8 %v4156
    %v4158 = vlaneseq
    %v4159 = vshrl.u32 %v4158, 7
    %v4160 = vsub.s32 %v4157, %v4159
    %v4161 = vrot.slane %v4153, %v4160
    %v4163 = vunpack.c.l.s4 1966171168
    %v4164 = vunpack.c.0.s8 %v4163
    %v4165 = vlaneseq
    %v4166 = vshrl.u32 %v4165, 7
    %v4167 = vsub.s32 %v4164, %v4166
    %v4168 = vrot.slane %v4154, %v4167
    %v4169 = vcombine.low %v4161, %v4168
    %4170 = vset.pattern.permute.xlu0 0
    %4171 = vperm.xlu0 %4170, %v3434
    %v4172 = vpop.permute.xlu0 %4171
    %4173 = vset.pattern.permute.xlu0 0
    %4174 = vperm.xlu0 %4173, %v3483
    %v4175 = vpop.permute.xlu0 %4174
    %4176 = vset.pattern.permute.xlu0 0
    %4177 = vperm.xlu0 %4176, %v3532
    %v4178 = vpop.permute.xlu0 %4177
    %4179 = vset.pattern.permute.xlu0 0
    %4180 = vperm.xlu0 %4179, %v3581
    %v4181 = vpop.permute.xlu0 %4180
    %4182 = vset.pattern.permute.xlu0 0
    %4183 = vperm.xlu0 %4182, %v3630
    %v4184 = vpop.permute.xlu0 %4183
    %4185 = vset.pattern.permute.xlu0 0
    %4186 = vperm.xlu0 %4185, %v3679
    %v4187 = vpop.permute.xlu0 %4186
    %4188 = vset.pattern.permute.xlu0 0
    %4189 = vperm.xlu0 %4188, %v3728
    %v4190 = vpop.permute.xlu0 %4189
    %4191 = vset.pattern.permute.xlu0 0
    %4192 = vperm.xlu0 %4191, %v3777
    %v4193 = vpop.permute.xlu0 %4192
    %4194 = vset.pattern.permute.xlu0 0
    %4195 = vperm.xlu0 %4194, %v3826
    %v4196 = vpop.permute.xlu0 %4195
    %4197 = vset.pattern.permute.xlu0 0
    %4198 = vperm.xlu0 %4197, %v3875
    %v4199 = vpop.permute.xlu0 %4198
    %4200 = vset.pattern.permute.xlu0 0
    %4201 = vperm.xlu0 %4200, %v3924
    %v4202 = vpop.permute.xlu0 %4201
    %4203 = vset.pattern.permute.xlu0 0
    %4204 = vperm.xlu0 %4203, %v3973
    %v4205 = vpop.permute.xlu0 %4204
    %4206 = vset.pattern.permute.xlu0 0
    %4207 = vperm.xlu0 %4206, %v4022
    %v4208 = vpop.permute.xlu0 %4207
    %4209 = vset.pattern.permute.xlu0 0
    %4210 = vperm.xlu0 %4209, %v4071
    %v4211 = vpop.permute.xlu0 %4210
    %4212 = vset.pattern.permute.xlu0 0
    %4213 = vperm.xlu0 %4212, %v4120
    %v4214 = vpop.permute.xlu0 %4213
    %4215 = vset.pattern.permute.xlu0 0
    %4216 = vperm.xlu0 %4215, %v4169
    %v4217 = vpop.permute.xlu0 %4216
    %v4218 = vlaneseq
    %v4219 = vshrl.u32 %v4218, 7
    %v4220 = vsub.s32 %v29, %v4219
    %v4221 = vrot.slane %v4172, %v4220
    %v4222 = vlaneseq
    %v4223 = vshrl.u32 %v4222, 7
    %v4224 = vsub.s32 %v2033, %v4223
    %v4225 = vrot.slane %v4175, %v4224
    %v4226 = vsel %vm2038, %v4225, %v4221
    %v4227 = vlaneseq
    %v4228 = vshrl.u32 %v4227, 7
    %v4229 = vsub.s32 %v2040, %v4228
    %v4230 = vrot.slane %v4178, %v4229
    %v4231 = vsel %vm2045, %v4230, %v4226
    %v4232 = vlaneseq
    %v4233 = vshrl.u32 %v4232, 7
    %v4234 = vsub.s32 %v2047, %v4233
    %v4235 = vrot.slane %v4181, %v4234
    %v4236 = vsel %vm2052, %v4235, %v4231
    %v4237 = vlaneseq
    %v4238 = vshrl.u32 %v4237, 7
    %v4239 = vsub.s32 %v2054, %v4238
    %v4240 = vrot.slane %v4184, %v4239
    %v4241 = vsel %vm2059, %v4240, %v4236
    %v4242 = vlaneseq
    %v4243 = vshrl.u32 %v4242, 7
    %v4244 = vsub.s32 %v2061, %v4243
    %v4245 = vrot.slane %v4187, %v4244
    %v4246 = vsel %vm2066, %v4245, %v4241
    %v4247 = vlaneseq
    %v4248 = vshrl.u32 %v4247, 7
    %v4249 = vsub.s32 %v2068, %v4248
    %v4250 = vrot.slane %v4190, %v4249
    %v4251 = vsel %vm2073, %v4250, %v4246
    %v4252 = vlaneseq
    %v4253 = vshrl.u32 %v4252, 7
    %v4254 = vsub.s32 %v2075, %v4253
    %v4255 = vrot.slane %v4193, %v4254
    %v4256 = vsel %vm2080, %v4255, %v4251
    %v4257 = vlaneseq
    %v4258 = vshrl.u32 %v4257, 7
    %v4259 = vsub.s32 %v2082, %v4258
    %v4260 = vrot.slane %v4196, %v4259
    %v4261 = vsel %vm2087, %v4260, %v4256
    %v4262 = vlaneseq
    %v4263 = vshrl.u32 %v4262, 7
    %v4264 = vsub.s32 %v2089, %v4263
    %v4265 = vrot.slane %v4199, %v4264
    %v4266 = vsel %vm2094, %v4265, %v4261
    %v4267 = vlaneseq
    %v4268 = vshrl.u32 %v4267, 7
    %v4269 = vsub.s32 %v2096, %v4268
    %v4270 = vrot.slane %v4202, %v4269
    %v4271 = vsel %vm2101, %v4270, %v4266
    %v4272 = vlaneseq
    %v4273 = vshrl.u32 %v4272, 7
    %v4274 = vsub.s32 %v2103, %v4273
    %v4275 = vrot.slane %v4205, %v4274
    %v4276 = vsel %vm2108, %v4275, %v4271
    %v4277 = vlaneseq
    %v4278 = vshrl.u32 %v4277, 7
    %v4279 = vsub.s32 %v2110, %v4278
    %v4280 = vrot.slane %v4208, %v4279
    %v4281 = vsel %vm2115, %v4280, %v4276
    %v4282 = vlaneseq
    %v4283 = vshrl.u32 %v4282, 7
    %v4284 = vsub.s32 %v2117, %v4283
    %v4285 = vrot.slane %v4211, %v4284
    %v4286 = vsel %vm2122, %v4285, %v4281
    %v4287 = vlaneseq
    %v4288 = vshrl.u32 %v4287, 7
    %v4289 = vsub.s32 %v2124, %v4288
    %v4290 = vrot.slane %v4214, %v4289
    %v4291 = vsel %vm2129, %v4290, %v4286
    %v4292 = vlaneseq
    %v4293 = vshrl.u32 %v4292, 7
    %v4294 = vsub.s32 %v2131, %v4293
    %v4295 = vrot.slane %v4217, %v4294
    %v4296 = vsel %vm2136, %v4295, %v4291
    %v4298 = vunpack.c.l.s4 1966171168
    %v4299 = vunpack.c.0.s8 %v4298
    %v4300 = vlaneseq
    %v4301 = vshrl.u32 %v4300, 7
    %v4302 = vsub.s32 %v4299, %v4301
    %v4303 = vrot.slane %v4296, %v4302
    %v4305 = vunpack.c.l.s4 1966171168
    %v4306 = vunpack.c.0.s8 %v4305
    %v4307 = vlaneseq
    %v4308 = vshrl.u32 %v4307, 7
    %v4309 = vsub.s32 %v4306, %v4308
    %v4310 = vrot.slane %v4303, %v4309
    %s4311 = scalar_lea.vmem [#allocation2], 1
    %4312 = vst.msk [vmem:[%s4311] sm:$0x1] %vm2155, %v4310
    %v4313 = vsub.f32 %v2231, %v2779
    %v4314 = vsub.f32 %v2232, %v2784
    %v4315 = vsub.f32 %v2233, %v2789
    %v4316 = vsub.f32 %v2234, %v2794
    %v4317 = vsub.f32 %v2235, %v2799
    %v4318 = vsub.f32 %v2236, %v2804
    %v4319 = vsub.f32 %v2237, %v2809
    %v4320 = vsub.f32 %v2238, %v2814
    %v4321 = vsub.f32 %v2239, %v2819
    %v4322 = vsub.f32 %v2240, %v2824
    %v4323 = vsub.f32 %v2241, %v2829
    %v4324 = vsub.f32 %v2242, %v2834
    %v4325 = vsub.f32 %v2243, %v2839
    %v4326 = vsub.f32 %v2244, %v2844
    %v4327 = vsub.f32 %v2245, %v2849
    %v4328 = vsub.f32 %v2246, %v2854
    %v4329 = vmul.f32 %v4313, %v4313
    %v4330 = vmul.f32 %v4314, %v4314
    %v4331 = vmul.f32 %v4315, %v4315
    %v4332 = vmul.f32 %v4316, %v4316
    %v4333 = vmul.f32 %v4317, %v4317
    %v4334 = vmul.f32 %v4318, %v4318
    %v4335 = vmul.f32 %v4319, %v4319
    %v4336 = vmul.f32 %v4320, %v4320
    %v4337 = vmul.f32 %v4321, %v4321
    %v4338 = vmul.f32 %v4322, %v4322
    %v4339 = vmul.f32 %v4323, %v4323
    %v4340 = vmul.f32 %v4324, %v4324
    %v4341 = vmul.f32 %v4325, %v4325
    %v4342 = vmul.f32 %v4326, %v4326
    %v4343 = vmul.f32 %v4327, %v4327
    %v4344 = vmul.f32 %v4328, %v4328
    %v4345 = vsel %vm47, %v4329, 0.0
    %v4346 = vsel %vm47, %v4330, 0.0
    %v4347 = vadd.f32 %v4345, %v4346
    %v4348 = vsel %vm47, %v4331, 0.0
    %v4349 = vadd.f32 %v4347, %v4348
    %v4350 = vsel %vm47, %v4332, 0.0
    %v4351 = vadd.f32 %v4349, %v4350
    %v4352 = vsel %vm47, %v4333, 0.0
    %v4353 = vadd.f32 %v4351, %v4352
    %v4354 = vsel %vm47, %v4334, 0.0
    %v4355 = vadd.f32 %v4353, %v4354
    %v4356 = vsel %vm47, %v4335, 0.0
    %v4357 = vadd.f32 %v4355, %v4356
    %v4358 = vsel %vm47, %v4336, 0.0
    %v4359 = vadd.f32 %v4357, %v4358
    %v4360 = vsel %vm47, %v4337, 0.0
    %v4361 = vadd.f32 %v4359, %v4360
    %v4362 = vsel %vm47, %v4338, 0.0
    %v4363 = vadd.f32 %v4361, %v4362
    %v4364 = vsel %vm47, %v4339, 0.0
    %v4365 = vadd.f32 %v4363, %v4364
    %v4366 = vsel %vm47, %v4340, 0.0
    %v4367 = vadd.f32 %v4365, %v4366
    %v4368 = vsel %vm47, %v4341, 0.0
    %v4369 = vadd.f32 %v4367, %v4368
    %v4370 = vsel %vm47, %v4342, 0.0
    %v4371 = vadd.f32 %v4369, %v4370
    %v4372 = vsel %vm47, %v4343, 0.0
    %v4373 = vadd.f32 %v4371, %v4372
    %v4374 = vsel %vm47, %v4344, 0.0
    %v4375 = vadd.f32 %v4373, %v4374
    %4376 = vadd.xlane.f32.xlu0 %v4375
    %v4377 = vpop.xlane.xlu0 %4376
    %v4378 = vrot.slane %v4377, 4
    %v4379 = vadd.f32 %v4377, %v4378
    %v4380 = vrot.slane %v4379, 2
    %v4381 = vadd.f32 %v4379, %v4380
    %v4382 = vrot.slane %v4381, 1
    %v4383 = vadd.f32 %v4381, %v4382
    %s4384 = vtos %v4383
    %s4385 = sadd.f32 %s2229, %s4384
    %s4386 = scalar_lea.vmem %s0, 256
    %v4387 = vld [vmem:[%s4386] sm:$0xff]
    %v4388 = vld [vmem:[%s4386 + $0x8] sm:$0xff]
    %v4389 = vld [vmem:[%s4386 + $0x10] sm:$0xff]
    %v4390 = vld [vmem:[%s4386 + $0x18] sm:$0xff]
    %v4391 = vld [vmem:[%s4386 + $0x20] sm:$0xff]
    %v4392 = vld [vmem:[%s4386 + $0x28] sm:$0xff]
    %v4393 = vld [vmem:[%s4386 + $0x30] sm:$0xff]
    %v4394 = vld [vmem:[%s4386 + $0x38] sm:$0xff]
    %v4395 = vld [vmem:[%s4386 + $0x40] sm:$0xff]
    %v4396 = vld [vmem:[%s4386 + $0x48] sm:$0xff]
    %v4397 = vld [vmem:[%s4386 + $0x50] sm:$0xff]
    %v4398 = vld [vmem:[%s4386 + $0x58] sm:$0xff]
    %v4399 = vld [vmem:[%s4386 + $0x60] sm:$0xff]
    %v4400 = vld [vmem:[%s4386 + $0x68] sm:$0xff]
    %v4401 = vld [vmem:[%s4386 + $0x70] sm:$0xff]
    %v4402 = vld [vmem:[%s4386 + $0x78] sm:$0xff]
    %v4404 = vsel %vm47, %v4387, 0
    %v4407 = vsel %vm47, %v4388, 0
    %v4410 = vsel %vm47, %v4389, 0
    %v4413 = vsel %vm47, %v4390, 0
    %v4416 = vsel %vm47, %v4391, 0
    %v4419 = vsel %vm47, %v4392, 0
    %v4422 = vsel %vm47, %v4393, 0
    %v4425 = vsel %vm47, %v4394, 0
    %v4428 = vsel %vm47, %v4395, 0
    %v4431 = vsel %vm47, %v4396, 0
    %v4434 = vsel %vm47, %v4397, 0
    %v4437 = vsel %vm47, %v4398, 0
    %v4440 = vsel %vm47, %v4399, 0
    %v4443 = vsel %vm47, %v4400, 0
    %v4446 = vsel %vm47, %v4401, 0
    %v4449 = vsel %vm47, %v4402, 0
    %4451 = vmatprep.subr.mxu0 %v20
    %4452 = vmatpush1.msra.mxu0 %v19
    %4453 = vmatprep.subr.mxu0 %v22
    %4454 = vmatpush1.msra.mxu0 %v21
    %4455 = vmatprep.subr.mxu0 %v24
    %4456 = vmatpush1.msra.mxu0 %v23
    %4457 = vmatprep.subr.mxu0 %v26
    %4458 = vmatpush1.msra.mxu0 %v25
    %4459 = vmatprep.subr.mxu0 0.0
    %4460 = vmatpush1.msra.mxu0 0.0
    %4461 = vmatprep.subr.mxu0 0.0
    %4462 = vmatpush1.msra.mxu0 0.0
    %4463 = vmatprep.subr.mxu0 0.0
    %4464 = vmatpush1.msra.mxu0 0.0
    %4465 = vmatprep.subr.mxu0 0.0
    %4466 = vmatpush1.msra.mxu0 0.0
    %4467 = vmatprep.subr.mxu0 0.0
    %4468 = vmatpush1.msra.mxu0 0.0
    %4469 = vmatprep.subr.mxu0 0.0
    %4470 = vmatpush1.msra.mxu0 0.0
    %4471 = vmatprep.subr.mxu0 0.0
    %4472 = vmatpush1.msra.mxu0 0.0
    %4473 = vmatprep.subr.mxu0 0.0
    %4474 = vmatpush1.msra.mxu0 0.0
    %4475 = vmatprep.subr.mxu0 0.0
    %4476 = vmatpush1.msra.mxu0 0.0
    %4477 = vmatprep.subr.mxu0 0.0
    %4478 = vmatpush1.msra.mxu0 0.0
    %4479 = vmatprep.subr.mxu0 0.0
    %4480 = vmatpush1.msra.mxu0 0.0
    %4481 = vmatprep.subr.mxu0 0.0
    %4482 = vmatpush1.msra.mxu0 0.0
    %4483 = vmatprep.subr.mxu0 0.0
    %4484 = vmatpush1.msra.mxu0 0.0
    %4485 = vmatprep.subr.mxu0 0.0
    %4486 = vmatpush1.msra.mxu0 0.0
    %4487 = vmatprep.subr.mxu0 0.0
    %4488 = vmatpush1.msra.mxu0 0.0
    %4489 = vmatprep.subr.mxu0 0.0
    %4490 = vmatpush1.msra.mxu0 0.0
    %4491 = vmatprep.subr.mxu0 0.0
    %4492 = vmatpush1.msra.mxu0 0.0
    %4493 = vmatprep.subr.mxu0 0.0
    %4494 = vmatpush1.msra.mxu0 0.0
    %4495 = vmatprep.subr.mxu0 0.0
    %4496 = vmatpush1.msra.mxu0 0.0
    %4497 = vmatprep.subr.mxu0 0.0
    %4498 = vmatpush1.msra.mxu0 0.0
    %4499 = vmatprep.subr.mxu0 0.0
    %4500 = vmatpush1.msra.mxu0 0.0
    %4501 = vmatprep.subr.mxu0 0.0
    %4502 = vmatpush1.msra.mxu0 0.0
    %4503 = vmatprep.subr.mxu0 0.0
    %4504 = vmatpush1.msra.mxu0 0.0
    %4505 = vmatprep.subr.mxu0 0.0
    %4506 = vmatpush1.msra.mxu0 0.0
    %4507 = vmatprep.subr.mxu0 0.0
    %4508 = vmatpush1.msra.mxu0 0.0
    %4509 = vmatprep.subr.mxu0 0.0
    %4510 = vmatpush1.msra.mxu0 0.0
    %4511 = vmatprep.subr.mxu0 0.0
    %4512 = vmatpush1.msra.mxu0 0.0
    %4513 = vmatprep.subr.mxu0 0.0
    %4514 = vmatpush1.msra.mxu0 0.0
    %4515 = vmatprep.mubr.f32.mxu0 0.0
    %4516 = vmatmul.mubr.f32.gmra.mrb[0].mxu0 %v4404
    %v4517 = vpop.f32.mrb[0].mxu0
    %v4518 = vadd.f32 0.0, %v4517
    %v4519 = vpop.f32.mrb[0].mxu0
    %v4520 = vadd.f32 0.0, %v4519
    %4521 = vmatprep.mubr.f32.mxu0 0.0
    %4522 = vmatmul.mubr.f32.gmra.mrb[0].mxu0 %v4407
    %v4523 = vpop.f32.mrb[0].mxu0
    %v4524 = vadd.f32 0.0, %v4523
    %v4525 = vpop.f32.mrb[0].mxu0
    %v4526 = vadd.f32 0.0, %v4525
    %4527 = vmatprep.mubr.f32.mxu0 0.0
    %4528 = vmatmul.mubr.f32.gmra.mrb[0].mxu0 %v4410
    %v4529 = vpop.f32.mrb[0].mxu0
    %v4530 = vadd.f32 0.0, %v4529
    %v4531 = vpop.f32.mrb[0].mxu0
    %v4532 = vadd.f32 0.0, %v4531
    %4533 = vmatprep.mubr.f32.mxu0 0.0
    %4534 = vmatmul.mubr.f32.gmra.mrb[0].mxu0 %v4413
    %v4535 = vpop.f32.mrb[0].mxu0
    %v4536 = vadd.f32 0.0, %v4535
    %v4537 = vpop.f32.mrb[0].mxu0
    %v4538 = vadd.f32 0.0, %v4537
    %4539 = vmatprep.mubr.f32.mxu0 0.0
    %4540 = vmatmul.mubr.f32.gmra.mrb[0].mxu0 %v4416
    %v4541 = vpop.f32.mrb[0].mxu0
    %v4542 = vadd.f32 0.0, %v4541
    %v4543 = vpop.f32.mrb[0].mxu0
    %v4544 = vadd.f32 0.0, %v4543
    %4545 = vmatprep.mubr.f32.mxu0 0.0
    %4546 = vmatmul.mubr.f32.gmra.mrb[0].mxu0 %v4419
    %v4547 = vpop.f32.mrb[0].mxu0
    %v4548 = vadd.f32 0.0, %v4547
    %v4549 = vpop.f32.mrb[0].mxu0
    %v4550 = vadd.f32 0.0, %v4549
    %4551 = vmatprep.mubr.f32.mxu0 0.0
    %4552 = vmatmul.mubr.f32.gmra.mrb[0].mxu0 %v4422
    %v4553 = vpop.f32.mrb[0].mxu0
    %v4554 = vadd.f32 0.0, %v4553
    %v4555 = vpop.f32.mrb[0].mxu0
    %v4556 = vadd.f32 0.0, %v4555
    %4557 = vmatprep.mubr.f32.mxu0 0.0
    %4558 = vmatmul.mubr.f32.gmra.mrb[0].mxu0 %v4425
    %v4559 = vpop.f32.mrb[0].mxu0
    %v4560 = vadd.f32 0.0, %v4559
    %v4561 = vpop.f32.mrb[0].mxu0
    %v4562 = vadd.f32 0.0, %v4561
    %4563 = vmatprep.mubr.f32.mxu0 0.0
    %4564 = vmatmul.mubr.f32.gmra.mrb[0].mxu0 %v4428
    %v4565 = vpop.f32.mrb[0].mxu0
    %v4566 = vadd.f32 0.0, %v4565
    %v4567 = vpop.f32.mrb[0].mxu0
    %v4568 = vadd.f32 0.0, %v4567
    %4569 = vmatprep.mubr.f32.mxu0 0.0
    %4570 = vmatmul.mubr.f32.gmra.mrb[0].mxu0 %v4431
    %v4571 = vpop.f32.mrb[0].mxu0
    %v4572 = vadd.f32 0.0, %v4571
    %v4573 = vpop.f32.mrb[0].mxu0
    %v4574 = vadd.f32 0.0, %v4573
    %4575 = vmatprep.mubr.f32.mxu0 0.0
    %4576 = vmatmul.mubr.f32.gmra.mrb[0].mxu0 %v4434
    %v4577 = vpop.f32.mrb[0].mxu0
    %v4578 = vadd.f32 0.0, %v4577
    %v4579 = vpop.f32.mrb[0].mxu0
    %v4580 = vadd.f32 0.0, %v4579
    %4581 = vmatprep.mubr.f32.mxu0 0.0
    %4582 = vmatmul.mubr.f32.gmra.mrb[0].mxu0 %v4437
    %v4583 = vpop.f32.mrb[0].mxu0
    %v4584 = vadd.f32 0.0, %v4583
    %v4585 = vpop.f32.mrb[0].mxu0
    %v4586 = vadd.f32 0.0, %v4585
    %4587 = vmatprep.mubr.f32.mxu0 0.0
    %4588 = vmatmul.mubr.f32.gmra.mrb[0].mxu0 %v4440
    %v4589 = vpop.f32.mrb[0].mxu0
    %v4590 = vadd.f32 0.0, %v4589
    %v4591 = vpop.f32.mrb[0].mxu0
    %v4592 = vadd.f32 0.0, %v4591
    %4593 = vmatprep.mubr.f32.mxu0 0.0
    %4594 = vmatmul.mubr.f32.gmra.mrb[0].mxu0 %v4443
    %v4595 = vpop.f32.mrb[0].mxu0
    %v4596 = vadd.f32 0.0, %v4595
    %v4597 = vpop.f32.mrb[0].mxu0
    %v4598 = vadd.f32 0.0, %v4597
    %4599 = vmatprep.mubr.f32.mxu0 0.0
    %4600 = vmatmul.mubr.f32.gmra.mrb[0].mxu0 %v4446
    %v4601 = vpop.f32.mrb[0].mxu0
    %v4602 = vadd.f32 0.0, %v4601
    %v4603 = vpop.f32.mrb[0].mxu0
    %v4604 = vadd.f32 0.0, %v4603
    %4605 = vmatprep.mubr.f32.mxu0 0.0
    %4606 = vmatmul.mubr.f32.gmra.mrb[0].mxu0 %v4449
    %v4607 = vpop.f32.mrb[0].mxu0
    %v4608 = vadd.f32 0.0, %v4607
    %v4609 = vpop.f32.mrb[0].mxu0
    %v4610 = vadd.f32 0.0, %v4609
    %4611 = vdwg.mxu0
    %v4612 = vsub.f32 %v261, %v4518
    %v4613 = vsub.f32 %v265, %v4520
    %v4614 = vsub.f32 %v261, %v4524
    %v4615 = vsub.f32 %v265, %v4526
    %v4616 = vsub.f32 %v261, %v4530
    %v4617 = vsub.f32 %v265, %v4532
    %v4618 = vsub.f32 %v261, %v4536
    %v4619 = vsub.f32 %v265, %v4538
    %v4620 = vsub.f32 %v261, %v4542
    %v4621 = vsub.f32 %v265, %v4544
    %v4622 = vsub.f32 %v261, %v4548
    %v4623 = vsub.f32 %v265, %v4550
    %v4624 = vsub.f32 %v261, %v4554
    %v4625 = vsub.f32 %v265, %v4556
    %v4626 = vsub.f32 %v261, %v4560
    %v4627 = vsub.f32 %v265, %v4562
    %v4628 = vsub.f32 %v261, %v4566
    %v4629 = vsub.f32 %v265, %v4568
    %v4630 = vsub.f32 %v261, %v4572
    %v4631 = vsub.f32 %v265, %v4574
    %v4632 = vsub.f32 %v261, %v4578
    %v4633 = vsub.f32 %v265, %v4580
    %v4634 = vsub.f32 %v261, %v4584
    %v4635 = vsub.f32 %v265, %v4586
    %v4636 = vsub.f32 %v261, %v4590
    %v4637 = vsub.f32 %v265, %v4592
    %v4638 = vsub.f32 %v261, %v4596
    %v4639 = vsub.f32 %v265, %v4598
    %v4640 = vsub.f32 %v261, %v4602
    %v4641 = vsub.f32 %v265, %v4604
    %v4642 = vsub.f32 %v261, %v4608
    %v4643 = vsub.f32 %v265, %v4610
    %vm4644 = vcmp.le.f32.partialorder %v4612, %v4613
    %v4645 = vsel %vm4644, %v4612, %v4613
    %v4646 = vsel %vm4644, %v29, %v30
    %4647 = vmin.index.xlane.f32.xlu0 %v4645
    %v4648 = vpop.xlane.xlu0 %4647
    %4649 = vset.pattern.permute.xlu0 %v4648
    %4650 = vperm.xlu0 %4649, %v4646
    %v4651 = vpop.permute.xlu0 %4650
    %vm4652 = vcmp.le.f32.partialorder %v4614, %v4615
    %v4653 = vsel %vm4652, %v4614, %v4615
    %v4654 = vsel %vm4652, %v29, %v30
    %4655 = vmin.index.xlane.f32.xlu0 %v4653
    %v4656 = vpop.xlane.xlu0 %4655
    %4657 = vset.pattern.permute.xlu0 %v4656
    %4658 = vperm.xlu0 %4657, %v4654
    %v4659 = vpop.permute.xlu0 %4658
    %vm4660 = vcmp.le.f32.partialorder %v4616, %v4617
    %v4661 = vsel %vm4660, %v4616, %v4617
    %v4662 = vsel %vm4660, %v29, %v30
    %4663 = vmin.index.xlane.f32.xlu0 %v4661
    %v4664 = vpop.xlane.xlu0 %4663
    %4665 = vset.pattern.permute.xlu0 %v4664
    %4666 = vperm.xlu0 %4665, %v4662
    %v4667 = vpop.permute.xlu0 %4666
    %vm4668 = vcmp.le.f32.partialorder %v4618, %v4619
    %v4669 = vsel %vm4668, %v4618, %v4619
    %v4670 = vsel %vm4668, %v29, %v30
    %4671 = vmin.index.xlane.f32.xlu0 %v4669
    %v4672 = vpop.xlane.xlu0 %4671
    %4673 = vset.pattern.permute.xlu0 %v4672
    %4674 = vperm.xlu0 %4673, %v4670
    %v4675 = vpop.permute.xlu0 %4674
    %vm4676 = vcmp.le.f32.partialorder %v4620, %v4621
    %v4677 = vsel %vm4676, %v4620, %v4621
    %v4678 = vsel %vm4676, %v29, %v30
    %4679 = vmin.index.xlane.f32.xlu0 %v4677
    %v4680 = vpop.xlane.xlu0 %4679
    %4681 = vset.pattern.permute.xlu0 %v4680
    %4682 = vperm.xlu0 %4681, %v4678
    %v4683 = vpop.permute.xlu0 %4682
    %vm4684 = vcmp.le.f32.partialorder %v4622, %v4623
    %v4685 = vsel %vm4684, %v4622, %v4623
    %v4686 = vsel %vm4684, %v29, %v30
    %4687 = vmin.index.xlane.f32.xlu0 %v4685
    %v4688 = vpop.xlane.xlu0 %4687
    %4689 = vset.pattern.permute.xlu0 %v4688
    %4690 = vperm.xlu0 %4689, %v4686
    %v4691 = vpop.permute.xlu0 %4690
    %vm4692 = vcmp.le.f32.partialorder %v4624, %v4625
    %v4693 = vsel %vm4692, %v4624, %v4625
    %v4694 = vsel %vm4692, %v29, %v30
    %4695 = vmin.index.xlane.f32.xlu0 %v4693
    %v4696 = vpop.xlane.xlu0 %4695
    %4697 = vset.pattern.permute.xlu0 %v4696
    %4698 = vperm.xlu0 %4697, %v4694
    %v4699 = vpop.permute.xlu0 %4698
    %vm4700 = vcmp.le.f32.partialorder %v4626, %v4627
    %v4701 = vsel %vm4700, %v4626, %v4627
    %v4702 = vsel %vm4700, %v29, %v30
    %4703 = vmin.index.xlane.f32.xlu0 %v4701
    %v4704 = vpop.xlane.xlu0 %4703
    %4705 = vset.pattern.permute.xlu0 %v4704
    %4706 = vperm.xlu0 %4705, %v4702
    %v4707 = vpop.permute.xlu0 %4706
    %vm4708 = vcmp.le.f32.partialorder %v4628, %v4629
    %v4709 = vsel %vm4708, %v4628, %v4629
    %v4710 = vsel %vm4708, %v29, %v30
    %4711 = vmin.index.xlane.f32.xlu0 %v4709
    %v4712 = vpop.xlane.xlu0 %4711
    %4713 = vset.pattern.permute.xlu0 %v4712
    %4714 = vperm.xlu0 %4713, %v4710
    %v4715 = vpop.permute.xlu0 %4714
    %vm4716 = vcmp.le.f32.partialorder %v4630, %v4631
    %v4717 = vsel %vm4716, %v4630, %v4631
    %v4718 = vsel %vm4716, %v29, %v30
    %4719 = vmin.index.xlane.f32.xlu0 %v4717
    %v4720 = vpop.xlane.xlu0 %4719
    %4721 = vset.pattern.permute.xlu0 %v4720
    %4722 = vperm.xlu0 %4721, %v4718
    %v4723 = vpop.permute.xlu0 %4722
    %vm4724 = vcmp.le.f32.partialorder %v4632, %v4633
    %v4725 = vsel %vm4724, %v4632, %v4633
    %v4726 = vsel %vm4724, %v29, %v30
    %4727 = vmin.index.xlane.f32.xlu0 %v4725
    %v4728 = vpop.xlane.xlu0 %4727
    %4729 = vset.pattern.permute.xlu0 %v4728
    %4730 = vperm.xlu0 %4729, %v4726
    %v4731 = vpop.permute.xlu0 %4730
    %vm4732 = vcmp.le.f32.partialorder %v4634, %v4635
    %v4733 = vsel %vm4732, %v4634, %v4635
    %v4734 = vsel %vm4732, %v29, %v30
    %4735 = vmin.index.xlane.f32.xlu0 %v4733
    %v4736 = vpop.xlane.xlu0 %4735
    %4737 = vset.pattern.permute.xlu0 %v4736
    %4738 = vperm.xlu0 %4737, %v4734
    %v4739 = vpop.permute.xlu0 %4738
    %vm4740 = vcmp.le.f32.partialorder %v4636, %v4637
    %v4741 = vsel %vm4740, %v4636, %v4637
    %v4742 = vsel %vm4740, %v29, %v30
    %4743 = vmin.index.xlane.f32.xlu0 %v4741
    %v4744 = vpop.xlane.xlu0 %4743
    %4745 = vset.pattern.permute.xlu0 %v4744
    %4746 = vperm.xlu0 %4745, %v4742
    %v4747 = vpop.permute.xlu0 %4746
    %vm4748 = vcmp.le.f32.partialorder %v4638, %v4639
    %v4749 = vsel %vm4748, %v4638, %v4639
    %v4750 = vsel %vm4748, %v29, %v30
    %4751 = vmin.index.xlane.f32.xlu0 %v4749
    %v4752 = vpop.xlane.xlu0 %4751
    %4753 = vset.pattern.permute.xlu0 %v4752
    %4754 = vperm.xlu0 %4753, %v4750
    %v4755 = vpop.permute.xlu0 %4754
    %vm4756 = vcmp.le.f32.partialorder %v4640, %v4641
    %v4757 = vsel %vm4756, %v4640, %v4641
    %v4758 = vsel %vm4756, %v29, %v30
    %4759 = vmin.index.xlane.f32.xlu0 %v4757
    %v4760 = vpop.xlane.xlu0 %4759
    %4761 = vset.pattern.permute.xlu0 %v4760
    %4762 = vperm.xlu0 %4761, %v4758
    %v4763 = vpop.permute.xlu0 %4762
    %vm4764 = vcmp.le.f32.partialorder %v4642, %v4643
    %v4765 = vsel %vm4764, %v4642, %v4643
    %v4766 = vsel %vm4764, %v29, %v30
    %4767 = vmin.index.xlane.f32.xlu0 %v4765
    %v4768 = vpop.xlane.xlu0 %4767
    %4769 = vset.pattern.permute.xlu0 %v4768
    %4770 = vperm.xlu0 %4769, %v4766
    %v4771 = vpop.permute.xlu0 %4770
    %vm4772 = vcmp.eq.s32.totalorder %v29, %v4651
    %vm4773 = vcmp.eq.s32.totalorder %v30, %v4651
    %vm4774 = vcmp.eq.s32.totalorder %v29, %v4659
    %vm4775 = vcmp.eq.s32.totalorder %v30, %v4659
    %vm4776 = vcmp.eq.s32.totalorder %v29, %v4667
    %vm4777 = vcmp.eq.s32.totalorder %v30, %v4667
    %vm4778 = vcmp.eq.s32.totalorder %v29, %v4675
    %vm4779 = vcmp.eq.s32.totalorder %v30, %v4675
    %vm4780 = vcmp.eq.s32.totalorder %v29, %v4683
    %vm4781 = vcmp.eq.s32.totalorder %v30, %v4683
    %vm4782 = vcmp.eq.s32.totalorder %v29, %v4691
    %vm4783 = vcmp.eq.s32.totalorder %v30, %v4691
    %vm4784 = vcmp.eq.s32.totalorder %v29, %v4699
    %vm4785 = vcmp.eq.s32.totalorder %v30, %v4699
    %vm4786 = vcmp.eq.s32.totalorder %v29, %v4707
    %vm4787 = vcmp.eq.s32.totalorder %v30, %v4707
    %vm4788 = vcmp.eq.s32.totalorder %v29, %v4715
    %vm4789 = vcmp.eq.s32.totalorder %v30, %v4715
    %vm4790 = vcmp.eq.s32.totalorder %v29, %v4723
    %vm4791 = vcmp.eq.s32.totalorder %v30, %v4723
    %vm4792 = vcmp.eq.s32.totalorder %v29, %v4731
    %vm4793 = vcmp.eq.s32.totalorder %v30, %v4731
    %vm4794 = vcmp.eq.s32.totalorder %v29, %v4739
    %vm4795 = vcmp.eq.s32.totalorder %v30, %v4739
    %vm4796 = vcmp.eq.s32.totalorder %v29, %v4747
    %vm4797 = vcmp.eq.s32.totalorder %v30, %v4747
    %vm4798 = vcmp.eq.s32.totalorder %v29, %v4755
    %vm4799 = vcmp.eq.s32.totalorder %v30, %v4755
    %vm4800 = vcmp.eq.s32.totalorder %v29, %v4763
    %vm4801 = vcmp.eq.s32.totalorder %v30, %v4763
    %vm4802 = vcmp.eq.s32.totalorder %v29, %v4771
    %vm4803 = vcmp.eq.s32.totalorder %v30, %v4771
    %v4804 = vsel %vm4772, 1, 0
    %v4805 = vsel %vm4773, 1, 0
    %v4806 = vsel %vm4774, 1, 0
    %v4807 = vsel %vm4775, 1, 0
    %v4808 = vsel %vm4776, 1, 0
    %v4809 = vsel %vm4777, 1, 0
    %v4810 = vsel %vm4778, 1, 0
    %v4811 = vsel %vm4779, 1, 0
    %v4812 = vsel %vm4780, 1, 0
    %v4813 = vsel %vm4781, 1, 0
    %v4814 = vsel %vm4782, 1, 0
    %v4815 = vsel %vm4783, 1, 0
    %v4816 = vsel %vm4784, 1, 0
    %v4817 = vsel %vm4785, 1, 0
    %v4818 = vsel %vm4786, 1, 0
    %v4819 = vsel %vm4787, 1, 0
    %v4820 = vsel %vm4788, 1, 0
    %v4821 = vsel %vm4789, 1, 0
    %v4822 = vsel %vm4790, 1, 0
    %v4823 = vsel %vm4791, 1, 0
    %v4824 = vsel %vm4792, 1, 0
    %v4825 = vsel %vm4793, 1, 0
    %v4826 = vsel %vm4794, 1, 0
    %v4827 = vsel %vm4795, 1, 0
    %v4828 = vsel %vm4796, 1, 0
    %v4829 = vsel %vm4797, 1, 0
    %v4830 = vsel %vm4798, 1, 0
    %v4831 = vsel %vm4799, 1, 0
    %v4832 = vsel %vm4800, 1, 0
    %v4833 = vsel %vm4801, 1, 0
    %v4834 = vsel %vm4802, 1, 0
    %v4835 = vsel %vm4803, 1, 0
    %v4836 = vcvt.s32.f32 %v4804
    %v4837 = vcvt.s32.f32 %v4805
    %v4838 = vcvt.s32.f32 %v4806
    %v4839 = vcvt.s32.f32 %v4807
    %v4840 = vcvt.s32.f32 %v4808
    %v4841 = vcvt.s32.f32 %v4809
    %v4842 = vcvt.s32.f32 %v4810
    %v4843 = vcvt.s32.f32 %v4811
    %v4844 = vcvt.s32.f32 %v4812
    %v4845 = vcvt.s32.f32 %v4813
    %v4846 = vcvt.s32.f32 %v4814
    %v4847 = vcvt.s32.f32 %v4815
    %v4848 = vcvt.s32.f32 %v4816
    %v4849 = vcvt.s32.f32 %v4817
    %v4850 = vcvt.s32.f32 %v4818
    %v4851 = vcvt.s32.f32 %v4819
    %v4852 = vcvt.s32.f32 %v4820
    %v4853 = vcvt.s32.f32 %v4821
    %v4854 = vcvt.s32.f32 %v4822
    %v4855 = vcvt.s32.f32 %v4823
    %v4856 = vcvt.s32.f32 %v4824
    %v4857 = vcvt.s32.f32 %v4825
    %v4858 = vcvt.s32.f32 %v4826
    %v4859 = vcvt.s32.f32 %v4827
    %v4860 = vcvt.s32.f32 %v4828
    %v4861 = vcvt.s32.f32 %v4829
    %v4862 = vcvt.s32.f32 %v4830
    %v4863 = vcvt.s32.f32 %v4831
    %v4864 = vcvt.s32.f32 %v4832
    %v4865 = vcvt.s32.f32 %v4833
    %v4866 = vcvt.s32.f32 %v4834
    %v4867 = vcvt.s32.f32 %v4835
    %4868 = vmatprep.subr.mxu0 %v20
    %4869 = vmatpush1.xpose.msra.mxu0 %v19
    %4870 = vmatprep.subr.mxu0 %v22
    %4871 = vmatpush1.xpose.msra.mxu0 %v21
    %4872 = vmatprep.subr.mxu0 %v24
    %4873 = vmatpush1.xpose.msra.mxu0 %v23
    %4874 = vmatprep.subr.mxu0 %v26
    %4875 = vmatpush1.xpose.msra.mxu0 %v25
    %4876 = vmatprep.subr.mxu0 0.0
    %4877 = vmatpush1.xpose.msra.mxu0 0.0
    %4878 = vmatprep.subr.mxu0 0.0
    %4879 = vmatpush1.xpose.msra.mxu0 0.0
    %4880 = vmatprep.subr.mxu0 0.0
    %4881 = vmatpush1.xpose.msra.mxu0 0.0
    %4882 = vmatprep.subr.mxu0 0.0
    %4883 = vmatpush1.xpose.msra.mxu0 0.0
    %4884 = vmatprep.subr.mxu0 0.0
    %4885 = vmatpush1.xpose.msra.mxu0 0.0
    %4886 = vmatprep.subr.mxu0 0.0
    %4887 = vmatpush1.xpose.msra.mxu0 0.0
    %4888 = vmatprep.subr.mxu0 0.0
    %4889 = vmatpush1.xpose.msra.mxu0 0.0
    %4890 = vmatprep.subr.mxu0 0.0
    %4891 = vmatpush1.xpose.msra.mxu0 0.0
    %4892 = vmatprep.subr.mxu0 0.0
    %4893 = vmatpush1.xpose.msra.mxu0 0.0
    %4894 = vmatprep.subr.mxu0 0.0
    %4895 = vmatpush1.xpose.msra.mxu0 0.0
    %4896 = vmatprep.subr.mxu0 0.0
    %4897 = vmatpush1.xpose.msra.mxu0 0.0
    %4898 = vmatprep.subr.mxu0 0.0
    %4899 = vmatpush1.xpose.msra.mxu0 0.0
    %4900 = vmatprep.subr.mxu0 0.0
    %4901 = vmatpush1.xpose.msra.mxu0 0.0
    %4902 = vmatprep.subr.mxu0 0.0
    %4903 = vmatpush1.xpose.msra.mxu0 0.0
    %4904 = vmatprep.subr.mxu0 0.0
    %4905 = vmatpush1.xpose.msra.mxu0 0.0
    %4906 = vmatprep.subr.mxu0 0.0
    %4907 = vmatpush1.xpose.msra.mxu0 0.0
    %4908 = vmatprep.subr.mxu0 0.0
    %4909 = vmatpush1.xpose.msra.mxu0 0.0
    %4910 = vmatprep.subr.mxu0 0.0
    %4911 = vmatpush1.xpose.msra.mxu0 0.0
    %4912 = vmatprep.subr.mxu0 0.0
    %4913 = vmatpush1.xpose.msra.mxu0 0.0
    %4914 = vmatprep.subr.mxu0 0.0
    %4915 = vmatpush1.xpose.msra.mxu0 0.0
    %4916 = vmatprep.subr.mxu0 0.0
    %4917 = vmatpush1.xpose.msra.mxu0 0.0
    %4918 = vmatprep.subr.mxu0 0.0
    %4919 = vmatpush1.xpose.msra.mxu0 0.0
    %4920 = vmatprep.subr.mxu0 0.0
    %4921 = vmatpush1.xpose.msra.mxu0 0.0
    %4922 = vmatprep.subr.mxu0 0.0
    %4923 = vmatpush1.xpose.msra.mxu0 0.0
    %4924 = vmatprep.subr.mxu0 0.0
    %4925 = vmatpush1.xpose.msra.mxu0 0.0
    %4926 = vmatprep.subr.mxu0 0.0
    %4927 = vmatpush1.xpose.msra.mxu0 0.0
    %4928 = vmatprep.subr.mxu0 0.0
    %4929 = vmatpush1.xpose.msra.mxu0 0.0
    %4930 = vmatprep.subr.mxu0 0.0
    %4931 = vmatpush1.xpose.msra.mxu0 0.0
    %4932 = vmatprep.mubr.f32.mxu0 %v4837
    %4933 = vmatmul.mubr.f32.gmra.mrb[0].mxu0 %v4836
    %v4934 = vpop.f32.mrb[0].mxu0
    %v4935 = vadd.f32 0.0, %v4934
    %v4936 = vpop.f32.mrb[0].mxu0
    %4937 = vmatprep.mubr.f32.mxu0 %v4839
    %4938 = vmatmul.mubr.f32.gmra.mrb[0].mxu0 %v4838
    %v4939 = vpop.f32.mrb[0].mxu0
    %v4940 = vadd.f32 0.0, %v4939
    %v4941 = vpop.f32.mrb[0].mxu0
    %4942 = vmatprep.mubr.f32.mxu0 %v4841
    %4943 = vmatmul.mubr.f32.gmra.mrb[0].mxu0 %v4840
    %v4944 = vpop.f32.mrb[0].mxu0
    %v4945 = vadd.f32 0.0, %v4944
    %v4946 = vpop.f32.mrb[0].mxu0
    %4947 = vmatprep.mubr.f32.mxu0 %v4843
    %4948 = vmatmul.mubr.f32.gmra.mrb[0].mxu0 %v4842
    %v4949 = vpop.f32.mrb[0].mxu0
    %v4950 = vadd.f32 0.0, %v4949
    %v4951 = vpop.f32.mrb[0].mxu0
    %4952 = vmatprep.mubr.f32.mxu0 %v4845
    %4953 = vmatmul.mubr.f32.gmra.mrb[0].mxu0 %v4844
    %v4954 = vpop.f32.mrb[0].mxu0
    %v4955 = vadd.f32 0.0, %v4954
    %v4956 = vpop.f32.mrb[0].mxu0
    %4957 = vmatprep.mubr.f32.mxu0 %v4847
    %4958 = vmatmul.mubr.f32.gmra.mrb[0].mxu0 %v4846
    %v4959 = vpop.f32.mrb[0].mxu0
    %v4960 = vadd.f32 0.0, %v4959
    %v4961 = vpop.f32.mrb[0].mxu0
    %4962 = vmatprep.mubr.f32.mxu0 %v4849
    %4963 = vmatmul.mubr.f32.gmra.mrb[0].mxu0 %v4848
    %v4964 = vpop.f32.mrb[0].mxu0
    %v4965 = vadd.f32 0.0, %v4964
    %v4966 = vpop.f32.mrb[0].mxu0
    %4967 = vmatprep.mubr.f32.mxu0 %v4851
    %4968 = vmatmul.mubr.f32.gmra.mrb[0].mxu0 %v4850
    %v4969 = vpop.f32.mrb[0].mxu0
    %v4970 = vadd.f32 0.0, %v4969
    %v4971 = vpop.f32.mrb[0].mxu0
    %4972 = vmatprep.mubr.f32.mxu0 %v4853
    %4973 = vmatmul.mubr.f32.gmra.mrb[0].mxu0 %v4852
    %v4974 = vpop.f32.mrb[0].mxu0
    %v4975 = vadd.f32 0.0, %v4974
    %v4976 = vpop.f32.mrb[0].mxu0
    %4977 = vmatprep.mubr.f32.mxu0 %v4855
    %4978 = vmatmul.mubr.f32.gmra.mrb[0].mxu0 %v4854
    %v4979 = vpop.f32.mrb[0].mxu0
    %v4980 = vadd.f32 0.0, %v4979
    %v4981 = vpop.f32.mrb[0].mxu0
    %4982 = vmatprep.mubr.f32.mxu0 %v4857
    %4983 = vmatmul.mubr.f32.gmra.mrb[0].mxu0 %v4856
    %v4984 = vpop.f32.mrb[0].mxu0
    %v4985 = vadd.f32 0.0, %v4984
    %v4986 = vpop.f32.mrb[0].mxu0
    %4987 = vmatprep.mubr.f32.mxu0 %v4859
    %4988 = vmatmul.mubr.f32.gmra.mrb[0].mxu0 %v4858
    %v4989 = vpop.f32.mrb[0].mxu0
    %v4990 = vadd.f32 0.0, %v4989
    %v4991 = vpop.f32.mrb[0].mxu0
    %4992 = vmatprep.mubr.f32.mxu0 %v4861
    %4993 = vmatmul.mubr.f32.gmra.mrb[0].mxu0 %v4860
    %v4994 = vpop.f32.mrb[0].mxu0
    %v4995 = vadd.f32 0.0, %v4994
    %v4996 = vpop.f32.mrb[0].mxu0
    %4997 = vmatprep.mubr.f32.mxu0 %v4863
    %4998 = vmatmul.mubr.f32.gmra.mrb[0].mxu0 %v4862
    %v4999 = vpop.f32.mrb[0].mxu0
    %v5000 = vadd.f32 0.0, %v4999
    %v5001 = vpop.f32.mrb[0].mxu0
    %5002 = vmatprep.mubr.f32.mxu0 %v4865
    %5003 = vmatmul.mubr.f32.gmra.mrb[0].mxu0 %v4864
    %v5004 = vpop.f32.mrb[0].mxu0
    %v5005 = vadd.f32 0.0, %v5004
    %v5006 = vpop.f32.mrb[0].mxu0
    %5007 = vmatprep.mubr.f32.mxu0 %v4867
    %5008 = vmatmul.mubr.f32.gmra.mrb[0].mxu0 %v4866
    %v5009 = vpop.f32.mrb[0].mxu0
    %v5010 = vadd.f32 0.0, %v5009
    %v5011 = vpop.f32.mrb[0].mxu0
    %5012 = vdwg.mxu0
    %s5013 = scalar_lea.vmem %s3, 256
    %5014 = vst.msk [vmem:[%s5013] sm:$0xff] %vm47, %v4935
    %5015 = vst.msk [vmem:[%s5013 + $0x8] sm:$0xff] %vm47, %v4940
    %5016 = vst.msk [vmem:[%s5013 + $0x10] sm:$0xff] %vm47, %v4945
    %5017 = vst.msk [vmem:[%s5013 + $0x18] sm:$0xff] %vm47, %v4950
    %5018 = vst.msk [vmem:[%s5013 + $0x20] sm:$0xff] %vm47, %v4955
    %5019 = vst.msk [vmem:[%s5013 + $0x28] sm:$0xff] %vm47, %v4960
    %5020 = vst.msk [vmem:[%s5013 + $0x30] sm:$0xff] %vm47, %v4965
    %5021 = vst.msk [vmem:[%s5013 + $0x38] sm:$0xff] %vm47, %v4970
    %5022 = vst.msk [vmem:[%s5013 + $0x40] sm:$0xff] %vm47, %v4975
    %5023 = vst.msk [vmem:[%s5013 + $0x48] sm:$0xff] %vm47, %v4980
    %5024 = vst.msk [vmem:[%s5013 + $0x50] sm:$0xff] %vm47, %v4985
    %5025 = vst.msk [vmem:[%s5013 + $0x58] sm:$0xff] %vm47, %v4990
    %5026 = vst.msk [vmem:[%s5013 + $0x60] sm:$0xff] %vm47, %v4995
    %5027 = vst.msk [vmem:[%s5013 + $0x68] sm:$0xff] %vm47, %v5000
    %5028 = vst.msk [vmem:[%s5013 + $0x70] sm:$0xff] %vm47, %v5005
    %5029 = vst.msk [vmem:[%s5013 + $0x78] sm:$0xff] %vm47, %v5010
    %v5030 = vlaneseq
    %v5031 = vshrl.u32 %v5030, 7
    %v5032 = vsub.s32 0, %v5031
    %v5033 = vrot.slane %v4651, %v5032
    %v5034 = vlaneseq
    %v5035 = vshrl.u32 %v5034, 7
    %v5036 = vsub.s32 1, %v5035
    %v5037 = vrot.slane %v4651, %v5036
    %v5038 = vlaneseq
    %v5039 = vshrl.u32 %v5038, 7
    %v5040 = vsub.s32 2, %v5039
    %v5041 = vrot.slane %v4651, %v5040
    %v5042 = vlaneseq
    %v5043 = vshrl.u32 %v5042, 7
    %v5044 = vsub.s32 3, %v5043
    %v5045 = vrot.slane %v4651, %v5044
    %v5046 = vlaneseq
    %v5047 = vshrl.u32 %v5046, 7
    %v5048 = vsub.s32 4, %v5047
    %v5049 = vrot.slane %v4651, %v5048
    %v5050 = vlaneseq
    %v5051 = vshrl.u32 %v5050, 7
    %v5052 = vsub.s32 5, %v5051
    %v5053 = vrot.slane %v4651, %v5052
    %v5054 = vlaneseq
    %v5055 = vshrl.u32 %v5054, 7
    %v5056 = vsub.s32 6, %v5055
    %v5057 = vrot.slane %v4651, %v5056
    %v5058 = vlaneseq
    %v5059 = vshrl.u32 %v5058, 7
    %v5060 = vsub.s32 7, %v5059
    %v5061 = vrot.slane %v4651, %v5060
    %v5062 = vlaneseq
    %v5063 = vshrl.u32 %v5062, 7
    %v5064 = vsub.s32 0, %v5063
    %v5065 = vrot.slane %v4659, %v5064
    %v5066 = vlaneseq
    %v5067 = vshrl.u32 %v5066, 7
    %v5068 = vsub.s32 1, %v5067
    %v5069 = vrot.slane %v4659, %v5068
    %v5070 = vlaneseq
    %v5071 = vshrl.u32 %v5070, 7
    %v5072 = vsub.s32 2, %v5071
    %v5073 = vrot.slane %v4659, %v5072
    %v5074 = vlaneseq
    %v5075 = vshrl.u32 %v5074, 7
    %v5076 = vsub.s32 3, %v5075
    %v5077 = vrot.slane %v4659, %v5076
    %v5078 = vlaneseq
    %v5079 = vshrl.u32 %v5078, 7
    %v5080 = vsub.s32 4, %v5079
    %v5081 = vrot.slane %v4659, %v5080
    %v5082 = vlaneseq
    %v5083 = vshrl.u32 %v5082, 7
    %v5084 = vsub.s32 5, %v5083
    %v5085 = vrot.slane %v4659, %v5084
    %v5086 = vlaneseq
    %v5087 = vshrl.u32 %v5086, 7
    %v5088 = vsub.s32 6, %v5087
    %v5089 = vrot.slane %v4659, %v5088
    %v5090 = vlaneseq
    %v5091 = vshrl.u32 %v5090, 7
    %v5092 = vsub.s32 7, %v5091
    %v5093 = vrot.slane %v4659, %v5092
    %v5094 = vlaneseq
    %v5095 = vshrl.u32 %v5094, 7
    %v5096 = vsub.s32 0, %v5095
    %v5097 = vrot.slane %v4667, %v5096
    %v5098 = vlaneseq
    %v5099 = vshrl.u32 %v5098, 7
    %v5100 = vsub.s32 1, %v5099
    %v5101 = vrot.slane %v4667, %v5100
    %v5102 = vlaneseq
    %v5103 = vshrl.u32 %v5102, 7
    %v5104 = vsub.s32 2, %v5103
    %v5105 = vrot.slane %v4667, %v5104
    %v5106 = vlaneseq
    %v5107 = vshrl.u32 %v5106, 7
    %v5108 = vsub.s32 3, %v5107
    %v5109 = vrot.slane %v4667, %v5108
    %v5110 = vlaneseq
    %v5111 = vshrl.u32 %v5110, 7
    %v5112 = vsub.s32 4, %v5111
    %v5113 = vrot.slane %v4667, %v5112
    %v5114 = vlaneseq
    %v5115 = vshrl.u32 %v5114, 7
    %v5116 = vsub.s32 5, %v5115
    %v5117 = vrot.slane %v4667, %v5116
    %v5118 = vlaneseq
    %v5119 = vshrl.u32 %v5118, 7
    %v5120 = vsub.s32 6, %v5119
    %v5121 = vrot.slane %v4667, %v5120
    %v5122 = vlaneseq
    %v5123 = vshrl.u32 %v5122, 7
    %v5124 = vsub.s32 7, %v5123
    %v5125 = vrot.slane %v4667, %v5124
    %v5126 = vlaneseq
    %v5127 = vshrl.u32 %v5126, 7
    %v5128 = vsub.s32 0, %v5127
    %v5129 = vrot.slane %v4675, %v5128
    %v5130 = vlaneseq
    %v5131 = vshrl.u32 %v5130, 7
    %v5132 = vsub.s32 1, %v5131
    %v5133 = vrot.slane %v4675, %v5132
    %v5134 = vlaneseq
    %v5135 = vshrl.u32 %v5134, 7
    %v5136 = vsub.s32 2, %v5135
    %v5137 = vrot.slane %v4675, %v5136
    %v5138 = vlaneseq
    %v5139 = vshrl.u32 %v5138, 7
    %v5140 = vsub.s32 3, %v5139
    %v5141 = vrot.slane %v4675, %v5140
    %v5142 = vlaneseq
    %v5143 = vshrl.u32 %v5142, 7
    %v5144 = vsub.s32 4, %v5143
    %v5145 = vrot.slane %v4675, %v5144
    %v5146 = vlaneseq
    %v5147 = vshrl.u32 %v5146, 7
    %v5148 = vsub.s32 5, %v5147
    %v5149 = vrot.slane %v4675, %v5148
    %v5150 = vlaneseq
    %v5151 = vshrl.u32 %v5150, 7
    %v5152 = vsub.s32 6, %v5151
    %v5153 = vrot.slane %v4675, %v5152
    %v5154 = vlaneseq
    %v5155 = vshrl.u32 %v5154, 7
    %v5156 = vsub.s32 7, %v5155
    %v5157 = vrot.slane %v4675, %v5156
    %v5158 = vlaneseq
    %v5159 = vshrl.u32 %v5158, 7
    %v5160 = vsub.s32 0, %v5159
    %v5161 = vrot.slane %v4683, %v5160
    %v5162 = vlaneseq
    %v5163 = vshrl.u32 %v5162, 7
    %v5164 = vsub.s32 1, %v5163
    %v5165 = vrot.slane %v4683, %v5164
    %v5166 = vlaneseq
    %v5167 = vshrl.u32 %v5166, 7
    %v5168 = vsub.s32 2, %v5167
    %v5169 = vrot.slane %v4683, %v5168
    %v5170 = vlaneseq
    %v5171 = vshrl.u32 %v5170, 7
    %v5172 = vsub.s32 3, %v5171
    %v5173 = vrot.slane %v4683, %v5172
    %v5174 = vlaneseq
    %v5175 = vshrl.u32 %v5174, 7
    %v5176 = vsub.s32 4, %v5175
    %v5177 = vrot.slane %v4683, %v5176
    %v5178 = vlaneseq
    %v5179 = vshrl.u32 %v5178, 7
    %v5180 = vsub.s32 5, %v5179
    %v5181 = vrot.slane %v4683, %v5180
    %v5182 = vlaneseq
    %v5183 = vshrl.u32 %v5182, 7
    %v5184 = vsub.s32 6, %v5183
    %v5185 = vrot.slane %v4683, %v5184
    %v5186 = vlaneseq
    %v5187 = vshrl.u32 %v5186, 7
    %v5188 = vsub.s32 7, %v5187
    %v5189 = vrot.slane %v4683, %v5188
    %v5190 = vlaneseq
    %v5191 = vshrl.u32 %v5190, 7
    %v5192 = vsub.s32 0, %v5191
    %v5193 = vrot.slane %v4691, %v5192
    %v5194 = vlaneseq
    %v5195 = vshrl.u32 %v5194, 7
    %v5196 = vsub.s32 1, %v5195
    %v5197 = vrot.slane %v4691, %v5196
    %v5198 = vlaneseq
    %v5199 = vshrl.u32 %v5198, 7
    %v5200 = vsub.s32 2, %v5199
    %v5201 = vrot.slane %v4691, %v5200
    %v5202 = vlaneseq
    %v5203 = vshrl.u32 %v5202, 7
    %v5204 = vsub.s32 3, %v5203
    %v5205 = vrot.slane %v4691, %v5204
    %v5206 = vlaneseq
    %v5207 = vshrl.u32 %v5206, 7
    %v5208 = vsub.s32 4, %v5207
    %v5209 = vrot.slane %v4691, %v5208
    %v5210 = vlaneseq
    %v5211 = vshrl.u32 %v5210, 7
    %v5212 = vsub.s32 5, %v5211
    %v5213 = vrot.slane %v4691, %v5212
    %v5214 = vlaneseq
    %v5215 = vshrl.u32 %v5214, 7
    %v5216 = vsub.s32 6, %v5215
    %v5217 = vrot.slane %v4691, %v5216
    %v5218 = vlaneseq
    %v5219 = vshrl.u32 %v5218, 7
    %v5220 = vsub.s32 7, %v5219
    %v5221 = vrot.slane %v4691, %v5220
    %v5222 = vlaneseq
    %v5223 = vshrl.u32 %v5222, 7
    %v5224 = vsub.s32 0, %v5223
    %v5225 = vrot.slane %v4699, %v5224
    %v5226 = vlaneseq
    %v5227 = vshrl.u32 %v5226, 7
    %v5228 = vsub.s32 1, %v5227
    %v5229 = vrot.slane %v4699, %v5228
    %v5230 = vlaneseq
    %v5231 = vshrl.u32 %v5230, 7
    %v5232 = vsub.s32 2, %v5231
    %v5233 = vrot.slane %v4699, %v5232
    %v5234 = vlaneseq
    %v5235 = vshrl.u32 %v5234, 7
    %v5236 = vsub.s32 3, %v5235
    %v5237 = vrot.slane %v4699, %v5236
    %v5238 = vlaneseq
    %v5239 = vshrl.u32 %v5238, 7
    %v5240 = vsub.s32 4, %v5239
    %v5241 = vrot.slane %v4699, %v5240
    %v5242 = vlaneseq
    %v5243 = vshrl.u32 %v5242, 7
    %v5244 = vsub.s32 5, %v5243
    %v5245 = vrot.slane %v4699, %v5244
    %v5246 = vlaneseq
    %v5247 = vshrl.u32 %v5246, 7
    %v5248 = vsub.s32 6, %v5247
    %v5249 = vrot.slane %v4699, %v5248
    %v5250 = vlaneseq
    %v5251 = vshrl.u32 %v5250, 7
    %v5252 = vsub.s32 7, %v5251
    %v5253 = vrot.slane %v4699, %v5252
    %v5254 = vlaneseq
    %v5255 = vshrl.u32 %v5254, 7
    %v5256 = vsub.s32 0, %v5255
    %v5257 = vrot.slane %v4707, %v5256
    %v5258 = vlaneseq
    %v5259 = vshrl.u32 %v5258, 7
    %v5260 = vsub.s32 1, %v5259
    %v5261 = vrot.slane %v4707, %v5260
    %v5262 = vlaneseq
    %v5263 = vshrl.u32 %v5262, 7
    %v5264 = vsub.s32 2, %v5263
    %v5265 = vrot.slane %v4707, %v5264
    %v5266 = vlaneseq
    %v5267 = vshrl.u32 %v5266, 7
    %v5268 = vsub.s32 3, %v5267
    %v5269 = vrot.slane %v4707, %v5268
    %v5270 = vlaneseq
    %v5271 = vshrl.u32 %v5270, 7
    %v5272 = vsub.s32 4, %v5271
    %v5273 = vrot.slane %v4707, %v5272
    %v5274 = vlaneseq
    %v5275 = vshrl.u32 %v5274, 7
    %v5276 = vsub.s32 5, %v5275
    %v5277 = vrot.slane %v4707, %v5276
    %v5278 = vlaneseq
    %v5279 = vshrl.u32 %v5278, 7
    %v5280 = vsub.s32 6, %v5279
    %v5281 = vrot.slane %v4707, %v5280
    %v5282 = vlaneseq
    %v5283 = vshrl.u32 %v5282, 7
    %v5284 = vsub.s32 7, %v5283
    %v5285 = vrot.slane %v4707, %v5284
    %v5286 = vlaneseq
    %v5287 = vshrl.u32 %v5286, 7
    %v5288 = vsub.s32 0, %v5287
    %v5289 = vrot.slane %v4715, %v5288
    %v5290 = vlaneseq
    %v5291 = vshrl.u32 %v5290, 7
    %v5292 = vsub.s32 1, %v5291
    %v5293 = vrot.slane %v4715, %v5292
    %v5294 = vlaneseq
    %v5295 = vshrl.u32 %v5294, 7
    %v5296 = vsub.s32 2, %v5295
    %v5297 = vrot.slane %v4715, %v5296
    %v5298 = vlaneseq
    %v5299 = vshrl.u32 %v5298, 7
    %v5300 = vsub.s32 3, %v5299
    %v5301 = vrot.slane %v4715, %v5300
    %v5302 = vlaneseq
    %v5303 = vshrl.u32 %v5302, 7
    %v5304 = vsub.s32 4, %v5303
    %v5305 = vrot.slane %v4715, %v5304
    %v5306 = vlaneseq
    %v5307 = vshrl.u32 %v5306, 7
    %v5308 = vsub.s32 5, %v5307
    %v5309 = vrot.slane %v4715, %v5308
    %v5310 = vlaneseq
    %v5311 = vshrl.u32 %v5310, 7
    %v5312 = vsub.s32 6, %v5311
    %v5313 = vrot.slane %v4715, %v5312
    %v5314 = vlaneseq
    %v5315 = vshrl.u32 %v5314, 7
    %v5316 = vsub.s32 7, %v5315
    %v5317 = vrot.slane %v4715, %v5316
    %v5318 = vlaneseq
    %v5319 = vshrl.u32 %v5318, 7
    %v5320 = vsub.s32 0, %v5319
    %v5321 = vrot.slane %v4723, %v5320
    %v5322 = vlaneseq
    %v5323 = vshrl.u32 %v5322, 7
    %v5324 = vsub.s32 1, %v5323
    %v5325 = vrot.slane %v4723, %v5324
    %v5326 = vlaneseq
    %v5327 = vshrl.u32 %v5326, 7
    %v5328 = vsub.s32 2, %v5327
    %v5329 = vrot.slane %v4723, %v5328
    %v5330 = vlaneseq
    %v5331 = vshrl.u32 %v5330, 7
    %v5332 = vsub.s32 3, %v5331
    %v5333 = vrot.slane %v4723, %v5332
    %v5334 = vlaneseq
    %v5335 = vshrl.u32 %v5334, 7
    %v5336 = vsub.s32 4, %v5335
    %v5337 = vrot.slane %v4723, %v5336
    %v5338 = vlaneseq
    %v5339 = vshrl.u32 %v5338, 7
    %v5340 = vsub.s32 5, %v5339
    %v5341 = vrot.slane %v4723, %v5340
    %v5342 = vlaneseq
    %v5343 = vshrl.u32 %v5342, 7
    %v5344 = vsub.s32 6, %v5343
    %v5345 = vrot.slane %v4723, %v5344
    %v5346 = vlaneseq
    %v5347 = vshrl.u32 %v5346, 7
    %v5348 = vsub.s32 7, %v5347
    %v5349 = vrot.slane %v4723, %v5348
    %v5350 = vlaneseq
    %v5351 = vshrl.u32 %v5350, 7
    %v5352 = vsub.s32 0, %v5351
    %v5353 = vrot.slane %v4731, %v5352
    %v5354 = vlaneseq
    %v5355 = vshrl.u32 %v5354, 7
    %v5356 = vsub.s32 1, %v5355
    %v5357 = vrot.slane %v4731, %v5356
    %v5358 = vlaneseq
    %v5359 = vshrl.u32 %v5358, 7
    %v5360 = vsub.s32 2, %v5359
    %v5361 = vrot.slane %v4731, %v5360
    %v5362 = vlaneseq
    %v5363 = vshrl.u32 %v5362, 7
    %v5364 = vsub.s32 3, %v5363
    %v5365 = vrot.slane %v4731, %v5364
    %v5366 = vlaneseq
    %v5367 = vshrl.u32 %v5366, 7
    %v5368 = vsub.s32 4, %v5367
    %v5369 = vrot.slane %v4731, %v5368
    %v5370 = vlaneseq
    %v5371 = vshrl.u32 %v5370, 7
    %v5372 = vsub.s32 5, %v5371
    %v5373 = vrot.slane %v4731, %v5372
    %v5374 = vlaneseq
    %v5375 = vshrl.u32 %v5374, 7
    %v5376 = vsub.s32 6, %v5375
    %v5377 = vrot.slane %v4731, %v5376
    %v5378 = vlaneseq
    %v5379 = vshrl.u32 %v5378, 7
    %v5380 = vsub.s32 7, %v5379
    %v5381 = vrot.slane %v4731, %v5380
    %v5382 = vlaneseq
    %v5383 = vshrl.u32 %v5382, 7
    %v5384 = vsub.s32 0, %v5383
    %v5385 = vrot.slane %v4739, %v5384
    %v5386 = vlaneseq
    %v5387 = vshrl.u32 %v5386, 7
    %v5388 = vsub.s32 1, %v5387
    %v5389 = vrot.slane %v4739, %v5388
    %v5390 = vlaneseq
    %v5391 = vshrl.u32 %v5390, 7
    %v5392 = vsub.s32 2, %v5391
    %v5393 = vrot.slane %v4739, %v5392
    %v5394 = vlaneseq
    %v5395 = vshrl.u32 %v5394, 7
    %v5396 = vsub.s32 3, %v5395
    %v5397 = vrot.slane %v4739, %v5396
    %v5398 = vlaneseq
    %v5399 = vshrl.u32 %v5398, 7
    %v5400 = vsub.s32 4, %v5399
    %v5401 = vrot.slane %v4739, %v5400
    %v5402 = vlaneseq
    %v5403 = vshrl.u32 %v5402, 7
    %v5404 = vsub.s32 5, %v5403
    %v5405 = vrot.slane %v4739, %v5404
    %v5406 = vlaneseq
    %v5407 = vshrl.u32 %v5406, 7
    %v5408 = vsub.s32 6, %v5407
    %v5409 = vrot.slane %v4739, %v5408
    %v5410 = vlaneseq
    %v5411 = vshrl.u32 %v5410, 7
    %v5412 = vsub.s32 7, %v5411
    %v5413 = vrot.slane %v4739, %v5412
    %v5414 = vlaneseq
    %v5415 = vshrl.u32 %v5414, 7
    %v5416 = vsub.s32 0, %v5415
    %v5417 = vrot.slane %v4747, %v5416
    %v5418 = vlaneseq
    %v5419 = vshrl.u32 %v5418, 7
    %v5420 = vsub.s32 1, %v5419
    %v5421 = vrot.slane %v4747, %v5420
    %v5422 = vlaneseq
    %v5423 = vshrl.u32 %v5422, 7
    %v5424 = vsub.s32 2, %v5423
    %v5425 = vrot.slane %v4747, %v5424
    %v5426 = vlaneseq
    %v5427 = vshrl.u32 %v5426, 7
    %v5428 = vsub.s32 3, %v5427
    %v5429 = vrot.slane %v4747, %v5428
    %v5430 = vlaneseq
    %v5431 = vshrl.u32 %v5430, 7
    %v5432 = vsub.s32 4, %v5431
    %v5433 = vrot.slane %v4747, %v5432
    %v5434 = vlaneseq
    %v5435 = vshrl.u32 %v5434, 7
    %v5436 = vsub.s32 5, %v5435
    %v5437 = vrot.slane %v4747, %v5436
    %v5438 = vlaneseq
    %v5439 = vshrl.u32 %v5438, 7
    %v5440 = vsub.s32 6, %v5439
    %v5441 = vrot.slane %v4747, %v5440
    %v5442 = vlaneseq
    %v5443 = vshrl.u32 %v5442, 7
    %v5444 = vsub.s32 7, %v5443
    %v5445 = vrot.slane %v4747, %v5444
    %v5446 = vlaneseq
    %v5447 = vshrl.u32 %v5446, 7
    %v5448 = vsub.s32 0, %v5447
    %v5449 = vrot.slane %v4755, %v5448
    %v5450 = vlaneseq
    %v5451 = vshrl.u32 %v5450, 7
    %v5452 = vsub.s32 1, %v5451
    %v5453 = vrot.slane %v4755, %v5452
    %v5454 = vlaneseq
    %v5455 = vshrl.u32 %v5454, 7
    %v5456 = vsub.s32 2, %v5455
    %v5457 = vrot.slane %v4755, %v5456
    %v5458 = vlaneseq
    %v5459 = vshrl.u32 %v5458, 7
    %v5460 = vsub.s32 3, %v5459
    %v5461 = vrot.slane %v4755, %v5460
    %v5462 = vlaneseq
    %v5463 = vshrl.u32 %v5462, 7
    %v5464 = vsub.s32 4, %v5463
    %v5465 = vrot.slane %v4755, %v5464
    %v5466 = vlaneseq
    %v5467 = vshrl.u32 %v5466, 7
    %v5468 = vsub.s32 5, %v5467
    %v5469 = vrot.slane %v4755, %v5468
    %v5470 = vlaneseq
    %v5471 = vshrl.u32 %v5470, 7
    %v5472 = vsub.s32 6, %v5471
    %v5473 = vrot.slane %v4755, %v5472
    %v5474 = vlaneseq
    %v5475 = vshrl.u32 %v5474, 7
    %v5476 = vsub.s32 7, %v5475
    %v5477 = vrot.slane %v4755, %v5476
    %v5478 = vlaneseq
    %v5479 = vshrl.u32 %v5478, 7
    %v5480 = vsub.s32 0, %v5479
    %v5481 = vrot.slane %v4763, %v5480
    %v5482 = vlaneseq
    %v5483 = vshrl.u32 %v5482, 7
    %v5484 = vsub.s32 1, %v5483
    %v5485 = vrot.slane %v4763, %v5484
    %v5486 = vlaneseq
    %v5487 = vshrl.u32 %v5486, 7
    %v5488 = vsub.s32 2, %v5487
    %v5489 = vrot.slane %v4763, %v5488
    %v5490 = vlaneseq
    %v5491 = vshrl.u32 %v5490, 7
    %v5492 = vsub.s32 3, %v5491
    %v5493 = vrot.slane %v4763, %v5492
    %v5494 = vlaneseq
    %v5495 = vshrl.u32 %v5494, 7
    %v5496 = vsub.s32 4, %v5495
    %v5497 = vrot.slane %v4763, %v5496
    %v5498 = vlaneseq
    %v5499 = vshrl.u32 %v5498, 7
    %v5500 = vsub.s32 5, %v5499
    %v5501 = vrot.slane %v4763, %v5500
    %v5502 = vlaneseq
    %v5503 = vshrl.u32 %v5502, 7
    %v5504 = vsub.s32 6, %v5503
    %v5505 = vrot.slane %v4763, %v5504
    %v5506 = vlaneseq
    %v5507 = vshrl.u32 %v5506, 7
    %v5508 = vsub.s32 7, %v5507
    %v5509 = vrot.slane %v4763, %v5508
    %v5510 = vlaneseq
    %v5511 = vshrl.u32 %v5510, 7
    %v5512 = vsub.s32 0, %v5511
    %v5513 = vrot.slane %v4771, %v5512
    %v5514 = vlaneseq
    %v5515 = vshrl.u32 %v5514, 7
    %v5516 = vsub.s32 1, %v5515
    %v5517 = vrot.slane %v4771, %v5516
    %v5518 = vlaneseq
    %v5519 = vshrl.u32 %v5518, 7
    %v5520 = vsub.s32 2, %v5519
    %v5521 = vrot.slane %v4771, %v5520
    %v5522 = vlaneseq
    %v5523 = vshrl.u32 %v5522, 7
    %v5524 = vsub.s32 3, %v5523
    %v5525 = vrot.slane %v4771, %v5524
    %v5526 = vlaneseq
    %v5527 = vshrl.u32 %v5526, 7
    %v5528 = vsub.s32 4, %v5527
    %v5529 = vrot.slane %v4771, %v5528
    %v5530 = vlaneseq
    %v5531 = vshrl.u32 %v5530, 7
    %v5532 = vsub.s32 5, %v5531
    %v5533 = vrot.slane %v4771, %v5532
    %v5534 = vlaneseq
    %v5535 = vshrl.u32 %v5534, 7
    %v5536 = vsub.s32 6, %v5535
    %v5537 = vrot.slane %v4771, %v5536
    %v5538 = vlaneseq
    %v5539 = vshrl.u32 %v5538, 7
    %v5540 = vsub.s32 7, %v5539
    %v5541 = vrot.slane %v4771, %v5540
    %v5542 = vcombine.low %v5033, %v5037
    %v5543 = vcombine.low %v5041, %v5045
    %v5544 = vcombine.low %v5049, %v5053
    %v5545 = vcombine.low %v5057, %v5061
    %v5547 = vunpack.c.l.s4 1966171168
    %v5548 = vunpack.c.0.s8 %v5547
    %v5549 = vlaneseq
    %v5550 = vshrl.u32 %v5549, 7
    %v5551 = vsub.s32 %v5548, %v5550
    %v5552 = vrot.slane %v5542, %v5551
    %v5554 = vunpack.c.l.s4 1966171168
    %v5555 = vunpack.c.0.s8 %v5554
    %v5556 = vlaneseq
    %v5557 = vshrl.u32 %v5556, 7
    %v5558 = vsub.s32 %v5555, %v5557
    %v5559 = vrot.slane %v5543, %v5558
    %v5561 = vunpack.c.l.s4 1966171168
    %v5562 = vunpack.c.0.s8 %v5561
    %v5563 = vlaneseq
    %v5564 = vshrl.u32 %v5563, 7
    %v5565 = vsub.s32 %v5562, %v5564
    %v5566 = vrot.slane %v5544, %v5565
    %v5568 = vunpack.c.l.s4 1966171168
    %v5569 = vunpack.c.0.s8 %v5568
    %v5570 = vlaneseq
    %v5571 = vshrl.u32 %v5570, 7
    %v5572 = vsub.s32 %v5569, %v5571
    %v5573 = vrot.slane %v5545, %v5572
    %v5574 = vcombine.low %v5552, %v5559
    %v5575 = vcombine.low %v5566, %v5573
    %v5577 = vunpack.c.l.s4 1966171168
    %v5578 = vunpack.c.0.s8 %v5577
    %v5579 = vlaneseq
    %v5580 = vshrl.u32 %v5579, 7
    %v5581 = vsub.s32 %v5578, %v5580
    %v5582 = vrot.slane %v5574, %v5581
    %v5584 = vunpack.c.l.s4 1966171168
    %v5585 = vunpack.c.0.s8 %v5584
    %v5586 = vlaneseq
    %v5587 = vshrl.u32 %v5586, 7
    %v5588 = vsub.s32 %v5585, %v5587
    %v5589 = vrot.slane %v5575, %v5588
    %v5590 = vcombine.low %v5582, %v5589
    %v5591 = vcombine.low %v5065, %v5069
    %v5592 = vcombine.low %v5073, %v5077
    %v5593 = vcombine.low %v5081, %v5085
    %v5594 = vcombine.low %v5089, %v5093
    %v5596 = vunpack.c.l.s4 1966171168
    %v5597 = vunpack.c.0.s8 %v5596
    %v5598 = vlaneseq
    %v5599 = vshrl.u32 %v5598, 7
    %v5600 = vsub.s32 %v5597, %v5599
    %v5601 = vrot.slane %v5591, %v5600
    %v5603 = vunpack.c.l.s4 1966171168
    %v5604 = vunpack.c.0.s8 %v5603
    %v5605 = vlaneseq
    %v5606 = vshrl.u32 %v5605, 7
    %v5607 = vsub.s32 %v5604, %v5606
    %v5608 = vrot.slane %v5592, %v5607
    %v5610 = vunpack.c.l.s4 1966171168
    %v5611 = vunpack.c.0.s8 %v5610
    %v5612 = vlaneseq
    %v5613 = vshrl.u32 %v5612, 7
    %v5614 = vsub.s32 %v5611, %v5613
    %v5615 = vrot.slane %v5593, %v5614
    %v5617 = vunpack.c.l.s4 1966171168
    %v5618 = vunpack.c.0.s8 %v5617
    %v5619 = vlaneseq
    %v5620 = vshrl.u32 %v5619, 7
    %v5621 = vsub.s32 %v5618, %v5620
    %v5622 = vrot.slane %v5594, %v5621
    %v5623 = vcombine.low %v5601, %v5608
    %v5624 = vcombine.low %v5615, %v5622
    %v5626 = vunpack.c.l.s4 1966171168
    %v5627 = vunpack.c.0.s8 %v5626
    %v5628 = vlaneseq
    %v5629 = vshrl.u32 %v5628, 7
    %v5630 = vsub.s32 %v5627, %v5629
    %v5631 = vrot.slane %v5623, %v5630
    %v5633 = vunpack.c.l.s4 1966171168
    %v5634 = vunpack.c.0.s8 %v5633
    %v5635 = vlaneseq
    %v5636 = vshrl.u32 %v5635, 7
    %v5637 = vsub.s32 %v5634, %v5636
    %v5638 = vrot.slane %v5624, %v5637
    %v5639 = vcombine.low %v5631, %v5638
    %v5640 = vcombine.low %v5097, %v5101
    %v5641 = vcombine.low %v5105, %v5109
    %v5642 = vcombine.low %v5113, %v5117
    %v5643 = vcombine.low %v5121, %v5125
    %v5645 = vunpack.c.l.s4 1966171168
    %v5646 = vunpack.c.0.s8 %v5645
    %v5647 = vlaneseq
    %v5648 = vshrl.u32 %v5647, 7
    %v5649 = vsub.s32 %v5646, %v5648
    %v5650 = vrot.slane %v5640, %v5649
    %v5652 = vunpack.c.l.s4 1966171168
    %v5653 = vunpack.c.0.s8 %v5652
    %v5654 = vlaneseq
    %v5655 = vshrl.u32 %v5654, 7
    %v5656 = vsub.s32 %v5653, %v5655
    %v5657 = vrot.slane %v5641, %v5656
    %v5659 = vunpack.c.l.s4 1966171168
    %v5660 = vunpack.c.0.s8 %v5659
    %v5661 = vlaneseq
    %v5662 = vshrl.u32 %v5661, 7
    %v5663 = vsub.s32 %v5660, %v5662
    %v5664 = vrot.slane %v5642, %v5663
    %v5666 = vunpack.c.l.s4 1966171168
    %v5667 = vunpack.c.0.s8 %v5666
    %v5668 = vlaneseq
    %v5669 = vshrl.u32 %v5668, 7
    %v5670 = vsub.s32 %v5667, %v5669
    %v5671 = vrot.slane %v5643, %v5670
    %v5672 = vcombine.low %v5650, %v5657
    %v5673 = vcombine.low %v5664, %v5671
    %v5675 = vunpack.c.l.s4 1966171168
    %v5676 = vunpack.c.0.s8 %v5675
    %v5677 = vlaneseq
    %v5678 = vshrl.u32 %v5677, 7
    %v5679 = vsub.s32 %v5676, %v5678
    %v5680 = vrot.slane %v5672, %v5679
    %v5682 = vunpack.c.l.s4 1966171168
    %v5683 = vunpack.c.0.s8 %v5682
    %v5684 = vlaneseq
    %v5685 = vshrl.u32 %v5684, 7
    %v5686 = vsub.s32 %v5683, %v5685
    %v5687 = vrot.slane %v5673, %v5686
    %v5688 = vcombine.low %v5680, %v5687
    %v5689 = vcombine.low %v5129, %v5133
    %v5690 = vcombine.low %v5137, %v5141
    %v5691 = vcombine.low %v5145, %v5149
    %v5692 = vcombine.low %v5153, %v5157
    %v5694 = vunpack.c.l.s4 1966171168
    %v5695 = vunpack.c.0.s8 %v5694
    %v5696 = vlaneseq
    %v5697 = vshrl.u32 %v5696, 7
    %v5698 = vsub.s32 %v5695, %v5697
    %v5699 = vrot.slane %v5689, %v5698
    %v5701 = vunpack.c.l.s4 1966171168
    %v5702 = vunpack.c.0.s8 %v5701
    %v5703 = vlaneseq
    %v5704 = vshrl.u32 %v5703, 7
    %v5705 = vsub.s32 %v5702, %v5704
    %v5706 = vrot.slane %v5690, %v5705
    %v5708 = vunpack.c.l.s4 1966171168
    %v5709 = vunpack.c.0.s8 %v5708
    %v5710 = vlaneseq
    %v5711 = vshrl.u32 %v5710, 7
    %v5712 = vsub.s32 %v5709, %v5711
    %v5713 = vrot.slane %v5691, %v5712
    %v5715 = vunpack.c.l.s4 1966171168
    %v5716 = vunpack.c.0.s8 %v5715
    %v5717 = vlaneseq
    %v5718 = vshrl.u32 %v5717, 7
    %v5719 = vsub.s32 %v5716, %v5718
    %v5720 = vrot.slane %v5692, %v5719
    %v5721 = vcombine.low %v5699, %v5706
    %v5722 = vcombine.low %v5713, %v5720
    %v5724 = vunpack.c.l.s4 1966171168
    %v5725 = vunpack.c.0.s8 %v5724
    %v5726 = vlaneseq
    %v5727 = vshrl.u32 %v5726, 7
    %v5728 = vsub.s32 %v5725, %v5727
    %v5729 = vrot.slane %v5721, %v5728
    %v5731 = vunpack.c.l.s4 1966171168
    %v5732 = vunpack.c.0.s8 %v5731
    %v5733 = vlaneseq
    %v5734 = vshrl.u32 %v5733, 7
    %v5735 = vsub.s32 %v5732, %v5734
    %v5736 = vrot.slane %v5722, %v5735
    %v5737 = vcombine.low %v5729, %v5736
    %v5738 = vcombine.low %v5161, %v5165
    %v5739 = vcombine.low %v5169, %v5173
    %v5740 = vcombine.low %v5177, %v5181
    %v5741 = vcombine.low %v5185, %v5189
    %v5743 = vunpack.c.l.s4 1966171168
    %v5744 = vunpack.c.0.s8 %v5743
    %v5745 = vlaneseq
    %v5746 = vshrl.u32 %v5745, 7
    %v5747 = vsub.s32 %v5744, %v5746
    %v5748 = vrot.slane %v5738, %v5747
    %v5750 = vunpack.c.l.s4 1966171168
    %v5751 = vunpack.c.0.s8 %v5750
    %v5752 = vlaneseq
    %v5753 = vshrl.u32 %v5752, 7
    %v5754 = vsub.s32 %v5751, %v5753
    %v5755 = vrot.slane %v5739, %v5754
    %v5757 = vunpack.c.l.s4 1966171168
    %v5758 = vunpack.c.0.s8 %v5757
    %v5759 = vlaneseq
    %v5760 = vshrl.u32 %v5759, 7
    %v5761 = vsub.s32 %v5758, %v5760
    %v5762 = vrot.slane %v5740, %v5761
    %v5764 = vunpack.c.l.s4 1966171168
    %v5765 = vunpack.c.0.s8 %v5764
    %v5766 = vlaneseq
    %v5767 = vshrl.u32 %v5766, 7
    %v5768 = vsub.s32 %v5765, %v5767
    %v5769 = vrot.slane %v5741, %v5768
    %v5770 = vcombine.low %v5748, %v5755
    %v5771 = vcombine.low %v5762, %v5769
    %v5773 = vunpack.c.l.s4 1966171168
    %v5774 = vunpack.c.0.s8 %v5773
    %v5775 = vlaneseq
    %v5776 = vshrl.u32 %v5775, 7
    %v5777 = vsub.s32 %v5774, %v5776
    %v5778 = vrot.slane %v5770, %v5777
    %v5780 = vunpack.c.l.s4 1966171168
    %v5781 = vunpack.c.0.s8 %v5780
    %v5782 = vlaneseq
    %v5783 = vshrl.u32 %v5782, 7
    %v5784 = vsub.s32 %v5781, %v5783
    %v5785 = vrot.slane %v5771, %v5784
    %v5786 = vcombine.low %v5778, %v5785
    %v5787 = vcombine.low %v5193, %v5197
    %v5788 = vcombine.low %v5201, %v5205
    %v5789 = vcombine.low %v5209, %v5213
    %v5790 = vcombine.low %v5217, %v5221
    %v5792 = vunpack.c.l.s4 1966171168
    %v5793 = vunpack.c.0.s8 %v5792
    %v5794 = vlaneseq
    %v5795 = vshrl.u32 %v5794, 7
    %v5796 = vsub.s32 %v5793, %v5795
    %v5797 = vrot.slane %v5787, %v5796
    %v5799 = vunpack.c.l.s4 1966171168
    %v5800 = vunpack.c.0.s8 %v5799
    %v5801 = vlaneseq
    %v5802 = vshrl.u32 %v5801, 7
    %v5803 = vsub.s32 %v5800, %v5802
    %v5804 = vrot.slane %v5788, %v5803
    %v5806 = vunpack.c.l.s4 1966171168
    %v5807 = vunpack.c.0.s8 %v5806
    %v5808 = vlaneseq
    %v5809 = vshrl.u32 %v5808, 7
    %v5810 = vsub.s32 %v5807, %v5809
    %v5811 = vrot.slane %v5789, %v5810
    %v5813 = vunpack.c.l.s4 1966171168
    %v5814 = vunpack.c.0.s8 %v5813
    %v5815 = vlaneseq
    %v5816 = vshrl.u32 %v5815, 7
    %v5817 = vsub.s32 %v5814, %v5816
    %v5818 = vrot.slane %v5790, %v5817
    %v5819 = vcombine.low %v5797, %v5804
    %v5820 = vcombine.low %v5811, %v5818
    %v5822 = vunpack.c.l.s4 1966171168
    %v5823 = vunpack.c.0.s8 %v5822
    %v5824 = vlaneseq
    %v5825 = vshrl.u32 %v5824, 7
    %v5826 = vsub.s32 %v5823, %v5825
    %v5827 = vrot.slane %v5819, %v5826
    %v5829 = vunpack.c.l.s4 1966171168
    %v5830 = vunpack.c.0.s8 %v5829
    %v5831 = vlaneseq
    %v5832 = vshrl.u32 %v5831, 7
    %v5833 = vsub.s32 %v5830, %v5832
    %v5834 = vrot.slane %v5820, %v5833
    %v5835 = vcombine.low %v5827, %v5834
    %v5836 = vcombine.low %v5225, %v5229
    %v5837 = vcombine.low %v5233, %v5237
    %v5838 = vcombine.low %v5241, %v5245
    %v5839 = vcombine.low %v5249, %v5253
    %v5841 = vunpack.c.l.s4 1966171168
    %v5842 = vunpack.c.0.s8 %v5841
    %v5843 = vlaneseq
    %v5844 = vshrl.u32 %v5843, 7
    %v5845 = vsub.s32 %v5842, %v5844
    %v5846 = vrot.slane %v5836, %v5845
    %v5848 = vunpack.c.l.s4 1966171168
    %v5849 = vunpack.c.0.s8 %v5848
    %v5850 = vlaneseq
    %v5851 = vshrl.u32 %v5850, 7
    %v5852 = vsub.s32 %v5849, %v5851
    %v5853 = vrot.slane %v5837, %v5852
    %v5855 = vunpack.c.l.s4 1966171168
    %v5856 = vunpack.c.0.s8 %v5855
    %v5857 = vlaneseq
    %v5858 = vshrl.u32 %v5857, 7
    %v5859 = vsub.s32 %v5856, %v5858
    %v5860 = vrot.slane %v5838, %v5859
    %v5862 = vunpack.c.l.s4 1966171168
    %v5863 = vunpack.c.0.s8 %v5862
    %v5864 = vlaneseq
    %v5865 = vshrl.u32 %v5864, 7
    %v5866 = vsub.s32 %v5863, %v5865
    %v5867 = vrot.slane %v5839, %v5866
    %v5868 = vcombine.low %v5846, %v5853
    %v5869 = vcombine.low %v5860, %v5867
    %v5871 = vunpack.c.l.s4 1966171168
    %v5872 = vunpack.c.0.s8 %v5871
    %v5873 = vlaneseq
    %v5874 = vshrl.u32 %v5873, 7
    %v5875 = vsub.s32 %v5872, %v5874
    %v5876 = vrot.slane %v5868, %v5875
    %v5878 = vunpack.c.l.s4 1966171168
    %v5879 = vunpack.c.0.s8 %v5878
    %v5880 = vlaneseq
    %v5881 = vshrl.u32 %v5880, 7
    %v5882 = vsub.s32 %v5879, %v5881
    %v5883 = vrot.slane %v5869, %v5882
    %v5884 = vcombine.low %v5876, %v5883
    %v5885 = vcombine.low %v5257, %v5261
    %v5886 = vcombine.low %v5265, %v5269
    %v5887 = vcombine.low %v5273, %v5277
    %v5888 = vcombine.low %v5281, %v5285
    %v5890 = vunpack.c.l.s4 1966171168
    %v5891 = vunpack.c.0.s8 %v5890
    %v5892 = vlaneseq
    %v5893 = vshrl.u32 %v5892, 7
    %v5894 = vsub.s32 %v5891, %v5893
    %v5895 = vrot.slane %v5885, %v5894
    %v5897 = vunpack.c.l.s4 1966171168
    %v5898 = vunpack.c.0.s8 %v5897
    %v5899 = vlaneseq
    %v5900 = vshrl.u32 %v5899, 7
    %v5901 = vsub.s32 %v5898, %v5900
    %v5902 = vrot.slane %v5886, %v5901
    %v5904 = vunpack.c.l.s4 1966171168
    %v5905 = vunpack.c.0.s8 %v5904
    %v5906 = vlaneseq
    %v5907 = vshrl.u32 %v5906, 7
    %v5908 = vsub.s32 %v5905, %v5907
    %v5909 = vrot.slane %v5887, %v5908
    %v5911 = vunpack.c.l.s4 1966171168
    %v5912 = vunpack.c.0.s8 %v5911
    %v5913 = vlaneseq
    %v5914 = vshrl.u32 %v5913, 7
    %v5915 = vsub.s32 %v5912, %v5914
    %v5916 = vrot.slane %v5888, %v5915
    %v5917 = vcombine.low %v5895, %v5902
    %v5918 = vcombine.low %v5909, %v5916
    %v5920 = vunpack.c.l.s4 1966171168
    %v5921 = vunpack.c.0.s8 %v5920
    %v5922 = vlaneseq
    %v5923 = vshrl.u32 %v5922, 7
    %v5924 = vsub.s32 %v5921, %v5923
    %v5925 = vrot.slane %v5917, %v5924
    %v5927 = vunpack.c.l.s4 1966171168
    %v5928 = vunpack.c.0.s8 %v5927
    %v5929 = vlaneseq
    %v5930 = vshrl.u32 %v5929, 7
    %v5931 = vsub.s32 %v5928, %v5930
    %v5932 = vrot.slane %v5918, %v5931
    %v5933 = vcombine.low %v5925, %v5932
    %v5934 = vcombine.low %v5289, %v5293
    %v5935 = vcombine.low %v5297, %v5301
    %v5936 = vcombine.low %v5305, %v5309
    %v5937 = vcombine.low %v5313, %v5317
    %v5939 = vunpack.c.l.s4 1966171168
    %v5940 = vunpack.c.0.s8 %v5939
    %v5941 = vlaneseq
    %v5942 = vshrl.u32 %v5941, 7
    %v5943 = vsub.s32 %v5940, %v5942
    %v5944 = vrot.slane %v5934, %v5943
    %v5946 = vunpack.c.l.s4 1966171168
    %v5947 = vunpack.c.0.s8 %v5946
    %v5948 = vlaneseq
    %v5949 = vshrl.u32 %v5948, 7
    %v5950 = vsub.s32 %v5947, %v5949
    %v5951 = vrot.slane %v5935, %v5950
    %v5953 = vunpack.c.l.s4 1966171168
    %v5954 = vunpack.c.0.s8 %v5953
    %v5955 = vlaneseq
    %v5956 = vshrl.u32 %v5955, 7
    %v5957 = vsub.s32 %v5954, %v5956
    %v5958 = vrot.slane %v5936, %v5957
    %v5960 = vunpack.c.l.s4 1966171168
    %v5961 = vunpack.c.0.s8 %v5960
    %v5962 = vlaneseq
    %v5963 = vshrl.u32 %v5962, 7
    %v5964 = vsub.s32 %v5961, %v5963
    %v5965 = vrot.slane %v5937, %v5964
    %v5966 = vcombine.low %v5944, %v5951
    %v5967 = vcombine.low %v5958, %v5965
    %v5969 = vunpack.c.l.s4 1966171168
    %v5970 = vunpack.c.0.s8 %v5969
    %v5971 = vlaneseq
    %v5972 = vshrl.u32 %v5971, 7
    %v5973 = vsub.s32 %v5970, %v5972
    %v5974 = vrot.slane %v5966, %v5973
    %v5976 = vunpack.c.l.s4 1966171168
    %v5977 = vunpack.c.0.s8 %v5976
    %v5978 = vlaneseq
    %v5979 = vshrl.u32 %v5978, 7
    %v5980 = vsub.s32 %v5977, %v5979
    %v5981 = vrot.slane %v5967, %v5980
    %v5982 = vcombine.low %v5974, %v5981
    %v5983 = vcombine.low %v5321, %v5325
    %v5984 = vcombine.low %v5329, %v5333
    %v5985 = vcombine.low %v5337, %v5341
    %v5986 = vcombine.low %v5345, %v5349
    %v5988 = vunpack.c.l.s4 1966171168
    %v5989 = vunpack.c.0.s8 %v5988
    %v5990 = vlaneseq
    %v5991 = vshrl.u32 %v5990, 7
    %v5992 = vsub.s32 %v5989, %v5991
    %v5993 = vrot.slane %v5983, %v5992
    %v5995 = vunpack.c.l.s4 1966171168
    %v5996 = vunpack.c.0.s8 %v5995
    %v5997 = vlaneseq
    %v5998 = vshrl.u32 %v5997, 7
    %v5999 = vsub.s32 %v5996, %v5998
    %v6000 = vrot.slane %v5984, %v5999
    %v6002 = vunpack.c.l.s4 1966171168
    %v6003 = vunpack.c.0.s8 %v6002
    %v6004 = vlaneseq
    %v6005 = vshrl.u32 %v6004, 7
    %v6006 = vsub.s32 %v6003, %v6005
    %v6007 = vrot.slane %v5985, %v6006
    %v6009 = vunpack.c.l.s4 1966171168
    %v6010 = vunpack.c.0.s8 %v6009
    %v6011 = vlaneseq
    %v6012 = vshrl.u32 %v6011, 7
    %v6013 = vsub.s32 %v6010, %v6012
    %v6014 = vrot.slane %v5986, %v6013
    %v6015 = vcombine.low %v5993, %v6000
    %v6016 = vcombine.low %v6007, %v6014
    %v6018 = vunpack.c.l.s4 1966171168
    %v6019 = vunpack.c.0.s8 %v6018
    %v6020 = vlaneseq
    %v6021 = vshrl.u32 %v6020, 7
    %v6022 = vsub.s32 %v6019, %v6021
    %v6023 = vrot.slane %v6015, %v6022
    %v6025 = vunpack.c.l.s4 1966171168
    %v6026 = vunpack.c.0.s8 %v6025
    %v6027 = vlaneseq
    %v6028 = vshrl.u32 %v6027, 7
    %v6029 = vsub.s32 %v6026, %v6028
    %v6030 = vrot.slane %v6016, %v6029
    %v6031 = vcombine.low %v6023, %v6030
    %v6032 = vcombine.low %v5353, %v5357
    %v6033 = vcombine.low %v5361, %v5365
    %v6034 = vcombine.low %v5369, %v5373
    %v6035 = vcombine.low %v5377, %v5381
    %v6037 = vunpack.c.l.s4 1966171168
    %v6038 = vunpack.c.0.s8 %v6037
    %v6039 = vlaneseq
    %v6040 = vshrl.u32 %v6039, 7
    %v6041 = vsub.s32 %v6038, %v6040
    %v6042 = vrot.slane %v6032, %v6041
    %v6044 = vunpack.c.l.s4 1966171168
    %v6045 = vunpack.c.0.s8 %v6044
    %v6046 = vlaneseq
    %v6047 = vshrl.u32 %v6046, 7
    %v6048 = vsub.s32 %v6045, %v6047
    %v6049 = vrot.slane %v6033, %v6048
    %v6051 = vunpack.c.l.s4 1966171168
    %v6052 = vunpack.c.0.s8 %v6051
    %v6053 = vlaneseq
    %v6054 = vshrl.u32 %v6053, 7
    %v6055 = vsub.s32 %v6052, %v6054
    %v6056 = vrot.slane %v6034, %v6055
    %v6058 = vunpack.c.l.s4 1966171168
    %v6059 = vunpack.c.0.s8 %v6058
    %v6060 = vlaneseq
    %v6061 = vshrl.u32 %v6060, 7
    %v6062 = vsub.s32 %v6059, %v6061
    %v6063 = vrot.slane %v6035, %v6062
    %v6064 = vcombine.low %v6042, %v6049
    %v6065 = vcombine.low %v6056, %v6063
    %v6067 = vunpack.c.l.s4 1966171168
    %v6068 = vunpack.c.0.s8 %v6067
    %v6069 = vlaneseq
    %v6070 = vshrl.u32 %v6069, 7
    %v6071 = vsub.s32 %v6068, %v6070
    %v6072 = vrot.slane %v6064, %v6071
    %v6074 = vunpack.c.l.s4 1966171168
    %v6075 = vunpack.c.0.s8 %v6074
    %v6076 = vlaneseq
    %v6077 = vshrl.u32 %v6076, 7
    %v6078 = vsub.s32 %v6075, %v6077
    %v6079 = vrot.slane %v6065, %v6078
    %v6080 = vcombine.low %v6072, %v6079
    %v6081 = vcombine.low %v5385, %v5389
    %v6082 = vcombine.low %v5393, %v5397
    %v6083 = vcombine.low %v5401, %v5405
    %v6084 = vcombine.low %v5409, %v5413
    %v6086 = vunpack.c.l.s4 1966171168
    %v6087 = vunpack.c.0.s8 %v6086
    %v6088 = vlaneseq
    %v6089 = vshrl.u32 %v6088, 7
    %v6090 = vsub.s32 %v6087, %v6089
    %v6091 = vrot.slane %v6081, %v6090
    %v6093 = vunpack.c.l.s4 1966171168
    %v6094 = vunpack.c.0.s8 %v6093
    %v6095 = vlaneseq
    %v6096 = vshrl.u32 %v6095, 7
    %v6097 = vsub.s32 %v6094, %v6096
    %v6098 = vrot.slane %v6082, %v6097
    %v6100 = vunpack.c.l.s4 1966171168
    %v6101 = vunpack.c.0.s8 %v6100
    %v6102 = vlaneseq
    %v6103 = vshrl.u32 %v6102, 7
    %v6104 = vsub.s32 %v6101, %v6103
    %v6105 = vrot.slane %v6083, %v6104
    %v6107 = vunpack.c.l.s4 1966171168
    %v6108 = vunpack.c.0.s8 %v6107
    %v6109 = vlaneseq
    %v6110 = vshrl.u32 %v6109, 7
    %v6111 = vsub.s32 %v6108, %v6110
    %v6112 = vrot.slane %v6084, %v6111
    %v6113 = vcombine.low %v6091, %v6098
    %v6114 = vcombine.low %v6105, %v6112
    %v6116 = vunpack.c.l.s4 1966171168
    %v6117 = vunpack.c.0.s8 %v6116
    %v6118 = vlaneseq
    %v6119 = vshrl.u32 %v6118, 7
    %v6120 = vsub.s32 %v6117, %v6119
    %v6121 = vrot.slane %v6113, %v6120
    %v6123 = vunpack.c.l.s4 1966171168
    %v6124 = vunpack.c.0.s8 %v6123
    %v6125 = vlaneseq
    %v6126 = vshrl.u32 %v6125, 7
    %v6127 = vsub.s32 %v6124, %v6126
    %v6128 = vrot.slane %v6114, %v6127
    %v6129 = vcombine.low %v6121, %v6128
    %v6130 = vcombine.low %v5417, %v5421
    %v6131 = vcombine.low %v5425, %v5429
    %v6132 = vcombine.low %v5433, %v5437
    %v6133 = vcombine.low %v5441, %v5445
    %v6135 = vunpack.c.l.s4 1966171168
    %v6136 = vunpack.c.0.s8 %v6135
    %v6137 = vlaneseq
    %v6138 = vshrl.u32 %v6137, 7
    %v6139 = vsub.s32 %v6136, %v6138
    %v6140 = vrot.slane %v6130, %v6139
    %v6142 = vunpack.c.l.s4 1966171168
    %v6143 = vunpack.c.0.s8 %v6142
    %v6144 = vlaneseq
    %v6145 = vshrl.u32 %v6144, 7
    %v6146 = vsub.s32 %v6143, %v6145
    %v6147 = vrot.slane %v6131, %v6146
    %v6149 = vunpack.c.l.s4 1966171168
    %v6150 = vunpack.c.0.s8 %v6149
    %v6151 = vlaneseq
    %v6152 = vshrl.u32 %v6151, 7
    %v6153 = vsub.s32 %v6150, %v6152
    %v6154 = vrot.slane %v6132, %v6153
    %v6156 = vunpack.c.l.s4 1966171168
    %v6157 = vunpack.c.0.s8 %v6156
    %v6158 = vlaneseq
    %v6159 = vshrl.u32 %v6158, 7
    %v6160 = vsub.s32 %v6157, %v6159
    %v6161 = vrot.slane %v6133, %v6160
    %v6162 = vcombine.low %v6140, %v6147
    %v6163 = vcombine.low %v6154, %v6161
    %v6165 = vunpack.c.l.s4 1966171168
    %v6166 = vunpack.c.0.s8 %v6165
    %v6167 = vlaneseq
    %v6168 = vshrl.u32 %v6167, 7
    %v6169 = vsub.s32 %v6166, %v6168
    %v6170 = vrot.slane %v6162, %v6169
    %v6172 = vunpack.c.l.s4 1966171168
    %v6173 = vunpack.c.0.s8 %v6172
    %v6174 = vlaneseq
    %v6175 = vshrl.u32 %v6174, 7
    %v6176 = vsub.s32 %v6173, %v6175
    %v6177 = vrot.slane %v6163, %v6176
    %v6178 = vcombine.low %v6170, %v6177
    %v6179 = vcombine.low %v5449, %v5453
    %v6180 = vcombine.low %v5457, %v5461
    %v6181 = vcombine.low %v5465, %v5469
    %v6182 = vcombine.low %v5473, %v5477
    %v6184 = vunpack.c.l.s4 1966171168
    %v6185 = vunpack.c.0.s8 %v6184
    %v6186 = vlaneseq
    %v6187 = vshrl.u32 %v6186, 7
    %v6188 = vsub.s32 %v6185, %v6187
    %v6189 = vrot.slane %v6179, %v6188
    %v6191 = vunpack.c.l.s4 1966171168
    %v6192 = vunpack.c.0.s8 %v6191
    %v6193 = vlaneseq
    %v6194 = vshrl.u32 %v6193, 7
    %v6195 = vsub.s32 %v6192, %v6194
    %v6196 = vrot.slane %v6180, %v6195
    %v6198 = vunpack.c.l.s4 1966171168
    %v6199 = vunpack.c.0.s8 %v6198
    %v6200 = vlaneseq
    %v6201 = vshrl.u32 %v6200, 7
    %v6202 = vsub.s32 %v6199, %v6201
    %v6203 = vrot.slane %v6181, %v6202
    %v6205 = vunpack.c.l.s4 1966171168
    %v6206 = vunpack.c.0.s8 %v6205
    %v6207 = vlaneseq
    %v6208 = vshrl.u32 %v6207, 7
    %v6209 = vsub.s32 %v6206, %v6208
    %v6210 = vrot.slane %v6182, %v6209
    %v6211 = vcombine.low %v6189, %v6196
    %v6212 = vcombine.low %v6203, %v6210
    %v6214 = vunpack.c.l.s4 1966171168
    %v6215 = vunpack.c.0.s8 %v6214
    %v6216 = vlaneseq
    %v6217 = vshrl.u32 %v6216, 7
    %v6218 = vsub.s32 %v6215, %v6217
    %v6219 = vrot.slane %v6211, %v6218
    %v6221 = vunpack.c.l.s4 1966171168
    %v6222 = vunpack.c.0.s8 %v6221
    %v6223 = vlaneseq
    %v6224 = vshrl.u32 %v6223, 7
    %v6225 = vsub.s32 %v6222, %v6224
    %v6226 = vrot.slane %v6212, %v6225
    %v6227 = vcombine.low %v6219, %v6226
    %v6228 = vcombine.low %v5481, %v5485
    %v6229 = vcombine.low %v5489, %v5493
    %v6230 = vcombine.low %v5497, %v5501
    %v6231 = vcombine.low %v5505, %v5509
    %v6233 = vunpack.c.l.s4 1966171168
    %v6234 = vunpack.c.0.s8 %v6233
    %v6235 = vlaneseq
    %v6236 = vshrl.u32 %v6235, 7
    %v6237 = vsub.s32 %v6234, %v6236
    %v6238 = vrot.slane %v6228, %v6237
    %v6240 = vunpack.c.l.s4 1966171168
    %v6241 = vunpack.c.0.s8 %v6240
    %v6242 = vlaneseq
    %v6243 = vshrl.u32 %v6242, 7
    %v6244 = vsub.s32 %v6241, %v6243
    %v6245 = vrot.slane %v6229, %v6244
    %v6247 = vunpack.c.l.s4 1966171168
    %v6248 = vunpack.c.0.s8 %v6247
    %v6249 = vlaneseq
    %v6250 = vshrl.u32 %v6249, 7
    %v6251 = vsub.s32 %v6248, %v6250
    %v6252 = vrot.slane %v6230, %v6251
    %v6254 = vunpack.c.l.s4 1966171168
    %v6255 = vunpack.c.0.s8 %v6254
    %v6256 = vlaneseq
    %v6257 = vshrl.u32 %v6256, 7
    %v6258 = vsub.s32 %v6255, %v6257
    %v6259 = vrot.slane %v6231, %v6258
    %v6260 = vcombine.low %v6238, %v6245
    %v6261 = vcombine.low %v6252, %v6259
    %v6263 = vunpack.c.l.s4 1966171168
    %v6264 = vunpack.c.0.s8 %v6263
    %v6265 = vlaneseq
    %v6266 = vshrl.u32 %v6265, 7
    %v6267 = vsub.s32 %v6264, %v6266
    %v6268 = vrot.slane %v6260, %v6267
    %v6270 = vunpack.c.l.s4 1966171168
    %v6271 = vunpack.c.0.s8 %v6270
    %v6272 = vlaneseq
    %v6273 = vshrl.u32 %v6272, 7
    %v6274 = vsub.s32 %v6271, %v6273
    %v6275 = vrot.slane %v6261, %v6274
    %v6276 = vcombine.low %v6268, %v6275
    %v6277 = vcombine.low %v5513, %v5517
    %v6278 = vcombine.low %v5521, %v5525
    %v6279 = vcombine.low %v5529, %v5533
    %v6280 = vcombine.low %v5537, %v5541
    %v6282 = vunpack.c.l.s4 1966171168
    %v6283 = vunpack.c.0.s8 %v6282
    %v6284 = vlaneseq
    %v6285 = vshrl.u32 %v6284, 7
    %v6286 = vsub.s32 %v6283, %v6285
    %v6287 = vrot.slane %v6277, %v6286
    %v6289 = vunpack.c.l.s4 1966171168
    %v6290 = vunpack.c.0.s8 %v6289
    %v6291 = vlaneseq
    %v6292 = vshrl.u32 %v6291, 7
    %v6293 = vsub.s32 %v6290, %v6292
    %v6294 = vrot.slane %v6278, %v6293
    %v6296 = vunpack.c.l.s4 1966171168
    %v6297 = vunpack.c.0.s8 %v6296
    %v6298 = vlaneseq
    %v6299 = vshrl.u32 %v6298, 7
    %v6300 = vsub.s32 %v6297, %v6299
    %v6301 = vrot.slane %v6279, %v6300
    %v6303 = vunpack.c.l.s4 1966171168
    %v6304 = vunpack.c.0.s8 %v6303
    %v6305 = vlaneseq
    %v6306 = vshrl.u32 %v6305, 7
    %v6307 = vsub.s32 %v6304, %v6306
    %v6308 = vrot.slane %v6280, %v6307
    %v6309 = vcombine.low %v6287, %v6294
    %v6310 = vcombine.low %v6301, %v6308
    %v6312 = vunpack.c.l.s4 1966171168
    %v6313 = vunpack.c.0.s8 %v6312
    %v6314 = vlaneseq
    %v6315 = vshrl.u32 %v6314, 7
    %v6316 = vsub.s32 %v6313, %v6315
    %v6317 = vrot.slane %v6309, %v6316
    %v6319 = vunpack.c.l.s4 1966171168
    %v6320 = vunpack.c.0.s8 %v6319
    %v6321 = vlaneseq
    %v6322 = vshrl.u32 %v6321, 7
    %v6323 = vsub.s32 %v6320, %v6322
    %v6324 = vrot.slane %v6310, %v6323
    %v6325 = vcombine.low %v6317, %v6324
    %6326 = vset.pattern.permute.xlu0 0
    %6327 = vperm.xlu0 %6326, %v5590
    %v6328 = vpop.permute.xlu0 %6327
    %6329 = vset.pattern.permute.xlu0 0
    %6330 = vperm.xlu0 %6329, %v5639
    %v6331 = vpop.permute.xlu0 %6330
    %6332 = vset.pattern.permute.xlu0 0
    %6333 = vperm.xlu0 %6332, %v5688
    %v6334 = vpop.permute.xlu0 %6333
    %6335 = vset.pattern.permute.xlu0 0
    %6336 = vperm.xlu0 %6335, %v5737
    %v6337 = vpop.permute.xlu0 %6336
    %6338 = vset.pattern.permute.xlu0 0
    %6339 = vperm.xlu0 %6338, %v5786
    %v6340 = vpop.permute.xlu0 %6339
    %6341 = vset.pattern.permute.xlu0 0
    %6342 = vperm.xlu0 %6341, %v5835
    %v6343 = vpop.permute.xlu0 %6342
    %6344 = vset.pattern.permute.xlu0 0
    %6345 = vperm.xlu0 %6344, %v5884
    %v6346 = vpop.permute.xlu0 %6345
    %6347 = vset.pattern.permute.xlu0 0
    %6348 = vperm.xlu0 %6347, %v5933
    %v6349 = vpop.permute.xlu0 %6348
    %6350 = vset.pattern.permute.xlu0 0
    %6351 = vperm.xlu0 %6350, %v5982
    %v6352 = vpop.permute.xlu0 %6351
    %6353 = vset.pattern.permute.xlu0 0
    %6354 = vperm.xlu0 %6353, %v6031
    %v6355 = vpop.permute.xlu0 %6354
    %6356 = vset.pattern.permute.xlu0 0
    %6357 = vperm.xlu0 %6356, %v6080
    %v6358 = vpop.permute.xlu0 %6357
    %6359 = vset.pattern.permute.xlu0 0
    %6360 = vperm.xlu0 %6359, %v6129
    %v6361 = vpop.permute.xlu0 %6360
    %6362 = vset.pattern.permute.xlu0 0
    %6363 = vperm.xlu0 %6362, %v6178
    %v6364 = vpop.permute.xlu0 %6363
    %6365 = vset.pattern.permute.xlu0 0
    %6366 = vperm.xlu0 %6365, %v6227
    %v6367 = vpop.permute.xlu0 %6366
    %6368 = vset.pattern.permute.xlu0 0
    %6369 = vperm.xlu0 %6368, %v6276
    %v6370 = vpop.permute.xlu0 %6369
    %6371 = vset.pattern.permute.xlu0 0
    %6372 = vperm.xlu0 %6371, %v6325
    %v6373 = vpop.permute.xlu0 %6372
    %v6374 = vlaneseq
    %v6375 = vshrl.u32 %v6374, 7
    %v6376 = vsub.s32 %v29, %v6375
    %v6377 = vrot.slane %v6328, %v6376
    %v6378 = vlaneseq
    %v6379 = vshrl.u32 %v6378, 7
    %v6380 = vsub.s32 %v2033, %v6379
    %v6381 = vrot.slane %v6331, %v6380
    %v6382 = vsel %vm2038, %v6381, %v6377
    %v6383 = vlaneseq
    %v6384 = vshrl.u32 %v6383, 7
    %v6385 = vsub.s32 %v2040, %v6384
    %v6386 = vrot.slane %v6334, %v6385
    %v6387 = vsel %vm2045, %v6386, %v6382
    %v6388 = vlaneseq
    %v6389 = vshrl.u32 %v6388, 7
    %v6390 = vsub.s32 %v2047, %v6389
    %v6391 = vrot.slane %v6337, %v6390
    %v6392 = vsel %vm2052, %v6391, %v6387
    %v6393 = vlaneseq
    %v6394 = vshrl.u32 %v6393, 7
    %v6395 = vsub.s32 %v2054, %v6394
    %v6396 = vrot.slane %v6340, %v6395
    %v6397 = vsel %vm2059, %v6396, %v6392
    %v6398 = vlaneseq
    %v6399 = vshrl.u32 %v6398, 7
    %v6400 = vsub.s32 %v2061, %v6399
    %v6401 = vrot.slane %v6343, %v6400
    %v6402 = vsel %vm2066, %v6401, %v6397
    %v6403 = vlaneseq
    %v6404 = vshrl.u32 %v6403, 7
    %v6405 = vsub.s32 %v2068, %v6404
    %v6406 = vrot.slane %v6346, %v6405
    %v6407 = vsel %vm2073, %v6406, %v6402
    %v6408 = vlaneseq
    %v6409 = vshrl.u32 %v6408, 7
    %v6410 = vsub.s32 %v2075, %v6409
    %v6411 = vrot.slane %v6349, %v6410
    %v6412 = vsel %vm2080, %v6411, %v6407
    %v6413 = vlaneseq
    %v6414 = vshrl.u32 %v6413, 7
    %v6415 = vsub.s32 %v2082, %v6414
    %v6416 = vrot.slane %v6352, %v6415
    %v6417 = vsel %vm2087, %v6416, %v6412
    %v6418 = vlaneseq
    %v6419 = vshrl.u32 %v6418, 7
    %v6420 = vsub.s32 %v2089, %v6419
    %v6421 = vrot.slane %v6355, %v6420
    %v6422 = vsel %vm2094, %v6421, %v6417
    %v6423 = vlaneseq
    %v6424 = vshrl.u32 %v6423, 7
    %v6425 = vsub.s32 %v2096, %v6424
    %v6426 = vrot.slane %v6358, %v6425
    %v6427 = vsel %vm2101, %v6426, %v6422
    %v6428 = vlaneseq
    %v6429 = vshrl.u32 %v6428, 7
    %v6430 = vsub.s32 %v2103, %v6429
    %v6431 = vrot.slane %v6361, %v6430
    %v6432 = vsel %vm2108, %v6431, %v6427
    %v6433 = vlaneseq
    %v6434 = vshrl.u32 %v6433, 7
    %v6435 = vsub.s32 %v2110, %v6434
    %v6436 = vrot.slane %v6364, %v6435
    %v6437 = vsel %vm2115, %v6436, %v6432
    %v6438 = vlaneseq
    %v6439 = vshrl.u32 %v6438, 7
    %v6440 = vsub.s32 %v2117, %v6439
    %v6441 = vrot.slane %v6367, %v6440
    %v6442 = vsel %vm2122, %v6441, %v6437
    %v6443 = vlaneseq
    %v6444 = vshrl.u32 %v6443, 7
    %v6445 = vsub.s32 %v2124, %v6444
    %v6446 = vrot.slane %v6370, %v6445
    %v6447 = vsel %vm2129, %v6446, %v6442
    %v6448 = vlaneseq
    %v6449 = vshrl.u32 %v6448, 7
    %v6450 = vsub.s32 %v2131, %v6449
    %v6451 = vrot.slane %v6373, %v6450
    %v6452 = vsel %vm2136, %v6451, %v6447
    %v6454 = vunpack.c.l.s4 1966171168
    %v6455 = vunpack.c.0.s8 %v6454
    %v6456 = vlaneseq
    %v6457 = vshrl.u32 %v6456, 7
    %v6458 = vsub.s32 %v6455, %v6457
    %v6459 = vrot.slane %v6452, %v6458
    %v6461 = vunpack.c.l.s4 1966171168
    %v6462 = vunpack.c.0.s8 %v6461
    %v6463 = vlaneseq
    %v6464 = vshrl.u32 %v6463, 7
    %v6465 = vsub.s32 %v6462, %v6464
    %v6466 = vrot.slane %v6459, %v6465
    %s6467 = scalar_lea.vmem [#allocation2], 2
    %6468 = vst.msk [vmem:[%s6467] sm:$0x1] %vm2155, %v6466
    %v6469 = vsub.f32 %v4387, %v4935
    %v6470 = vsub.f32 %v4388, %v4940
    %v6471 = vsub.f32 %v4389, %v4945
    %v6472 = vsub.f32 %v4390, %v4950
    %v6473 = vsub.f32 %v4391, %v4955
    %v6474 = vsub.f32 %v4392, %v4960
    %v6475 = vsub.f32 %v4393, %v4965
    %v6476 = vsub.f32 %v4394, %v4970
    %v6477 = vsub.f32 %v4395, %v4975
    %v6478 = vsub.f32 %v4396, %v4980
    %v6479 = vsub.f32 %v4397, %v4985
    %v6480 = vsub.f32 %v4398, %v4990
    %v6481 = vsub.f32 %v4399, %v4995
    %v6482 = vsub.f32 %v4400, %v5000
    %v6483 = vsub.f32 %v4401, %v5005
    %v6484 = vsub.f32 %v4402, %v5010
    %v6485 = vmul.f32 %v6469, %v6469
    %v6486 = vmul.f32 %v6470, %v6470
    %v6487 = vmul.f32 %v6471, %v6471
    %v6488 = vmul.f32 %v6472, %v6472
    %v6489 = vmul.f32 %v6473, %v6473
    %v6490 = vmul.f32 %v6474, %v6474
    %v6491 = vmul.f32 %v6475, %v6475
    %v6492 = vmul.f32 %v6476, %v6476
    %v6493 = vmul.f32 %v6477, %v6477
    %v6494 = vmul.f32 %v6478, %v6478
    %v6495 = vmul.f32 %v6479, %v6479
    %v6496 = vmul.f32 %v6480, %v6480
    %v6497 = vmul.f32 %v6481, %v6481
    %v6498 = vmul.f32 %v6482, %v6482
    %v6499 = vmul.f32 %v6483, %v6483
    %v6500 = vmul.f32 %v6484, %v6484
    %v6501 = vsel %vm47, %v6485, 0.0
    %v6502 = vsel %vm47, %v6486, 0.0
    %v6503 = vadd.f32 %v6501, %v6502
    %v6504 = vsel %vm47, %v6487, 0.0
    %v6505 = vadd.f32 %v6503, %v6504
    %v6506 = vsel %vm47, %v6488, 0.0
    %v6507 = vadd.f32 %v6505, %v6506
    %v6508 = vsel %vm47, %v6489, 0.0
    %v6509 = vadd.f32 %v6507, %v6508
    %v6510 = vsel %vm47, %v6490, 0.0
    %v6511 = vadd.f32 %v6509, %v6510
    %v6512 = vsel %vm47, %v6491, 0.0
    %v6513 = vadd.f32 %v6511, %v6512
    %v6514 = vsel %vm47, %v6492, 0.0
    %v6515 = vadd.f32 %v6513, %v6514
    %v6516 = vsel %vm47, %v6493, 0.0
    %v6517 = vadd.f32 %v6515, %v6516
    %v6518 = vsel %vm47, %v6494, 0.0
    %v6519 = vadd.f32 %v6517, %v6518
    %v6520 = vsel %vm47, %v6495, 0.0
    %v6521 = vadd.f32 %v6519, %v6520
    %v6522 = vsel %vm47, %v6496, 0.0
    %v6523 = vadd.f32 %v6521, %v6522
    %v6524 = vsel %vm47, %v6497, 0.0
    %v6525 = vadd.f32 %v6523, %v6524
    %v6526 = vsel %vm47, %v6498, 0.0
    %v6527 = vadd.f32 %v6525, %v6526
    %v6528 = vsel %vm47, %v6499, 0.0
    %v6529 = vadd.f32 %v6527, %v6528
    %v6530 = vsel %vm47, %v6500, 0.0
    %v6531 = vadd.f32 %v6529, %v6530
    %6532 = vadd.xlane.f32.xlu0 %v6531
    %v6533 = vpop.xlane.xlu0 %6532
    %v6534 = vrot.slane %v6533, 4
    %v6535 = vadd.f32 %v6533, %v6534
    %v6536 = vrot.slane %v6535, 2
    %v6537 = vadd.f32 %v6535, %v6536
    %v6538 = vrot.slane %v6537, 1
    %v6539 = vadd.f32 %v6537, %v6538
    %s6540 = vtos %v6539
    %s6541 = sadd.f32 %s4385, %s6540
    %s6542 = scalar_lea.vmem %s0, 384
    %v6543 = vld [vmem:[%s6542] sm:$0xff]
    %v6544 = vld [vmem:[%s6542 + $0x8] sm:$0xff]
    %v6545 = vld [vmem:[%s6542 + $0x10] sm:$0xff]
    %v6546 = vld [vmem:[%s6542 + $0x18] sm:$0xff]
    %v6547 = vld [vmem:[%s6542 + $0x20] sm:$0xff]
    %v6548 = vld [vmem:[%s6542 + $0x28] sm:$0xff]
    %v6549 = vld [vmem:[%s6542 + $0x30] sm:$0xff]
    %v6550 = vld [vmem:[%s6542 + $0x38] sm:$0xff]
    %v6551 = vld [vmem:[%s6542 + $0x40] sm:$0xff]
    %v6552 = vld [vmem:[%s6542 + $0x48] sm:$0xff]
    %v6553 = vld [vmem:[%s6542 + $0x50] sm:$0xff]
    %v6554 = vld [vmem:[%s6542 + $0x58] sm:$0xff]
    %v6555 = vld [vmem:[%s6542 + $0x60] sm:$0xff]
    %v6556 = vld [vmem:[%s6542 + $0x68] sm:$0xff]
    %v6557 = vld [vmem:[%s6542 + $0x70] sm:$0xff]
    %v6558 = vld [vmem:[%s6542 + $0x78] sm:$0xff]
    %v6560 = vsel %vm47, %v6543, 0
    %v6563 = vsel %vm47, %v6544, 0
    %v6566 = vsel %vm47, %v6545, 0
    %v6569 = vsel %vm47, %v6546, 0
    %v6572 = vsel %vm47, %v6547, 0
    %v6575 = vsel %vm47, %v6548, 0
    %v6578 = vsel %vm47, %v6549, 0
    %v6581 = vsel %vm47, %v6550, 0
    %v6584 = vsel %vm47, %v6551, 0
    %v6587 = vsel %vm47, %v6552, 0
    %v6590 = vsel %vm47, %v6553, 0
    %v6593 = vsel %vm47, %v6554, 0
    %v6596 = vsel %vm47, %v6555, 0
    %v6599 = vsel %vm47, %v6556, 0
    %v6602 = vsel %vm47, %v6557, 0
    %v6605 = vsel %vm47, %v6558, 0
    %6607 = vmatprep.subr.mxu0 %v20
    %6608 = vmatpush1.msra.mxu0 %v19
    %6609 = vmatprep.subr.mxu0 %v22
    %6610 = vmatpush1.msra.mxu0 %v21
    %6611 = vmatprep.subr.mxu0 %v24
    %6612 = vmatpush1.msra.mxu0 %v23
    %6613 = vmatprep.subr.mxu0 %v26
    %6614 = vmatpush1.msra.mxu0 %v25
    %6615 = vmatprep.subr.mxu0 0.0
    %6616 = vmatpush1.msra.mxu0 0.0
    %6617 = vmatprep.subr.mxu0 0.0
    %6618 = vmatpush1.msra.mxu0 0.0
    %6619 = vmatprep.subr.mxu0 0.0
    %6620 = vmatpush1.msra.mxu0 0.0
    %6621 = vmatprep.subr.mxu0 0.0
    %6622 = vmatpush1.msra.mxu0 0.0
    %6623 = vmatprep.subr.mxu0 0.0
    %6624 = vmatpush1.msra.mxu0 0.0
    %6625 = vmatprep.subr.mxu0 0.0
    %6626 = vmatpush1.msra.mxu0 0.0
    %6627 = vmatprep.subr.mxu0 0.0
    %6628 = vmatpush1.msra.mxu0 0.0
    %6629 = vmatprep.subr.mxu0 0.0
    %6630 = vmatpush1.msra.mxu0 0.0
    %6631 = vmatprep.subr.mxu0 0.0
    %6632 = vmatpush1.msra.mxu0 0.0
    %6633 = vmatprep.subr.mxu0 0.0
    %6634 = vmatpush1.msra.mxu0 0.0
    %6635 = vmatprep.subr.mxu0 0.0
    %6636 = vmatpush1.msra.mxu0 0.0
    %6637 = vmatprep.subr.mxu0 0.0
    %6638 = vmatpush1.msra.mxu0 0.0
    %6639 = vmatprep.subr.mxu0 0.0
    %6640 = vmatpush1.msra.mxu0 0.0
    %6641 = vmatprep.subr.mxu0 0.0
    %6642 = vmatpush1.msra.mxu0 0.0
    %6643 = vmatprep.subr.mxu0 0.0
    %6644 = vmatpush1.msra.mxu0 0.0
    %6645 = vmatprep.subr.mxu0 0.0
    %6646 = vmatpush1.msra.mxu0 0.0
    %6647 = vmatprep.subr.mxu0 0.0
    %6648 = vmatpush1.msra.mxu0 0.0
    %6649 = vmatprep.subr.mxu0 0.0
    %6650 = vmatpush1.msra.mxu0 0.0
    %6651 = vmatprep.subr.mxu0 0.0
    %6652 = vmatpush1.msra.mxu0 0.0
    %6653 = vmatprep.subr.mxu0 0.0
    %6654 = vmatpush1.msra.mxu0 0.0
    %6655 = vmatprep.subr.mxu0 0.0
    %6656 = vmatpush1.msra.mxu0 0.0
    %6657 = vmatprep.subr.mxu0 0.0
    %6658 = vmatpush1.msra.mxu0 0.0
    %6659 = vmatprep.subr.mxu0 0.0
    %6660 = vmatpush1.msra.mxu0 0.0
    %6661 = vmatprep.subr.mxu0 0.0
    %6662 = vmatpush1.msra.mxu0 0.0
    %6663 = vmatprep.subr.mxu0 0.0
    %6664 = vmatpush1.msra.mxu0 0.0
    %6665 = vmatprep.subr.mxu0 0.0
    %6666 = vmatpush1.msra.mxu0 0.0
    %6667 = vmatprep.subr.mxu0 0.0
    %6668 = vmatpush1.msra.mxu0 0.0
    %6669 = vmatprep.subr.mxu0 0.0
    %6670 = vmatpush1.msra.mxu0 0.0
    %6671 = vmatprep.mubr.f32.mxu0 0.0
    %6672 = vmatmul.mubr.f32.gmra.mrb[0].mxu0 %v6560
    %v6673 = vpop.f32.mrb[0].mxu0
    %v6674 = vadd.f32 0.0, %v6673
    %v6675 = vpop.f32.mrb[0].mxu0
    %v6676 = vadd.f32 0.0, %v6675
    %6677 = vmatprep.mubr.f32.mxu0 0.0
    %6678 = vmatmul.mubr.f32.gmra.mrb[0].mxu0 %v6563
    %v6679 = vpop.f32.mrb[0].mxu0
    %v6680 = vadd.f32 0.0, %v6679
    %v6681 = vpop.f32.mrb[0].mxu0
    %v6682 = vadd.f32 0.0, %v6681
    %6683 = vmatprep.mubr.f32.mxu0 0.0
    %6684 = vmatmul.mubr.f32.gmra.mrb[0].mxu0 %v6566
    %v6685 = vpop.f32.mrb[0].mxu0
    %v6686 = vadd.f32 0.0, %v6685
    %v6687 = vpop.f32.mrb[0].mxu0
    %v6688 = vadd.f32 0.0, %v6687
    %6689 = vmatprep.mubr.f32.mxu0 0.0
    %6690 = vmatmul.mubr.f32.gmra.mrb[0].mxu0 %v6569
    %v6691 = vpop.f32.mrb[0].mxu0
    %v6692 = vadd.f32 0.0, %v6691
    %v6693 = vpop.f32.mrb[0].mxu0
    %v6694 = vadd.f32 0.0, %v6693
    %6695 = vmatprep.mubr.f32.mxu0 0.0
    %6696 = vmatmul.mubr.f32.gmra.mrb[0].mxu0 %v6572
    %v6697 = vpop.f32.mrb[0].mxu0
    %v6698 = vadd.f32 0.0, %v6697
    %v6699 = vpop.f32.mrb[0].mxu0
    %v6700 = vadd.f32 0.0, %v6699
    %6701 = vmatprep.mubr.f32.mxu0 0.0
    %6702 = vmatmul.mubr.f32.gmra.mrb[0].mxu0 %v6575
    %v6703 = vpop.f32.mrb[0].mxu0
    %v6704 = vadd.f32 0.0, %v6703
    %v6705 = vpop.f32.mrb[0].mxu0
    %v6706 = vadd.f32 0.0, %v6705
    %6707 = vmatprep.mubr.f32.mxu0 0.0
    %6708 = vmatmul.mubr.f32.gmra.mrb[0].mxu0 %v6578
    %v6709 = vpop.f32.mrb[0].mxu0
    %v6710 = vadd.f32 0.0, %v6709
    %v6711 = vpop.f32.mrb[0].mxu0
    %v6712 = vadd.f32 0.0, %v6711
    %6713 = vmatprep.mubr.f32.mxu0 0.0
    %6714 = vmatmul.mubr.f32.gmra.mrb[0].mxu0 %v6581
    %v6715 = vpop.f32.mrb[0].mxu0
    %v6716 = vadd.f32 0.0, %v6715
    %v6717 = vpop.f32.mrb[0].mxu0
    %v6718 = vadd.f32 0.0, %v6717
    %6719 = vmatprep.mubr.f32.mxu0 0.0
    %6720 = vmatmul.mubr.f32.gmra.mrb[0].mxu0 %v6584
    %v6721 = vpop.f32.mrb[0].mxu0
    %v6722 = vadd.f32 0.0, %v6721
    %v6723 = vpop.f32.mrb[0].mxu0
    %v6724 = vadd.f32 0.0, %v6723
    %6725 = vmatprep.mubr.f32.mxu0 0.0
    %6726 = vmatmul.mubr.f32.gmra.mrb[0].mxu0 %v6587
    %v6727 = vpop.f32.mrb[0].mxu0
    %v6728 = vadd.f32 0.0, %v6727
    %v6729 = vpop.f32.mrb[0].mxu0
    %v6730 = vadd.f32 0.0, %v6729
    %6731 = vmatprep.mubr.f32.mxu0 0.0
    %6732 = vmatmul.mubr.f32.gmra.mrb[0].mxu0 %v6590
    %v6733 = vpop.f32.mrb[0].mxu0
    %v6734 = vadd.f32 0.0, %v6733
    %v6735 = vpop.f32.mrb[0].mxu0
    %v6736 = vadd.f32 0.0, %v6735
    %6737 = vmatprep.mubr.f32.mxu0 0.0
    %6738 = vmatmul.mubr.f32.gmra.mrb[0].mxu0 %v6593
    %v6739 = vpop.f32.mrb[0].mxu0
    %v6740 = vadd.f32 0.0, %v6739
    %v6741 = vpop.f32.mrb[0].mxu0
    %v6742 = vadd.f32 0.0, %v6741
    %6743 = vmatprep.mubr.f32.mxu0 0.0
    %6744 = vmatmul.mubr.f32.gmra.mrb[0].mxu0 %v6596
    %v6745 = vpop.f32.mrb[0].mxu0
    %v6746 = vadd.f32 0.0, %v6745
    %v6747 = vpop.f32.mrb[0].mxu0
    %v6748 = vadd.f32 0.0, %v6747
    %6749 = vmatprep.mubr.f32.mxu0 0.0
    %6750 = vmatmul.mubr.f32.gmra.mrb[0].mxu0 %v6599
    %v6751 = vpop.f32.mrb[0].mxu0
    %v6752 = vadd.f32 0.0, %v6751
    %v6753 = vpop.f32.mrb[0].mxu0
    %v6754 = vadd.f32 0.0, %v6753
    %6755 = vmatprep.mubr.f32.mxu0 0.0
    %6756 = vmatmul.mubr.f32.gmra.mrb[0].mxu0 %v6602
    %v6757 = vpop.f32.mrb[0].mxu0
    %v6758 = vadd.f32 0.0, %v6757
    %v6759 = vpop.f32.mrb[0].mxu0
    %v6760 = vadd.f32 0.0, %v6759
    %6761 = vmatprep.mubr.f32.mxu0 0.0
    %6762 = vmatmul.mubr.f32.gmra.mrb[0].mxu0 %v6605
    %v6763 = vpop.f32.mrb[0].mxu0
    %v6764 = vadd.f32 0.0, %v6763
    %v6765 = vpop.f32.mrb[0].mxu0
    %v6766 = vadd.f32 0.0, %v6765
    %6767 = vdwg.mxu0
    %v6768 = vsub.f32 %v261, %v6674
    %v6769 = vsub.f32 %v265, %v6676
    %v6770 = vsub.f32 %v261, %v6680
    %v6771 = vsub.f32 %v265, %v6682
    %v6772 = vsub.f32 %v261, %v6686
    %v6773 = vsub.f32 %v265, %v6688
    %v6774 = vsub.f32 %v261, %v6692
    %v6775 = vsub.f32 %v265, %v6694
    %v6776 = vsub.f32 %v261, %v6698
    %v6777 = vsub.f32 %v265, %v6700
    %v6778 = vsub.f32 %v261, %v6704
    %v6779 = vsub.f32 %v265, %v6706
    %v6780 = vsub.f32 %v261, %v6710
    %v6781 = vsub.f32 %v265, %v6712
    %v6782 = vsub.f32 %v261, %v6716
    %v6783 = vsub.f32 %v265, %v6718
    %v6784 = vsub.f32 %v261, %v6722
    %v6785 = vsub.f32 %v265, %v6724
    %v6786 = vsub.f32 %v261, %v6728
    %v6787 = vsub.f32 %v265, %v6730
    %v6788 = vsub.f32 %v261, %v6734
    %v6789 = vsub.f32 %v265, %v6736
    %v6790 = vsub.f32 %v261, %v6740
    %v6791 = vsub.f32 %v265, %v6742
    %v6792 = vsub.f32 %v261, %v6746
    %v6793 = vsub.f32 %v265, %v6748
    %v6794 = vsub.f32 %v261, %v6752
    %v6795 = vsub.f32 %v265, %v6754
    %v6796 = vsub.f32 %v261, %v6758
    %v6797 = vsub.f32 %v265, %v6760
    %v6798 = vsub.f32 %v261, %v6764
    %v6799 = vsub.f32 %v265, %v6766
    %vm6800 = vcmp.le.f32.partialorder %v6768, %v6769
    %v6801 = vsel %vm6800, %v6768, %v6769
    %v6802 = vsel %vm6800, %v29, %v30
    %6803 = vmin.index.xlane.f32.xlu0 %v6801
    %v6804 = vpop.xlane.xlu0 %6803
    %6805 = vset.pattern.permute.xlu0 %v6804
    %6806 = vperm.xlu0 %6805, %v6802
    %v6807 = vpop.permute.xlu0 %6806
    %vm6808 = vcmp.le.f32.partialorder %v6770, %v6771
    %v6809 = vsel %vm6808, %v6770, %v6771
    %v6810 = vsel %vm6808, %v29, %v30
    %6811 = vmin.index.xlane.f32.xlu0 %v6809
    %v6812 = vpop.xlane.xlu0 %6811
    %6813 = vset.pattern.permute.xlu0 %v6812
    %6814 = vperm.xlu0 %6813, %v6810
    %v6815 = vpop.permute.xlu0 %6814
    %vm6816 = vcmp.le.f32.partialorder %v6772, %v6773
    %v6817 = vsel %vm6816, %v6772, %v6773
    %v6818 = vsel %vm6816, %v29, %v30
    %6819 = vmin.index.xlane.f32.xlu0 %v6817
    %v6820 = vpop.xlane.xlu0 %6819
    %6821 = vset.pattern.permute.xlu0 %v6820
    %6822 = vperm.xlu0 %6821, %v6818
    %v6823 = vpop.permute.xlu0 %6822
    %vm6824 = vcmp.le.f32.partialorder %v6774, %v6775
    %v6825 = vsel %vm6824, %v6774, %v6775
    %v6826 = vsel %vm6824, %v29, %v30
    %6827 = vmin.index.xlane.f32.xlu0 %v6825
    %v6828 = vpop.xlane.xlu0 %6827
    %6829 = vset.pattern.permute.xlu0 %v6828
    %6830 = vperm.xlu0 %6829, %v6826
    %v6831 = vpop.permute.xlu0 %6830
    %vm6832 = vcmp.le.f32.partialorder %v6776, %v6777
    %v6833 = vsel %vm6832, %v6776, %v6777
    %v6834 = vsel %vm6832, %v29, %v30
    %6835 = vmin.index.xlane.f32.xlu0 %v6833
    %v6836 = vpop.xlane.xlu0 %6835
    %6837 = vset.pattern.permute.xlu0 %v6836
    %6838 = vperm.xlu0 %6837, %v6834
    %v6839 = vpop.permute.xlu0 %6838
    %vm6840 = vcmp.le.f32.partialorder %v6778, %v6779
    %v6841 = vsel %vm6840, %v6778, %v6779
    %v6842 = vsel %vm6840, %v29, %v30
    %6843 = vmin.index.xlane.f32.xlu0 %v6841
    %v6844 = vpop.xlane.xlu0 %6843
    %6845 = vset.pattern.permute.xlu0 %v6844
    %6846 = vperm.xlu0 %6845, %v6842
    %v6847 = vpop.permute.xlu0 %6846
    %vm6848 = vcmp.le.f32.partialorder %v6780, %v6781
    %v6849 = vsel %vm6848, %v6780, %v6781
    %v6850 = vsel %vm6848, %v29, %v30
    %6851 = vmin.index.xlane.f32.xlu0 %v6849
    %v6852 = vpop.xlane.xlu0 %6851
    %6853 = vset.pattern.permute.xlu0 %v6852
    %6854 = vperm.xlu0 %6853, %v6850
    %v6855 = vpop.permute.xlu0 %6854
    %vm6856 = vcmp.le.f32.partialorder %v6782, %v6783
    %v6857 = vsel %vm6856, %v6782, %v6783
    %v6858 = vsel %vm6856, %v29, %v30
    %6859 = vmin.index.xlane.f32.xlu0 %v6857
    %v6860 = vpop.xlane.xlu0 %6859
    %6861 = vset.pattern.permute.xlu0 %v6860
    %6862 = vperm.xlu0 %6861, %v6858
    %v6863 = vpop.permute.xlu0 %6862
    %vm6864 = vcmp.le.f32.partialorder %v6784, %v6785
    %v6865 = vsel %vm6864, %v6784, %v6785
    %v6866 = vsel %vm6864, %v29, %v30
    %6867 = vmin.index.xlane.f32.xlu0 %v6865
    %v6868 = vpop.xlane.xlu0 %6867
    %6869 = vset.pattern.permute.xlu0 %v6868
    %6870 = vperm.xlu0 %6869, %v6866
    %v6871 = vpop.permute.xlu0 %6870
    %vm6872 = vcmp.le.f32.partialorder %v6786, %v6787
    %v6873 = vsel %vm6872, %v6786, %v6787
    %v6874 = vsel %vm6872, %v29, %v30
    %6875 = vmin.index.xlane.f32.xlu0 %v6873
    %v6876 = vpop.xlane.xlu0 %6875
    %6877 = vset.pattern.permute.xlu0 %v6876
    %6878 = vperm.xlu0 %6877, %v6874
    %v6879 = vpop.permute.xlu0 %6878
    %vm6880 = vcmp.le.f32.partialorder %v6788, %v6789
    %v6881 = vsel %vm6880, %v6788, %v6789
    %v6882 = vsel %vm6880, %v29, %v30
    %6883 = vmin.index.xlane.f32.xlu0 %v6881
    %v6884 = vpop.xlane.xlu0 %6883
    %6885 = vset.pattern.permute.xlu0 %v6884
    %6886 = vperm.xlu0 %6885, %v6882
    %v6887 = vpop.permute.xlu0 %6886
    %vm6888 = vcmp.le.f32.partialorder %v6790, %v6791
    %v6889 = vsel %vm6888, %v6790, %v6791
    %v6890 = vsel %vm6888, %v29, %v30
    %6891 = vmin.index.xlane.f32.xlu0 %v6889
    %v6892 = vpop.xlane.xlu0 %6891
    %6893 = vset.pattern.permute.xlu0 %v6892
    %6894 = vperm.xlu0 %6893, %v6890
    %v6895 = vpop.permute.xlu0 %6894
    %vm6896 = vcmp.le.f32.partialorder %v6792, %v6793
    %v6897 = vsel %vm6896, %v6792, %v6793
    %v6898 = vsel %vm6896, %v29, %v30
    %6899 = vmin.index.xlane.f32.xlu0 %v6897
    %v6900 = vpop.xlane.xlu0 %6899
    %6901 = vset.pattern.permute.xlu0 %v6900
    %6902 = vperm.xlu0 %6901, %v6898
    %v6903 = vpop.permute.xlu0 %6902
    %vm6904 = vcmp.le.f32.partialorder %v6794, %v6795
    %v6905 = vsel %vm6904, %v6794, %v6795
    %v6906 = vsel %vm6904, %v29, %v30
    %6907 = vmin.index.xlane.f32.xlu0 %v6905
    %v6908 = vpop.xlane.xlu0 %6907
    %6909 = vset.pattern.permute.xlu0 %v6908
    %6910 = vperm.xlu0 %6909, %v6906
    %v6911 = vpop.permute.xlu0 %6910
    %vm6912 = vcmp.le.f32.partialorder %v6796, %v6797
    %v6913 = vsel %vm6912, %v6796, %v6797
    %v6914 = vsel %vm6912, %v29, %v30
    %6915 = vmin.index.xlane.f32.xlu0 %v6913
    %v6916 = vpop.xlane.xlu0 %6915
    %6917 = vset.pattern.permute.xlu0 %v6916
    %6918 = vperm.xlu0 %6917, %v6914
    %v6919 = vpop.permute.xlu0 %6918
    %vm6920 = vcmp.le.f32.partialorder %v6798, %v6799
    %v6921 = vsel %vm6920, %v6798, %v6799
    %v6922 = vsel %vm6920, %v29, %v30
    %6923 = vmin.index.xlane.f32.xlu0 %v6921
    %v6924 = vpop.xlane.xlu0 %6923
    %6925 = vset.pattern.permute.xlu0 %v6924
    %6926 = vperm.xlu0 %6925, %v6922
    %v6927 = vpop.permute.xlu0 %6926
    %vm6928 = vcmp.eq.s32.totalorder %v29, %v6807
    %vm6929 = vcmp.eq.s32.totalorder %v30, %v6807
    %vm6930 = vcmp.eq.s32.totalorder %v29, %v6815
    %vm6931 = vcmp.eq.s32.totalorder %v30, %v6815
    %vm6932 = vcmp.eq.s32.totalorder %v29, %v6823
    %vm6933 = vcmp.eq.s32.totalorder %v30, %v6823
    %vm6934 = vcmp.eq.s32.totalorder %v29, %v6831
    %vm6935 = vcmp.eq.s32.totalorder %v30, %v6831
    %vm6936 = vcmp.eq.s32.totalorder %v29, %v6839
    %vm6937 = vcmp.eq.s32.totalorder %v30, %v6839
    %vm6938 = vcmp.eq.s32.totalorder %v29, %v6847
    %vm6939 = vcmp.eq.s32.totalorder %v30, %v6847
    %vm6940 = vcmp.eq.s32.totalorder %v29, %v6855
    %vm6941 = vcmp.eq.s32.totalorder %v30, %v6855
    %vm6942 = vcmp.eq.s32.totalorder %v29, %v6863
    %vm6943 = vcmp.eq.s32.totalorder %v30, %v6863
    %vm6944 = vcmp.eq.s32.totalorder %v29, %v6871
    %vm6945 = vcmp.eq.s32.totalorder %v30, %v6871
    %vm6946 = vcmp.eq.s32.totalorder %v29, %v6879
    %vm6947 = vcmp.eq.s32.totalorder %v30, %v6879
    %vm6948 = vcmp.eq.s32.totalorder %v29, %v6887
    %vm6949 = vcmp.eq.s32.totalorder %v30, %v6887
    %vm6950 = vcmp.eq.s32.totalorder %v29, %v6895
    %vm6951 = vcmp.eq.s32.totalorder %v30, %v6895
    %vm6952 = vcmp.eq.s32.totalorder %v29, %v6903
    %vm6953 = vcmp.eq.s32.totalorder %v30, %v6903
    %vm6954 = vcmp.eq.s32.totalorder %v29, %v6911
    %vm6955 = vcmp.eq.s32.totalorder %v30, %v6911
    %vm6956 = vcmp.eq.s32.totalorder %v29, %v6919
    %vm6957 = vcmp.eq.s32.totalorder %v30, %v6919
    %vm6958 = vcmp.eq.s32.totalorder %v29, %v6927
    %vm6959 = vcmp.eq.s32.totalorder %v30, %v6927
    %v6960 = vsel %vm6928, 1, 0
    %v6961 = vsel %vm6929, 1, 0
    %v6962 = vsel %vm6930, 1, 0
    %v6963 = vsel %vm6931, 1, 0
    %v6964 = vsel %vm6932, 1, 0
    %v6965 = vsel %vm6933, 1, 0
    %v6966 = vsel %vm6934, 1, 0
    %v6967 = vsel %vm6935, 1, 0
    %v6968 = vsel %vm6936, 1, 0
    %v6969 = vsel %vm6937, 1, 0
    %v6970 = vsel %vm6938, 1, 0
    %v6971 = vsel %vm6939, 1, 0
    %v6972 = vsel %vm6940, 1, 0
    %v6973 = vsel %vm6941, 1, 0
    %v6974 = vsel %vm6942, 1, 0
    %v6975 = vsel %vm6943, 1, 0
    %v6976 = vsel %vm6944, 1, 0
    %v6977 = vsel %vm6945, 1, 0
    %v6978 = vsel %vm6946, 1, 0
    %v6979 = vsel %vm6947, 1, 0
    %v6980 = vsel %vm6948, 1, 0
    %v6981 = vsel %vm6949, 1, 0
    %v6982 = vsel %vm6950, 1, 0
    %v6983 = vsel %vm6951, 1, 0
    %v6984 = vsel %vm6952, 1, 0
    %v6985 = vsel %vm6953, 1, 0
    %v6986 = vsel %vm6954, 1, 0
    %v6987 = vsel %vm6955, 1, 0
    %v6988 = vsel %vm6956, 1, 0
    %v6989 = vsel %vm6957, 1, 0
    %v6990 = vsel %vm6958, 1, 0
    %v6991 = vsel %vm6959, 1, 0
    %v6992 = vcvt.s32.f32 %v6960
    %v6993 = vcvt.s32.f32 %v6961
    %v6994 = vcvt.s32.f32 %v6962
    %v6995 = vcvt.s32.f32 %v6963
    %v6996 = vcvt.s32.f32 %v6964
    %v6997 = vcvt.s32.f32 %v6965
    %v6998 = vcvt.s32.f32 %v6966
    %v6999 = vcvt.s32.f32 %v6967
    %v7000 = vcvt.s32.f32 %v6968
    %v7001 = vcvt.s32.f32 %v6969
    %v7002 = vcvt.s32.f32 %v6970
    %v7003 = vcvt.s32.f32 %v6971
    %v7004 = vcvt.s32.f32 %v6972
    %v7005 = vcvt.s32.f32 %v6973
    %v7006 = vcvt.s32.f32 %v6974
    %v7007 = vcvt.s32.f32 %v6975
    %v7008 = vcvt.s32.f32 %v6976
    %v7009 = vcvt.s32.f32 %v6977
    %v7010 = vcvt.s32.f32 %v6978
    %v7011 = vcvt.s32.f32 %v6979
    %v7012 = vcvt.s32.f32 %v6980
    %v7013 = vcvt.s32.f32 %v6981
    %v7014 = vcvt.s32.f32 %v6982
    %v7015 = vcvt.s32.f32 %v6983
    %v7016 = vcvt.s32.f32 %v6984
    %v7017 = vcvt.s32.f32 %v6985
    %v7018 = vcvt.s32.f32 %v6986
    %v7019 = vcvt.s32.f32 %v6987
    %v7020 = vcvt.s32.f32 %v6988
    %v7021 = vcvt.s32.f32 %v6989
    %v7022 = vcvt.s32.f32 %v6990
    %v7023 = vcvt.s32.f32 %v6991
    %7024 = vmatprep.subr.mxu0 %v20
    %7025 = vmatpush1.xpose.msra.mxu0 %v19
    %7026 = vmatprep.subr.mxu0 %v22
    %7027 = vmatpush1.xpose.msra.mxu0 %v21
    %7028 = vmatprep.subr.mxu0 %v24
    %7029 = vmatpush1.xpose.msra.mxu0 %v23
    %7030 = vmatprep.subr.mxu0 %v26
    %7031 = vmatpush1.xpose.msra.mxu0 %v25
    %7032 = vmatprep.subr.mxu0 0.0
    %7033 = vmatpush1.xpose.msra.mxu0 0.0
    %7034 = vmatprep.subr.mxu0 0.0
    %7035 = vmatpush1.xpose.msra.mxu0 0.0
    %7036 = vmatprep.subr.mxu0 0.0
    %7037 = vmatpush1.xpose.msra.mxu0 0.0
    %7038 = vmatprep.subr.mxu0 0.0
    %7039 = vmatpush1.xpose.msra.mxu0 0.0
    %7040 = vmatprep.subr.mxu0 0.0
    %7041 = vmatpush1.xpose.msra.mxu0 0.0
    %7042 = vmatprep.subr.mxu0 0.0
    %7043 = vmatpush1.xpose.msra.mxu0 0.0
    %7044 = vmatprep.subr.mxu0 0.0
    %7045 = vmatpush1.xpose.msra.mxu0 0.0
    %7046 = vmatprep.subr.mxu0 0.0
    %7047 = vmatpush1.xpose.msra.mxu0 0.0
    %7048 = vmatprep.subr.mxu0 0.0
    %7049 = vmatpush1.xpose.msra.mxu0 0.0
    %7050 = vmatprep.subr.mxu0 0.0
    %7051 = vmatpush1.xpose.msra.mxu0 0.0
    %7052 = vmatprep.subr.mxu0 0.0
    %7053 = vmatpush1.xpose.msra.mxu0 0.0
    %7054 = vmatprep.subr.mxu0 0.0
    %7055 = vmatpush1.xpose.msra.mxu0 0.0
    %7056 = vmatprep.subr.mxu0 0.0
    %7057 = vmatpush1.xpose.msra.mxu0 0.0
    %7058 = vmatprep.subr.mxu0 0.0
    %7059 = vmatpush1.xpose.msra.mxu0 0.0
    %7060 = vmatprep.subr.mxu0 0.0
    %7061 = vmatpush1.xpose.msra.mxu0 0.0
    %7062 = vmatprep.subr.mxu0 0.0
    %7063 = vmatpush1.xpose.msra.mxu0 0.0
    %7064 = vmatprep.subr.mxu0 0.0
    %7065 = vmatpush1.xpose.msra.mxu0 0.0
    %7066 = vmatprep.subr.mxu0 0.0
    %7067 = vmatpush1.xpose.msra.mxu0 0.0
    %7068 = vmatprep.subr.mxu0 0.0
    %7069 = vmatpush1.xpose.msra.mxu0 0.0
    %7070 = vmatprep.subr.mxu0 0.0
    %7071 = vmatpush1.xpose.msra.mxu0 0.0
    %7072 = vmatprep.subr.mxu0 0.0
    %7073 = vmatpush1.xpose.msra.mxu0 0.0
    %7074 = vmatprep.subr.mxu0 0.0
    %7075 = vmatpush1.xpose.msra.mxu0 0.0
    %7076 = vmatprep.subr.mxu0 0.0
    %7077 = vmatpush1.xpose.msra.mxu0 0.0
    %7078 = vmatprep.subr.mxu0 0.0
    %7079 = vmatpush1.xpose.msra.mxu0 0.0
    %7080 = vmatprep.subr.mxu0 0.0
    %7081 = vmatpush1.xpose.msra.mxu0 0.0
    %7082 = vmatprep.subr.mxu0 0.0
    %7083 = vmatpush1.xpose.msra.mxu0 0.0
    %7084 = vmatprep.subr.mxu0 0.0
    %7085 = vmatpush1.xpose.msra.mxu0 0.0
    %7086 = vmatprep.subr.mxu0 0.0
    %7087 = vmatpush1.xpose.msra.mxu0 0.0
    %7088 = vmatprep.mubr.f32.mxu0 %v6993
    %7089 = vmatmul.mubr.f32.gmra.mrb[0].mxu0 %v6992
    %v7090 = vpop.f32.mrb[0].mxu0
    %v7091 = vadd.f32 0.0, %v7090
    %v7092 = vpop.f32.mrb[0].mxu0
    %7093 = vmatprep.mubr.f32.mxu0 %v6995
    %7094 = vmatmul.mubr.f32.gmra.mrb[0].mxu0 %v6994
    %v7095 = vpop.f32.mrb[0].mxu0
    %v7096 = vadd.f32 0.0, %v7095
    %v7097 = vpop.f32.mrb[0].mxu0
    %7098 = vmatprep.mubr.f32.mxu0 %v6997
    %7099 = vmatmul.mubr.f32.gmra.mrb[0].mxu0 %v6996
    %v7100 = vpop.f32.mrb[0].mxu0
    %v7101 = vadd.f32 0.0, %v7100
    %v7102 = vpop.f32.mrb[0].mxu0
    %7103 = vmatprep.mubr.f32.mxu0 %v6999
    %7104 = vmatmul.mubr.f32.gmra.mrb[0].mxu0 %v6998
    %v7105 = vpop.f32.mrb[0].mxu0
    %v7106 = vadd.f32 0.0, %v7105
    %v7107 = vpop.f32.mrb[0].mxu0
    %7108 = vmatprep.mubr.f32.mxu0 %v7001
    %7109 = vmatmul.mubr.f32.gmra.mrb[0].mxu0 %v7000
    %v7110 = vpop.f32.mrb[0].mxu0
    %v7111 = vadd.f32 0.0, %v7110
    %v7112 = vpop.f32.mrb[0].mxu0
    %7113 = vmatprep.mubr.f32.mxu0 %v7003
    %7114 = vmatmul.mubr.f32.gmra.mrb[0].mxu0 %v7002
    %v7115 = vpop.f32.mrb[0].mxu0
    %v7116 = vadd.f32 0.0, %v7115
    %v7117 = vpop.f32.mrb[0].mxu0
    %7118 = vmatprep.mubr.f32.mxu0 %v7005
    %7119 = vmatmul.mubr.f32.gmra.mrb[0].mxu0 %v7004
    %v7120 = vpop.f32.mrb[0].mxu0
    %v7121 = vadd.f32 0.0, %v7120
    %v7122 = vpop.f32.mrb[0].mxu0
    %7123 = vmatprep.mubr.f32.mxu0 %v7007
    %7124 = vmatmul.mubr.f32.gmra.mrb[0].mxu0 %v7006
    %v7125 = vpop.f32.mrb[0].mxu0
    %v7126 = vadd.f32 0.0, %v7125
    %v7127 = vpop.f32.mrb[0].mxu0
    %7128 = vmatprep.mubr.f32.mxu0 %v7009
    %7129 = vmatmul.mubr.f32.gmra.mrb[0].mxu0 %v7008
    %v7130 = vpop.f32.mrb[0].mxu0
    %v7131 = vadd.f32 0.0, %v7130
    %v7132 = vpop.f32.mrb[0].mxu0
    %7133 = vmatprep.mubr.f32.mxu0 %v7011
    %7134 = vmatmul.mubr.f32.gmra.mrb[0].mxu0 %v7010
    %v7135 = vpop.f32.mrb[0].mxu0
    %v7136 = vadd.f32 0.0, %v7135
    %v7137 = vpop.f32.mrb[0].mxu0
    %7138 = vmatprep.mubr.f32.mxu0 %v7013
    %7139 = vmatmul.mubr.f32.gmra.mrb[0].mxu0 %v7012
    %v7140 = vpop.f32.mrb[0].mxu0
    %v7141 = vadd.f32 0.0, %v7140
    %v7142 = vpop.f32.mrb[0].mxu0
    %7143 = vmatprep.mubr.f32.mxu0 %v7015
    %7144 = vmatmul.mubr.f32.gmra.mrb[0].mxu0 %v7014
    %v7145 = vpop.f32.mrb[0].mxu0
    %v7146 = vadd.f32 0.0, %v7145
    %v7147 = vpop.f32.mrb[0].mxu0
    %7148 = vmatprep.mubr.f32.mxu0 %v7017
    %7149 = vmatmul.mubr.f32.gmra.mrb[0].mxu0 %v7016
    %v7150 = vpop.f32.mrb[0].mxu0
    %v7151 = vadd.f32 0.0, %v7150
    %v7152 = vpop.f32.mrb[0].mxu0
    %7153 = vmatprep.mubr.f32.mxu0 %v7019
    %7154 = vmatmul.mubr.f32.gmra.mrb[0].mxu0 %v7018
    %v7155 = vpop.f32.mrb[0].mxu0
    %v7156 = vadd.f32 0.0, %v7155
    %v7157 = vpop.f32.mrb[0].mxu0
    %7158 = vmatprep.mubr.f32.mxu0 %v7021
    %7159 = vmatmul.mubr.f32.gmra.mrb[0].mxu0 %v7020
    %v7160 = vpop.f32.mrb[0].mxu0
    %v7161 = vadd.f32 0.0, %v7160
    %v7162 = vpop.f32.mrb[0].mxu0
    %7163 = vmatprep.mubr.f32.mxu0 %v7023
    %7164 = vmatmul.mubr.f32.gmra.mrb[0].mxu0 %v7022
    %v7165 = vpop.f32.mrb[0].mxu0
    %v7166 = vadd.f32 0.0, %v7165
    %v7167 = vpop.f32.mrb[0].mxu0
    %7168 = vdwg.mxu0
    %s7169 = scalar_lea.vmem %s3, 384
    %7170 = vst.msk [vmem:[%s7169] sm:$0xff] %vm47, %v7091
    %7171 = vst.msk [vmem:[%s7169 + $0x8] sm:$0xff] %vm47, %v7096
    %7172 = vst.msk [vmem:[%s7169 + $0x10] sm:$0xff] %vm47, %v7101
    %7173 = vst.msk [vmem:[%s7169 + $0x18] sm:$0xff] %vm47, %v7106
    %7174 = vst.msk [vmem:[%s7169 + $0x20] sm:$0xff] %vm47, %v7111
    %7175 = vst.msk [vmem:[%s7169 + $0x28] sm:$0xff] %vm47, %v7116
    %7176 = vst.msk [vmem:[%s7169 + $0x30] sm:$0xff] %vm47, %v7121
    %7177 = vst.msk [vmem:[%s7169 + $0x38] sm:$0xff] %vm47, %v7126
    %7178 = vst.msk [vmem:[%s7169 + $0x40] sm:$0xff] %vm47, %v7131
    %7179 = vst.msk [vmem:[%s7169 + $0x48] sm:$0xff] %vm47, %v7136
    %7180 = vst.msk [vmem:[%s7169 + $0x50] sm:$0xff] %vm47, %v7141
    %7181 = vst.msk [vmem:[%s7169 + $0x58] sm:$0xff] %vm47, %v7146
    %7182 = vst.msk [vmem:[%s7169 + $0x60] sm:$0xff] %vm47, %v7151
    %7183 = vst.msk [vmem:[%s7169 + $0x68] sm:$0xff] %vm47, %v7156
    %7184 = vst.msk [vmem:[%s7169 + $0x70] sm:$0xff] %vm47, %v7161
    %7185 = vst.msk [vmem:[%s7169 + $0x78] sm:$0xff] %vm47, %v7166
    %v7186 = vlaneseq
    %v7187 = vshrl.u32 %v7186, 7
    %v7188 = vsub.s32 0, %v7187
    %v7189 = vrot.slane %v6807, %v7188
    %v7190 = vlaneseq
    %v7191 = vshrl.u32 %v7190, 7
    %v7192 = vsub.s32 1, %v7191
    %v7193 = vrot.slane %v6807, %v7192
    %v7194 = vlaneseq
    %v7195 = vshrl.u32 %v7194, 7
    %v7196 = vsub.s32 2, %v7195
    %v7197 = vrot.slane %v6807, %v7196
    %v7198 = vlaneseq
    %v7199 = vshrl.u32 %v7198, 7
    %v7200 = vsub.s32 3, %v7199
    %v7201 = vrot.slane %v6807, %v7200
    %v7202 = vlaneseq
    %v7203 = vshrl.u32 %v7202, 7
    %v7204 = vsub.s32 4, %v7203
    %v7205 = vrot.slane %v6807, %v7204
    %v7206 = vlaneseq
    %v7207 = vshrl.u32 %v7206, 7
    %v7208 = vsub.s32 5, %v7207
    %v7209 = vrot.slane %v6807, %v7208
    %v7210 = vlaneseq
    %v7211 = vshrl.u32 %v7210, 7
    %v7212 = vsub.s32 6, %v7211
    %v7213 = vrot.slane %v6807, %v7212
    %v7214 = vlaneseq
    %v7215 = vshrl.u32 %v7214, 7
    %v7216 = vsub.s32 7, %v7215
    %v7217 = vrot.slane %v6807, %v7216
    %v7218 = vlaneseq
    %v7219 = vshrl.u32 %v7218, 7
    %v7220 = vsub.s32 0, %v7219
    %v7221 = vrot.slane %v6815, %v7220
    %v7222 = vlaneseq
    %v7223 = vshrl.u32 %v7222, 7
    %v7224 = vsub.s32 1, %v7223
    %v7225 = vrot.slane %v6815, %v7224
    %v7226 = vlaneseq
    %v7227 = vshrl.u32 %v7226, 7
    %v7228 = vsub.s32 2, %v7227
    %v7229 = vrot.slane %v6815, %v7228
    %v7230 = vlaneseq
    %v7231 = vshrl.u32 %v7230, 7
    %v7232 = vsub.s32 3, %v7231
    %v7233 = vrot.slane %v6815, %v7232
    %v7234 = vlaneseq
    %v7235 = vshrl.u32 %v7234, 7
    %v7236 = vsub.s32 4, %v7235
    %v7237 = vrot.slane %v6815, %v7236
    %v7238 = vlaneseq
    %v7239 = vshrl.u32 %v7238, 7
    %v7240 = vsub.s32 5, %v7239
    %v7241 = vrot.slane %v6815, %v7240
    %v7242 = vlaneseq
    %v7243 = vshrl.u32 %v7242, 7
    %v7244 = vsub.s32 6, %v7243
    %v7245 = vrot.slane %v6815, %v7244
    %v7246 = vlaneseq
    %v7247 = vshrl.u32 %v7246, 7
    %v7248 = vsub.s32 7, %v7247
    %v7249 = vrot.slane %v6815, %v7248
    %v7250 = vlaneseq
    %v7251 = vshrl.u32 %v7250, 7
    %v7252 = vsub.s32 0, %v7251
    %v7253 = vrot.slane %v6823, %v7252
    %v7254 = vlaneseq
    %v7255 = vshrl.u32 %v7254, 7
    %v7256 = vsub.s32 1, %v7255
    %v7257 = vrot.slane %v6823, %v7256
    %v7258 = vlaneseq
    %v7259 = vshrl.u32 %v7258, 7
    %v7260 = vsub.s32 2, %v7259
    %v7261 = vrot.slane %v6823, %v7260
    %v7262 = vlaneseq
    %v7263 = vshrl.u32 %v7262, 7
    %v7264 = vsub.s32 3, %v7263
    %v7265 = vrot.slane %v6823, %v7264
    %v7266 = vlaneseq
    %v7267 = vshrl.u32 %v7266, 7
    %v7268 = vsub.s32 4, %v7267
    %v7269 = vrot.slane %v6823, %v7268
    %v7270 = vlaneseq
    %v7271 = vshrl.u32 %v7270, 7
    %v7272 = vsub.s32 5, %v7271
    %v7273 = vrot.slane %v6823, %v7272
    %v7274 = vlaneseq
    %v7275 = vshrl.u32 %v7274, 7
    %v7276 = vsub.s32 6, %v7275
    %v7277 = vrot.slane %v6823, %v7276
    %v7278 = vlaneseq
    %v7279 = vshrl.u32 %v7278, 7
    %v7280 = vsub.s32 7, %v7279
    %v7281 = vrot.slane %v6823, %v7280
    %v7282 = vlaneseq
    %v7283 = vshrl.u32 %v7282, 7
    %v7284 = vsub.s32 0, %v7283
    %v7285 = vrot.slane %v6831, %v7284
    %v7286 = vlaneseq
    %v7287 = vshrl.u32 %v7286, 7
    %v7288 = vsub.s32 1, %v7287
    %v7289 = vrot.slane %v6831, %v7288
    %v7290 = vlaneseq
    %v7291 = vshrl.u32 %v7290, 7
    %v7292 = vsub.s32 2, %v7291
    %v7293 = vrot.slane %v6831, %v7292
    %v7294 = vlaneseq
    %v7295 = vshrl.u32 %v7294, 7
    %v7296 = vsub.s32 3, %v7295
    %v7297 = vrot.slane %v6831, %v7296
    %v7298 = vlaneseq
    %v7299 = vshrl.u32 %v7298, 7
    %v7300 = vsub.s32 4, %v7299
    %v7301 = vrot.slane %v6831, %v7300
    %v7302 = vlaneseq
    %v7303 = vshrl.u32 %v7302, 7
    %v7304 = vsub.s32 5, %v7303
    %v7305 = vrot.slane %v6831, %v7304
    %v7306 = vlaneseq
    %v7307 = vshrl.u32 %v7306, 7
    %v7308 = vsub.s32 6, %v7307
    %v7309 = vrot.slane %v6831, %v7308
    %v7310 = vlaneseq
    %v7311 = vshrl.u32 %v7310, 7
    %v7312 = vsub.s32 7, %v7311
    %v7313 = vrot.slane %v6831, %v7312
    %v7314 = vlaneseq
    %v7315 = vshrl.u32 %v7314, 7
    %v7316 = vsub.s32 0, %v7315
    %v7317 = vrot.slane %v6839, %v7316
    %v7318 = vlaneseq
    %v7319 = vshrl.u32 %v7318, 7
    %v7320 = vsub.s32 1, %v7319
    %v7321 = vrot.slane %v6839, %v7320
    %v7322 = vlaneseq
    %v7323 = vshrl.u32 %v7322, 7
    %v7324 = vsub.s32 2, %v7323
    %v7325 = vrot.slane %v6839, %v7324
    %v7326 = vlaneseq
    %v7327 = vshrl.u32 %v7326, 7
    %v7328 = vsub.s32 3, %v7327
    %v7329 = vrot.slane %v6839, %v7328
    %v7330 = vlaneseq
    %v7331 = vshrl.u32 %v7330, 7
    %v7332 = vsub.s32 4, %v7331
    %v7333 = vrot.slane %v6839, %v7332
    %v7334 = vlaneseq
    %v7335 = vshrl.u32 %v7334, 7
    %v7336 = vsub.s32 5, %v7335
    %v7337 = vrot.slane %v6839, %v7336
    %v7338 = vlaneseq
    %v7339 = vshrl.u32 %v7338, 7
    %v7340 = vsub.s32 6, %v7339
    %v7341 = vrot.slane %v6839, %v7340
    %v7342 = vlaneseq
    %v7343 = vshrl.u32 %v7342, 7
    %v7344 = vsub.s32 7, %v7343
    %v7345 = vrot.slane %v6839, %v7344
    %v7346 = vlaneseq
    %v7347 = vshrl.u32 %v7346, 7
    %v7348 = vsub.s32 0, %v7347
    %v7349 = vrot.slane %v6847, %v7348
    %v7350 = vlaneseq
    %v7351 = vshrl.u32 %v7350, 7
    %v7352 = vsub.s32 1, %v7351
    %v7353 = vrot.slane %v6847, %v7352
    %v7354 = vlaneseq
    %v7355 = vshrl.u32 %v7354, 7
    %v7356 = vsub.s32 2, %v7355
    %v7357 = vrot.slane %v6847, %v7356
    %v7358 = vlaneseq
    %v7359 = vshrl.u32 %v7358, 7
    %v7360 = vsub.s32 3, %v7359
    %v7361 = vrot.slane %v6847, %v7360
    %v7362 = vlaneseq
    %v7363 = vshrl.u32 %v7362, 7
    %v7364 = vsub.s32 4, %v7363
    %v7365 = vrot.slane %v6847, %v7364
    %v7366 = vlaneseq
    %v7367 = vshrl.u32 %v7366, 7
    %v7368 = vsub.s32 5, %v7367
    %v7369 = vrot.slane %v6847, %v7368
    %v7370 = vlaneseq
    %v7371 = vshrl.u32 %v7370, 7
    %v7372 = vsub.s32 6, %v7371
    %v7373 = vrot.slane %v6847, %v7372
    %v7374 = vlaneseq
    %v7375 = vshrl.u32 %v7374, 7
    %v7376 = vsub.s32 7, %v7375
    %v7377 = vrot.slane %v6847, %v7376
    %v7378 = vlaneseq
    %v7379 = vshrl.u32 %v7378, 7
    %v7380 = vsub.s32 0, %v7379
    %v7381 = vrot.slane %v6855, %v7380
    %v7382 = vlaneseq
    %v7383 = vshrl.u32 %v7382, 7
    %v7384 = vsub.s32 1, %v7383
    %v7385 = vrot.slane %v6855, %v7384
    %v7386 = vlaneseq
    %v7387 = vshrl.u32 %v7386, 7
    %v7388 = vsub.s32 2, %v7387
    %v7389 = vrot.slane %v6855, %v7388
    %v7390 = vlaneseq
    %v7391 = vshrl.u32 %v7390, 7
    %v7392 = vsub.s32 3, %v7391
    %v7393 = vrot.slane %v6855, %v7392
    %v7394 = vlaneseq
    %v7395 = vshrl.u32 %v7394, 7
    %v7396 = vsub.s32 4, %v7395
    %v7397 = vrot.slane %v6855, %v7396
    %v7398 = vlaneseq
    %v7399 = vshrl.u32 %v7398, 7
    %v7400 = vsub.s32 5, %v7399
    %v7401 = vrot.slane %v6855, %v7400
    %v7402 = vlaneseq
    %v7403 = vshrl.u32 %v7402, 7
    %v7404 = vsub.s32 6, %v7403
    %v7405 = vrot.slane %v6855, %v7404
    %v7406 = vlaneseq
    %v7407 = vshrl.u32 %v7406, 7
    %v7408 = vsub.s32 7, %v7407
    %v7409 = vrot.slane %v6855, %v7408
    %v7410 = vlaneseq
    %v7411 = vshrl.u32 %v7410, 7
    %v7412 = vsub.s32 0, %v7411
    %v7413 = vrot.slane %v6863, %v7412
    %v7414 = vlaneseq
    %v7415 = vshrl.u32 %v7414, 7
    %v7416 = vsub.s32 1, %v7415
    %v7417 = vrot.slane %v6863, %v7416
    %v7418 = vlaneseq
    %v7419 = vshrl.u32 %v7418, 7
    %v7420 = vsub.s32 2, %v7419
    %v7421 = vrot.slane %v6863, %v7420
    %v7422 = vlaneseq
    %v7423 = vshrl.u32 %v7422, 7
    %v7424 = vsub.s32 3, %v7423
    %v7425 = vrot.slane %v6863, %v7424
    %v7426 = vlaneseq
    %v7427 = vshrl.u32 %v7426, 7
    %v7428 = vsub.s32 4, %v7427
    %v7429 = vrot.slane %v6863, %v7428
    %v7430 = vlaneseq
    %v7431 = vshrl.u32 %v7430, 7
    %v7432 = vsub.s32 5, %v7431
    %v7433 = vrot.slane %v6863, %v7432
    %v7434 = vlaneseq
    %v7435 = vshrl.u32 %v7434, 7
    %v7436 = vsub.s32 6, %v7435
    %v7437 = vrot.slane %v6863, %v7436
    %v7438 = vlaneseq
    %v7439 = vshrl.u32 %v7438, 7
    %v7440 = vsub.s32 7, %v7439
    %v7441 = vrot.slane %v6863, %v7440
    %v7442 = vlaneseq
    %v7443 = vshrl.u32 %v7442, 7
    %v7444 = vsub.s32 0, %v7443
    %v7445 = vrot.slane %v6871, %v7444
    %v7446 = vlaneseq
    %v7447 = vshrl.u32 %v7446, 7
    %v7448 = vsub.s32 1, %v7447
    %v7449 = vrot.slane %v6871, %v7448
    %v7450 = vlaneseq
    %v7451 = vshrl.u32 %v7450, 7
    %v7452 = vsub.s32 2, %v7451
    %v7453 = vrot.slane %v6871, %v7452
    %v7454 = vlaneseq
    %v7455 = vshrl.u32 %v7454, 7
    %v7456 = vsub.s32 3, %v7455
    %v7457 = vrot.slane %v6871, %v7456
    %v7458 = vlaneseq
    %v7459 = vshrl.u32 %v7458, 7
    %v7460 = vsub.s32 4, %v7459
    %v7461 = vrot.slane %v6871, %v7460
    %v7462 = vlaneseq
    %v7463 = vshrl.u32 %v7462, 7
    %v7464 = vsub.s32 5, %v7463
    %v7465 = vrot.slane %v6871, %v7464
    %v7466 = vlaneseq
    %v7467 = vshrl.u32 %v7466, 7
    %v7468 = vsub.s32 6, %v7467
    %v7469 = vrot.slane %v6871, %v7468
    %v7470 = vlaneseq
    %v7471 = vshrl.u32 %v7470, 7
    %v7472 = vsub.s32 7, %v7471
    %v7473 = vrot.slane %v6871, %v7472
    %v7474 = vlaneseq
    %v7475 = vshrl.u32 %v7474, 7
    %v7476 = vsub.s32 0, %v7475
    %v7477 = vrot.slane %v6879, %v7476
    %v7478 = vlaneseq
    %v7479 = vshrl.u32 %v7478, 7
    %v7480 = vsub.s32 1, %v7479
    %v7481 = vrot.slane %v6879, %v7480
    %v7482 = vlaneseq
    %v7483 = vshrl.u32 %v7482, 7
    %v7484 = vsub.s32 2, %v7483
    %v7485 = vrot.slane %v6879, %v7484
    %v7486 = vlaneseq
    %v7487 = vshrl.u32 %v7486, 7
    %v7488 = vsub.s32 3, %v7487
    %v7489 = vrot.slane %v6879, %v7488
    %v7490 = vlaneseq
    %v7491 = vshrl.u32 %v7490, 7
    %v7492 = vsub.s32 4, %v7491
    %v7493 = vrot.slane %v6879, %v7492
    %v7494 = vlaneseq
    %v7495 = vshrl.u32 %v7494, 7
    %v7496 = vsub.s32 5, %v7495
    %v7497 = vrot.slane %v6879, %v7496
    %v7498 = vlaneseq
    %v7499 = vshrl.u32 %v7498, 7
    %v7500 = vsub.s32 6, %v7499
    %v7501 = vrot.slane %v6879, %v7500
    %v7502 = vlaneseq
    %v7503 = vshrl.u32 %v7502, 7
    %v7504 = vsub.s32 7, %v7503
    %v7505 = vrot.slane %v6879, %v7504
    %v7506 = vlaneseq
    %v7507 = vshrl.u32 %v7506, 7
    %v7508 = vsub.s32 0, %v7507
    %v7509 = vrot.slane %v6887, %v7508
    %v7510 = vlaneseq
    %v7511 = vshrl.u32 %v7510, 7
    %v7512 = vsub.s32 1, %v7511
    %v7513 = vrot.slane %v6887, %v7512
    %v7514 = vlaneseq
    %v7515 = vshrl.u32 %v7514, 7
    %v7516 = vsub.s32 2, %v7515
    %v7517 = vrot.slane %v6887, %v7516
    %v7518 = vlaneseq
    %v7519 = vshrl.u32 %v7518, 7
    %v7520 = vsub.s32 3, %v7519
    %v7521 = vrot.slane %v6887, %v7520
    %v7522 = vlaneseq
    %v7523 = vshrl.u32 %v7522, 7
    %v7524 = vsub.s32 4, %v7523
    %v7525 = vrot.slane %v6887, %v7524
    %v7526 = vlaneseq
    %v7527 = vshrl.u32 %v7526, 7
    %v7528 = vsub.s32 5, %v7527
    %v7529 = vrot.slane %v6887, %v7528
    %v7530 = vlaneseq
    %v7531 = vshrl.u32 %v7530, 7
    %v7532 = vsub.s32 6, %v7531
    %v7533 = vrot.slane %v6887, %v7532
    %v7534 = vlaneseq
    %v7535 = vshrl.u32 %v7534, 7
    %v7536 = vsub.s32 7, %v7535
    %v7537 = vrot.slane %v6887, %v7536
    %v7538 = vlaneseq
    %v7539 = vshrl.u32 %v7538, 7
    %v7540 = vsub.s32 0, %v7539
    %v7541 = vrot.slane %v6895, %v7540
    %v7542 = vlaneseq
    %v7543 = vshrl.u32 %v7542, 7
    %v7544 = vsub.s32 1, %v7543
    %v7545 = vrot.slane %v6895, %v7544
    %v7546 = vlaneseq
    %v7547 = vshrl.u32 %v7546, 7
    %v7548 = vsub.s32 2, %v7547
    %v7549 = vrot.slane %v6895, %v7548
    %v7550 = vlaneseq
    %v7551 = vshrl.u32 %v7550, 7
    %v7552 = vsub.s32 3, %v7551
    %v7553 = vrot.slane %v6895, %v7552
    %v7554 = vlaneseq
    %v7555 = vshrl.u32 %v7554, 7
    %v7556 = vsub.s32 4, %v7555
    %v7557 = vrot.slane %v6895, %v7556
    %v7558 = vlaneseq
    %v7559 = vshrl.u32 %v7558, 7
    %v7560 = vsub.s32 5, %v7559
    %v7561 = vrot.slane %v6895, %v7560
    %v7562 = vlaneseq
    %v7563 = vshrl.u32 %v7562, 7
    %v7564 = vsub.s32 6, %v7563
    %v7565 = vrot.slane %v6895, %v7564
    %v7566 = vlaneseq
    %v7567 = vshrl.u32 %v7566, 7
    %v7568 = vsub.s32 7, %v7567
    %v7569 = vrot.slane %v6895, %v7568
    %v7570 = vlaneseq
    %v7571 = vshrl.u32 %v7570, 7
    %v7572 = vsub.s32 0, %v7571
    %v7573 = vrot.slane %v6903, %v7572
    %v7574 = vlaneseq
    %v7575 = vshrl.u32 %v7574, 7
    %v7576 = vsub.s32 1, %v7575
    %v7577 = vrot.slane %v6903, %v7576
    %v7578 = vlaneseq
    %v7579 = vshrl.u32 %v7578, 7
    %v7580 = vsub.s32 2, %v7579
    %v7581 = vrot.slane %v6903, %v7580
    %v7582 = vlaneseq
    %v7583 = vshrl.u32 %v7582, 7
    %v7584 = vsub.s32 3, %v7583
    %v7585 = vrot.slane %v6903, %v7584
    %v7586 = vlaneseq
    %v7587 = vshrl.u32 %v7586, 7
    %v7588 = vsub.s32 4, %v7587
    %v7589 = vrot.slane %v6903, %v7588
    %v7590 = vlaneseq
    %v7591 = vshrl.u32 %v7590, 7
    %v7592 = vsub.s32 5, %v7591
    %v7593 = vrot.slane %v6903, %v7592
    %v7594 = vlaneseq
    %v7595 = vshrl.u32 %v7594, 7
    %v7596 = vsub.s32 6, %v7595
    %v7597 = vrot.slane %v6903, %v7596
    %v7598 = vlaneseq
    %v7599 = vshrl.u32 %v7598, 7
    %v7600 = vsub.s32 7, %v7599
    %v7601 = vrot.slane %v6903, %v7600
    %v7602 = vlaneseq
    %v7603 = vshrl.u32 %v7602, 7
    %v7604 = vsub.s32 0, %v7603
    %v7605 = vrot.slane %v6911, %v7604
    %v7606 = vlaneseq
    %v7607 = vshrl.u32 %v7606, 7
    %v7608 = vsub.s32 1, %v7607
    %v7609 = vrot.slane %v6911, %v7608
    %v7610 = vlaneseq
    %v7611 = vshrl.u32 %v7610, 7
    %v7612 = vsub.s32 2, %v7611
    %v7613 = vrot.slane %v6911, %v7612
    %v7614 = vlaneseq
    %v7615 = vshrl.u32 %v7614, 7
    %v7616 = vsub.s32 3, %v7615
    %v7617 = vrot.slane %v6911, %v7616
    %v7618 = vlaneseq
    %v7619 = vshrl.u32 %v7618, 7
    %v7620 = vsub.s32 4, %v7619
    %v7621 = vrot.slane %v6911, %v7620
    %v7622 = vlaneseq
    %v7623 = vshrl.u32 %v7622, 7
    %v7624 = vsub.s32 5, %v7623
    %v7625 = vrot.slane %v6911, %v7624
    %v7626 = vlaneseq
    %v7627 = vshrl.u32 %v7626, 7
    %v7628 = vsub.s32 6, %v7627
    %v7629 = vrot.slane %v6911, %v7628
    %v7630 = vlaneseq
    %v7631 = vshrl.u32 %v7630, 7
    %v7632 = vsub.s32 7, %v7631
    %v7633 = vrot.slane %v6911, %v7632
    %v7634 = vlaneseq
    %v7635 = vshrl.u32 %v7634, 7
    %v7636 = vsub.s32 0, %v7635
    %v7637 = vrot.slane %v6919, %v7636
    %v7638 = vlaneseq
    %v7639 = vshrl.u32 %v7638, 7
    %v7640 = vsub.s32 1, %v7639
    %v7641 = vrot.slane %v6919, %v7640
    %v7642 = vlaneseq
    %v7643 = vshrl.u32 %v7642, 7
    %v7644 = vsub.s32 2, %v7643
    %v7645 = vrot.slane %v6919, %v7644
    %v7646 = vlaneseq
    %v7647 = vshrl.u32 %v7646, 7
    %v7648 = vsub.s32 3, %v7647
    %v7649 = vrot.slane %v6919, %v7648
    %v7650 = vlaneseq
    %v7651 = vshrl.u32 %v7650, 7
    %v7652 = vsub.s32 4, %v7651
    %v7653 = vrot.slane %v6919, %v7652
    %v7654 = vlaneseq
    %v7655 = vshrl.u32 %v7654, 7
    %v7656 = vsub.s32 5, %v7655
    %v7657 = vrot.slane %v6919, %v7656
    %v7658 = vlaneseq
    %v7659 = vshrl.u32 %v7658, 7
    %v7660 = vsub.s32 6, %v7659
    %v7661 = vrot.slane %v6919, %v7660
    %v7662 = vlaneseq
    %v7663 = vshrl.u32 %v7662, 7
    %v7664 = vsub.s32 7, %v7663
    %v7665 = vrot.slane %v6919, %v7664
    %v7666 = vlaneseq
    %v7667 = vshrl.u32 %v7666, 7
    %v7668 = vsub.s32 0, %v7667
    %v7669 = vrot.slane %v6927, %v7668
    %v7670 = vlaneseq
    %v7671 = vshrl.u32 %v7670, 7
    %v7672 = vsub.s32 1, %v7671
    %v7673 = vrot.slane %v6927, %v7672
    %v7674 = vlaneseq
    %v7675 = vshrl.u32 %v7674, 7
    %v7676 = vsub.s32 2, %v7675
    %v7677 = vrot.slane %v6927, %v7676
    %v7678 = vlaneseq
    %v7679 = vshrl.u32 %v7678, 7
    %v7680 = vsub.s32 3, %v7679
    %v7681 = vrot.slane %v6927, %v7680
    %v7682 = vlaneseq
    %v7683 = vshrl.u32 %v7682, 7
    %v7684 = vsub.s32 4, %v7683
    %v7685 = vrot.slane %v6927, %v7684
    %v7686 = vlaneseq
    %v7687 = vshrl.u32 %v7686, 7
    %v7688 = vsub.s32 5, %v7687
    %v7689 = vrot.slane %v6927, %v7688
    %v7690 = vlaneseq
    %v7691 = vshrl.u32 %v7690, 7
    %v7692 = vsub.s32 6, %v7691
    %v7693 = vrot.slane %v6927, %v7692
    %v7694 = vlaneseq
    %v7695 = vshrl.u32 %v7694, 7
    %v7696 = vsub.s32 7, %v7695
    %v7697 = vrot.slane %v6927, %v7696
    %v7698 = vcombine.low %v7189, %v7193
    %v7699 = vcombine.low %v7197, %v7201
    %v7700 = vcombine.low %v7205, %v7209
    %v7701 = vcombine.low %v7213, %v7217
    %v7703 = vunpack.c.l.s4 1966171168
    %v7704 = vunpack.c.0.s8 %v7703
    %v7705 = vlaneseq
    %v7706 = vshrl.u32 %v7705, 7
    %v7707 = vsub.s32 %v7704, %v7706
    %v7708 = vrot.slane %v7698, %v7707
    %v7710 = vunpack.c.l.s4 1966171168
    %v7711 = vunpack.c.0.s8 %v7710
    %v7712 = vlaneseq
    %v7713 = vshrl.u32 %v7712, 7
    %v7714 = vsub.s32 %v7711, %v7713
    %v7715 = vrot.slane %v7699, %v7714
    %v7717 = vunpack.c.l.s4 1966171168
    %v7718 = vunpack.c.0.s8 %v7717
    %v7719 = vlaneseq
    %v7720 = vshrl.u32 %v7719, 7
    %v7721 = vsub.s32 %v7718, %v7720
    %v7722 = vrot.slane %v7700, %v7721
    %v7724 = vunpack.c.l.s4 1966171168
    %v7725 = vunpack.c.0.s8 %v7724
    %v7726 = vlaneseq
    %v7727 = vshrl.u32 %v7726, 7
    %v7728 = vsub.s32 %v7725, %v7727
    %v7729 = vrot.slane %v7701, %v7728
    %v7730 = vcombine.low %v7708, %v7715
    %v7731 = vcombine.low %v7722, %v7729
    %v7733 = vunpack.c.l.s4 1966171168
    %v7734 = vunpack.c.0.s8 %v7733
    %v7735 = vlaneseq
    %v7736 = vshrl.u32 %v7735, 7
    %v7737 = vsub.s32 %v7734, %v7736
    %v7738 = vrot.slane %v7730, %v7737
    %v7740 = vunpack.c.l.s4 1966171168
    %v7741 = vunpack.c.0.s8 %v7740
    %v7742 = vlaneseq
    %v7743 = vshrl.u32 %v7742, 7
    %v7744 = vsub.s32 %v7741, %v7743
    %v7745 = vrot.slane %v7731, %v7744
    %v7746 = vcombine.low %v7738, %v7745
    %v7747 = vcombine.low %v7221, %v7225
    %v7748 = vcombine.low %v7229, %v7233
    %v7749 = vcombine.low %v7237, %v7241
    %v7750 = vcombine.low %v7245, %v7249
    %v7752 = vunpack.c.l.s4 1966171168
    %v7753 = vunpack.c.0.s8 %v7752
    %v7754 = vlaneseq
    %v7755 = vshrl.u32 %v7754, 7
    %v7756 = vsub.s32 %v7753, %v7755
    %v7757 = vrot.slane %v7747, %v7756
    %v7759 = vunpack.c.l.s4 1966171168
    %v7760 = vunpack.c.0.s8 %v7759
    %v7761 = vlaneseq
    %v7762 = vshrl.u32 %v7761, 7
    %v7763 = vsub.s32 %v7760, %v7762
    %v7764 = vrot.slane %v7748, %v7763
    %v7766 = vunpack.c.l.s4 1966171168
    %v7767 = vunpack.c.0.s8 %v7766
    %v7768 = vlaneseq
    %v7769 = vshrl.u32 %v7768, 7
    %v7770 = vsub.s32 %v7767, %v7769
    %v7771 = vrot.slane %v7749, %v7770
    %v7773 = vunpack.c.l.s4 1966171168
    %v7774 = vunpack.c.0.s8 %v7773
    %v7775 = vlaneseq
    %v7776 = vshrl.u32 %v7775, 7
    %v7777 = vsub.s32 %v7774, %v7776
    %v7778 = vrot.slane %v7750, %v7777
    %v7779 = vcombine.low %v7757, %v7764
    %v7780 = vcombine.low %v7771, %v7778
    %v7782 = vunpack.c.l.s4 1966171168
    %v7783 = vunpack.c.0.s8 %v7782
    %v7784 = vlaneseq
    %v7785 = vshrl.u32 %v7784, 7
    %v7786 = vsub.s32 %v7783, %v7785
    %v7787 = vrot.slane %v7779, %v7786
    %v7789 = vunpack.c.l.s4 1966171168
    %v7790 = vunpack.c.0.s8 %v7789
    %v7791 = vlaneseq
    %v7792 = vshrl.u32 %v7791, 7
    %v7793 = vsub.s32 %v7790, %v7792
    %v7794 = vrot.slane %v7780, %v7793
    %v7795 = vcombine.low %v7787, %v7794
    %v7796 = vcombine.low %v7253, %v7257
    %v7797 = vcombine.low %v7261, %v7265
    %v7798 = vcombine.low %v7269, %v7273
    %v7799 = vcombine.low %v7277, %v7281
    %v7801 = vunpack.c.l.s4 1966171168
    %v7802 = vunpack.c.0.s8 %v7801
    %v7803 = vlaneseq
    %v7804 = vshrl.u32 %v7803, 7
    %v7805 = vsub.s32 %v7802, %v7804
    %v7806 = vrot.slane %v7796, %v7805
    %v7808 = vunpack.c.l.s4 1966171168
    %v7809 = vunpack.c.0.s8 %v7808
    %v7810 = vlaneseq
    %v7811 = vshrl.u32 %v7810, 7
    %v7812 = vsub.s32 %v7809, %v7811
    %v7813 = vrot.slane %v7797, %v7812
    %v7815 = vunpack.c.l.s4 1966171168
    %v7816 = vunpack.c.0.s8 %v7815
    %v7817 = vlaneseq
    %v7818 = vshrl.u32 %v7817, 7
    %v7819 = vsub.s32 %v7816, %v7818
    %v7820 = vrot.slane %v7798, %v7819
    %v7822 = vunpack.c.l.s4 1966171168
    %v7823 = vunpack.c.0.s8 %v7822
    %v7824 = vlaneseq
    %v7825 = vshrl.u32 %v7824, 7
    %v7826 = vsub.s32 %v7823, %v7825
    %v7827 = vrot.slane %v7799, %v7826
    %v7828 = vcombine.low %v7806, %v7813
    %v7829 = vcombine.low %v7820, %v7827
    %v7831 = vunpack.c.l.s4 1966171168
    %v7832 = vunpack.c.0.s8 %v7831
    %v7833 = vlaneseq
    %v7834 = vshrl.u32 %v7833, 7
    %v7835 = vsub.s32 %v7832, %v7834
    %v7836 = vrot.slane %v7828, %v7835
    %v7838 = vunpack.c.l.s4 1966171168
    %v7839 = vunpack.c.0.s8 %v7838
    %v7840 = vlaneseq
    %v7841 = vshrl.u32 %v7840, 7
    %v7842 = vsub.s32 %v7839, %v7841
    %v7843 = vrot.slane %v7829, %v7842
    %v7844 = vcombine.low %v7836, %v7843
    %v7845 = vcombine.low %v7285, %v7289
    %v7846 = vcombine.low %v7293, %v7297
    %v7847 = vcombine.low %v7301, %v7305
    %v7848 = vcombine.low %v7309, %v7313
    %v7850 = vunpack.c.l.s4 1966171168
    %v7851 = vunpack.c.0.s8 %v7850
    %v7852 = vlaneseq
    %v7853 = vshrl.u32 %v7852, 7
    %v7854 = vsub.s32 %v7851, %v7853
    %v7855 = vrot.slane %v7845, %v7854
    %v7857 = vunpack.c.l.s4 1966171168
    %v7858 = vunpack.c.0.s8 %v7857
    %v7859 = vlaneseq
    %v7860 = vshrl.u32 %v7859, 7
    %v7861 = vsub.s32 %v7858, %v7860
    %v7862 = vrot.slane %v7846, %v7861
    %v7864 = vunpack.c.l.s4 1966171168
    %v7865 = vunpack.c.0.s8 %v7864
    %v7866 = vlaneseq
    %v7867 = vshrl.u32 %v7866, 7
    %v7868 = vsub.s32 %v7865, %v7867
    %v7869 = vrot.slane %v7847, %v7868
    %v7871 = vunpack.c.l.s4 1966171168
    %v7872 = vunpack.c.0.s8 %v7871
    %v7873 = vlaneseq
    %v7874 = vshrl.u32 %v7873, 7
    %v7875 = vsub.s32 %v7872, %v7874
    %v7876 = vrot.slane %v7848, %v7875
    %v7877 = vcombine.low %v7855, %v7862
    %v7878 = vcombine.low %v7869, %v7876
    %v7880 = vunpack.c.l.s4 1966171168
    %v7881 = vunpack.c.0.s8 %v7880
    %v7882 = vlaneseq
    %v7883 = vshrl.u32 %v7882, 7
    %v7884 = vsub.s32 %v7881, %v7883
    %v7885 = vrot.slane %v7877, %v7884
    %v7887 = vunpack.c.l.s4 1966171168
    %v7888 = vunpack.c.0.s8 %v7887
    %v7889 = vlaneseq
    %v7890 = vshrl.u32 %v7889, 7
    %v7891 = vsub.s32 %v7888, %v7890
    %v7892 = vrot.slane %v7878, %v7891
    %v7893 = vcombine.low %v7885, %v7892
    %v7894 = vcombine.low %v7317, %v7321
    %v7895 = vcombine.low %v7325, %v7329
    %v7896 = vcombine.low %v7333, %v7337
    %v7897 = vcombine.low %v7341, %v7345
    %v7899 = vunpack.c.l.s4 1966171168
    %v7900 = vunpack.c.0.s8 %v7899
    %v7901 = vlaneseq
    %v7902 = vshrl.u32 %v7901, 7
    %v7903 = vsub.s32 %v7900, %v7902
    %v7904 = vrot.slane %v7894, %v7903
    %v7906 = vunpack.c.l.s4 1966171168
    %v7907 = vunpack.c.0.s8 %v7906
    %v7908 = vlaneseq
    %v7909 = vshrl.u32 %v7908, 7
    %v7910 = vsub.s32 %v7907, %v7909
    %v7911 = vrot.slane %v7895, %v7910
    %v7913 = vunpack.c.l.s4 1966171168
    %v7914 = vunpack.c.0.s8 %v7913
    %v7915 = vlaneseq
    %v7916 = vshrl.u32 %v7915, 7
    %v7917 = vsub.s32 %v7914, %v7916
    %v7918 = vrot.slane %v7896, %v7917
    %v7920 = vunpack.c.l.s4 1966171168
    %v7921 = vunpack.c.0.s8 %v7920
    %v7922 = vlaneseq
    %v7923 = vshrl.u32 %v7922, 7
    %v7924 = vsub.s32 %v7921, %v7923
    %v7925 = vrot.slane %v7897, %v7924
    %v7926 = vcombine.low %v7904, %v7911
    %v7927 = vcombine.low %v7918, %v7925
    %v7929 = vunpack.c.l.s4 1966171168
    %v7930 = vunpack.c.0.s8 %v7929
    %v7931 = vlaneseq
    %v7932 = vshrl.u32 %v7931, 7
    %v7933 = vsub.s32 %v7930, %v7932
    %v7934 = vrot.slane %v7926, %v7933
    %v7936 = vunpack.c.l.s4 1966171168
    %v7937 = vunpack.c.0.s8 %v7936
    %v7938 = vlaneseq
    %v7939 = vshrl.u32 %v7938, 7
    %v7940 = vsub.s32 %v7937, %v7939
    %v7941 = vrot.slane %v7927, %v7940
    %v7942 = vcombine.low %v7934, %v7941
    %v7943 = vcombine.low %v7349, %v7353
    %v7944 = vcombine.low %v7357, %v7361
    %v7945 = vcombine.low %v7365, %v7369
    %v7946 = vcombine.low %v7373, %v7377
    %v7948 = vunpack.c.l.s4 1966171168
    %v7949 = vunpack.c.0.s8 %v7948
    %v7950 = vlaneseq
    %v7951 = vshrl.u32 %v7950, 7
    %v7952 = vsub.s32 %v7949, %v7951
    %v7953 = vrot.slane %v7943, %v7952
    %v7955 = vunpack.c.l.s4 1966171168
    %v7956 = vunpack.c.0.s8 %v7955
    %v7957 = vlaneseq
    %v7958 = vshrl.u32 %v7957, 7
    %v7959 = vsub.s32 %v7956, %v7958
    %v7960 = vrot.slane %v7944, %v7959
    %v7962 = vunpack.c.l.s4 1966171168
    %v7963 = vunpack.c.0.s8 %v7962
    %v7964 = vlaneseq
    %v7965 = vshrl.u32 %v7964, 7
    %v7966 = vsub.s32 %v7963, %v7965
    %v7967 = vrot.slane %v7945, %v7966
    %v7969 = vunpack.c.l.s4 1966171168
    %v7970 = vunpack.c.0.s8 %v7969
    %v7971 = vlaneseq
    %v7972 = vshrl.u32 %v7971, 7
    %v7973 = vsub.s32 %v7970, %v7972
    %v7974 = vrot.slane %v7946, %v7973
    %v7975 = vcombine.low %v7953, %v7960
    %v7976 = vcombine.low %v7967, %v7974
    %v7978 = vunpack.c.l.s4 1966171168
    %v7979 = vunpack.c.0.s8 %v7978
    %v7980 = vlaneseq
    %v7981 = vshrl.u32 %v7980, 7
    %v7982 = vsub.s32 %v7979, %v7981
    %v7983 = vrot.slane %v7975, %v7982
    %v7985 = vunpack.c.l.s4 1966171168
    %v7986 = vunpack.c.0.s8 %v7985
    %v7987 = vlaneseq
    %v7988 = vshrl.u32 %v7987, 7
    %v7989 = vsub.s32 %v7986, %v7988
    %v7990 = vrot.slane %v7976, %v7989
    %v7991 = vcombine.low %v7983, %v7990
    %v7992 = vcombine.low %v7381, %v7385
    %v7993 = vcombine.low %v7389, %v7393
    %v7994 = vcombine.low %v7397, %v7401
    %v7995 = vcombine.low %v7405, %v7409
    %v7997 = vunpack.c.l.s4 1966171168
    %v7998 = vunpack.c.0.s8 %v7997
    %v7999 = vlaneseq
    %v8000 = vshrl.u32 %v7999, 7
    %v8001 = vsub.s32 %v7998, %v8000
    %v8002 = vrot.slane %v7992, %v8001
    %v8004 = vunpack.c.l.s4 1966171168
    %v8005 = vunpack.c.0.s8 %v8004
    %v8006 = vlaneseq
    %v8007 = vshrl.u32 %v8006, 7
    %v8008 = vsub.s32 %v8005, %v8007
    %v8009 = vrot.slane %v7993, %v8008
    %v8011 = vunpack.c.l.s4 1966171168
    %v8012 = vunpack.c.0.s8 %v8011
    %v8013 = vlaneseq
    %v8014 = vshrl.u32 %v8013, 7
    %v8015 = vsub.s32 %v8012, %v8014
    %v8016 = vrot.slane %v7994, %v8015
    %v8018 = vunpack.c.l.s4 1966171168
    %v8019 = vunpack.c.0.s8 %v8018
    %v8020 = vlaneseq
    %v8021 = vshrl.u32 %v8020, 7
    %v8022 = vsub.s32 %v8019, %v8021
    %v8023 = vrot.slane %v7995, %v8022
    %v8024 = vcombine.low %v8002, %v8009
    %v8025 = vcombine.low %v8016, %v8023
    %v8027 = vunpack.c.l.s4 1966171168
    %v8028 = vunpack.c.0.s8 %v8027
    %v8029 = vlaneseq
    %v8030 = vshrl.u32 %v8029, 7
    %v8031 = vsub.s32 %v8028, %v8030
    %v8032 = vrot.slane %v8024, %v8031
    %v8034 = vunpack.c.l.s4 1966171168
    %v8035 = vunpack.c.0.s8 %v8034
    %v8036 = vlaneseq
    %v8037 = vshrl.u32 %v8036, 7
    %v8038 = vsub.s32 %v8035, %v8037
    %v8039 = vrot.slane %v8025, %v8038
    %v8040 = vcombine.low %v8032, %v8039
    %v8041 = vcombine.low %v7413, %v7417
    %v8042 = vcombine.low %v7421, %v7425
    %v8043 = vcombine.low %v7429, %v7433
    %v8044 = vcombine.low %v7437, %v7441
    %v8046 = vunpack.c.l.s4 1966171168
    %v8047 = vunpack.c.0.s8 %v8046
    %v8048 = vlaneseq
    %v8049 = vshrl.u32 %v8048, 7
    %v8050 = vsub.s32 %v8047, %v8049
    %v8051 = vrot.slane %v8041, %v8050
    %v8053 = vunpack.c.l.s4 1966171168
    %v8054 = vunpack.c.0.s8 %v8053
    %v8055 = vlaneseq
    %v8056 = vshrl.u32 %v8055, 7
    %v8057 = vsub.s32 %v8054, %v8056
    %v8058 = vrot.slane %v8042, %v8057
    %v8060 = vunpack.c.l.s4 1966171168
    %v8061 = vunpack.c.0.s8 %v8060
    %v8062 = vlaneseq
    %v8063 = vshrl.u32 %v8062, 7
    %v8064 = vsub.s32 %v8061, %v8063
    %v8065 = vrot.slane %v8043, %v8064
    %v8067 = vunpack.c.l.s4 1966171168
    %v8068 = vunpack.c.0.s8 %v8067
    %v8069 = vlaneseq
    %v8070 = vshrl.u32 %v8069, 7
    %v8071 = vsub.s32 %v8068, %v8070
    %v8072 = vrot.slane %v8044, %v8071
    %v8073 = vcombine.low %v8051, %v8058
    %v8074 = vcombine.low %v8065, %v8072
    %v8076 = vunpack.c.l.s4 1966171168
    %v8077 = vunpack.c.0.s8 %v8076
    %v8078 = vlaneseq
    %v8079 = vshrl.u32 %v8078, 7
    %v8080 = vsub.s32 %v8077, %v8079
    %v8081 = vrot.slane %v8073, %v8080
    %v8083 = vunpack.c.l.s4 1966171168
    %v8084 = vunpack.c.0.s8 %v8083
    %v8085 = vlaneseq
    %v8086 = vshrl.u32 %v8085, 7
    %v8087 = vsub.s32 %v8084, %v8086
    %v8088 = vrot.slane %v8074, %v8087
    %v8089 = vcombine.low %v8081, %v8088
    %v8090 = vcombine.low %v7445, %v7449
    %v8091 = vcombine.low %v7453, %v7457
    %v8092 = vcombine.low %v7461, %v7465
    %v8093 = vcombine.low %v7469, %v7473
    %v8095 = vunpack.c.l.s4 1966171168
    %v8096 = vunpack.c.0.s8 %v8095
    %v8097 = vlaneseq
    %v8098 = vshrl.u32 %v8097, 7
    %v8099 = vsub.s32 %v8096, %v8098
    %v8100 = vrot.slane %v8090, %v8099
    %v8102 = vunpack.c.l.s4 1966171168
    %v8103 = vunpack.c.0.s8 %v8102
    %v8104 = vlaneseq
    %v8105 = vshrl.u32 %v8104, 7
    %v8106 = vsub.s32 %v8103, %v8105
    %v8107 = vrot.slane %v8091, %v8106
    %v8109 = vunpack.c.l.s4 1966171168
    %v8110 = vunpack.c.0.s8 %v8109
    %v8111 = vlaneseq
    %v8112 = vshrl.u32 %v8111, 7
    %v8113 = vsub.s32 %v8110, %v8112
    %v8114 = vrot.slane %v8092, %v8113
    %v8116 = vunpack.c.l.s4 1966171168
    %v8117 = vunpack.c.0.s8 %v8116
    %v8118 = vlaneseq
    %v8119 = vshrl.u32 %v8118, 7
    %v8120 = vsub.s32 %v8117, %v8119
    %v8121 = vrot.slane %v8093, %v8120
    %v8122 = vcombine.low %v8100, %v8107
    %v8123 = vcombine.low %v8114, %v8121
    %v8125 = vunpack.c.l.s4 1966171168
    %v8126 = vunpack.c.0.s8 %v8125
    %v8127 = vlaneseq
    %v8128 = vshrl.u32 %v8127, 7
    %v8129 = vsub.s32 %v8126, %v8128
    %v8130 = vrot.slane %v8122, %v8129
    %v8132 = vunpack.c.l.s4 1966171168
    %v8133 = vunpack.c.0.s8 %v8132
    %v8134 = vlaneseq
    %v8135 = vshrl.u32 %v8134, 7
    %v8136 = vsub.s32 %v8133, %v8135
    %v8137 = vrot.slane %v8123, %v8136
    %v8138 = vcombine.low %v8130, %v8137
    %v8139 = vcombine.low %v7477, %v7481
    %v8140 = vcombine.low %v7485, %v7489
    %v8141 = vcombine.low %v7493, %v7497
    %v8142 = vcombine.low %v7501, %v7505
    %v8144 = vunpack.c.l.s4 1966171168
    %v8145 = vunpack.c.0.s8 %v8144
    %v8146 = vlaneseq
    %v8147 = vshrl.u32 %v8146, 7
    %v8148 = vsub.s32 %v8145, %v8147
    %v8149 = vrot.slane %v8139, %v8148
    %v8151 = vunpack.c.l.s4 1966171168
    %v8152 = vunpack.c.0.s8 %v8151
    %v8153 = vlaneseq
    %v8154 = vshrl.u32 %v8153, 7
    %v8155 = vsub.s32 %v8152, %v8154
    %v8156 = vrot.slane %v8140, %v8155
    %v8158 = vunpack.c.l.s4 1966171168
    %v8159 = vunpack.c.0.s8 %v8158
    %v8160 = vlaneseq
    %v8161 = vshrl.u32 %v8160, 7
    %v8162 = vsub.s32 %v8159, %v8161
    %v8163 = vrot.slane %v8141, %v8162
    %v8165 = vunpack.c.l.s4 1966171168
    %v8166 = vunpack.c.0.s8 %v8165
    %v8167 = vlaneseq
    %v8168 = vshrl.u32 %v8167, 7
    %v8169 = vsub.s32 %v8166, %v8168
    %v8170 = vrot.slane %v8142, %v8169
    %v8171 = vcombine.low %v8149, %v8156
    %v8172 = vcombine.low %v8163, %v8170
    %v8174 = vunpack.c.l.s4 1966171168
    %v8175 = vunpack.c.0.s8 %v8174
    %v8176 = vlaneseq
    %v8177 = vshrl.u32 %v8176, 7
    %v8178 = vsub.s32 %v8175, %v8177
    %v8179 = vrot.slane %v8171, %v8178
    %v8181 = vunpack.c.l.s4 1966171168
    %v8182 = vunpack.c.0.s8 %v8181
    %v8183 = vlaneseq
    %v8184 = vshrl.u32 %v8183, 7
    %v8185 = vsub.s32 %v8182, %v8184
    %v8186 = vrot.slane %v8172, %v8185
    %v8187 = vcombine.low %v8179, %v8186
    %v8188 = vcombine.low %v7509, %v7513
    %v8189 = vcombine.low %v7517, %v7521
    %v8190 = vcombine.low %v7525, %v7529
    %v8191 = vcombine.low %v7533, %v7537
    %v8193 = vunpack.c.l.s4 1966171168
    %v8194 = vunpack.c.0.s8 %v8193
    %v8195 = vlaneseq
    %v8196 = vshrl.u32 %v8195, 7
    %v8197 = vsub.s32 %v8194, %v8196
    %v8198 = vrot.slane %v8188, %v8197
    %v8200 = vunpack.c.l.s4 1966171168
    %v8201 = vunpack.c.0.s8 %v8200
    %v8202 = vlaneseq
    %v8203 = vshrl.u32 %v8202, 7
    %v8204 = vsub.s32 %v8201, %v8203
    %v8205 = vrot.slane %v8189, %v8204
    %v8207 = vunpack.c.l.s4 1966171168
    %v8208 = vunpack.c.0.s8 %v8207
    %v8209 = vlaneseq
    %v8210 = vshrl.u32 %v8209, 7
    %v8211 = vsub.s32 %v8208, %v8210
    %v8212 = vrot.slane %v8190, %v8211
    %v8214 = vunpack.c.l.s4 1966171168
    %v8215 = vunpack.c.0.s8 %v8214
    %v8216 = vlaneseq
    %v8217 = vshrl.u32 %v8216, 7
    %v8218 = vsub.s32 %v8215, %v8217
    %v8219 = vrot.slane %v8191, %v8218
    %v8220 = vcombine.low %v8198, %v8205
    %v8221 = vcombine.low %v8212, %v8219
    %v8223 = vunpack.c.l.s4 1966171168
    %v8224 = vunpack.c.0.s8 %v8223
    %v8225 = vlaneseq
    %v8226 = vshrl.u32 %v8225, 7
    %v8227 = vsub.s32 %v8224, %v8226
    %v8228 = vrot.slane %v8220, %v8227
    %v8230 = vunpack.c.l.s4 1966171168
    %v8231 = vunpack.c.0.s8 %v8230
    %v8232 = vlaneseq
    %v8233 = vshrl.u32 %v8232, 7
    %v8234 = vsub.s32 %v8231, %v8233
    %v8235 = vrot.slane %v8221, %v8234
    %v8236 = vcombine.low %v8228, %v8235
    %v8237 = vcombine.low %v7541, %v7545
    %v8238 = vcombine.low %v7549, %v7553
    %v8239 = vcombine.low %v7557, %v7561
    %v8240 = vcombine.low %v7565, %v7569
    %v8242 = vunpack.c.l.s4 1966171168
    %v8243 = vunpack.c.0.s8 %v8242
    %v8244 = vlaneseq
    %v8245 = vshrl.u32 %v8244, 7
    %v8246 = vsub.s32 %v8243, %v8245
    %v8247 = vrot.slane %v8237, %v8246
    %v8249 = vunpack.c.l.s4 1966171168
    %v8250 = vunpack.c.0.s8 %v8249
    %v8251 = vlaneseq
    %v8252 = vshrl.u32 %v8251, 7
    %v8253 = vsub.s32 %v8250, %v8252
    %v8254 = vrot.slane %v8238, %v8253
    %v8256 = vunpack.c.l.s4 1966171168
    %v8257 = vunpack.c.0.s8 %v8256
    %v8258 = vlaneseq
    %v8259 = vshrl.u32 %v8258, 7
    %v8260 = vsub.s32 %v8257, %v8259
    %v8261 = vrot.slane %v8239, %v8260
    %v8263 = vunpack.c.l.s4 1966171168
    %v8264 = vunpack.c.0.s8 %v8263
    %v8265 = vlaneseq
    %v8266 = vshrl.u32 %v8265, 7
    %v8267 = vsub.s32 %v8264, %v8266
    %v8268 = vrot.slane %v8240, %v8267
    %v8269 = vcombine.low %v8247, %v8254
    %v8270 = vcombine.low %v8261, %v8268
    %v8272 = vunpack.c.l.s4 1966171168
    %v8273 = vunpack.c.0.s8 %v8272
    %v8274 = vlaneseq
    %v8275 = vshrl.u32 %v8274, 7
    %v8276 = vsub.s32 %v8273, %v8275
    %v8277 = vrot.slane %v8269, %v8276
    %v8279 = vunpack.c.l.s4 1966171168
    %v8280 = vunpack.c.0.s8 %v8279
    %v8281 = vlaneseq
    %v8282 = vshrl.u32 %v8281, 7
    %v8283 = vsub.s32 %v8280, %v8282
    %v8284 = vrot.slane %v8270, %v8283
    %v8285 = vcombine.low %v8277, %v8284
    %v8286 = vcombine.low %v7573, %v7577
    %v8287 = vcombine.low %v7581, %v7585
    %v8288 = vcombine.low %v7589, %v7593
    %v8289 = vcombine.low %v7597, %v7601
    %v8291 = vunpack.c.l.s4 1966171168
    %v8292 = vunpack.c.0.s8 %v8291
    %v8293 = vlaneseq
    %v8294 = vshrl.u32 %v8293, 7
    %v8295 = vsub.s32 %v8292, %v8294
    %v8296 = vrot.slane %v8286, %v8295
    %v8298 = vunpack.c.l.s4 1966171168
    %v8299 = vunpack.c.0.s8 %v8298
    %v8300 = vlaneseq
    %v8301 = vshrl.u32 %v8300, 7
    %v8302 = vsub.s32 %v8299, %v8301
    %v8303 = vrot.slane %v8287, %v8302
    %v8305 = vunpack.c.l.s4 1966171168
    %v8306 = vunpack.c.0.s8 %v8305
    %v8307 = vlaneseq
    %v8308 = vshrl.u32 %v8307, 7
    %v8309 = vsub.s32 %v8306, %v8308
    %v8310 = vrot.slane %v8288, %v8309
    %v8312 = vunpack.c.l.s4 1966171168
    %v8313 = vunpack.c.0.s8 %v8312
    %v8314 = vlaneseq
    %v8315 = vshrl.u32 %v8314, 7
    %v8316 = vsub.s32 %v8313, %v8315
    %v8317 = vrot.slane %v8289, %v8316
    %v8318 = vcombine.low %v8296, %v8303
    %v8319 = vcombine.low %v8310, %v8317
    %v8321 = vunpack.c.l.s4 1966171168
    %v8322 = vunpack.c.0.s8 %v8321
    %v8323 = vlaneseq
    %v8324 = vshrl.u32 %v8323, 7
    %v8325 = vsub.s32 %v8322, %v8324
    %v8326 = vrot.slane %v8318, %v8325
    %v8328 = vunpack.c.l.s4 1966171168
    %v8329 = vunpack.c.0.s8 %v8328
    %v8330 = vlaneseq
    %v8331 = vshrl.u32 %v8330, 7
    %v8332 = vsub.s32 %v8329, %v8331
    %v8333 = vrot.slane %v8319, %v8332
    %v8334 = vcombine.low %v8326, %v8333
    %v8335 = vcombine.low %v7605, %v7609
    %v8336 = vcombine.low %v7613, %v7617
    %v8337 = vcombine.low %v7621, %v7625
    %v8338 = vcombine.low %v7629, %v7633
    %v8340 = vunpack.c.l.s4 1966171168
    %v8341 = vunpack.c.0.s8 %v8340
    %v8342 = vlaneseq
    %v8343 = vshrl.u32 %v8342, 7
    %v8344 = vsub.s32 %v8341, %v8343
    %v8345 = vrot.slane %v8335, %v8344
    %v8347 = vunpack.c.l.s4 1966171168
    %v8348 = vunpack.c.0.s8 %v8347
    %v8349 = vlaneseq
    %v8350 = vshrl.u32 %v8349, 7
    %v8351 = vsub.s32 %v8348, %v8350
    %v8352 = vrot.slane %v8336, %v8351
    %v8354 = vunpack.c.l.s4 1966171168
    %v8355 = vunpack.c.0.s8 %v8354
    %v8356 = vlaneseq
    %v8357 = vshrl.u32 %v8356, 7
    %v8358 = vsub.s32 %v8355, %v8357
    %v8359 = vrot.slane %v8337, %v8358
    %v8361 = vunpack.c.l.s4 1966171168
    %v8362 = vunpack.c.0.s8 %v8361
    %v8363 = vlaneseq
    %v8364 = vshrl.u32 %v8363, 7
    %v8365 = vsub.s32 %v8362, %v8364
    %v8366 = vrot.slane %v8338, %v8365
    %v8367 = vcombine.low %v8345, %v8352
    %v8368 = vcombine.low %v8359, %v8366
    %v8370 = vunpack.c.l.s4 1966171168
    %v8371 = vunpack.c.0.s8 %v8370
    %v8372 = vlaneseq
    %v8373 = vshrl.u32 %v8372, 7
    %v8374 = vsub.s32 %v8371, %v8373
    %v8375 = vrot.slane %v8367, %v8374
    %v8377 = vunpack.c.l.s4 1966171168
    %v8378 = vunpack.c.0.s8 %v8377
    %v8379 = vlaneseq
    %v8380 = vshrl.u32 %v8379, 7
    %v8381 = vsub.s32 %v8378, %v8380
    %v8382 = vrot.slane %v8368, %v8381
    %v8383 = vcombine.low %v8375, %v8382
    %v8384 = vcombine.low %v7637, %v7641
    %v8385 = vcombine.low %v7645, %v7649
    %v8386 = vcombine.low %v7653, %v7657
    %v8387 = vcombine.low %v7661, %v7665
    %v8389 = vunpack.c.l.s4 1966171168
    %v8390 = vunpack.c.0.s8 %v8389
    %v8391 = vlaneseq
    %v8392 = vshrl.u32 %v8391, 7
    %v8393 = vsub.s32 %v8390, %v8392
    %v8394 = vrot.slane %v8384, %v8393
    %v8396 = vunpack.c.l.s4 1966171168
    %v8397 = vunpack.c.0.s8 %v8396
    %v8398 = vlaneseq
    %v8399 = vshrl.u32 %v8398, 7
    %v8400 = vsub.s32 %v8397, %v8399
    %v8401 = vrot.slane %v8385, %v8400
    %v8403 = vunpack.c.l.s4 1966171168
    %v8404 = vunpack.c.0.s8 %v8403
    %v8405 = vlaneseq
    %v8406 = vshrl.u32 %v8405, 7
    %v8407 = vsub.s32 %v8404, %v8406
    %v8408 = vrot.slane %v8386, %v8407
    %v8410 = vunpack.c.l.s4 1966171168
    %v8411 = vunpack.c.0.s8 %v8410
    %v8412 = vlaneseq
    %v8413 = vshrl.u32 %v8412, 7
    %v8414 = vsub.s32 %v8411, %v8413
    %v8415 = vrot.slane %v8387, %v8414
    %v8416 = vcombine.low %v8394, %v8401
    %v8417 = vcombine.low %v8408, %v8415
    %v8419 = vunpack.c.l.s4 1966171168
    %v8420 = vunpack.c.0.s8 %v8419
    %v8421 = vlaneseq
    %v8422 = vshrl.u32 %v8421, 7
    %v8423 = vsub.s32 %v8420, %v8422
    %v8424 = vrot.slane %v8416, %v8423
    %v8426 = vunpack.c.l.s4 1966171168
    %v8427 = vunpack.c.0.s8 %v8426
    %v8428 = vlaneseq
    %v8429 = vshrl.u32 %v8428, 7
    %v8430 = vsub.s32 %v8427, %v8429
    %v8431 = vrot.slane %v8417, %v8430
    %v8432 = vcombine.low %v8424, %v8431
    %v8433 = vcombine.low %v7669, %v7673
    %v8434 = vcombine.low %v7677, %v7681
    %v8435 = vcombine.low %v7685, %v7689
    %v8436 = vcombine.low %v7693, %v7697
    %v8438 = vunpack.c.l.s4 1966171168
    %v8439 = vunpack.c.0.s8 %v8438
    %v8440 = vlaneseq
    %v8441 = vshrl.u32 %v8440, 7
    %v8442 = vsub.s32 %v8439, %v8441
    %v8443 = vrot.slane %v8433, %v8442
    %v8445 = vunpack.c.l.s4 1966171168
    %v8446 = vunpack.c.0.s8 %v8445
    %v8447 = vlaneseq
    %v8448 = vshrl.u32 %v8447, 7
    %v8449 = vsub.s32 %v8446, %v8448
    %v8450 = vrot.slane %v8434, %v8449
    %v8452 = vunpack.c.l.s4 1966171168
    %v8453 = vunpack.c.0.s8 %v8452
    %v8454 = vlaneseq
    %v8455 = vshrl.u32 %v8454, 7
    %v8456 = vsub.s32 %v8453, %v8455
    %v8457 = vrot.slane %v8435, %v8456
    %v8459 = vunpack.c.l.s4 1966171168
    %v8460 = vunpack.c.0.s8 %v8459
    %v8461 = vlaneseq
    %v8462 = vshrl.u32 %v8461, 7
    %v8463 = vsub.s32 %v8460, %v8462
    %v8464 = vrot.slane %v8436, %v8463
    %v8465 = vcombine.low %v8443, %v8450
    %v8466 = vcombine.low %v8457, %v8464
    %v8468 = vunpack.c.l.s4 1966171168
    %v8469 = vunpack.c.0.s8 %v8468
    %v8470 = vlaneseq
    %v8471 = vshrl.u32 %v8470, 7
    %v8472 = vsub.s32 %v8469, %v8471
    %v8473 = vrot.slane %v8465, %v8472
    %v8475 = vunpack.c.l.s4 1966171168
    %v8476 = vunpack.c.0.s8 %v8475
    %v8477 = vlaneseq
    %v8478 = vshrl.u32 %v8477, 7
    %v8479 = vsub.s32 %v8476, %v8478
    %v8480 = vrot.slane %v8466, %v8479
    %v8481 = vcombine.low %v8473, %v8480
    %8482 = vset.pattern.permute.xlu0 0
    %8483 = vperm.xlu0 %8482, %v7746
    %v8484 = vpop.permute.xlu0 %8483
    %8485 = vset.pattern.permute.xlu0 0
    %8486 = vperm.xlu0 %8485, %v7795
    %v8487 = vpop.permute.xlu0 %8486
    %8488 = vset.pattern.permute.xlu0 0
    %8489 = vperm.xlu0 %8488, %v7844
    %v8490 = vpop.permute.xlu0 %8489
    %8491 = vset.pattern.permute.xlu0 0
    %8492 = vperm.xlu0 %8491, %v7893
    %v8493 = vpop.permute.xlu0 %8492
    %8494 = vset.pattern.permute.xlu0 0
    %8495 = vperm.xlu0 %8494, %v7942
    %v8496 = vpop.permute.xlu0 %8495
    %8497 = vset.pattern.permute.xlu0 0
    %8498 = vperm.xlu0 %8497, %v7991
    %v8499 = vpop.permute.xlu0 %8498
    %8500 = vset.pattern.permute.xlu0 0
    %8501 = vperm.xlu0 %8500, %v8040
    %v8502 = vpop.permute.xlu0 %8501
    %8503 = vset.pattern.permute.xlu0 0
    %8504 = vperm.xlu0 %8503, %v8089
    %v8505 = vpop.permute.xlu0 %8504
    %8506 = vset.pattern.permute.xlu0 0
    %8507 = vperm.xlu0 %8506, %v8138
    %v8508 = vpop.permute.xlu0 %8507
    %8509 = vset.pattern.permute.xlu0 0
    %8510 = vperm.xlu0 %8509, %v8187
    %v8511 = vpop.permute.xlu0 %8510
    %8512 = vset.pattern.permute.xlu0 0
    %8513 = vperm.xlu0 %8512, %v8236
    %v8514 = vpop.permute.xlu0 %8513
    %8515 = vset.pattern.permute.xlu0 0
    %8516 = vperm.xlu0 %8515, %v8285
    %v8517 = vpop.permute.xlu0 %8516
    %8518 = vset.pattern.permute.xlu0 0
    %8519 = vperm.xlu0 %8518, %v8334
    %v8520 = vpop.permute.xlu0 %8519
    %8521 = vset.pattern.permute.xlu0 0
    %8522 = vperm.xlu0 %8521, %v8383
    %v8523 = vpop.permute.xlu0 %8522
    %8524 = vset.pattern.permute.xlu0 0
    %8525 = vperm.xlu0 %8524, %v8432
    %v8526 = vpop.permute.xlu0 %8525
    %8527 = vset.pattern.permute.xlu0 0
    %8528 = vperm.xlu0 %8527, %v8481
    %v8529 = vpop.permute.xlu0 %8528
    %v8530 = vlaneseq
    %v8531 = vshrl.u32 %v8530, 7
    %v8532 = vsub.s32 %v29, %v8531
    %v8533 = vrot.slane %v8484, %v8532
    %v8534 = vlaneseq
    %v8535 = vshrl.u32 %v8534, 7
    %v8536 = vsub.s32 %v2033, %v8535
    %v8537 = vrot.slane %v8487, %v8536
    %v8538 = vsel %vm2038, %v8537, %v8533
    %v8539 = vlaneseq
    %v8540 = vshrl.u32 %v8539, 7
    %v8541 = vsub.s32 %v2040, %v8540
    %v8542 = vrot.slane %v8490, %v8541
    %v8543 = vsel %vm2045, %v8542, %v8538
    %v8544 = vlaneseq
    %v8545 = vshrl.u32 %v8544, 7
    %v8546 = vsub.s32 %v2047, %v8545
    %v8547 = vrot.slane %v8493, %v8546
    %v8548 = vsel %vm2052, %v8547, %v8543
    %v8549 = vlaneseq
    %v8550 = vshrl.u32 %v8549, 7
    %v8551 = vsub.s32 %v2054, %v8550
    %v8552 = vrot.slane %v8496, %v8551
    %v8553 = vsel %vm2059, %v8552, %v8548
    %v8554 = vlaneseq
    %v8555 = vshrl.u32 %v8554, 7
    %v8556 = vsub.s32 %v2061, %v8555
    %v8557 = vrot.slane %v8499, %v8556
    %v8558 = vsel %vm2066, %v8557, %v8553
    %v8559 = vlaneseq
    %v8560 = vshrl.u32 %v8559, 7
    %v8561 = vsub.s32 %v2068, %v8560
    %v8562 = vrot.slane %v8502, %v8561
    %v8563 = vsel %vm2073, %v8562, %v8558
    %v8564 = vlaneseq
    %v8565 = vshrl.u32 %v8564, 7
    %v8566 = vsub.s32 %v2075, %v8565
    %v8567 = vrot.slane %v8505, %v8566
    %v8568 = vsel %vm2080, %v8567, %v8563
    %v8569 = vlaneseq
    %v8570 = vshrl.u32 %v8569, 7
    %v8571 = vsub.s32 %v2082, %v8570
    %v8572 = vrot.slane %v8508, %v8571
    %v8573 = vsel %vm2087, %v8572, %v8568
    %v8574 = vlaneseq
    %v8575 = vshrl.u32 %v8574, 7
    %v8576 = vsub.s32 %v2089, %v8575
    %v8577 = vrot.slane %v8511, %v8576
    %v8578 = vsel %vm2094, %v8577, %v8573
    %v8579 = vlaneseq
    %v8580 = vshrl.u32 %v8579, 7
    %v8581 = vsub.s32 %v2096, %v8580
    %v8582 = vrot.slane %v8514, %v8581
    %v8583 = vsel %vm2101, %v8582, %v8578
    %v8584 = vlaneseq
    %v8585 = vshrl.u32 %v8584, 7
    %v8586 = vsub.s32 %v2103, %v8585
    %v8587 = vrot.slane %v8517, %v8586
    %v8588 = vsel %vm2108, %v8587, %v8583
    %v8589 = vlaneseq
    %v8590 = vshrl.u32 %v8589, 7
    %v8591 = vsub.s32 %v2110, %v8590
    %v8592 = vrot.slane %v8520, %v8591
    %v8593 = vsel %vm2115, %v8592, %v8588
    %v8594 = vlaneseq
    %v8595 = vshrl.u32 %v8594, 7
    %v8596 = vsub.s32 %v2117, %v8595
    %v8597 = vrot.slane %v8523, %v8596
    %v8598 = vsel %vm2122, %v8597, %v8593
    %v8599 = vlaneseq
    %v8600 = vshrl.u32 %v8599, 7
    %v8601 = vsub.s32 %v2124, %v8600
    %v8602 = vrot.slane %v8526, %v8601
    %v8603 = vsel %vm2129, %v8602, %v8598
    %v8604 = vlaneseq
    %v8605 = vshrl.u32 %v8604, 7
    %v8606 = vsub.s32 %v2131, %v8605
    %v8607 = vrot.slane %v8529, %v8606
    %v8608 = vsel %vm2136, %v8607, %v8603
    %v8610 = vunpack.c.l.s4 1966171168
    %v8611 = vunpack.c.0.s8 %v8610
    %v8612 = vlaneseq
    %v8613 = vshrl.u32 %v8612, 7
    %v8614 = vsub.s32 %v8611, %v8613
    %v8615 = vrot.slane %v8608, %v8614
    %v8617 = vunpack.c.l.s4 1966171168
    %v8618 = vunpack.c.0.s8 %v8617
    %v8619 = vlaneseq
    %v8620 = vshrl.u32 %v8619, 7
    %v8621 = vsub.s32 %v8618, %v8620
    %v8622 = vrot.slane %v8615, %v8621
    %s8623 = scalar_lea.vmem [#allocation2], 3
    %8624 = vst.msk [vmem:[%s8623] sm:$0x1] %vm2155, %v8622
    %v8625 = vsub.f32 %v6543, %v7091
    %v8626 = vsub.f32 %v6544, %v7096
    %v8627 = vsub.f32 %v6545, %v7101
    %v8628 = vsub.f32 %v6546, %v7106
    %v8629 = vsub.f32 %v6547, %v7111
    %v8630 = vsub.f32 %v6548, %v7116
    %v8631 = vsub.f32 %v6549, %v7121
    %v8632 = vsub.f32 %v6550, %v7126
    %v8633 = vsub.f32 %v6551, %v7131
    %v8634 = vsub.f32 %v6552, %v7136
    %v8635 = vsub.f32 %v6553, %v7141
    %v8636 = vsub.f32 %v6554, %v7146
    %v8637 = vsub.f32 %v6555, %v7151
    %v8638 = vsub.f32 %v6556, %v7156
    %v8639 = vsub.f32 %v6557, %v7161
    %v8640 = vsub.f32 %v6558, %v7166
    %v8641 = vmul.f32 %v8625, %v8625
    %v8642 = vmul.f32 %v8626, %v8626
    %v8643 = vmul.f32 %v8627, %v8627
    %v8644 = vmul.f32 %v8628, %v8628
    %v8645 = vmul.f32 %v8629, %v8629
    %v8646 = vmul.f32 %v8630, %v8630
    %v8647 = vmul.f32 %v8631, %v8631
    %v8648 = vmul.f32 %v8632, %v8632
    %v8649 = vmul.f32 %v8633, %v8633
    %v8650 = vmul.f32 %v8634, %v8634
    %v8651 = vmul.f32 %v8635, %v8635
    %v8652 = vmul.f32 %v8636, %v8636
    %v8653 = vmul.f32 %v8637, %v8637
    %v8654 = vmul.f32 %v8638, %v8638
    %v8655 = vmul.f32 %v8639, %v8639
    %v8656 = vmul.f32 %v8640, %v8640
    %v8657 = vsel %vm47, %v8641, 0.0
    %v8658 = vsel %vm47, %v8642, 0.0
    %v8659 = vadd.f32 %v8657, %v8658
    %v8660 = vsel %vm47, %v8643, 0.0
    %v8661 = vadd.f32 %v8659, %v8660
    %v8662 = vsel %vm47, %v8644, 0.0
    %v8663 = vadd.f32 %v8661, %v8662
    %v8664 = vsel %vm47, %v8645, 0.0
    %v8665 = vadd.f32 %v8663, %v8664
    %v8666 = vsel %vm47, %v8646, 0.0
    %v8667 = vadd.f32 %v8665, %v8666
    %v8668 = vsel %vm47, %v8647, 0.0
    %v8669 = vadd.f32 %v8667, %v8668
    %v8670 = vsel %vm47, %v8648, 0.0
    %v8671 = vadd.f32 %v8669, %v8670
    %v8672 = vsel %vm47, %v8649, 0.0
    %v8673 = vadd.f32 %v8671, %v8672
    %v8674 = vsel %vm47, %v8650, 0.0
    %v8675 = vadd.f32 %v8673, %v8674
    %v8676 = vsel %vm47, %v8651, 0.0
    %v8677 = vadd.f32 %v8675, %v8676
    %v8678 = vsel %vm47, %v8652, 0.0
    %v8679 = vadd.f32 %v8677, %v8678
    %v8680 = vsel %vm47, %v8653, 0.0
    %v8681 = vadd.f32 %v8679, %v8680
    %v8682 = vsel %vm47, %v8654, 0.0
    %v8683 = vadd.f32 %v8681, %v8682
    %v8684 = vsel %vm47, %v8655, 0.0
    %v8685 = vadd.f32 %v8683, %v8684
    %v8686 = vsel %vm47, %v8656, 0.0
    %v8687 = vadd.f32 %v8685, %v8686
    %8688 = vadd.xlane.f32.xlu0 %v8687
    %v8689 = vpop.xlane.xlu0 %8688
    %v8690 = vrot.slane %v8689, 4
    %v8691 = vadd.f32 %v8689, %v8690
    %v8692 = vrot.slane %v8691, 2
    %v8693 = vadd.f32 %v8691, %v8692
    %v8694 = vrot.slane %v8693, 1
    %v8695 = vadd.f32 %v8693, %v8694
    %s8696 = vtos %v8695
    %s8697 = sadd.f32 %s6541, %s8696
    %v8698 = vstv %s8697
    %8699 = vst [vmem:[#allocation4] sm:$0x1] %v8698
    // Predicated region
    $region14: #{tpu_custom_call.1} parent=1 // pred_check
      _
    $region15: #{tpu_custom_call.1} parent=1 // pred_check_branch
      %8701 = sbr.rel (0) target = $region17
    $region16: #{tpu_custom_call.1} parent=1 // pred_region
      _
    $region17: #{tpu_custom_call.1} parent=1 // pred_fallthru
      _
    // Predicated region
    $region18: #{tpu_custom_call.1} parent=1 // pred_check
      _
    $region19: #{tpu_custom_call.1} parent=1 // pred_check_branch
      %8703 = sbr.rel (0) target = $region21
    $region20: #{tpu_custom_call.1} parent=1 // pred_region
      %s8705 = ssub.s32 64, 64
      %8706 = vsyncadd [#allocation3], %s8705
      %s8708 = sshll.u32 [#allocation2], 4
      %s8709 = int_to_ptr.vmem [resolvable:$true] %s8708
      %8711 = dma.vmem_to_hbm [thread:$0]  %s8709, 64, %s4, [#allocation3]
    $region21: #{tpu_custom_call.1} parent=1 // pred_fallthru
      _
    // Predicated region
    $region22: #{tpu_custom_call.1} parent=1 // pred_check
      _
    $region23: #{tpu_custom_call.1} parent=1 // pred_check_branch
      %8713 = sbr.rel (0) target = $region25
    $region24: #{tpu_custom_call.1} parent=1 // pred_region
      %s8715 = ssub.s32 16, 16
      %8716 = vsyncadd [#allocation5], %s8715
      %s8718 = sshll.u32 [#allocation4], 4
      %s8719 = int_to_ptr.vmem [resolvable:$true] %s8718
      %8721 = dma.vmem_to_hbm [thread:$0]  %s8719, 16, %s5, [#allocation5]
    $region25: #{tpu_custom_call.1} parent=1 // pred_fallthru
      _
    // Predicated region
    $region26: #{tpu_custom_call.1} parent=1 // pred_check
      _
    $region27: #{tpu_custom_call.1} parent=1 // pred_check_branch
      %8723 = sbr.rel (0) target = $region29
    $region28: #{tpu_custom_call.1} parent=1 // pred_region
      _
    $region29: #{tpu_custom_call.1} parent=1 // pred_fallthru
      _
    // Predicated region
    $region30: #{tpu_custom_call.1} parent=1 // pred_check
      _
    $region31: #{tpu_custom_call.1} parent=1 // pred_check_branch
      %8725 = sbr.rel (0) target = $region33
    $region32: #{tpu_custom_call.1} parent=1 // pred_region
      %8726 = dma.done [#allocation3], 64
    $region33: #{tpu_custom_call.1} parent=1 // pred_fallthru
      _
    // Predicated region
    $region34: #{tpu_custom_call.1} parent=1 // pred_check
      _
    $region35: #{tpu_custom_call.1} parent=1 // pred_check_branch
      %8728 = sbr.rel (0) target = $region37
    $region36: #{tpu_custom_call.1} parent=1 // pred_region
      %8729 = dma.done [#allocation5], 16
    $region37: #{tpu_custom_call.1} parent=1 // pred_fallthru
      _
    %8730 = vsyncpa [#allocation3], 1
    %8731 = vsyncpa [#allocation5], 1

</llo_original>
